<compile_context>
chip_gen: v7x
topology: tpu7x:2x2x1
jax: 0.10.0
libtpu: 0.0.40
codegen_flags: <defaults>
</compile_context>

<pallas_src>
import math

import jax
import jax.numpy as jnp
import numpy as np
from jax.experimental import pallas as pl
from jax.experimental.pallas import tpu as pltpu


def _make_fused_kernel(H, W, B, K, layer_dims):
    """layer_dims: [(cin, cout), ...] per conv layer. Activations: (cin, L)."""
    PAD = K // 2
    L = B * H * W
    n_conv = len(layer_dims)

    def kernel(*refs):
        x_ref = refs[0]                           # (1, L) single-channel input
        m_ref = refs[1]                           # (K*K, L) 0/1 edge masks
        w_refs = refs[2:2 + 2 * n_conv:2]         # (cout, K*K*cin) per layer
        b_refs = refs[3:3 + 2 * n_conv:2]         # (cout, 1)        per layer
        o_ref = refs[2 + 2 * n_conv]              # (1, L) lane-dense output

        x = x_ref[...]                            # (cin, L); cin=1 for layer 0
        for li, (cin, cout) in enumerate(layer_dims):
            wl = w_refs[li]
            acc = jnp.zeros((cout, L), jnp.float32)
            for kh in range(K):
                for kw in range(K):
                    t = kh * K + kw
                    off = (kh - PAD) * W + (kw - PAD)
                    # Lane rotate (XLU) so lane p holds the (h+dh, w+dw)
                    # neighbour of position p in the flattened spatial axis.
                    src = x if off == 0 else pltpu.roll(x, (-off) % L, 1)
                    # Zero taps outside the image ('same' padding) and the
                    # positions that wrapped across image/batch boundaries.
                    src = src * m_ref[t:t + 1, :]
                    w_tap = wl[:, t * cin:(t + 1) * cin]      # (cout, cin)
                    if cin == 1:
                        # Rank-1 tap: broadcast outer product on the VPU
                        # instead of a degenerate K=1 MXU matmul.
                        acc = acc + w_tap * src
                    else:
                        acc = acc + jnp.dot(
                            w_tap, src, preferred_element_type=jnp.float32)
            acc = acc + b_refs[li][...]            # (cout, 1) bias broadcast
            if li < n_conv - 1:
                x = jnp.maximum(acc, 0.0)          # ReLU; stays on-chip
            else:
                o_ref[...] = acc.astype(o_ref.dtype)

    return kernel


def _edge_mask(H, W, B, K):
    """(K*K, B*H*W) float32 0/1 mask: tap (kh,kw) is valid at position p."""
    PAD = K // 2
    L = B * H * W
    pos = np.arange(L, dtype=np.int64)
    ww = pos % W
    hh = (pos // W) % H
    rows = []
    for kh in range(K):
        dh = kh - PAD
        for kw in range(K):
            dw = kw - PAD
            ok = ((hh + dh >= 0) & (hh + dh < H)
                  & (ww + dw >= 0) & (ww + dw < W))
            rows.append(ok)
    return jnp.asarray(np.stack(rows).astype(np.float32))


def network_preconditioner(x_nchw, params):
    """x_nchw: (N, 1, H, W); params: list of ((K,K,cin,cout) w, (cout,) b)."""
    N, C, H, W = x_nchw.shape
    assert C == 1, "module takes single-channel input"
    K = params[0][0].shape[0]
    layer_dims = [(w.shape[2], w.shape[3]) for w, _ in params]
    assert layer_dims[-1][1] == 1, "final conv must have cout == 1"

    # Images per grid step: keep two grid steps when the batch is even so
    # v7x's two TensorCores each take half the batch ("parallel" axis); the
    # rest of the batch is folded into the matmul lane (L) dimension, which
    # amortises per-step pipeline overhead on single-TC v5e/v6e.
    G = 2 if (N % 2 == 0 and N >= 2) else N
    B = N // G
    L = B * H * W

    # (N,1,H,W) -> (G, 1, B*H*W): pure reshape (C == 1), lane-dense layout.
    x = x_nchw.reshape(G, 1, L).astype(jnp.float32)
    mask = _edge_mask(H, W, B, K)

    inputs = [x, mask]
    in_specs = [pl.BlockSpec((None, 1, L), lambda g: (g, 0, 0)),
                pl.BlockSpec(mask.shape, lambda g: (0, 0))]
    for w, b in params:
        cin, cout = w.shape[2], w.shape[3]
        # (K,K,cin,cout) -> lane-dense (cout, K*K*cin); columns ordered
        # (kh, kw, cin) to match the kernel's per-tap slices.
        w_flat = jnp.transpose(w, (3, 0, 1, 2)).reshape(cout, K * K * cin)
        inputs.append(w_flat.astype(jnp.float32))
        in_specs.append(pl.BlockSpec(w_flat.shape, lambda g: (0, 0)))
        b_col = b.reshape(cout, 1).astype(jnp.float32)
        inputs.append(b_col)
        in_specs.append(pl.BlockSpec(b_col.shape, lambda g: (0, 0)))

    # TODO(synk): for larger H*W, tile L along lanes with a K//2 row halo and
    # set vmem_limit_bytes explicitly (budget against v7x's 64 MiB VMEM).
    kernel = _make_fused_kernel(H, W, B, K, layer_dims)
    out = pl.pallas_call(
        kernel,
        out_shape=jax.ShapeDtypeStruct((G, 1, L), jnp.float32),
        grid=(G,),
        in_specs=in_specs,
        out_specs=pl.BlockSpec((None, 1, L), lambda g: (g, 0, 0)),
        compiler_params=pltpu.CompilerParams(
            dimension_semantics=("parallel",)),
    )(*inputs)
    return out.reshape(N, 1, H, W)


def init_params(key, n_layers=1, hidden_channels=32, kernel_size=5):
    """Deterministic synthetic init matching the module's layer shapes.

    Weights stored as (K, K, cin, cout).  Real PyTorch (cout, cin, K, K)
    weights would map via w.transpose(2, 3, 1, 0).
    """
    dims = ([(1, hidden_channels)]
            + [(hidden_channels, hidden_channels)] * n_layers
            + [(hidden_channels, 1)])
    params = []
    for cin, cout in dims:
        key, wk, bk = jax.random.split(key, 3)
        fan_in = cin * kernel_size * kernel_size
        bound = 1.0 / math.sqrt(fan_in)
        w = jax.random.uniform(wk, (kernel_size, kernel_size, cin, cout),
                               jnp.float32, -bound, bound)
        b = jax.random.uniform(bk, (cout,), jnp.float32, -bound, bound)
        params.append((w, b))
    return params


def _reference_forward(x_nchw, params):
    """Pure-JAX reference (same math as the PyTorch module)."""
    x = jnp.transpose(x_nchw, (0, 2, 3, 1))
    n_conv = len(params)
    for li, (w, b) in enumerate(params):
        x = jax.lax.conv_general_dilated(
            x, w, window_strides=(1, 1), padding="SAME",
            dimension_numbers=("NHWC", "HWIO", "NHWC"),
            precision=jax.lax.Precision.HIGHEST)
        x = x + b
        if li < n_conv - 1:
            x = jnp.maximum(x, 0.0)
    return jnp.transpose(x, (0, 3, 1, 2))


if __name__ == "__main__":
    key = jax.random.PRNGKey(0)
    pkey, xkey = jax.random.split(key)
    params = init_params(pkey, n_layers=1, hidden_channels=32, kernel_size=5)
    # Module takes single-channel NCHW images.
    x = jax.random.normal(xkey, (2, 1, 16, 16), dtype=jnp.float32)

    out = jax.jit(network_preconditioner)(x, params)
    jax.block_until_ready(out)
    assert out.shape == (2, 1, 16, 16), out.shape

    ref = _reference_forward(x, params)
    err = float(jnp.max(jnp.abs(out - ref)))
    assert err < 1e-3, f"max abs error vs reference: {err}"
    print("KERNEL_OK")
</pallas_src>

<mosaic_0001>
module attributes {stable_mosaic.version = 11 : i64} {
  func.func @kernel(%arg0: i32, %arg1: memref<1x1x256xf32, #tpu.memory_space<vmem>>, %arg2: memref<25x256xf32, #tpu.memory_space<vmem>>, %arg3: memref<32x25xf32, #tpu.memory_space<vmem>>, %arg4: memref<32x1xf32, #tpu.memory_space<vmem>>, %arg5: memref<32x800xf32, #tpu.memory_space<vmem>>, %arg6: memref<32x1xf32, #tpu.memory_space<vmem>>, %arg7: memref<1x800xf32, #tpu.memory_space<vmem>>, %arg8: memref<1x1xf32, #tpu.memory_space<vmem>>, %arg9: memref<1x1x256xf32, #tpu.memory_space<vmem>>) attributes {dimension_semantics = [#tpu.dimension_semantics<parallel>], iteration_bounds = array<i64: 2>, scalar_prefetch = 0 : i64, scratch_operands = 0 : i64, tpu.core_type = #tpu.core_type<tc>, window_params = [{transform_indices = @transform_0, window_bounds = array<i64: 1, 1, 256>}, {pipeline_mode = #tpu.pipeline_mode<synchronous>, transform_indices = @transform_1, window_bounds = array<i64: 25, 256>}, {pipeline_mode = #tpu.pipeline_mode<synchronous>, transform_indices = @transform_2, window_bounds = array<i64: 32, 25>}, {pipeline_mode = #tpu.pipeline_mode<synchronous>, transform_indices = @transform_3, window_bounds = array<i64: 32, 1>}, {pipeline_mode = #tpu.pipeline_mode<synchronous>, transform_indices = @transform_4, window_bounds = array<i64: 32, 800>}, {pipeline_mode = #tpu.pipeline_mode<synchronous>, transform_indices = @transform_5, window_bounds = array<i64: 32, 1>}, {pipeline_mode = #tpu.pipeline_mode<synchronous>, transform_indices = @transform_6, window_bounds = array<i64: 1, 800>}, {pipeline_mode = #tpu.pipeline_mode<synchronous>, transform_indices = @transform_7, window_bounds = array<i64: 1, 1>}, {transform_indices = @transform_8, window_bounds = array<i64: 1, 1, 256>}]} {
    %c0 = arith.constant 0 : index
    %c0_0 = arith.constant 0 : index
    %c0_1 = arith.constant 0 : index
    %0 = vector.load %arg1[%c0, %c0_0, %c0_1] : memref<1x1x256xf32, #tpu.memory_space<vmem>>, vector<1x1x256xf32>
    %1 = vector.shape_cast %0 : vector<1x1x256xf32> to vector<1x256xf32>
    %cst = arith.constant 0.000000e+00 : f32
    %2 = vector.broadcast %cst : f32 to vector<32x256xf32>
    %c34_i32 = arith.constant 34 : i32
    %3 = tpu.dynamic_rotate %1 by %c34_i32 dim 1 : vector<1x256xf32>, i32 -> vector<1x256xf32>
    %c0_2 = arith.constant 0 : index
    %c0_3 = arith.constant 0 : index
    %4 = vector.load %arg2[%c0_2, %c0_3] : memref<25x256xf32, #tpu.memory_space<vmem>>, vector<1x256xf32>
    %5 = arith.mulf %3, %4 : vector<1x256xf32>
    %c0_4 = arith.constant 0 : index
    %c0_5 = arith.constant 0 : index
    %6 = vector.load %arg3[%c0_4, %c0_5] : memref<32x25xf32, #tpu.memory_space<vmem>>, vector<32x1xf32>
    %7 = vector.broadcast %6 : vector<32x1xf32> to vector<32x256xf32>
    %8 = vector.broadcast %5 : vector<1x256xf32> to vector<32x256xf32>
    %9 = arith.mulf %7, %8 : vector<32x256xf32>
    %10 = arith.addf %2, %9 : vector<32x256xf32>
    %c33_i32 = arith.constant 33 : i32
    %11 = tpu.dynamic_rotate %1 by %c33_i32 dim 1 : vector<1x256xf32>, i32 -> vector<1x256xf32>
    %c1 = arith.constant 1 : index
    %c0_6 = arith.constant 0 : index
    %12 = vector.load %arg2[%c1, %c0_6] : memref<25x256xf32, #tpu.memory_space<vmem>>, vector<1x256xf32>
    %13 = arith.mulf %11, %12 : vector<1x256xf32>
    %c0_7 = arith.constant 0 : index
    %c1_8 = arith.constant 1 : index
    %14 = vector.load %arg3[%c0_7, %c1_8] : memref<32x25xf32, #tpu.memory_space<vmem>>, vector<32x1xf32>
    %15 = vector.broadcast %14 : vector<32x1xf32> to vector<32x256xf32>
    %16 = vector.broadcast %13 : vector<1x256xf32> to vector<32x256xf32>
    %17 = arith.mulf %15, %16 : vector<32x256xf32>
    %18 = arith.addf %10, %17 : vector<32x256xf32>
    %c32_i32 = arith.constant 32 : i32
    %19 = tpu.dynamic_rotate %1 by %c32_i32 dim 1 : vector<1x256xf32>, i32 -> vector<1x256xf32>
    %c2 = arith.constant 2 : index
    %c0_9 = arith.constant 0 : index
    %20 = vector.load %arg2[%c2, %c0_9] : memref<25x256xf32, #tpu.memory_space<vmem>>, vector<1x256xf32>
    %21 = arith.mulf %19, %20 : vector<1x256xf32>
    %c0_10 = arith.constant 0 : index
    %c2_11 = arith.constant 2 : index
    %22 = vector.load %arg3[%c0_10, %c2_11] : memref<32x25xf32, #tpu.memory_space<vmem>>, vector<32x1xf32>
    %23 = vector.broadcast %22 : vector<32x1xf32> to vector<32x256xf32>
    %24 = vector.broadcast %21 : vector<1x256xf32> to vector<32x256xf32>
    %25 = arith.mulf %23, %24 : vector<32x256xf32>
    %26 = arith.addf %18, %25 : vector<32x256xf32>
    %c31_i32 = arith.constant 31 : i32
    %27 = tpu.dynamic_rotate %1 by %c31_i32 dim 1 : vector<1x256xf32>, i32 -> vector<1x256xf32>
    %c3 = arith.constant 3 : index
    %c0_12 = arith.constant 0 : index
    %28 = vector.load %arg2[%c3, %c0_12] : memref<25x256xf32, #tpu.memory_space<vmem>>, vector<1x256xf32>
    %29 = arith.mulf %27, %28 : vector<1x256xf32>
    %c0_13 = arith.constant 0 : index
    %c3_14 = arith.constant 3 : index
    %30 = vector.load %arg3[%c0_13, %c3_14] : memref<32x25xf32, #tpu.memory_space<vmem>>, vector<32x1xf32>
    %31 = vector.broadcast %30 : vector<32x1xf32> to vector<32x256xf32>
    %32 = vector.broadcast %29 : vector<1x256xf32> to vector<32x256xf32>
    %33 = arith.mulf %31, %32 : vector<32x256xf32>
    %34 = arith.addf %26, %33 : vector<32x256xf32>
    %c30_i32 = arith.constant 30 : i32
    %35 = tpu.dynamic_rotate %1 by %c30_i32 dim 1 : vector<1x256xf32>, i32 -> vector<1x256xf32>
    %c4 = arith.constant 4 : index
    %c0_15 = arith.constant 0 : index
    %36 = vector.load %arg2[%c4, %c0_15] : memref<25x256xf32, #tpu.memory_space<vmem>>, vector<1x256xf32>
    %37 = arith.mulf %35, %36 : vector<1x256xf32>
    %c0_16 = arith.constant 0 : index
    %c4_17 = arith.constant 4 : index
    %38 = vector.load %arg3[%c0_16, %c4_17] : memref<32x25xf32, #tpu.memory_space<vmem>>, vector<32x1xf32>
    %39 = vector.broadcast %38 : vector<32x1xf32> to vector<32x256xf32>
    %40 = vector.broadcast %37 : vector<1x256xf32> to vector<32x256xf32>
    %41 = arith.mulf %39, %40 : vector<32x256xf32>
    %42 = arith.addf %34, %41 : vector<32x256xf32>
    %c18_i32 = arith.constant 18 : i32
    %43 = tpu.dynamic_rotate %1 by %c18_i32 dim 1 : vector<1x256xf32>, i32 -> vector<1x256xf32>
    %c5 = arith.constant 5 : index
    %c0_18 = arith.constant 0 : index
    %44 = vector.load %arg2[%c5, %c0_18] : memref<25x256xf32, #tpu.memory_space<vmem>>, vector<1x256xf32>
    %45 = arith.mulf %43, %44 : vector<1x256xf32>
    %c0_19 = arith.constant 0 : index
    %c5_20 = arith.constant 5 : index
    %46 = vector.load %arg3[%c0_19, %c5_20] : memref<32x25xf32, #tpu.memory_space<vmem>>, vector<32x1xf32>
    %47 = vector.broadcast %46 : vector<32x1xf32> to vector<32x256xf32>
    %48 = vector.broadcast %45 : vector<1x256xf32> to vector<32x256xf32>
    %49 = arith.mulf %47, %48 : vector<32x256xf32>
    %50 = arith.addf %42, %49 : vector<32x256xf32>
    %c17_i32 = arith.constant 17 : i32
    %51 = tpu.dynamic_rotate %1 by %c17_i32 dim 1 : vector<1x256xf32>, i32 -> vector<1x256xf32>
    %c6 = arith.constant 6 : index
    %c0_21 = arith.constant 0 : index
    %52 = vector.load %arg2[%c6, %c0_21] : memref<25x256xf32, #tpu.memory_space<vmem>>, vector<1x256xf32>
    %53 = arith.mulf %51, %52 : vector<1x256xf32>
    %c0_22 = arith.constant 0 : index
    %c6_23 = arith.constant 6 : index
    %54 = vector.load %arg3[%c0_22, %c6_23] : memref<32x25xf32, #tpu.memory_space<vmem>>, vector<32x1xf32>
    %55 = vector.broadcast %54 : vector<32x1xf32> to vector<32x256xf32>
    %56 = vector.broadcast %53 : vector<1x256xf32> to vector<32x256xf32>
    %57 = arith.mulf %55, %56 : vector<32x256xf32>
    %58 = arith.addf %50, %57 : vector<32x256xf32>
    %c16_i32 = arith.constant 16 : i32
    %59 = tpu.dynamic_rotate %1 by %c16_i32 dim 1 : vector<1x256xf32>, i32 -> vector<1x256xf32>
    %c7 = arith.constant 7 : index
    %c0_24 = arith.constant 0 : index
    %60 = vector.load %arg2[%c7, %c0_24] : memref<25x256xf32, #tpu.memory_space<vmem>>, vector<1x256xf32>
    %61 = arith.mulf %59, %60 : vector<1x256xf32>
    %c0_25 = arith.constant 0 : index
    %c7_26 = arith.constant 7 : index
    %62 = vector.load %arg3[%c0_25, %c7_26] : memref<32x25xf32, #tpu.memory_space<vmem>>, vector<32x1xf32>
    %63 = vector.broadcast %62 : vector<32x1xf32> to vector<32x256xf32>
    %64 = vector.broadcast %61 : vector<1x256xf32> to vector<32x256xf32>
    %65 = arith.mulf %63, %64 : vector<32x256xf32>
    %66 = arith.addf %58, %65 : vector<32x256xf32>
    %c15_i32 = arith.constant 15 : i32
    %67 = tpu.dynamic_rotate %1 by %c15_i32 dim 1 : vector<1x256xf32>, i32 -> vector<1x256xf32>
    %c8 = arith.constant 8 : index
    %c0_27 = arith.constant 0 : index
    %68 = vector.load %arg2[%c8, %c0_27] : memref<25x256xf32, #tpu.memory_space<vmem>>, vector<1x256xf32>
    %69 = arith.mulf %67, %68 : vector<1x256xf32>
    %c0_28 = arith.constant 0 : index
    %c8_29 = arith.constant 8 : index
    %70 = vector.load %arg3[%c0_28, %c8_29] : memref<32x25xf32, #tpu.memory_space<vmem>>, vector<32x1xf32>
    %71 = vector.broadcast %70 : vector<32x1xf32> to vector<32x256xf32>
    %72 = vector.broadcast %69 : vector<1x256xf32> to vector<32x256xf32>
    %73 = arith.mulf %71, %72 : vector<32x256xf32>
    %74 = arith.addf %66, %73 : vector<32x256xf32>
    %c14_i32 = arith.constant 14 : i32
    %75 = tpu.dynamic_rotate %1 by %c14_i32 dim 1 : vector<1x256xf32>, i32 -> vector<1x256xf32>
    %c9 = arith.constant 9 : index
    %c0_30 = arith.constant 0 : index
    %76 = vector.load %arg2[%c9, %c0_30] : memref<25x256xf32, #tpu.memory_space<vmem>>, vector<1x256xf32>
    %77 = arith.mulf %75, %76 : vector<1x256xf32>
    %c0_31 = arith.constant 0 : index
    %c9_32 = arith.constant 9 : index
    %78 = vector.load %arg3[%c0_31, %c9_32] : memref<32x25xf32, #tpu.memory_space<vmem>>, vector<32x1xf32>
    %79 = vector.broadcast %78 : vector<32x1xf32> to vector<32x256xf32>
    %80 = vector.broadcast %77 : vector<1x256xf32> to vector<32x256xf32>
    %81 = arith.mulf %79, %80 : vector<32x256xf32>
    %82 = arith.addf %74, %81 : vector<32x256xf32>
    %c2_i32 = arith.constant 2 : i32
    %83 = tpu.dynamic_rotate %1 by %c2_i32 dim 1 : vector<1x256xf32>, i32 -> vector<1x256xf32>
    %c10 = arith.constant 10 : index
    %c0_33 = arith.constant 0 : index
    %84 = vector.load %arg2[%c10, %c0_33] : memref<25x256xf32, #tpu.memory_space<vmem>>, vector<1x256xf32>
    %85 = arith.mulf %83, %84 : vector<1x256xf32>
    %c0_34 = arith.constant 0 : index
    %c10_35 = arith.constant 10 : index
    %86 = vector.load %arg3[%c0_34, %c10_35] : memref<32x25xf32, #tpu.memory_space<vmem>>, vector<32x1xf32>
    %87 = vector.broadcast %86 : vector<32x1xf32> to vector<32x256xf32>
    %88 = vector.broadcast %85 : vector<1x256xf32> to vector<32x256xf32>
    %89 = arith.mulf %87, %88 : vector<32x256xf32>
    %90 = arith.addf %82, %89 : vector<32x256xf32>
    %c1_i32 = arith.constant 1 : i32
    %91 = tpu.dynamic_rotate %1 by %c1_i32 dim 1 : vector<1x256xf32>, i32 -> vector<1x256xf32>
    %c11 = arith.constant 11 : index
    %c0_36 = arith.constant 0 : index
    %92 = vector.load %arg2[%c11, %c0_36] : memref<25x256xf32, #tpu.memory_space<vmem>>, vector<1x256xf32>
    %93 = arith.mulf %91, %92 : vector<1x256xf32>
    %c0_37 = arith.constant 0 : index
    %c11_38 = arith.constant 11 : index
    %94 = vector.load %arg3[%c0_37, %c11_38] : memref<32x25xf32, #tpu.memory_space<vmem>>, vector<32x1xf32>
    %95 = vector.broadcast %94 : vector<32x1xf32> to vector<32x256xf32>
    %96 = vector.broadcast %93 : vector<1x256xf32> to vector<32x256xf32>
    %97 = arith.mulf %95, %96 : vector<32x256xf32>
    %98 = arith.addf %90, %97 : vector<32x256xf32>
    %c12 = arith.constant 12 : index
    %c0_39 = arith.constant 0 : index
    %99 = vector.load %arg2[%c12, %c0_39] : memref<25x256xf32, #tpu.memory_space<vmem>>, vector<1x256xf32>
    %100 = arith.mulf %1, %99 : vector<1x256xf32>
    %c0_40 = arith.constant 0 : index
    %c12_41 = arith.constant 12 : index
    %101 = vector.load %arg3[%c0_40, %c12_41] : memref<32x25xf32, #tpu.memory_space<vmem>>, vector<32x1xf32>
    %102 = vector.broadcast %101 : vector<32x1xf32> to vector<32x256xf32>
    %103 = vector.broadcast %100 : vector<1x256xf32> to vector<32x256xf32>
    %104 = arith.mulf %102, %103 : vector<32x256xf32>
    %105 = arith.addf %98, %104 : vector<32x256xf32>
    %c255_i32 = arith.constant 255 : i32
    %106 = tpu.dynamic_rotate %1 by %c255_i32 dim 1 : vector<1x256xf32>, i32 -> vector<1x256xf32>
    %c13 = arith.constant 13 : index
    %c0_42 = arith.constant 0 : index
    %107 = vector.load %arg2[%c13, %c0_42] : memref<25x256xf32, #tpu.memory_space<vmem>>, vector<1x256xf32>
    %108 = arith.mulf %106, %107 : vector<1x256xf32>
    %c0_43 = arith.constant 0 : index
    %c13_44 = arith.constant 13 : index
    %109 = vector.load %arg3[%c0_43, %c13_44] : memref<32x25xf32, #tpu.memory_space<vmem>>, vector<32x1xf32>
    %110 = vector.broadcast %109 : vector<32x1xf32> to vector<32x256xf32>
    %111 = vector.broadcast %108 : vector<1x256xf32> to vector<32x256xf32>
    %112 = arith.mulf %110, %111 : vector<32x256xf32>
    %113 = arith.addf %105, %112 : vector<32x256xf32>
    %c254_i32 = arith.constant 254 : i32
    %114 = tpu.dynamic_rotate %1 by %c254_i32 dim 1 : vector<1x256xf32>, i32 -> vector<1x256xf32>
    %c14 = arith.constant 14 : index
    %c0_45 = arith.constant 0 : index
    %115 = vector.load %arg2[%c14, %c0_45] : memref<25x256xf32, #tpu.memory_space<vmem>>, vector<1x256xf32>
    %116 = arith.mulf %114, %115 : vector<1x256xf32>
    %c0_46 = arith.constant 0 : index
    %c14_47 = arith.constant 14 : index
    %117 = vector.load %arg3[%c0_46, %c14_47] : memref<32x25xf32, #tpu.memory_space<vmem>>, vector<32x1xf32>
    %118 = vector.broadcast %117 : vector<32x1xf32> to vector<32x256xf32>
    %119 = vector.broadcast %116 : vector<1x256xf32> to vector<32x256xf32>
    %120 = arith.mulf %118, %119 : vector<32x256xf32>
    %121 = arith.addf %113, %120 : vector<32x256xf32>
    %c242_i32 = arith.constant 242 : i32
    %122 = tpu.dynamic_rotate %1 by %c242_i32 dim 1 : vector<1x256xf32>, i32 -> vector<1x256xf32>
    %c15 = arith.constant 15 : index
    %c0_48 = arith.constant 0 : index
    %123 = vector.load %arg2[%c15, %c0_48] : memref<25x256xf32, #tpu.memory_space<vmem>>, vector<1x256xf32>
    %124 = arith.mulf %122, %123 : vector<1x256xf32>
    %c0_49 = arith.constant 0 : index
    %c15_50 = arith.constant 15 : index
    %125 = vector.load %arg3[%c0_49, %c15_50] : memref<32x25xf32, #tpu.memory_space<vmem>>, vector<32x1xf32>
    %126 = vector.broadcast %125 : vector<32x1xf32> to vector<32x256xf32>
    %127 = vector.broadcast %124 : vector<1x256xf32> to vector<32x256xf32>
    %128 = arith.mulf %126, %127 : vector<32x256xf32>
    %129 = arith.addf %121, %128 : vector<32x256xf32>
    %c241_i32 = arith.constant 241 : i32
    %130 = tpu.dynamic_rotate %1 by %c241_i32 dim 1 : vector<1x256xf32>, i32 -> vector<1x256xf32>
    %c16 = arith.constant 16 : index
    %c0_51 = arith.constant 0 : index
    %131 = vector.load %arg2[%c16, %c0_51] : memref<25x256xf32, #tpu.memory_space<vmem>>, vector<1x256xf32>
    %132 = arith.mulf %130, %131 : vector<1x256xf32>
    %c0_52 = arith.constant 0 : index
    %c16_53 = arith.constant 16 : index
    %133 = vector.load %arg3[%c0_52, %c16_53] : memref<32x25xf32, #tpu.memory_space<vmem>>, vector<32x1xf32>
    %134 = vector.broadcast %133 : vector<32x1xf32> to vector<32x256xf32>
    %135 = vector.broadcast %132 : vector<1x256xf32> to vector<32x256xf32>
    %136 = arith.mulf %134, %135 : vector<32x256xf32>
    %137 = arith.addf %129, %136 : vector<32x256xf32>
    %c240_i32 = arith.constant 240 : i32
    %138 = tpu.dynamic_rotate %1 by %c240_i32 dim 1 : vector<1x256xf32>, i32 -> vector<1x256xf32>
    %c17 = arith.constant 17 : index
    %c0_54 = arith.constant 0 : index
    %139 = vector.load %arg2[%c17, %c0_54] : memref<25x256xf32, #tpu.memory_space<vmem>>, vector<1x256xf32>
    %140 = arith.mulf %138, %139 : vector<1x256xf32>
    %c0_55 = arith.constant 0 : index
    %c17_56 = arith.constant 17 : index
    %141 = vector.load %arg3[%c0_55, %c17_56] : memref<32x25xf32, #tpu.memory_space<vmem>>, vector<32x1xf32>
    %142 = vector.broadcast %141 : vector<32x1xf32> to vector<32x256xf32>
    %143 = vector.broadcast %140 : vector<1x256xf32> to vector<32x256xf32>
    %144 = arith.mulf %142, %143 : vector<32x256xf32>
    %145 = arith.addf %137, %144 : vector<32x256xf32>
    %c239_i32 = arith.constant 239 : i32
    %146 = tpu.dynamic_rotate %1 by %c239_i32 dim 1 : vector<1x256xf32>, i32 -> vector<1x256xf32>
    %c18 = arith.constant 18 : index
    %c0_57 = arith.constant 0 : index
    %147 = vector.load %arg2[%c18, %c0_57] : memref<25x256xf32, #tpu.memory_space<vmem>>, vector<1x256xf32>
    %148 = arith.mulf %146, %147 : vector<1x256xf32>
    %c0_58 = arith.constant 0 : index
    %c18_59 = arith.constant 18 : index
    %149 = vector.load %arg3[%c0_58, %c18_59] : memref<32x25xf32, #tpu.memory_space<vmem>>, vector<32x1xf32>
    %150 = vector.broadcast %149 : vector<32x1xf32> to vector<32x256xf32>
    %151 = vector.broadcast %148 : vector<1x256xf32> to vector<32x256xf32>
    %152 = arith.mulf %150, %151 : vector<32x256xf32>
    %153 = arith.addf %145, %152 : vector<32x256xf32>
    %c238_i32 = arith.constant 238 : i32
    %154 = tpu.dynamic_rotate %1 by %c238_i32 dim 1 : vector<1x256xf32>, i32 -> vector<1x256xf32>
    %c19 = arith.constant 19 : index
    %c0_60 = arith.constant 0 : index
    %155 = vector.load %arg2[%c19, %c0_60] : memref<25x256xf32, #tpu.memory_space<vmem>>, vector<1x256xf32>
    %156 = arith.mulf %154, %155 : vector<1x256xf32>
    %c0_61 = arith.constant 0 : index
    %c19_62 = arith.constant 19 : index
    %157 = vector.load %arg3[%c0_61, %c19_62] : memref<32x25xf32, #tpu.memory_space<vmem>>, vector<32x1xf32>
    %158 = vector.broadcast %157 : vector<32x1xf32> to vector<32x256xf32>
    %159 = vector.broadcast %156 : vector<1x256xf32> to vector<32x256xf32>
    %160 = arith.mulf %158, %159 : vector<32x256xf32>
    %161 = arith.addf %153, %160 : vector<32x256xf32>
    %c226_i32 = arith.constant 226 : i32
    %162 = tpu.dynamic_rotate %1 by %c226_i32 dim 1 : vector<1x256xf32>, i32 -> vector<1x256xf32>
    %c20 = arith.constant 20 : index
    %c0_63 = arith.constant 0 : index
    %163 = vector.load %arg2[%c20, %c0_63] : memref<25x256xf32, #tpu.memory_space<vmem>>, vector<1x256xf32>
    %164 = arith.mulf %162, %163 : vector<1x256xf32>
    %c0_64 = arith.constant 0 : index
    %c20_65 = arith.constant 20 : index
    %165 = vector.load %arg3[%c0_64, %c20_65] : memref<32x25xf32, #tpu.memory_space<vmem>>, vector<32x1xf32>
    %166 = vector.broadcast %165 : vector<32x1xf32> to vector<32x256xf32>
    %167 = vector.broadcast %164 : vector<1x256xf32> to vector<32x256xf32>
    %168 = arith.mulf %166, %167 : vector<32x256xf32>
    %169 = arith.addf %161, %168 : vector<32x256xf32>
    %c225_i32 = arith.constant 225 : i32
    %170 = tpu.dynamic_rotate %1 by %c225_i32 dim 1 : vector<1x256xf32>, i32 -> vector<1x256xf32>
    %c21 = arith.constant 21 : index
    %c0_66 = arith.constant 0 : index
    %171 = vector.load %arg2[%c21, %c0_66] : memref<25x256xf32, #tpu.memory_space<vmem>>, vector<1x256xf32>
    %172 = arith.mulf %170, %171 : vector<1x256xf32>
    %c0_67 = arith.constant 0 : index
    %c21_68 = arith.constant 21 : index
    %173 = vector.load %arg3[%c0_67, %c21_68] : memref<32x25xf32, #tpu.memory_space<vmem>>, vector<32x1xf32>
    %174 = vector.broadcast %173 : vector<32x1xf32> to vector<32x256xf32>
    %175 = vector.broadcast %172 : vector<1x256xf32> to vector<32x256xf32>
    %176 = arith.mulf %174, %175 : vector<32x256xf32>
    %177 = arith.addf %169, %176 : vector<32x256xf32>
    %c224_i32 = arith.constant 224 : i32
    %178 = tpu.dynamic_rotate %1 by %c224_i32 dim 1 : vector<1x256xf32>, i32 -> vector<1x256xf32>
    %c22 = arith.constant 22 : index
    %c0_69 = arith.constant 0 : index
    %179 = vector.load %arg2[%c22, %c0_69] : memref<25x256xf32, #tpu.memory_space<vmem>>, vector<1x256xf32>
    %180 = arith.mulf %178, %179 : vector<1x256xf32>
    %c0_70 = arith.constant 0 : index
    %c22_71 = arith.constant 22 : index
    %181 = vector.load %arg3[%c0_70, %c22_71] : memref<32x25xf32, #tpu.memory_space<vmem>>, vector<32x1xf32>
    %182 = vector.broadcast %181 : vector<32x1xf32> to vector<32x256xf32>
    %183 = vector.broadcast %180 : vector<1x256xf32> to vector<32x256xf32>
    %184 = arith.mulf %182, %183 : vector<32x256xf32>
    %185 = arith.addf %177, %184 : vector<32x256xf32>
    %c223_i32 = arith.constant 223 : i32
    %186 = tpu.dynamic_rotate %1 by %c223_i32 dim 1 : vector<1x256xf32>, i32 -> vector<1x256xf32>
    %c23 = arith.constant 23 : index
    %c0_72 = arith.constant 0 : index
    %187 = vector.load %arg2[%c23, %c0_72] : memref<25x256xf32, #tpu.memory_space<vmem>>, vector<1x256xf32>
    %188 = arith.mulf %186, %187 : vector<1x256xf32>
    %c0_73 = arith.constant 0 : index
    %c23_74 = arith.constant 23 : index
    %189 = vector.load %arg3[%c0_73, %c23_74] : memref<32x25xf32, #tpu.memory_space<vmem>>, vector<32x1xf32>
    %190 = vector.broadcast %189 : vector<32x1xf32> to vector<32x256xf32>
    %191 = vector.broadcast %188 : vector<1x256xf32> to vector<32x256xf32>
    %192 = arith.mulf %190, %191 : vector<32x256xf32>
    %193 = arith.addf %185, %192 : vector<32x256xf32>
    %c222_i32 = arith.constant 222 : i32
    %194 = tpu.dynamic_rotate %1 by %c222_i32 dim 1 : vector<1x256xf32>, i32 -> vector<1x256xf32>
    %c24 = arith.constant 24 : index
    %c0_75 = arith.constant 0 : index
    %195 = vector.load %arg2[%c24, %c0_75] : memref<25x256xf32, #tpu.memory_space<vmem>>, vector<1x256xf32>
    %196 = arith.mulf %194, %195 : vector<1x256xf32>
    %c0_76 = arith.constant 0 : index
    %c24_77 = arith.constant 24 : index
    %197 = vector.load %arg3[%c0_76, %c24_77] : memref<32x25xf32, #tpu.memory_space<vmem>>, vector<32x1xf32>
    %198 = vector.broadcast %197 : vector<32x1xf32> to vector<32x256xf32>
    %199 = vector.broadcast %196 : vector<1x256xf32> to vector<32x256xf32>
    %200 = arith.mulf %198, %199 : vector<32x256xf32>
    %201 = arith.addf %193, %200 : vector<32x256xf32>
    %c0_78 = arith.constant 0 : index
    %c0_79 = arith.constant 0 : index
    %202 = vector.load %arg4[%c0_78, %c0_79] : memref<32x1xf32, #tpu.memory_space<vmem>>, vector<32x1xf32>
    %203 = vector.broadcast %202 : vector<32x1xf32> to vector<32x256xf32>
    %204 = arith.addf %201, %203 : vector<32x256xf32>
    %cst_80 = arith.constant 0.000000e+00 : f32
    %205 = vector.broadcast %cst_80 : f32 to vector<32x256xf32>
    %206 = arith.maximumf %204, %205 : vector<32x256xf32>
    %cst_81 = arith.constant 0.000000e+00 : f32
    %207 = vector.broadcast %cst_81 : f32 to vector<32x256xf32>
    %c34_i32_82 = arith.constant 34 : i32
    %208 = tpu.dynamic_rotate %206 by %c34_i32_82 dim 1 : vector<32x256xf32>, i32 -> vector<32x256xf32>
    %c0_83 = arith.constant 0 : index
    %c0_84 = arith.constant 0 : index
    %209 = vector.load %arg2[%c0_83, %c0_84] : memref<25x256xf32, #tpu.memory_space<vmem>>, vector<1x256xf32>
    %210 = vector.broadcast %209 : vector<1x256xf32> to vector<32x256xf32>
    %211 = arith.mulf %208, %210 : vector<32x256xf32>
    %c0_85 = arith.constant 0 : index
    %c0_86 = arith.constant 0 : index
    %212 = vector.load %arg5[%c0_85, %c0_86] : memref<32x800xf32, #tpu.memory_space<vmem>>, vector<32x32xf32>
    %cst_87 = arith.constant dense<0.000000e+00> : vector<32x256xf32>
    %213 = tpu.matmul %212, %211, %cst_87 {dimension_numbers = #tpu.dot_dimension_numbers<[1], [0], [0], [1], [0, 0, 1, 1], [], []>} : vector<32x32xf32>, vector<32x256xf32>, vector<32x256xf32> -> vector<32x256xf32>
    %214 = arith.addf %207, %213 : vector<32x256xf32>
    %c33_i32_88 = arith.constant 33 : i32
    %215 = tpu.dynamic_rotate %206 by %c33_i32_88 dim 1 : vector<32x256xf32>, i32 -> vector<32x256xf32>
    %c1_89 = arith.constant 1 : index
    %c0_90 = arith.constant 0 : index
    %216 = vector.load %arg2[%c1_89, %c0_90] : memref<25x256xf32, #tpu.memory_space<vmem>>, vector<1x256xf32>
    %217 = vector.broadcast %216 : vector<1x256xf32> to vector<32x256xf32>
    %218 = arith.mulf %215, %217 : vector<32x256xf32>
    %c0_91 = arith.constant 0 : index
    %c32 = arith.constant 32 : index
    %219 = vector.load %arg5[%c0_91, %c32] : memref<32x800xf32, #tpu.memory_space<vmem>>, vector<32x32xf32>
    %cst_92 = arith.constant dense<0.000000e+00> : vector<32x256xf32>
    %220 = tpu.matmul %219, %218, %cst_92 {dimension_numbers = #tpu.dot_dimension_numbers<[1], [0], [0], [1], [0, 0, 1, 1], [], []>} : vector<32x32xf32>, vector<32x256xf32>, vector<32x256xf32> -> vector<32x256xf32>
    %221 = arith.addf %214, %220 : vector<32x256xf32>
    %c32_i32_93 = arith.constant 32 : i32
    %222 = tpu.dynamic_rotate %206 by %c32_i32_93 dim 1 : vector<32x256xf32>, i32 -> vector<32x256xf32>
    %c2_94 = arith.constant 2 : index
    %c0_95 = arith.constant 0 : index
    %223 = vector.load %arg2[%c2_94, %c0_95] : memref<25x256xf32, #tpu.memory_space<vmem>>, vector<1x256xf32>
    %224 = vector.broadcast %223 : vector<1x256xf32> to vector<32x256xf32>
    %225 = arith.mulf %222, %224 : vector<32x256xf32>
    %c0_96 = arith.constant 0 : index
    %c64 = arith.constant 64 : index
    %226 = vector.load %arg5[%c0_96, %c64] : memref<32x800xf32, #tpu.memory_space<vmem>>, vector<32x32xf32>
    %cst_97 = arith.constant dense<0.000000e+00> : vector<32x256xf32>
    %227 = tpu.matmul %226, %225, %cst_97 {dimension_numbers = #tpu.dot_dimension_numbers<[1], [0], [0], [1], [0, 0, 1, 1], [], []>} : vector<32x32xf32>, vector<32x256xf32>, vector<32x256xf32> -> vector<32x256xf32>
    %228 = arith.addf %221, %227 : vector<32x256xf32>
    %c31_i32_98 = arith.constant 31 : i32
    %229 = tpu.dynamic_rotate %206 by %c31_i32_98 dim 1 : vector<32x256xf32>, i32 -> vector<32x256xf32>
    %c3_99 = arith.constant 3 : index
    %c0_100 = arith.constant 0 : index
    %230 = vector.load %arg2[%c3_99, %c0_100] : memref<25x256xf32, #tpu.memory_space<vmem>>, vector<1x256xf32>
    %231 = vector.broadcast %230 : vector<1x256xf32> to vector<32x256xf32>
    %232 = arith.mulf %229, %231 : vector<32x256xf32>
    %c0_101 = arith.constant 0 : index
    %c96 = arith.constant 96 : index
    %233 = vector.load %arg5[%c0_101, %c96] : memref<32x800xf32, #tpu.memory_space<vmem>>, vector<32x32xf32>
    %cst_102 = arith.constant dense<0.000000e+00> : vector<32x256xf32>
    %234 = tpu.matmul %233, %232, %cst_102 {dimension_numbers = #tpu.dot_dimension_numbers<[1], [0], [0], [1], [0, 0, 1, 1], [], []>} : vector<32x32xf32>, vector<32x256xf32>, vector<32x256xf32> -> vector<32x256xf32>
    %235 = arith.addf %228, %234 : vector<32x256xf32>
    %c30_i32_103 = arith.constant 30 : i32
    %236 = tpu.dynamic_rotate %206 by %c30_i32_103 dim 1 : vector<32x256xf32>, i32 -> vector<32x256xf32>
    %c4_104 = arith.constant 4 : index
    %c0_105 = arith.constant 0 : index
    %237 = vector.load %arg2[%c4_104, %c0_105] : memref<25x256xf32, #tpu.memory_space<vmem>>, vector<1x256xf32>
    %238 = vector.broadcast %237 : vector<1x256xf32> to vector<32x256xf32>
    %239 = arith.mulf %236, %238 : vector<32x256xf32>
    %c0_106 = arith.constant 0 : index
    %c128 = arith.constant 128 : index
    %240 = vector.load %arg5[%c0_106, %c128] : memref<32x800xf32, #tpu.memory_space<vmem>>, vector<32x32xf32>
    %cst_107 = arith.constant dense<0.000000e+00> : vector<32x256xf32>
    %241 = tpu.matmul %240, %239, %cst_107 {dimension_numbers = #tpu.dot_dimension_numbers<[1], [0], [0], [1], [0, 0, 1, 1], [], []>} : vector<32x32xf32>, vector<32x256xf32>, vector<32x256xf32> -> vector<32x256xf32>
    %242 = arith.addf %235, %241 : vector<32x256xf32>
    %c18_i32_108 = arith.constant 18 : i32
    %243 = tpu.dynamic_rotate %206 by %c18_i32_108 dim 1 : vector<32x256xf32>, i32 -> vector<32x256xf32>
    %c5_109 = arith.constant 5 : index
    %c0_110 = arith.constant 0 : index
    %244 = vector.load %arg2[%c5_109, %c0_110] : memref<25x256xf32, #tpu.memory_space<vmem>>, vector<1x256xf32>
    %245 = vector.broadcast %244 : vector<1x256xf32> to vector<32x256xf32>
    %246 = arith.mulf %243, %245 : vector<32x256xf32>
    %c0_111 = arith.constant 0 : index
    %c160 = arith.constant 160 : index
    %247 = vector.load %arg5[%c0_111, %c160] : memref<32x800xf32, #tpu.memory_space<vmem>>, vector<32x32xf32>
    %cst_112 = arith.constant dense<0.000000e+00> : vector<32x256xf32>
    %248 = tpu.matmul %247, %246, %cst_112 {dimension_numbers = #tpu.dot_dimension_numbers<[1], [0], [0], [1], [0, 0, 1, 1], [], []>} : vector<32x32xf32>, vector<32x256xf32>, vector<32x256xf32> -> vector<32x256xf32>
    %249 = arith.addf %242, %248 : vector<32x256xf32>
    %c17_i32_113 = arith.constant 17 : i32
    %250 = tpu.dynamic_rotate %206 by %c17_i32_113 dim 1 : vector<32x256xf32>, i32 -> vector<32x256xf32>
    %c6_114 = arith.constant 6 : index
    %c0_115 = arith.constant 0 : index
    %251 = vector.load %arg2[%c6_114, %c0_115] : memref<25x256xf32, #tpu.memory_space<vmem>>, vector<1x256xf32>
    %252 = vector.broadcast %251 : vector<1x256xf32> to vector<32x256xf32>
    %253 = arith.mulf %250, %252 : vector<32x256xf32>
    %c0_116 = arith.constant 0 : index
    %c192 = arith.constant 192 : index
    %254 = vector.load %arg5[%c0_116, %c192] : memref<32x800xf32, #tpu.memory_space<vmem>>, vector<32x32xf32>
    %cst_117 = arith.constant dense<0.000000e+00> : vector<32x256xf32>
    %255 = tpu.matmul %254, %253, %cst_117 {dimension_numbers = #tpu.dot_dimension_numbers<[1], [0], [0], [1], [0, 0, 1, 1], [], []>} : vector<32x32xf32>, vector<32x256xf32>, vector<32x256xf32> -> vector<32x256xf32>
    %256 = arith.addf %249, %255 : vector<32x256xf32>
    %c16_i32_118 = arith.constant 16 : i32
    %257 = tpu.dynamic_rotate %206 by %c16_i32_118 dim 1 : vector<32x256xf32>, i32 -> vector<32x256xf32>
    %c7_119 = arith.constant 7 : index
    %c0_120 = arith.constant 0 : index
    %258 = vector.load %arg2[%c7_119, %c0_120] : memref<25x256xf32, #tpu.memory_space<vmem>>, vector<1x256xf32>
    %259 = vector.broadcast %258 : vector<1x256xf32> to vector<32x256xf32>
    %260 = arith.mulf %257, %259 : vector<32x256xf32>
    %c0_121 = arith.constant 0 : index
    %c224 = arith.constant 224 : index
    %261 = vector.load %arg5[%c0_121, %c224] : memref<32x800xf32, #tpu.memory_space<vmem>>, vector<32x32xf32>
    %cst_122 = arith.constant dense<0.000000e+00> : vector<32x256xf32>
    %262 = tpu.matmul %261, %260, %cst_122 {dimension_numbers = #tpu.dot_dimension_numbers<[1], [0], [0], [1], [0, 0, 1, 1], [], []>} : vector<32x32xf32>, vector<32x256xf32>, vector<32x256xf32> -> vector<32x256xf32>
    %263 = arith.addf %256, %262 : vector<32x256xf32>
    %c15_i32_123 = arith.constant 15 : i32
    %264 = tpu.dynamic_rotate %206 by %c15_i32_123 dim 1 : vector<32x256xf32>, i32 -> vector<32x256xf32>
    %c8_124 = arith.constant 8 : index
    %c0_125 = arith.constant 0 : index
    %265 = vector.load %arg2[%c8_124, %c0_125] : memref<25x256xf32, #tpu.memory_space<vmem>>, vector<1x256xf32>
    %266 = vector.broadcast %265 : vector<1x256xf32> to vector<32x256xf32>
    %267 = arith.mulf %264, %266 : vector<32x256xf32>
    %c0_126 = arith.constant 0 : index
    %c256 = arith.constant 256 : index
    %268 = vector.load %arg5[%c0_126, %c256] : memref<32x800xf32, #tpu.memory_space<vmem>>, vector<32x32xf32>
    %cst_127 = arith.constant dense<0.000000e+00> : vector<32x256xf32>
    %269 = tpu.matmul %268, %267, %cst_127 {dimension_numbers = #tpu.dot_dimension_numbers<[1], [0], [0], [1], [0, 0, 1, 1], [], []>} : vector<32x32xf32>, vector<32x256xf32>, vector<32x256xf32> -> vector<32x256xf32>
    %270 = arith.addf %263, %269 : vector<32x256xf32>
    %c14_i32_128 = arith.constant 14 : i32
    %271 = tpu.dynamic_rotate %206 by %c14_i32_128 dim 1 : vector<32x256xf32>, i32 -> vector<32x256xf32>
    %c9_129 = arith.constant 9 : index
    %c0_130 = arith.constant 0 : index
    %272 = vector.load %arg2[%c9_129, %c0_130] : memref<25x256xf32, #tpu.memory_space<vmem>>, vector<1x256xf32>
    %273 = vector.broadcast %272 : vector<1x256xf32> to vector<32x256xf32>
    %274 = arith.mulf %271, %273 : vector<32x256xf32>
    %c0_131 = arith.constant 0 : index
    %c288 = arith.constant 288 : index
    %275 = vector.load %arg5[%c0_131, %c288] : memref<32x800xf32, #tpu.memory_space<vmem>>, vector<32x32xf32>
    %cst_132 = arith.constant dense<0.000000e+00> : vector<32x256xf32>
    %276 = tpu.matmul %275, %274, %cst_132 {dimension_numbers = #tpu.dot_dimension_numbers<[1], [0], [0], [1], [0, 0, 1, 1], [], []>} : vector<32x32xf32>, vector<32x256xf32>, vector<32x256xf32> -> vector<32x256xf32>
    %277 = arith.addf %270, %276 : vector<32x256xf32>
    %c2_i32_133 = arith.constant 2 : i32
    %278 = tpu.dynamic_rotate %206 by %c2_i32_133 dim 1 : vector<32x256xf32>, i32 -> vector<32x256xf32>
    %c10_134 = arith.constant 10 : index
    %c0_135 = arith.constant 0 : index
    %279 = vector.load %arg2[%c10_134, %c0_135] : memref<25x256xf32, #tpu.memory_space<vmem>>, vector<1x256xf32>
    %280 = vector.broadcast %279 : vector<1x256xf32> to vector<32x256xf32>
    %281 = arith.mulf %278, %280 : vector<32x256xf32>
    %c0_136 = arith.constant 0 : index
    %c320 = arith.constant 320 : index
    %282 = vector.load %arg5[%c0_136, %c320] : memref<32x800xf32, #tpu.memory_space<vmem>>, vector<32x32xf32>
    %cst_137 = arith.constant dense<0.000000e+00> : vector<32x256xf32>
    %283 = tpu.matmul %282, %281, %cst_137 {dimension_numbers = #tpu.dot_dimension_numbers<[1], [0], [0], [1], [0, 0, 1, 1], [], []>} : vector<32x32xf32>, vector<32x256xf32>, vector<32x256xf32> -> vector<32x256xf32>
    %284 = arith.addf %277, %283 : vector<32x256xf32>
    %c1_i32_138 = arith.constant 1 : i32
    %285 = tpu.dynamic_rotate %206 by %c1_i32_138 dim 1 : vector<32x256xf32>, i32 -> vector<32x256xf32>
    %c11_139 = arith.constant 11 : index
    %c0_140 = arith.constant 0 : index
    %286 = vector.load %arg2[%c11_139, %c0_140] : memref<25x256xf32, #tpu.memory_space<vmem>>, vector<1x256xf32>
    %287 = vector.broadcast %286 : vector<1x256xf32> to vector<32x256xf32>
    %288 = arith.mulf %285, %287 : vector<32x256xf32>
    %c0_141 = arith.constant 0 : index
    %c352 = arith.constant 352 : index
    %289 = vector.load %arg5[%c0_141, %c352] : memref<32x800xf32, #tpu.memory_space<vmem>>, vector<32x32xf32>
    %cst_142 = arith.constant dense<0.000000e+00> : vector<32x256xf32>
    %290 = tpu.matmul %289, %288, %cst_142 {dimension_numbers = #tpu.dot_dimension_numbers<[1], [0], [0], [1], [0, 0, 1, 1], [], []>} : vector<32x32xf32>, vector<32x256xf32>, vector<32x256xf32> -> vector<32x256xf32>
    %291 = arith.addf %284, %290 : vector<32x256xf32>
    %c12_143 = arith.constant 12 : index
    %c0_144 = arith.constant 0 : index
    %292 = vector.load %arg2[%c12_143, %c0_144] : memref<25x256xf32, #tpu.memory_space<vmem>>, vector<1x256xf32>
    %293 = vector.broadcast %292 : vector<1x256xf32> to vector<32x256xf32>
    %294 = arith.mulf %206, %293 : vector<32x256xf32>
    %c0_145 = arith.constant 0 : index
    %c384 = arith.constant 384 : index
    %295 = vector.load %arg5[%c0_145, %c384] : memref<32x800xf32, #tpu.memory_space<vmem>>, vector<32x32xf32>
    %cst_146 = arith.constant dense<0.000000e+00> : vector<32x256xf32>
    %296 = tpu.matmul %295, %294, %cst_146 {dimension_numbers = #tpu.dot_dimension_numbers<[1], [0], [0], [1], [0, 0, 1, 1], [], []>} : vector<32x32xf32>, vector<32x256xf32>, vector<32x256xf32> -> vector<32x256xf32>
    %297 = arith.addf %291, %296 : vector<32x256xf32>
    %c255_i32_147 = arith.constant 255 : i32
    %298 = tpu.dynamic_rotate %206 by %c255_i32_147 dim 1 : vector<32x256xf32>, i32 -> vector<32x256xf32>
    %c13_148 = arith.constant 13 : index
    %c0_149 = arith.constant 0 : index
    %299 = vector.load %arg2[%c13_148, %c0_149] : memref<25x256xf32, #tpu.memory_space<vmem>>, vector<1x256xf32>
    %300 = vector.broadcast %299 : vector<1x256xf32> to vector<32x256xf32>
    %301 = arith.mulf %298, %300 : vector<32x256xf32>
    %c0_150 = arith.constant 0 : index
    %c416 = arith.constant 416 : index
    %302 = vector.load %arg5[%c0_150, %c416] : memref<32x800xf32, #tpu.memory_space<vmem>>, vector<32x32xf32>
    %cst_151 = arith.constant dense<0.000000e+00> : vector<32x256xf32>
    %303 = tpu.matmul %302, %301, %cst_151 {dimension_numbers = #tpu.dot_dimension_numbers<[1], [0], [0], [1], [0, 0, 1, 1], [], []>} : vector<32x32xf32>, vector<32x256xf32>, vector<32x256xf32> -> vector<32x256xf32>
    %304 = arith.addf %297, %303 : vector<32x256xf32>
    %c254_i32_152 = arith.constant 254 : i32
    %305 = tpu.dynamic_rotate %206 by %c254_i32_152 dim 1 : vector<32x256xf32>, i32 -> vector<32x256xf32>
    %c14_153 = arith.constant 14 : index
    %c0_154 = arith.constant 0 : index
    %306 = vector.load %arg2[%c14_153, %c0_154] : memref<25x256xf32, #tpu.memory_space<vmem>>, vector<1x256xf32>
    %307 = vector.broadcast %306 : vector<1x256xf32> to vector<32x256xf32>
    %308 = arith.mulf %305, %307 : vector<32x256xf32>
    %c0_155 = arith.constant 0 : index
    %c448 = arith.constant 448 : index
    %309 = vector.load %arg5[%c0_155, %c448] : memref<32x800xf32, #tpu.memory_space<vmem>>, vector<32x32xf32>
    %cst_156 = arith.constant dense<0.000000e+00> : vector<32x256xf32>
    %310 = tpu.matmul %309, %308, %cst_156 {dimension_numbers = #tpu.dot_dimension_numbers<[1], [0], [0], [1], [0, 0, 1, 1], [], []>} : vector<32x32xf32>, vector<32x256xf32>, vector<32x256xf32> -> vector<32x256xf32>
    %311 = arith.addf %304, %310 : vector<32x256xf32>
    %c242_i32_157 = arith.constant 242 : i32
    %312 = tpu.dynamic_rotate %206 by %c242_i32_157 dim 1 : vector<32x256xf32>, i32 -> vector<32x256xf32>
    %c15_158 = arith.constant 15 : index
    %c0_159 = arith.constant 0 : index
    %313 = vector.load %arg2[%c15_158, %c0_159] : memref<25x256xf32, #tpu.memory_space<vmem>>, vector<1x256xf32>
    %314 = vector.broadcast %313 : vector<1x256xf32> to vector<32x256xf32>
    %315 = arith.mulf %312, %314 : vector<32x256xf32>
    %c0_160 = arith.constant 0 : index
    %c480 = arith.constant 480 : index
    %316 = vector.load %arg5[%c0_160, %c480] : memref<32x800xf32, #tpu.memory_space<vmem>>, vector<32x32xf32>
    %cst_161 = arith.constant dense<0.000000e+00> : vector<32x256xf32>
    %317 = tpu.matmul %316, %315, %cst_161 {dimension_numbers = #tpu.dot_dimension_numbers<[1], [0], [0], [1], [0, 0, 1, 1], [], []>} : vector<32x32xf32>, vector<32x256xf32>, vector<32x256xf32> -> vector<32x256xf32>
    %318 = arith.addf %311, %317 : vector<32x256xf32>
    %c241_i32_162 = arith.constant 241 : i32
    %319 = tpu.dynamic_rotate %206 by %c241_i32_162 dim 1 : vector<32x256xf32>, i32 -> vector<32x256xf32>
    %c16_163 = arith.constant 16 : index
    %c0_164 = arith.constant 0 : index
    %320 = vector.load %arg2[%c16_163, %c0_164] : memref<25x256xf32, #tpu.memory_space<vmem>>, vector<1x256xf32>
    %321 = vector.broadcast %320 : vector<1x256xf32> to vector<32x256xf32>
    %322 = arith.mulf %319, %321 : vector<32x256xf32>
    %c0_165 = arith.constant 0 : index
    %c512 = arith.constant 512 : index
    %323 = vector.load %arg5[%c0_165, %c512] : memref<32x800xf32, #tpu.memory_space<vmem>>, vector<32x32xf32>
    %cst_166 = arith.constant dense<0.000000e+00> : vector<32x256xf32>
    %324 = tpu.matmul %323, %322, %cst_166 {dimension_numbers = #tpu.dot_dimension_numbers<[1], [0], [0], [1], [0, 0, 1, 1], [], []>} : vector<32x32xf32>, vector<32x256xf32>, vector<32x256xf32> -> vector<32x256xf32>
    %325 = arith.addf %318, %324 : vector<32x256xf32>
    %c240_i32_167 = arith.constant 240 : i32
    %326 = tpu.dynamic_rotate %206 by %c240_i32_167 dim 1 : vector<32x256xf32>, i32 -> vector<32x256xf32>
    %c17_168 = arith.constant 17 : index
    %c0_169 = arith.constant 0 : index
    %327 = vector.load %arg2[%c17_168, %c0_169] : memref<25x256xf32, #tpu.memory_space<vmem>>, vector<1x256xf32>
    %328 = vector.broadcast %327 : vector<1x256xf32> to vector<32x256xf32>
    %329 = arith.mulf %326, %328 : vector<32x256xf32>
    %c0_170 = arith.constant 0 : index
    %c544 = arith.constant 544 : index
    %330 = vector.load %arg5[%c0_170, %c544] : memref<32x800xf32, #tpu.memory_space<vmem>>, vector<32x32xf32>
    %cst_171 = arith.constant dense<0.000000e+00> : vector<32x256xf32>
    %331 = tpu.matmul %330, %329, %cst_171 {dimension_numbers = #tpu.dot_dimension_numbers<[1], [0], [0], [1], [0, 0, 1, 1], [], []>} : vector<32x32xf32>, vector<32x256xf32>, vector<32x256xf32> -> vector<32x256xf32>
    %332 = arith.addf %325, %331 : vector<32x256xf32>
    %c239_i32_172 = arith.constant 239 : i32
    %333 = tpu.dynamic_rotate %206 by %c239_i32_172 dim 1 : vector<32x256xf32>, i32 -> vector<32x256xf32>
    %c18_173 = arith.constant 18 : index
    %c0_174 = arith.constant 0 : index
    %334 = vector.load %arg2[%c18_173, %c0_174] : memref<25x256xf32, #tpu.memory_space<vmem>>, vector<1x256xf32>
    %335 = vector.broadcast %334 : vector<1x256xf32> to vector<32x256xf32>
    %336 = arith.mulf %333, %335 : vector<32x256xf32>
    %c0_175 = arith.constant 0 : index
    %c576 = arith.constant 576 : index
    %337 = vector.load %arg5[%c0_175, %c576] : memref<32x800xf32, #tpu.memory_space<vmem>>, vector<32x32xf32>
    %cst_176 = arith.constant dense<0.000000e+00> : vector<32x256xf32>
    %338 = tpu.matmul %337, %336, %cst_176 {dimension_numbers = #tpu.dot_dimension_numbers<[1], [0], [0], [1], [0, 0, 1, 1], [], []>} : vector<32x32xf32>, vector<32x256xf32>, vector<32x256xf32> -> vector<32x256xf32>
    %339 = arith.addf %332, %338 : vector<32x256xf32>
    %c238_i32_177 = arith.constant 238 : i32
    %340 = tpu.dynamic_rotate %206 by %c238_i32_177 dim 1 : vector<32x256xf32>, i32 -> vector<32x256xf32>
    %c19_178 = arith.constant 19 : index
    %c0_179 = arith.constant 0 : index
    %341 = vector.load %arg2[%c19_178, %c0_179] : memref<25x256xf32, #tpu.memory_space<vmem>>, vector<1x256xf32>
    %342 = vector.broadcast %341 : vector<1x256xf32> to vector<32x256xf32>
    %343 = arith.mulf %340, %342 : vector<32x256xf32>
    %c0_180 = arith.constant 0 : index
    %c608 = arith.constant 608 : index
    %344 = vector.load %arg5[%c0_180, %c608] : memref<32x800xf32, #tpu.memory_space<vmem>>, vector<32x32xf32>
    %cst_181 = arith.constant dense<0.000000e+00> : vector<32x256xf32>
    %345 = tpu.matmul %344, %343, %cst_181 {dimension_numbers = #tpu.dot_dimension_numbers<[1], [0], [0], [1], [0, 0, 1, 1], [], []>} : vector<32x32xf32>, vector<32x256xf32>, vector<32x256xf32> -> vector<32x256xf32>
    %346 = arith.addf %339, %345 : vector<32x256xf32>
    %c226_i32_182 = arith.constant 226 : i32
    %347 = tpu.dynamic_rotate %206 by %c226_i32_182 dim 1 : vector<32x256xf32>, i32 -> vector<32x256xf32>
    %c20_183 = arith.constant 20 : index
    %c0_184 = arith.constant 0 : index
    %348 = vector.load %arg2[%c20_183, %c0_184] : memref<25x256xf32, #tpu.memory_space<vmem>>, vector<1x256xf32>
    %349 = vector.broadcast %348 : vector<1x256xf32> to vector<32x256xf32>
    %350 = arith.mulf %347, %349 : vector<32x256xf32>
    %c0_185 = arith.constant 0 : index
    %c640 = arith.constant 640 : index
    %351 = vector.load %arg5[%c0_185, %c640] : memref<32x800xf32, #tpu.memory_space<vmem>>, vector<32x32xf32>
    %cst_186 = arith.constant dense<0.000000e+00> : vector<32x256xf32>
    %352 = tpu.matmul %351, %350, %cst_186 {dimension_numbers = #tpu.dot_dimension_numbers<[1], [0], [0], [1], [0, 0, 1, 1], [], []>} : vector<32x32xf32>, vector<32x256xf32>, vector<32x256xf32> -> vector<32x256xf32>
    %353 = arith.addf %346, %352 : vector<32x256xf32>
    %c225_i32_187 = arith.constant 225 : i32
    %354 = tpu.dynamic_rotate %206 by %c225_i32_187 dim 1 : vector<32x256xf32>, i32 -> vector<32x256xf32>
    %c21_188 = arith.constant 21 : index
    %c0_189 = arith.constant 0 : index
    %355 = vector.load %arg2[%c21_188, %c0_189] : memref<25x256xf32, #tpu.memory_space<vmem>>, vector<1x256xf32>
    %356 = vector.broadcast %355 : vector<1x256xf32> to vector<32x256xf32>
    %357 = arith.mulf %354, %356 : vector<32x256xf32>
    %c0_190 = arith.constant 0 : index
    %c672 = arith.constant 672 : index
    %358 = vector.load %arg5[%c0_190, %c672] : memref<32x800xf32, #tpu.memory_space<vmem>>, vector<32x32xf32>
    %cst_191 = arith.constant dense<0.000000e+00> : vector<32x256xf32>
    %359 = tpu.matmul %358, %357, %cst_191 {dimension_numbers = #tpu.dot_dimension_numbers<[1], [0], [0], [1], [0, 0, 1, 1], [], []>} : vector<32x32xf32>, vector<32x256xf32>, vector<32x256xf32> -> vector<32x256xf32>
    %360 = arith.addf %353, %359 : vector<32x256xf32>
    %c224_i32_192 = arith.constant 224 : i32
    %361 = tpu.dynamic_rotate %206 by %c224_i32_192 dim 1 : vector<32x256xf32>, i32 -> vector<32x256xf32>
    %c22_193 = arith.constant 22 : index
    %c0_194 = arith.constant 0 : index
    %362 = vector.load %arg2[%c22_193, %c0_194] : memref<25x256xf32, #tpu.memory_space<vmem>>, vector<1x256xf32>
    %363 = vector.broadcast %362 : vector<1x256xf32> to vector<32x256xf32>
    %364 = arith.mulf %361, %363 : vector<32x256xf32>
    %c0_195 = arith.constant 0 : index
    %c704 = arith.constant 704 : index
    %365 = vector.load %arg5[%c0_195, %c704] : memref<32x800xf32, #tpu.memory_space<vmem>>, vector<32x32xf32>
    %cst_196 = arith.constant dense<0.000000e+00> : vector<32x256xf32>
    %366 = tpu.matmul %365, %364, %cst_196 {dimension_numbers = #tpu.dot_dimension_numbers<[1], [0], [0], [1], [0, 0, 1, 1], [], []>} : vector<32x32xf32>, vector<32x256xf32>, vector<32x256xf32> -> vector<32x256xf32>
    %367 = arith.addf %360, %366 : vector<32x256xf32>
    %c223_i32_197 = arith.constant 223 : i32
    %368 = tpu.dynamic_rotate %206 by %c223_i32_197 dim 1 : vector<32x256xf32>, i32 -> vector<32x256xf32>
    %c23_198 = arith.constant 23 : index
    %c0_199 = arith.constant 0 : index
    %369 = vector.load %arg2[%c23_198, %c0_199] : memref<25x256xf32, #tpu.memory_space<vmem>>, vector<1x256xf32>
    %370 = vector.broadcast %369 : vector<1x256xf32> to vector<32x256xf32>
    %371 = arith.mulf %368, %370 : vector<32x256xf32>
    %c0_200 = arith.constant 0 : index
    %c736 = arith.constant 736 : index
    %372 = vector.load %arg5[%c0_200, %c736] : memref<32x800xf32, #tpu.memory_space<vmem>>, vector<32x32xf32>
    %cst_201 = arith.constant dense<0.000000e+00> : vector<32x256xf32>
    %373 = tpu.matmul %372, %371, %cst_201 {dimension_numbers = #tpu.dot_dimension_numbers<[1], [0], [0], [1], [0, 0, 1, 1], [], []>} : vector<32x32xf32>, vector<32x256xf32>, vector<32x256xf32> -> vector<32x256xf32>
    %374 = arith.addf %367, %373 : vector<32x256xf32>
    %c222_i32_202 = arith.constant 222 : i32
    %375 = tpu.dynamic_rotate %206 by %c222_i32_202 dim 1 : vector<32x256xf32>, i32 -> vector<32x256xf32>
    %c24_203 = arith.constant 24 : index
    %c0_204 = arith.constant 0 : index
    %376 = vector.load %arg2[%c24_203, %c0_204] : memref<25x256xf32, #tpu.memory_space<vmem>>, vector<1x256xf32>
    %377 = vector.broadcast %376 : vector<1x256xf32> to vector<32x256xf32>
    %378 = arith.mulf %375, %377 : vector<32x256xf32>
    %c0_205 = arith.constant 0 : index
    %c768 = arith.constant 768 : index
    %379 = vector.load %arg5[%c0_205, %c768] : memref<32x800xf32, #tpu.memory_space<vmem>>, vector<32x32xf32>
    %cst_206 = arith.constant dense<0.000000e+00> : vector<32x256xf32>
    %380 = tpu.matmul %379, %378, %cst_206 {dimension_numbers = #tpu.dot_dimension_numbers<[1], [0], [0], [1], [0, 0, 1, 1], [], []>} : vector<32x32xf32>, vector<32x256xf32>, vector<32x256xf32> -> vector<32x256xf32>
    %381 = arith.addf %374, %380 : vector<32x256xf32>
    %c0_207 = arith.constant 0 : index
    %c0_208 = arith.constant 0 : index
    %382 = vector.load %arg6[%c0_207, %c0_208] : memref<32x1xf32, #tpu.memory_space<vmem>>, vector<32x1xf32>
    %383 = vector.broadcast %382 : vector<32x1xf32> to vector<32x256xf32>
    %384 = arith.addf %381, %383 : vector<32x256xf32>
    %cst_209 = arith.constant 0.000000e+00 : f32
    %385 = vector.broadcast %cst_209 : f32 to vector<32x256xf32>
    %386 = arith.maximumf %384, %385 : vector<32x256xf32>
    %cst_210 = arith.constant 0.000000e+00 : f32
    %387 = vector.broadcast %cst_210 : f32 to vector<1x256xf32>
    %c34_i32_211 = arith.constant 34 : i32
    %388 = tpu.dynamic_rotate %386 by %c34_i32_211 dim 1 : vector<32x256xf32>, i32 -> vector<32x256xf32>
    %c0_212 = arith.constant 0 : index
    %c0_213 = arith.constant 0 : index
    %389 = vector.load %arg2[%c0_212, %c0_213] : memref<25x256xf32, #tpu.memory_space<vmem>>, vector<1x256xf32>
    %390 = vector.broadcast %389 : vector<1x256xf32> to vector<32x256xf32>
    %391 = arith.mulf %388, %390 : vector<32x256xf32>
    %c0_214 = arith.constant 0 : index
    %c0_215 = arith.constant 0 : index
    %392 = vector.load %arg7[%c0_214, %c0_215] : memref<1x800xf32, #tpu.memory_space<vmem>>, vector<1x32xf32>
    %cst_216 = arith.constant dense<0.000000e+00> : vector<1x256xf32>
    %393 = tpu.matmul %392, %391, %cst_216 {dimension_numbers = #tpu.dot_dimension_numbers<[1], [0], [0], [1], [0, 0, 1, 1], [], []>} : vector<1x32xf32>, vector<32x256xf32>, vector<1x256xf32> -> vector<1x256xf32>
    %394 = arith.addf %387, %393 : vector<1x256xf32>
    %c33_i32_217 = arith.constant 33 : i32
    %395 = tpu.dynamic_rotate %386 by %c33_i32_217 dim 1 : vector<32x256xf32>, i32 -> vector<32x256xf32>
    %c1_218 = arith.constant 1 : index
    %c0_219 = arith.constant 0 : index
    %396 = vector.load %arg2[%c1_218, %c0_219] : memref<25x256xf32, #tpu.memory_space<vmem>>, vector<1x256xf32>
    %397 = vector.broadcast %396 : vector<1x256xf32> to vector<32x256xf32>
    %398 = arith.mulf %395, %397 : vector<32x256xf32>
    %c0_220 = arith.constant 0 : index
    %c32_221 = arith.constant 32 : index
    %399 = vector.load %arg7[%c0_220, %c32_221] : memref<1x800xf32, #tpu.memory_space<vmem>>, vector<1x32xf32>
    %cst_222 = arith.constant dense<0.000000e+00> : vector<1x256xf32>
    %400 = tpu.matmul %399, %398, %cst_222 {dimension_numbers = #tpu.dot_dimension_numbers<[1], [0], [0], [1], [0, 0, 1, 1], [], []>} : vector<1x32xf32>, vector<32x256xf32>, vector<1x256xf32> -> vector<1x256xf32>
    %401 = arith.addf %394, %400 : vector<1x256xf32>
    %c32_i32_223 = arith.constant 32 : i32
    %402 = tpu.dynamic_rotate %386 by %c32_i32_223 dim 1 : vector<32x256xf32>, i32 -> vector<32x256xf32>
    %c2_224 = arith.constant 2 : index
    %c0_225 = arith.constant 0 : index
    %403 = vector.load %arg2[%c2_224, %c0_225] : memref<25x256xf32, #tpu.memory_space<vmem>>, vector<1x256xf32>
    %404 = vector.broadcast %403 : vector<1x256xf32> to vector<32x256xf32>
    %405 = arith.mulf %402, %404 : vector<32x256xf32>
    %c0_226 = arith.constant 0 : index
    %c64_227 = arith.constant 64 : index
    %406 = vector.load %arg7[%c0_226, %c64_227] : memref<1x800xf32, #tpu.memory_space<vmem>>, vector<1x32xf32>
    %cst_228 = arith.constant dense<0.000000e+00> : vector<1x256xf32>
    %407 = tpu.matmul %406, %405, %cst_228 {dimension_numbers = #tpu.dot_dimension_numbers<[1], [0], [0], [1], [0, 0, 1, 1], [], []>} : vector<1x32xf32>, vector<32x256xf32>, vector<1x256xf32> -> vector<1x256xf32>
    %408 = arith.addf %401, %407 : vector<1x256xf32>
    %c31_i32_229 = arith.constant 31 : i32
    %409 = tpu.dynamic_rotate %386 by %c31_i32_229 dim 1 : vector<32x256xf32>, i32 -> vector<32x256xf32>
    %c3_230 = arith.constant 3 : index
    %c0_231 = arith.constant 0 : index
    %410 = vector.load %arg2[%c3_230, %c0_231] : memref<25x256xf32, #tpu.memory_space<vmem>>, vector<1x256xf32>
    %411 = vector.broadcast %410 : vector<1x256xf32> to vector<32x256xf32>
    %412 = arith.mulf %409, %411 : vector<32x256xf32>
    %c0_232 = arith.constant 0 : index
    %c96_233 = arith.constant 96 : index
    %413 = vector.load %arg7[%c0_232, %c96_233] : memref<1x800xf32, #tpu.memory_space<vmem>>, vector<1x32xf32>
    %cst_234 = arith.constant dense<0.000000e+00> : vector<1x256xf32>
    %414 = tpu.matmul %413, %412, %cst_234 {dimension_numbers = #tpu.dot_dimension_numbers<[1], [0], [0], [1], [0, 0, 1, 1], [], []>} : vector<1x32xf32>, vector<32x256xf32>, vector<1x256xf32> -> vector<1x256xf32>
    %415 = arith.addf %408, %414 : vector<1x256xf32>
    %c30_i32_235 = arith.constant 30 : i32
    %416 = tpu.dynamic_rotate %386 by %c30_i32_235 dim 1 : vector<32x256xf32>, i32 -> vector<32x256xf32>
    %c4_236 = arith.constant 4 : index
    %c0_237 = arith.constant 0 : index
    %417 = vector.load %arg2[%c4_236, %c0_237] : memref<25x256xf32, #tpu.memory_space<vmem>>, vector<1x256xf32>
    %418 = vector.broadcast %417 : vector<1x256xf32> to vector<32x256xf32>
    %419 = arith.mulf %416, %418 : vector<32x256xf32>
    %c0_238 = arith.constant 0 : index
    %c128_239 = arith.constant 128 : index
    %420 = vector.load %arg7[%c0_238, %c128_239] : memref<1x800xf32, #tpu.memory_space<vmem>>, vector<1x32xf32>
    %cst_240 = arith.constant dense<0.000000e+00> : vector<1x256xf32>
    %421 = tpu.matmul %420, %419, %cst_240 {dimension_numbers = #tpu.dot_dimension_numbers<[1], [0], [0], [1], [0, 0, 1, 1], [], []>} : vector<1x32xf32>, vector<32x256xf32>, vector<1x256xf32> -> vector<1x256xf32>
    %422 = arith.addf %415, %421 : vector<1x256xf32>
    %c18_i32_241 = arith.constant 18 : i32
    %423 = tpu.dynamic_rotate %386 by %c18_i32_241 dim 1 : vector<32x256xf32>, i32 -> vector<32x256xf32>
    %c5_242 = arith.constant 5 : index
    %c0_243 = arith.constant 0 : index
    %424 = vector.load %arg2[%c5_242, %c0_243] : memref<25x256xf32, #tpu.memory_space<vmem>>, vector<1x256xf32>
    %425 = vector.broadcast %424 : vector<1x256xf32> to vector<32x256xf32>
    %426 = arith.mulf %423, %425 : vector<32x256xf32>
    %c0_244 = arith.constant 0 : index
    %c160_245 = arith.constant 160 : index
    %427 = vector.load %arg7[%c0_244, %c160_245] : memref<1x800xf32, #tpu.memory_space<vmem>>, vector<1x32xf32>
    %cst_246 = arith.constant dense<0.000000e+00> : vector<1x256xf32>
    %428 = tpu.matmul %427, %426, %cst_246 {dimension_numbers = #tpu.dot_dimension_numbers<[1], [0], [0], [1], [0, 0, 1, 1], [], []>} : vector<1x32xf32>, vector<32x256xf32>, vector<1x256xf32> -> vector<1x256xf32>
    %429 = arith.addf %422, %428 : vector<1x256xf32>
    %c17_i32_247 = arith.constant 17 : i32
    %430 = tpu.dynamic_rotate %386 by %c17_i32_247 dim 1 : vector<32x256xf32>, i32 -> vector<32x256xf32>
    %c6_248 = arith.constant 6 : index
    %c0_249 = arith.constant 0 : index
    %431 = vector.load %arg2[%c6_248, %c0_249] : memref<25x256xf32, #tpu.memory_space<vmem>>, vector<1x256xf32>
    %432 = vector.broadcast %431 : vector<1x256xf32> to vector<32x256xf32>
    %433 = arith.mulf %430, %432 : vector<32x256xf32>
    %c0_250 = arith.constant 0 : index
    %c192_251 = arith.constant 192 : index
    %434 = vector.load %arg7[%c0_250, %c192_251] : memref<1x800xf32, #tpu.memory_space<vmem>>, vector<1x32xf32>
    %cst_252 = arith.constant dense<0.000000e+00> : vector<1x256xf32>
    %435 = tpu.matmul %434, %433, %cst_252 {dimension_numbers = #tpu.dot_dimension_numbers<[1], [0], [0], [1], [0, 0, 1, 1], [], []>} : vector<1x32xf32>, vector<32x256xf32>, vector<1x256xf32> -> vector<1x256xf32>
    %436 = arith.addf %429, %435 : vector<1x256xf32>
    %c16_i32_253 = arith.constant 16 : i32
    %437 = tpu.dynamic_rotate %386 by %c16_i32_253 dim 1 : vector<32x256xf32>, i32 -> vector<32x256xf32>
    %c7_254 = arith.constant 7 : index
    %c0_255 = arith.constant 0 : index
    %438 = vector.load %arg2[%c7_254, %c0_255] : memref<25x256xf32, #tpu.memory_space<vmem>>, vector<1x256xf32>
    %439 = vector.broadcast %438 : vector<1x256xf32> to vector<32x256xf32>
    %440 = arith.mulf %437, %439 : vector<32x256xf32>
    %c0_256 = arith.constant 0 : index
    %c224_257 = arith.constant 224 : index
    %441 = vector.load %arg7[%c0_256, %c224_257] : memref<1x800xf32, #tpu.memory_space<vmem>>, vector<1x32xf32>
    %cst_258 = arith.constant dense<0.000000e+00> : vector<1x256xf32>
    %442 = tpu.matmul %441, %440, %cst_258 {dimension_numbers = #tpu.dot_dimension_numbers<[1], [0], [0], [1], [0, 0, 1, 1], [], []>} : vector<1x32xf32>, vector<32x256xf32>, vector<1x256xf32> -> vector<1x256xf32>
    %443 = arith.addf %436, %442 : vector<1x256xf32>
    %c15_i32_259 = arith.constant 15 : i32
    %444 = tpu.dynamic_rotate %386 by %c15_i32_259 dim 1 : vector<32x256xf32>, i32 -> vector<32x256xf32>
    %c8_260 = arith.constant 8 : index
    %c0_261 = arith.constant 0 : index
    %445 = vector.load %arg2[%c8_260, %c0_261] : memref<25x256xf32, #tpu.memory_space<vmem>>, vector<1x256xf32>
    %446 = vector.broadcast %445 : vector<1x256xf32> to vector<32x256xf32>
    %447 = arith.mulf %444, %446 : vector<32x256xf32>
    %c0_262 = arith.constant 0 : index
    %c256_263 = arith.constant 256 : index
    %448 = vector.load %arg7[%c0_262, %c256_263] : memref<1x800xf32, #tpu.memory_space<vmem>>, vector<1x32xf32>
    %cst_264 = arith.constant dense<0.000000e+00> : vector<1x256xf32>
    %449 = tpu.matmul %448, %447, %cst_264 {dimension_numbers = #tpu.dot_dimension_numbers<[1], [0], [0], [1], [0, 0, 1, 1], [], []>} : vector<1x32xf32>, vector<32x256xf32>, vector<1x256xf32> -> vector<1x256xf32>
    %450 = arith.addf %443, %449 : vector<1x256xf32>
    %c14_i32_265 = arith.constant 14 : i32
    %451 = tpu.dynamic_rotate %386 by %c14_i32_265 dim 1 : vector<32x256xf32>, i32 -> vector<32x256xf32>
    %c9_266 = arith.constant 9 : index
    %c0_267 = arith.constant 0 : index
    %452 = vector.load %arg2[%c9_266, %c0_267] : memref<25x256xf32, #tpu.memory_space<vmem>>, vector<1x256xf32>
    %453 = vector.broadcast %452 : vector<1x256xf32> to vector<32x256xf32>
    %454 = arith.mulf %451, %453 : vector<32x256xf32>
    %c0_268 = arith.constant 0 : index
    %c288_269 = arith.constant 288 : index
    %455 = vector.load %arg7[%c0_268, %c288_269] : memref<1x800xf32, #tpu.memory_space<vmem>>, vector<1x32xf32>
    %cst_270 = arith.constant dense<0.000000e+00> : vector<1x256xf32>
    %456 = tpu.matmul %455, %454, %cst_270 {dimension_numbers = #tpu.dot_dimension_numbers<[1], [0], [0], [1], [0, 0, 1, 1], [], []>} : vector<1x32xf32>, vector<32x256xf32>, vector<1x256xf32> -> vector<1x256xf32>
    %457 = arith.addf %450, %456 : vector<1x256xf32>
    %c2_i32_271 = arith.constant 2 : i32
    %458 = tpu.dynamic_rotate %386 by %c2_i32_271 dim 1 : vector<32x256xf32>, i32 -> vector<32x256xf32>
    %c10_272 = arith.constant 10 : index
    %c0_273 = arith.constant 0 : index
    %459 = vector.load %arg2[%c10_272, %c0_273] : memref<25x256xf32, #tpu.memory_space<vmem>>, vector<1x256xf32>
    %460 = vector.broadcast %459 : vector<1x256xf32> to vector<32x256xf32>
    %461 = arith.mulf %458, %460 : vector<32x256xf32>
    %c0_274 = arith.constant 0 : index
    %c320_275 = arith.constant 320 : index
    %462 = vector.load %arg7[%c0_274, %c320_275] : memref<1x800xf32, #tpu.memory_space<vmem>>, vector<1x32xf32>
    %cst_276 = arith.constant dense<0.000000e+00> : vector<1x256xf32>
    %463 = tpu.matmul %462, %461, %cst_276 {dimension_numbers = #tpu.dot_dimension_numbers<[1], [0], [0], [1], [0, 0, 1, 1], [], []>} : vector<1x32xf32>, vector<32x256xf32>, vector<1x256xf32> -> vector<1x256xf32>
    %464 = arith.addf %457, %463 : vector<1x256xf32>
    %c1_i32_277 = arith.constant 1 : i32
    %465 = tpu.dynamic_rotate %386 by %c1_i32_277 dim 1 : vector<32x256xf32>, i32 -> vector<32x256xf32>
    %c11_278 = arith.constant 11 : index
    %c0_279 = arith.constant 0 : index
    %466 = vector.load %arg2[%c11_278, %c0_279] : memref<25x256xf32, #tpu.memory_space<vmem>>, vector<1x256xf32>
    %467 = vector.broadcast %466 : vector<1x256xf32> to vector<32x256xf32>
    %468 = arith.mulf %465, %467 : vector<32x256xf32>
    %c0_280 = arith.constant 0 : index
    %c352_281 = arith.constant 352 : index
    %469 = vector.load %arg7[%c0_280, %c352_281] : memref<1x800xf32, #tpu.memory_space<vmem>>, vector<1x32xf32>
    %cst_282 = arith.constant dense<0.000000e+00> : vector<1x256xf32>
    %470 = tpu.matmul %469, %468, %cst_282 {dimension_numbers = #tpu.dot_dimension_numbers<[1], [0], [0], [1], [0, 0, 1, 1], [], []>} : vector<1x32xf32>, vector<32x256xf32>, vector<1x256xf32> -> vector<1x256xf32>
    %471 = arith.addf %464, %470 : vector<1x256xf32>
    %c12_283 = arith.constant 12 : index
    %c0_284 = arith.constant 0 : index
    %472 = vector.load %arg2[%c12_283, %c0_284] : memref<25x256xf32, #tpu.memory_space<vmem>>, vector<1x256xf32>
    %473 = vector.broadcast %472 : vector<1x256xf32> to vector<32x256xf32>
    %474 = arith.mulf %386, %473 : vector<32x256xf32>
    %c0_285 = arith.constant 0 : index
    %c384_286 = arith.constant 384 : index
    %475 = vector.load %arg7[%c0_285, %c384_286] : memref<1x800xf32, #tpu.memory_space<vmem>>, vector<1x32xf32>
    %cst_287 = arith.constant dense<0.000000e+00> : vector<1x256xf32>
    %476 = tpu.matmul %475, %474, %cst_287 {dimension_numbers = #tpu.dot_dimension_numbers<[1], [0], [0], [1], [0, 0, 1, 1], [], []>} : vector<1x32xf32>, vector<32x256xf32>, vector<1x256xf32> -> vector<1x256xf32>
    %477 = arith.addf %471, %476 : vector<1x256xf32>
    %c255_i32_288 = arith.constant 255 : i32
    %478 = tpu.dynamic_rotate %386 by %c255_i32_288 dim 1 : vector<32x256xf32>, i32 -> vector<32x256xf32>
    %c13_289 = arith.constant 13 : index
    %c0_290 = arith.constant 0 : index
    %479 = vector.load %arg2[%c13_289, %c0_290] : memref<25x256xf32, #tpu.memory_space<vmem>>, vector<1x256xf32>
    %480 = vector.broadcast %479 : vector<1x256xf32> to vector<32x256xf32>
    %481 = arith.mulf %478, %480 : vector<32x256xf32>
    %c0_291 = arith.constant 0 : index
    %c416_292 = arith.constant 416 : index
    %482 = vector.load %arg7[%c0_291, %c416_292] : memref<1x800xf32, #tpu.memory_space<vmem>>, vector<1x32xf32>
    %cst_293 = arith.constant dense<0.000000e+00> : vector<1x256xf32>
    %483 = tpu.matmul %482, %481, %cst_293 {dimension_numbers = #tpu.dot_dimension_numbers<[1], [0], [0], [1], [0, 0, 1, 1], [], []>} : vector<1x32xf32>, vector<32x256xf32>, vector<1x256xf32> -> vector<1x256xf32>
    %484 = arith.addf %477, %483 : vector<1x256xf32>
    %c254_i32_294 = arith.constant 254 : i32
    %485 = tpu.dynamic_rotate %386 by %c254_i32_294 dim 1 : vector<32x256xf32>, i32 -> vector<32x256xf32>
    %c14_295 = arith.constant 14 : index
    %c0_296 = arith.constant 0 : index
    %486 = vector.load %arg2[%c14_295, %c0_296] : memref<25x256xf32, #tpu.memory_space<vmem>>, vector<1x256xf32>
    %487 = vector.broadcast %486 : vector<1x256xf32> to vector<32x256xf32>
    %488 = arith.mulf %485, %487 : vector<32x256xf32>
    %c0_297 = arith.constant 0 : index
    %c448_298 = arith.constant 448 : index
    %489 = vector.load %arg7[%c0_297, %c448_298] : memref<1x800xf32, #tpu.memory_space<vmem>>, vector<1x32xf32>
    %cst_299 = arith.constant dense<0.000000e+00> : vector<1x256xf32>
    %490 = tpu.matmul %489, %488, %cst_299 {dimension_numbers = #tpu.dot_dimension_numbers<[1], [0], [0], [1], [0, 0, 1, 1], [], []>} : vector<1x32xf32>, vector<32x256xf32>, vector<1x256xf32> -> vector<1x256xf32>
    %491 = arith.addf %484, %490 : vector<1x256xf32>
    %c242_i32_300 = arith.constant 242 : i32
    %492 = tpu.dynamic_rotate %386 by %c242_i32_300 dim 1 : vector<32x256xf32>, i32 -> vector<32x256xf32>
    %c15_301 = arith.constant 15 : index
    %c0_302 = arith.constant 0 : index
    %493 = vector.load %arg2[%c15_301, %c0_302] : memref<25x256xf32, #tpu.memory_space<vmem>>, vector<1x256xf32>
    %494 = vector.broadcast %493 : vector<1x256xf32> to vector<32x256xf32>
    %495 = arith.mulf %492, %494 : vector<32x256xf32>
    %c0_303 = arith.constant 0 : index
    %c480_304 = arith.constant 480 : index
    %496 = vector.load %arg7[%c0_303, %c480_304] : memref<1x800xf32, #tpu.memory_space<vmem>>, vector<1x32xf32>
    %cst_305 = arith.constant dense<0.000000e+00> : vector<1x256xf32>
    %497 = tpu.matmul %496, %495, %cst_305 {dimension_numbers = #tpu.dot_dimension_numbers<[1], [0], [0], [1], [0, 0, 1, 1], [], []>} : vector<1x32xf32>, vector<32x256xf32>, vector<1x256xf32> -> vector<1x256xf32>
    %498 = arith.addf %491, %497 : vector<1x256xf32>
    %c241_i32_306 = arith.constant 241 : i32
    %499 = tpu.dynamic_rotate %386 by %c241_i32_306 dim 1 : vector<32x256xf32>, i32 -> vector<32x256xf32>
    %c16_307 = arith.constant 16 : index
    %c0_308 = arith.constant 0 : index
    %500 = vector.load %arg2[%c16_307, %c0_308] : memref<25x256xf32, #tpu.memory_space<vmem>>, vector<1x256xf32>
    %501 = vector.broadcast %500 : vector<1x256xf32> to vector<32x256xf32>
    %502 = arith.mulf %499, %501 : vector<32x256xf32>
    %c0_309 = arith.constant 0 : index
    %c512_310 = arith.constant 512 : index
    %503 = vector.load %arg7[%c0_309, %c512_310] : memref<1x800xf32, #tpu.memory_space<vmem>>, vector<1x32xf32>
    %cst_311 = arith.constant dense<0.000000e+00> : vector<1x256xf32>
    %504 = tpu.matmul %503, %502, %cst_311 {dimension_numbers = #tpu.dot_dimension_numbers<[1], [0], [0], [1], [0, 0, 1, 1], [], []>} : vector<1x32xf32>, vector<32x256xf32>, vector<1x256xf32> -> vector<1x256xf32>
    %505 = arith.addf %498, %504 : vector<1x256xf32>
    %c240_i32_312 = arith.constant 240 : i32
    %506 = tpu.dynamic_rotate %386 by %c240_i32_312 dim 1 : vector<32x256xf32>, i32 -> vector<32x256xf32>
    %c17_313 = arith.constant 17 : index
    %c0_314 = arith.constant 0 : index
    %507 = vector.load %arg2[%c17_313, %c0_314] : memref<25x256xf32, #tpu.memory_space<vmem>>, vector<1x256xf32>
    %508 = vector.broadcast %507 : vector<1x256xf32> to vector<32x256xf32>
    %509 = arith.mulf %506, %508 : vector<32x256xf32>
    %c0_315 = arith.constant 0 : index
    %c544_316 = arith.constant 544 : index
    %510 = vector.load %arg7[%c0_315, %c544_316] : memref<1x800xf32, #tpu.memory_space<vmem>>, vector<1x32xf32>
    %cst_317 = arith.constant dense<0.000000e+00> : vector<1x256xf32>
    %511 = tpu.matmul %510, %509, %cst_317 {dimension_numbers = #tpu.dot_dimension_numbers<[1], [0], [0], [1], [0, 0, 1, 1], [], []>} : vector<1x32xf32>, vector<32x256xf32>, vector<1x256xf32> -> vector<1x256xf32>
    %512 = arith.addf %505, %511 : vector<1x256xf32>
    %c239_i32_318 = arith.constant 239 : i32
    %513 = tpu.dynamic_rotate %386 by %c239_i32_318 dim 1 : vector<32x256xf32>, i32 -> vector<32x256xf32>
    %c18_319 = arith.constant 18 : index
    %c0_320 = arith.constant 0 : index
    %514 = vector.load %arg2[%c18_319, %c0_320] : memref<25x256xf32, #tpu.memory_space<vmem>>, vector<1x256xf32>
    %515 = vector.broadcast %514 : vector<1x256xf32> to vector<32x256xf32>
    %516 = arith.mulf %513, %515 : vector<32x256xf32>
    %c0_321 = arith.constant 0 : index
    %c576_322 = arith.constant 576 : index
    %517 = vector.load %arg7[%c0_321, %c576_322] : memref<1x800xf32, #tpu.memory_space<vmem>>, vector<1x32xf32>
    %cst_323 = arith.constant dense<0.000000e+00> : vector<1x256xf32>
    %518 = tpu.matmul %517, %516, %cst_323 {dimension_numbers = #tpu.dot_dimension_numbers<[1], [0], [0], [1], [0, 0, 1, 1], [], []>} : vector<1x32xf32>, vector<32x256xf32>, vector<1x256xf32> -> vector<1x256xf32>
    %519 = arith.addf %512, %518 : vector<1x256xf32>
    %c238_i32_324 = arith.constant 238 : i32
    %520 = tpu.dynamic_rotate %386 by %c238_i32_324 dim 1 : vector<32x256xf32>, i32 -> vector<32x256xf32>
    %c19_325 = arith.constant 19 : index
    %c0_326 = arith.constant 0 : index
    %521 = vector.load %arg2[%c19_325, %c0_326] : memref<25x256xf32, #tpu.memory_space<vmem>>, vector<1x256xf32>
    %522 = vector.broadcast %521 : vector<1x256xf32> to vector<32x256xf32>
    %523 = arith.mulf %520, %522 : vector<32x256xf32>
    %c0_327 = arith.constant 0 : index
    %c608_328 = arith.constant 608 : index
    %524 = vector.load %arg7[%c0_327, %c608_328] : memref<1x800xf32, #tpu.memory_space<vmem>>, vector<1x32xf32>
    %cst_329 = arith.constant dense<0.000000e+00> : vector<1x256xf32>
    %525 = tpu.matmul %524, %523, %cst_329 {dimension_numbers = #tpu.dot_dimension_numbers<[1], [0], [0], [1], [0, 0, 1, 1], [], []>} : vector<1x32xf32>, vector<32x256xf32>, vector<1x256xf32> -> vector<1x256xf32>
    %526 = arith.addf %519, %525 : vector<1x256xf32>
    %c226_i32_330 = arith.constant 226 : i32
    %527 = tpu.dynamic_rotate %386 by %c226_i32_330 dim 1 : vector<32x256xf32>, i32 -> vector<32x256xf32>
    %c20_331 = arith.constant 20 : index
    %c0_332 = arith.constant 0 : index
    %528 = vector.load %arg2[%c20_331, %c0_332] : memref<25x256xf32, #tpu.memory_space<vmem>>, vector<1x256xf32>
    %529 = vector.broadcast %528 : vector<1x256xf32> to vector<32x256xf32>
    %530 = arith.mulf %527, %529 : vector<32x256xf32>
    %c0_333 = arith.constant 0 : index
    %c640_334 = arith.constant 640 : index
    %531 = vector.load %arg7[%c0_333, %c640_334] : memref<1x800xf32, #tpu.memory_space<vmem>>, vector<1x32xf32>
    %cst_335 = arith.constant dense<0.000000e+00> : vector<1x256xf32>
    %532 = tpu.matmul %531, %530, %cst_335 {dimension_numbers = #tpu.dot_dimension_numbers<[1], [0], [0], [1], [0, 0, 1, 1], [], []>} : vector<1x32xf32>, vector<32x256xf32>, vector<1x256xf32> -> vector<1x256xf32>
    %533 = arith.addf %526, %532 : vector<1x256xf32>
    %c225_i32_336 = arith.constant 225 : i32
    %534 = tpu.dynamic_rotate %386 by %c225_i32_336 dim 1 : vector<32x256xf32>, i32 -> vector<32x256xf32>
    %c21_337 = arith.constant 21 : index
    %c0_338 = arith.constant 0 : index
    %535 = vector.load %arg2[%c21_337, %c0_338] : memref<25x256xf32, #tpu.memory_space<vmem>>, vector<1x256xf32>
    %536 = vector.broadcast %535 : vector<1x256xf32> to vector<32x256xf32>
    %537 = arith.mulf %534, %536 : vector<32x256xf32>
    %c0_339 = arith.constant 0 : index
    %c672_340 = arith.constant 672 : index
    %538 = vector.load %arg7[%c0_339, %c672_340] : memref<1x800xf32, #tpu.memory_space<vmem>>, vector<1x32xf32>
    %cst_341 = arith.constant dense<0.000000e+00> : vector<1x256xf32>
    %539 = tpu.matmul %538, %537, %cst_341 {dimension_numbers = #tpu.dot_dimension_numbers<[1], [0], [0], [1], [0, 0, 1, 1], [], []>} : vector<1x32xf32>, vector<32x256xf32>, vector<1x256xf32> -> vector<1x256xf32>
    %540 = arith.addf %533, %539 : vector<1x256xf32>
    %c224_i32_342 = arith.constant 224 : i32
    %541 = tpu.dynamic_rotate %386 by %c224_i32_342 dim 1 : vector<32x256xf32>, i32 -> vector<32x256xf32>
    %c22_343 = arith.constant 22 : index
    %c0_344 = arith.constant 0 : index
    %542 = vector.load %arg2[%c22_343, %c0_344] : memref<25x256xf32, #tpu.memory_space<vmem>>, vector<1x256xf32>
    %543 = vector.broadcast %542 : vector<1x256xf32> to vector<32x256xf32>
    %544 = arith.mulf %541, %543 : vector<32x256xf32>
    %c0_345 = arith.constant 0 : index
    %c704_346 = arith.constant 704 : index
    %545 = vector.load %arg7[%c0_345, %c704_346] : memref<1x800xf32, #tpu.memory_space<vmem>>, vector<1x32xf32>
    %cst_347 = arith.constant dense<0.000000e+00> : vector<1x256xf32>
    %546 = tpu.matmul %545, %544, %cst_347 {dimension_numbers = #tpu.dot_dimension_numbers<[1], [0], [0], [1], [0, 0, 1, 1], [], []>} : vector<1x32xf32>, vector<32x256xf32>, vector<1x256xf32> -> vector<1x256xf32>
    %547 = arith.addf %540, %546 : vector<1x256xf32>
    %c223_i32_348 = arith.constant 223 : i32
    %548 = tpu.dynamic_rotate %386 by %c223_i32_348 dim 1 : vector<32x256xf32>, i32 -> vector<32x256xf32>
    %c23_349 = arith.constant 23 : index
    %c0_350 = arith.constant 0 : index
    %549 = vector.load %arg2[%c23_349, %c0_350] : memref<25x256xf32, #tpu.memory_space<vmem>>, vector<1x256xf32>
    %550 = vector.broadcast %549 : vector<1x256xf32> to vector<32x256xf32>
    %551 = arith.mulf %548, %550 : vector<32x256xf32>
    %c0_351 = arith.constant 0 : index
    %c736_352 = arith.constant 736 : index
    %552 = vector.load %arg7[%c0_351, %c736_352] : memref<1x800xf32, #tpu.memory_space<vmem>>, vector<1x32xf32>
    %cst_353 = arith.constant dense<0.000000e+00> : vector<1x256xf32>
    %553 = tpu.matmul %552, %551, %cst_353 {dimension_numbers = #tpu.dot_dimension_numbers<[1], [0], [0], [1], [0, 0, 1, 1], [], []>} : vector<1x32xf32>, vector<32x256xf32>, vector<1x256xf32> -> vector<1x256xf32>
    %554 = arith.addf %547, %553 : vector<1x256xf32>
    %c222_i32_354 = arith.constant 222 : i32
    %555 = tpu.dynamic_rotate %386 by %c222_i32_354 dim 1 : vector<32x256xf32>, i32 -> vector<32x256xf32>
    %c24_355 = arith.constant 24 : index
    %c0_356 = arith.constant 0 : index
    %556 = vector.load %arg2[%c24_355, %c0_356] : memref<25x256xf32, #tpu.memory_space<vmem>>, vector<1x256xf32>
    %557 = vector.broadcast %556 : vector<1x256xf32> to vector<32x256xf32>
    %558 = arith.mulf %555, %557 : vector<32x256xf32>
    %c0_357 = arith.constant 0 : index
    %c768_358 = arith.constant 768 : index
    %559 = vector.load %arg7[%c0_357, %c768_358] : memref<1x800xf32, #tpu.memory_space<vmem>>, vector<1x32xf32>
    %cst_359 = arith.constant dense<0.000000e+00> : vector<1x256xf32>
    %560 = tpu.matmul %559, %558, %cst_359 {dimension_numbers = #tpu.dot_dimension_numbers<[1], [0], [0], [1], [0, 0, 1, 1], [], []>} : vector<1x32xf32>, vector<32x256xf32>, vector<1x256xf32> -> vector<1x256xf32>
    %561 = arith.addf %554, %560 : vector<1x256xf32>
    %c0_360 = arith.constant 0 : index
    %c0_361 = arith.constant 0 : index
    %562 = vector.load %arg8[%c0_360, %c0_361] : memref<1x1xf32, #tpu.memory_space<vmem>>, vector<1x1xf32>
    %563 = vector.broadcast %562 : vector<1x1xf32> to vector<1x256xf32>
    %564 = arith.addf %561, %563 : vector<1x256xf32>
    %c0_362 = arith.constant 0 : index
    %c0_363 = arith.constant 0 : index
    %c0_364 = arith.constant 0 : index
    %565 = vector.load %arg9[%c0_362, %c0_363, %c0_364] : memref<1x1x256xf32, #tpu.memory_space<vmem>>, vector<1x1x256xf32>
    %566 = vector.shape_cast %565 : vector<1x1x256xf32> to vector<1x256xf32>
    %567 = vector.shape_cast %564 : vector<1x256xf32> to vector<1x1x256xf32>
    tpu.vector_store %arg9[%c0_362, %c0_363, %c0_364], %567 {strides = array<i32>} : memref<1x1x256xf32, #tpu.memory_space<vmem>>, vector<1x1x256xf32>,
    return
  }
  func.func @transform_0(%arg0: i32) -> (i32, i32, i32) {
    %c0_i32 = arith.constant 0 : i32
    %c0_i32_0 = arith.constant 0 : i32
    %c0_i32_1 = arith.constant 0 : i32
    return %arg0, %c0_i32, %c0_i32_0 : i32, i32, i32
  }
  func.func @transform_1(%arg0: i32) -> (i32, i32) {
    %c0_i32 = arith.constant 0 : i32
    %c0_i32_0 = arith.constant 0 : i32
    %c0_i32_1 = arith.constant 0 : i32
    return %c0_i32, %c0_i32_0 : i32, i32
  }
  func.func @transform_2(%arg0: i32) -> (i32, i32) {
    %c0_i32 = arith.constant 0 : i32
    %c0_i32_0 = arith.constant 0 : i32
    %c0_i32_1 = arith.constant 0 : i32
    return %c0_i32, %c0_i32_0 : i32, i32
  }
  func.func @transform_3(%arg0: i32) -> (i32, i32) {
    %c0_i32 = arith.constant 0 : i32
    %c0_i32_0 = arith.constant 0 : i32
    %c0_i32_1 = arith.constant 0 : i32
    return %c0_i32, %c0_i32_0 : i32, i32
  }
  func.func @transform_4(%arg0: i32) -> (i32, i32) {
    %c0_i32 = arith.constant 0 : i32
    %c0_i32_0 = arith.constant 0 : i32
    %c0_i32_1 = arith.constant 0 : i32
    return %c0_i32, %c0_i32_0 : i32, i32
  }
  func.func @transform_5(%arg0: i32) -> (i32, i32) {
    %c0_i32 = arith.constant 0 : i32
    %c0_i32_0 = arith.constant 0 : i32
    %c0_i32_1 = arith.constant 0 : i32
    return %c0_i32, %c0_i32_0 : i32, i32
  }
  func.func @transform_6(%arg0: i32) -> (i32, i32) {
    %c0_i32 = arith.constant 0 : i32
    %c0_i32_0 = arith.constant 0 : i32
    %c0_i32_1 = arith.constant 0 : i32
    return %c0_i32, %c0_i32_0 : i32, i32
  }
  func.func @transform_7(%arg0: i32) -> (i32, i32) {
    %c0_i32 = arith.constant 0 : i32
    %c0_i32_0 = arith.constant 0 : i32
    %c0_i32_1 = arith.constant 0 : i32
    return %c0_i32, %c0_i32_0 : i32, i32
  }
  func.func @transform_8(%arg0: i32) -> (i32, i32, i32) {
    %c0_i32 = arith.constant 0 : i32
    %c0_i32_0 = arith.constant 0 : i32
    %c0_i32_1 = arith.constant 0 : i32
    return %arg0, %c0_i32, %c0_i32_0 : i32, i32, i32
  }
}

</mosaic_0001>

<llo_original>
// kernel: network_preconditioner.1
$region0: #{network_preconditioner.1}
  #allocation0 [shape = 'u32[]', space=smem, size = 0x4, offset = 0x4, fixed_abs, tag = 'smem constant byte address 0x4 - core index']
  #allocation1 [shape = 'u32[144,128]{1,0:T(1,128)}', space=vmem, size = 0x12000, scoped, tag = 'internal scratch']
  #allocation2 [shape = 'f32[1,1]{1,0:T(1,128)S(1)}', space=vmem, size = 0x200, scoped, tag = 'scoped memory for network_preconditioner.1']
  %s0 = inlined_call_operand.vmem [shape: f32[2,1,256], index: 0, kind: input, shape index: {}]
  %s1 = inlined_call_operand.vmem [shape: f32[25,256], index: 1, kind: input, shape index: {}]
  %s2 = inlined_call_operand.vmem [shape: f32[32,25], index: 2, kind: input, shape index: {}]
  %s3 = inlined_call_operand.vmem [shape: f32[32,1], index: 3, kind: input, shape index: {}]
  %s4 = inlined_call_operand.vmem [shape: f32[32,800], index: 4, kind: input, shape index: {}]
  %s5 = inlined_call_operand.vmem [shape: f32[32,1], index: 5, kind: input, shape index: {}]
  %s6 = inlined_call_operand.vmem [shape: f32[1,800], index: 6, kind: input, shape index: {}]
  %s7 = inlined_call_operand.<no memory space> [shape: f32[1,1], index: 7, kind: input, shape index: {}]
  %s8 = inlined_call_operand.vmem [shape: f32[2,1,256], index: 8, kind: output, shape index: {}]
  %s9 = sld [smem:[#allocation0]]
  $region65: #{network_preconditioner.1} parent=0
    _
  %s11 = ssub.s32 1, %s9
  %s12 = scalar_select 0, %s11, %s9
  %v13 = vstv %s7
  %14 = vst [vmem:[#allocation2] sm:$0x1] %v13
  loop: start=0, step=1, limit=4
  $region2: #{network_preconditioner.1} parent=0 // loop_pre_header
    _
  $region3: #{network_preconditioner.1} parent=0 // loop_header
    %s16 = sphi 0, %s20
    %p17 = scmp.ge.s32.totalorder %s16, 4
    %s26 = sphi 0, %s28
    %s29 = sphi 0, %s26
    %s30 = sphi 0, %s29
    %s46 = sphi 0, %s30
    %s50 = sphi 0, %s50
    %s52 = sphi 0, %s50
    %s53 = sphi 0, %s52
    %s67 = sphi 0, %s53
    %s71 = sphi 0, %s71
    %s73 = sphi 0, %s71
    %s74 = sphi 0, %s73
    %s88 = sphi 0, %s74
    %s92 = sphi 0, %s92
    %s94 = sphi 0, %s92
    %s95 = sphi 0, %s94
    %s109 = sphi 0, %s95
    %s113 = sphi 0, %s113
    %s115 = sphi 0, %s113
    %s116 = sphi 0, %s115
    %s130 = sphi 0, %s116
    %s134 = sphi 0, %s134
    %s136 = sphi 0, %s134
    %s137 = sphi 0, %s136
    %s151 = sphi 0, %s137
    %s155 = sphi 0, %s155
    %s157 = sphi 0, %s155
    %s158 = sphi 0, %s157
    %s172 = sphi 0, %s158
    %s176 = sphi 0, %s176
    %s178 = sphi 0, %s176
    %s179 = sphi 0, %s178
    %s193 = sphi 0, %s179
    %s199 = sphi 0, %s201
    %s202 = sphi 0, %s199
    %s203 = sphi 0, %s202
    %s219 = sphi 0, %s203
  $region4: #{network_preconditioner.1} parent=0 // loop_header_branch
    %19 = sbr.rel (%p17) target = $region8
  $region5: #{network_preconditioner.1} parent=0 // loop_body
    %s21 = ssub.s32 %s16, 1
    %s22 = ssub.s32 %s16, 2
    %s23 = sadd.s32 %s16, 1
    %s24 = ssub.s32 %s16, %s23
    %p25 = scmp.eq.s32.totalorder %s24, 0
    %s27 = sadd.s32 %s26, 1
    %s28 = scalar_select %p25, %s26, %s27
    %p31 = pneg %p25
    %p32 = scmp.eq.s32.totalorder %s16, 1
    %p33 = por %p31, %p32
    %p34 = scmp.ne.s32.totalorder %s26, %s29
    %p35 = scmp.eq.s32.totalorder %s16, 0
    %p36 = por %p34, %p35
    %p37 = scmp.ne.s32.totalorder %s26, %s29
    %p38 = scmp.eq.s32.totalorder %s21, 1
    %p39 = por %p37, %p38
    %p40 = scmp.ne.s32.totalorder %s29, %s30
    %p41 = scmp.eq.s32.totalorder %s21, 0
    %p42 = por %p40, %p41
    %p43 = scmp.ne.s32.totalorder %s29, %s30
    %p44 = scmp.eq.s32.totalorder %s22, 1
    %p45 = por %p43, %p44
    %p47 = scmp.ne.s32.totalorder %s30, %s46
    %p48 = scmp.eq.s32.totalorder %s22, 0
    %p49 = por %p47, %p48
    %s51 = sadd.s32 %s50, 1
    %p54 = scmp.eq.s32.totalorder %s16, 1
    %p55 = scmp.ne.s32.totalorder %s50, %s52
    %p56 = scmp.eq.s32.totalorder %s16, 0
    %p57 = por %p55, %p56
    %p58 = scmp.ne.s32.totalorder %s50, %s52
    %p59 = scmp.eq.s32.totalorder %s21, 1
    %p60 = por %p58, %p59
    %p61 = scmp.ne.s32.totalorder %s52, %s53
    %p62 = scmp.eq.s32.totalorder %s21, 0
    %p63 = por %p61, %p62
    %p64 = scmp.ne.s32.totalorder %s52, %s53
    %p65 = scmp.eq.s32.totalorder %s22, 1
    %p66 = por %p64, %p65
    %p68 = scmp.ne.s32.totalorder %s53, %s67
    %p69 = scmp.eq.s32.totalorder %s22, 0
    %p70 = por %p68, %p69
    %s72 = sadd.s32 %s71, 1
    %p75 = scmp.eq.s32.totalorder %s16, 1
    %p76 = scmp.ne.s32.totalorder %s71, %s73
    %p77 = scmp.eq.s32.totalorder %s16, 0
    %p78 = por %p76, %p77
    %p79 = scmp.ne.s32.totalorder %s71, %s73
    %p80 = scmp.eq.s32.totalorder %s21, 1
    %p81 = por %p79, %p80
    %p82 = scmp.ne.s32.totalorder %s73, %s74
    %p83 = scmp.eq.s32.totalorder %s21, 0
    %p84 = por %p82, %p83
    %p85 = scmp.ne.s32.totalorder %s73, %s74
    %p86 = scmp.eq.s32.totalorder %s22, 1
    %p87 = por %p85, %p86
    %p89 = scmp.ne.s32.totalorder %s74, %s88
    %p90 = scmp.eq.s32.totalorder %s22, 0
    %p91 = por %p89, %p90
    %s93 = sadd.s32 %s92, 1
    %p96 = scmp.eq.s32.totalorder %s16, 1
    %p97 = scmp.ne.s32.totalorder %s92, %s94
    %p98 = scmp.eq.s32.totalorder %s16, 0
    %p99 = por %p97, %p98
    %p100 = scmp.ne.s32.totalorder %s92, %s94
    %p101 = scmp.eq.s32.totalorder %s21, 1
    %p102 = por %p100, %p101
    %p103 = scmp.ne.s32.totalorder %s94, %s95
    %p104 = scmp.eq.s32.totalorder %s21, 0
    %p105 = por %p103, %p104
    %p106 = scmp.ne.s32.totalorder %s94, %s95
    %p107 = scmp.eq.s32.totalorder %s22, 1
    %p108 = por %p106, %p107
    %p110 = scmp.ne.s32.totalorder %s95, %s109
    %p111 = scmp.eq.s32.totalorder %s22, 0
    %p112 = por %p110, %p111
    %s114 = sadd.s32 %s113, 1
    %p117 = scmp.eq.s32.totalorder %s16, 1
    %p118 = scmp.ne.s32.totalorder %s113, %s115
    %p119 = scmp.eq.s32.totalorder %s16, 0
    %p120 = por %p118, %p119
    %p121 = scmp.ne.s32.totalorder %s113, %s115
    %p122 = scmp.eq.s32.totalorder %s21, 1
    %p123 = por %p121, %p122
    %p124 = scmp.ne.s32.totalorder %s115, %s116
    %p125 = scmp.eq.s32.totalorder %s21, 0
    %p126 = por %p124, %p125
    %p127 = scmp.ne.s32.totalorder %s115, %s116
    %p128 = scmp.eq.s32.totalorder %s22, 1
    %p129 = por %p127, %p128
    %p131 = scmp.ne.s32.totalorder %s116, %s130
    %p132 = scmp.eq.s32.totalorder %s22, 0
    %p133 = por %p131, %p132
    %s135 = sadd.s32 %s134, 1
    %p138 = scmp.eq.s32.totalorder %s16, 1
    %p139 = scmp.ne.s32.totalorder %s134, %s136
    %p140 = scmp.eq.s32.totalorder %s16, 0
    %p141 = por %p139, %p140
    %p142 = scmp.ne.s32.totalorder %s134, %s136
    %p143 = scmp.eq.s32.totalorder %s21, 1
    %p144 = por %p142, %p143
    %p145 = scmp.ne.s32.totalorder %s136, %s137
    %p146 = scmp.eq.s32.totalorder %s21, 0
    %p147 = por %p145, %p146
    %p148 = scmp.ne.s32.totalorder %s136, %s137
    %p149 = scmp.eq.s32.totalorder %s22, 1
    %p150 = por %p148, %p149
    %p152 = scmp.ne.s32.totalorder %s137, %s151
    %p153 = scmp.eq.s32.totalorder %s22, 0
    %p154 = por %p152, %p153
    %s156 = sadd.s32 %s155, 1
    %p159 = scmp.eq.s32.totalorder %s16, 1
    %p160 = scmp.ne.s32.totalorder %s155, %s157
    %p161 = scmp.eq.s32.totalorder %s16, 0
    %p162 = por %p160, %p161
    %p163 = scmp.ne.s32.totalorder %s155, %s157
    %p164 = scmp.eq.s32.totalorder %s21, 1
    %p165 = por %p163, %p164
    %p166 = scmp.ne.s32.totalorder %s157, %s158
    %p167 = scmp.eq.s32.totalorder %s21, 0
    %p168 = por %p166, %p167
    %p169 = scmp.ne.s32.totalorder %s157, %s158
    %p170 = scmp.eq.s32.totalorder %s22, 1
    %p171 = por %p169, %p170
    %p173 = scmp.ne.s32.totalorder %s158, %s172
    %p174 = scmp.eq.s32.totalorder %s22, 0
    %p175 = por %p173, %p174
    %s177 = sadd.s32 %s176, 1
    %p180 = scmp.eq.s32.totalorder %s16, 1
    %p181 = scmp.ne.s32.totalorder %s176, %s178
    %p182 = scmp.eq.s32.totalorder %s16, 0
    %p183 = por %p181, %p182
    %p184 = scmp.ne.s32.totalorder %s176, %s178
    %p185 = scmp.eq.s32.totalorder %s21, 1
    %p186 = por %p184, %p185
    %p187 = scmp.ne.s32.totalorder %s178, %s179
    %p188 = scmp.eq.s32.totalorder %s21, 0
    %p189 = por %p187, %p188
    %p190 = scmp.ne.s32.totalorder %s178, %s179
    %p191 = scmp.eq.s32.totalorder %s22, 1
    %p192 = por %p190, %p191
    %p194 = scmp.ne.s32.totalorder %s179, %s193
    %p195 = scmp.eq.s32.totalorder %s22, 0
    %p196 = por %p194, %p195
    %s197 = ssub.s32 %s16, %s23
    %p198 = scmp.eq.s32.totalorder %s197, 0
    %s200 = sadd.s32 %s199, 1
    %s201 = scalar_select %p198, %s199, %s200
    %p204 = pneg %p198
    %p205 = scmp.eq.s32.totalorder %s16, 1
    %p206 = por %p204, %p205
    %p207 = scmp.ne.s32.totalorder %s199, %s202
    %p208 = scmp.eq.s32.totalorder %s16, 0
    %p209 = por %p207, %p208
    %p210 = scmp.ne.s32.totalorder %s199, %s202
    %p211 = scmp.eq.s32.totalorder %s21, 1
    %p212 = por %p210, %p211
    %p213 = scmp.ne.s32.totalorder %s202, %s203
    %p214 = scmp.eq.s32.totalorder %s21, 0
    %p215 = por %p213, %p214
    %p216 = scmp.ne.s32.totalorder %s202, %s203
    %p217 = scmp.eq.s32.totalorder %s22, 1
    %p218 = por %p216, %p217
    %p220 = scmp.ne.s32.totalorder %s203, %s219
    %p221 = scmp.eq.s32.totalorder %s22, 0
    %p222 = por %p220, %p221
    %p223 = scmp.le.s32.totalorder 1, %s16
    %p224 = scmp.lt.s32.totalorder %s16, 3
    %p225 = pnand %p223, %p224
    %p226 = pneg %p225
    // Predicated region
    $region9: #{network_preconditioner.1} parent=5 // pred_check
      _
    $region10: #{network_preconditioner.1} parent=5 // pred_check_branch
      %228 = sbr.rel (%p225) target = $region12
    $region11: #{network_preconditioner.1} parent=5 // pred_region
      %s229 = ssub.s32 %s16, 1
      // Predicated region
      $region13: #{network_preconditioner.1} parent=11 // pred_check
        %p230 = pneg %p63
      $region14: #{network_preconditioner.1} parent=11 // pred_check_branch
        %232 = sbr.rel (%p230) target = $region16
      $region15: #{network_preconditioner.1} parent=11 // pred_region
        _
      $region16: #{network_preconditioner.1} parent=11 // pred_fallthru
        _
      // Predicated region
      $region17: #{network_preconditioner.1} parent=11 // pred_check
        %p233 = pneg %p84
      $region18: #{network_preconditioner.1} parent=11 // pred_check_branch
        %235 = sbr.rel (%p233) target = $region20
      $region19: #{network_preconditioner.1} parent=11 // pred_region
        _
      $region20: #{network_preconditioner.1} parent=11 // pred_fallthru
        _
      // Predicated region
      $region21: #{network_preconditioner.1} parent=11 // pred_check
        %p236 = pneg %p105
      $region22: #{network_preconditioner.1} parent=11 // pred_check_branch
        %238 = sbr.rel (%p236) target = $region24
      $region23: #{network_preconditioner.1} parent=11 // pred_region
        _
      $region24: #{network_preconditioner.1} parent=11 // pred_fallthru
        _
      // Predicated region
      $region25: #{network_preconditioner.1} parent=11 // pred_check
        %p239 = pneg %p126
      $region26: #{network_preconditioner.1} parent=11 // pred_check_branch
        %241 = sbr.rel (%p239) target = $region28
      $region27: #{network_preconditioner.1} parent=11 // pred_region
        _
      $region28: #{network_preconditioner.1} parent=11 // pred_fallthru
        _
      // Predicated region
      $region29: #{network_preconditioner.1} parent=11 // pred_check
        %p242 = pneg %p147
      $region30: #{network_preconditioner.1} parent=11 // pred_check_branch
        %244 = sbr.rel (%p242) target = $region32
      $region31: #{network_preconditioner.1} parent=11 // pred_region
        _
      $region32: #{network_preconditioner.1} parent=11 // pred_fallthru
        _
      // Predicated region
      $region33: #{network_preconditioner.1} parent=11 // pred_check
        %p245 = pneg %p168
      $region34: #{network_preconditioner.1} parent=11 // pred_check_branch
        %247 = sbr.rel (%p245) target = $region36
      $region35: #{network_preconditioner.1} parent=11 // pred_region
        _
      $region36: #{network_preconditioner.1} parent=11 // pred_fallthru
        _
      // Predicated region
      $region37: #{network_preconditioner.1} parent=11 // pred_check
        %p248 = pneg %p189
      $region38: #{network_preconditioner.1} parent=11 // pred_check_branch
        %250 = sbr.rel (%p248) target = $region40
      $region39: #{network_preconditioner.1} parent=11 // pred_region
        _
      $region40: #{network_preconditioner.1} parent=11 // pred_fallthru
        _
    $region12: #{network_preconditioner.1} parent=5 // pred_fallthru
      _
    %p251 = scmp.lt.s32.totalorder %s16, 2
    // Predicated region
    $region41: #{network_preconditioner.1} parent=5 // pred_check
      %p252 = pneg %p251
    $region42: #{network_preconditioner.1} parent=5 // pred_check_branch
      %254 = sbr.rel (%p252) target = $region44
    $region43: #{network_preconditioner.1} parent=5 // pred_region
      // Predicated region
      $region45: #{network_preconditioner.1} parent=43 // pred_check
        %p255 = pneg %p36
      $region46: #{network_preconditioner.1} parent=43 // pred_check_branch
        %257 = sbr.rel (%p255) target = $region48
      $region47: #{network_preconditioner.1} parent=43 // pred_region
        %p258 = scmp.lt.s32.totalorder %s16, 1
        %s259 = scalar_select %p258, %s16, 1
        %s260 = smul.addr %s259, 2
        %s261 = scalar_lea.vmem %s0, %s260
      $region48: #{network_preconditioner.1} parent=43 // pred_fallthru
        _
    $region44: #{network_preconditioner.1} parent=5 // pred_fallthru
      _
    %p262 = scmp.le.s32.totalorder 1, %s16
    %p263 = scmp.lt.s32.totalorder %s16, 3
    %p264 = pnand %p262, %p263
    %p265 = pneg %p264
    // Predicated region
    $region49: #{network_preconditioner.1} parent=5 // pred_check
      _
    $region50: #{network_preconditioner.1} parent=5 // pred_check_branch
      %267 = sbr.rel (%p264) target = $region52
    $region51: #{network_preconditioner.1} parent=5 // pred_region
      %s268 = ssub.s32 %s16, 1
      %p269 = scmp.lt.s32.totalorder %s21, 1
      %s270 = scalar_select %p269, %s21, 1
      %s271 = smul.addr %s270, 2
      %s272 = scalar_lea.vmem %s0, %s271
      %p273 = pneg %p42
      %p274 = pneg %p39
      %p275 = pneg %p63
      %p276 = pneg %p60
      %p277 = pneg %p84
      %p278 = pneg %p81
      %p279 = pneg %p105
      %p280 = pneg %p102
      %p281 = pneg %p126
      %p282 = pneg %p123
      %p283 = pneg %p147
      %p284 = pneg %p144
      %p285 = pneg %p168
      %p286 = pneg %p165
      %p287 = pneg %p189
      %p288 = pneg %p186
      %p289 = pneg %p215
      %p290 = pneg %p212
      %p291 = scmp.lt.s32.totalorder %s21, 1
      %s292 = scalar_select %p291, %s21, 1
      %s293 = smul.addr %s292, 2
      %s294 = scalar_lea.vmem %s8, %s293
      %p295 = scmp.lt.s32.totalorder %s21, 1
      %s296 = scalar_select %p295, %s21, 1
      %s297 = smul.addr %s296, 2
      %s298 = scalar_lea.vmem %s0, %s297
      %p299 = scmp.lt.s32.totalorder %s21, 1
      %s300 = scalar_select %p299, %s21, 1
      %s301 = smul.addr %s300, 2
      %s302 = scalar_lea.vmem %s8, %s301
      %v303 = vld [vmem:[%s298] sm:$0x3]
      %v305 = vlaneseq
      %v306 = vshrl.u32 %v305, 7
      %v307 = vsub.s32 0, %v306
      %v308 = vrot.slane %v303, %v307
      %v309 = vlaneseq
      %v310 = vshrl.u32 %v309, 7
      %v311 = vsub.s32 1, %v310
      %v312 = vrot.slane %v303, %v311
      %315 = vrot.lane.b32.xlu0 %v308, 34
      %v316 = vpop.permute.xlu0 %315
      %317 = vrot.lane.b32.xlu0 %v312, 34
      %v318 = vpop.permute.xlu0 %317
      %v319 = vlaneseq
      %v320 = vand.u32 %v319, 127
      %vm321 = vcmp.lt.s32.totalorder %v320, 34
      %v322 = vsel %vm321, %v316, %v318
      %v323 = vsel %vm321, %v318, %v316
      %v324 = vld [vmem:[%s1] ss:$8 sm:$0x3]
      %v326 = vlaneseq
      %v327 = vshrl.u32 %v326, 7
      %v328 = vsub.s32 0, %v327
      %v329 = vrot.slane %v324, %v328
      %v330 = vlaneseq
      %v331 = vshrl.u32 %v330, 7
      %v332 = vsub.s32 1, %v331
      %v333 = vrot.slane %v324, %v332
      %v336 = vmul.f32 %v323, %v329
      %v337 = vmul.f32 %v322, %v333
      %v338 = vld [vmem:[%s2] sm:$0xff]
      %v339 = vld [vmem:[%s2 + $0x8] sm:$0xff]
      %v340 = vld [vmem:[%s2 + $0x10] sm:$0xff]
      %v341 = vld [vmem:[%s2 + $0x18] sm:$0xff]
      %343 = vset.pattern.permute.xlu0 0
      %344 = vperm.xlu0 %343, %v338
      %v345 = vpop.permute.xlu0 %344
      %348 = vset.pattern.permute.xlu0 0
      %349 = vperm.xlu0 %348, %v339
      %v350 = vpop.permute.xlu0 %349
      %353 = vset.pattern.permute.xlu0 0
      %354 = vperm.xlu0 %353, %v340
      %v355 = vpop.permute.xlu0 %354
      %358 = vset.pattern.permute.xlu0 0
      %359 = vperm.xlu0 %358, %v341
      %v360 = vpop.permute.xlu0 %359
      %v362 = vlaneseq
      %v363 = vshrl.u32 %v362, 7
      %v364 = vsub.s32 0, %v363
      %v365 = vrot.slane %v336, %v364
      %v366 = vlaneseq
      %v367 = vshrl.u32 %v366, 7
      %v368 = vsub.s32 0, %v367
      %v369 = vrot.slane %v337, %v368
      %v370 = vmul.f32 %v345, %v365
      %v371 = vmul.f32 %v345, %v369
      %v372 = vmul.f32 %v350, %v365
      %v373 = vmul.f32 %v350, %v369
      %v374 = vmul.f32 %v355, %v365
      %v375 = vmul.f32 %v355, %v369
      %v376 = vmul.f32 %v360, %v365
      %v377 = vmul.f32 %v360, %v369
      %v378 = vadd.f32 %v370, 0.0
      %v379 = vadd.f32 %v371, 0.0
      %v380 = vadd.f32 %v372, 0.0
      %v381 = vadd.f32 %v373, 0.0
      %v382 = vadd.f32 %v374, 0.0
      %v383 = vadd.f32 %v375, 0.0
      %v384 = vadd.f32 %v376, 0.0
      %v385 = vadd.f32 %v377, 0.0
      %386 = vrot.lane.b32.xlu0 %v308, 33
      %v387 = vpop.permute.xlu0 %386
      %388 = vrot.lane.b32.xlu0 %v312, 33
      %v389 = vpop.permute.xlu0 %388
      %vm390 = vcmp.lt.s32.totalorder %v320, 33
      %v391 = vsel %vm390, %v387, %v389
      %v392 = vsel %vm390, %v389, %v387
      %s393 = scalar_lea.vmem %s1, 1
      %v394 = vld [vmem:[%s393] ss:$8 sm:$0x3]
      %v396 = vlaneseq
      %v397 = vshrl.u32 %v396, 7
      %v398 = vsub.s32 0, %v397
      %v399 = vrot.slane %v394, %v398
      %v400 = vlaneseq
      %v401 = vshrl.u32 %v400, 7
      %v402 = vsub.s32 1, %v401
      %v403 = vrot.slane %v394, %v402
      %v406 = vmul.f32 %v392, %v399
      %v407 = vmul.f32 %v391, %v403
      %408 = vset.pattern.permute.xlu0 1
      %409 = vperm.xlu0 %408, %v338
      %v410 = vpop.permute.xlu0 %409
      %412 = vset.pattern.permute.xlu0 1
      %413 = vperm.xlu0 %412, %v339
      %v414 = vpop.permute.xlu0 %413
      %416 = vset.pattern.permute.xlu0 1
      %417 = vperm.xlu0 %416, %v340
      %v418 = vpop.permute.xlu0 %417
      %420 = vset.pattern.permute.xlu0 1
      %421 = vperm.xlu0 %420, %v341
      %v422 = vpop.permute.xlu0 %421
      %v424 = vlaneseq
      %v425 = vshrl.u32 %v424, 7
      %v426 = vsub.s32 0, %v425
      %v427 = vrot.slane %v406, %v426
      %v428 = vlaneseq
      %v429 = vshrl.u32 %v428, 7
      %v430 = vsub.s32 0, %v429
      %v431 = vrot.slane %v407, %v430
      %v432 = vmul.f32 %v410, %v427
      %v433 = vmul.f32 %v410, %v431
      %v434 = vmul.f32 %v414, %v427
      %v435 = vmul.f32 %v414, %v431
      %v436 = vmul.f32 %v418, %v427
      %v437 = vmul.f32 %v418, %v431
      %v438 = vmul.f32 %v422, %v427
      %v439 = vmul.f32 %v422, %v431
      %v440 = vadd.f32 %v378, %v432
      %v441 = vadd.f32 %v379, %v433
      %v442 = vadd.f32 %v380, %v434
      %v443 = vadd.f32 %v381, %v435
      %v444 = vadd.f32 %v382, %v436
      %v445 = vadd.f32 %v383, %v437
      %v446 = vadd.f32 %v384, %v438
      %v447 = vadd.f32 %v385, %v439
      %448 = vrot.lane.b32.xlu0 %v308, 32
      %v449 = vpop.permute.xlu0 %448
      %450 = vrot.lane.b32.xlu0 %v312, 32
      %v451 = vpop.permute.xlu0 %450
      %vm452 = vcmp.lt.s32.totalorder %v320, 32
      %v453 = vsel %vm452, %v449, %v451
      %v454 = vsel %vm452, %v451, %v449
      %s455 = scalar_lea.vmem %s1, 2
      %v456 = vld [vmem:[%s455] ss:$8 sm:$0x3]
      %v458 = vlaneseq
      %v459 = vshrl.u32 %v458, 7
      %v460 = vsub.s32 0, %v459
      %v461 = vrot.slane %v456, %v460
      %v462 = vlaneseq
      %v463 = vshrl.u32 %v462, 7
      %v464 = vsub.s32 1, %v463
      %v465 = vrot.slane %v456, %v464
      %v468 = vmul.f32 %v454, %v461
      %v469 = vmul.f32 %v453, %v465
      %470 = vset.pattern.permute.xlu0 2
      %471 = vperm.xlu0 %470, %v338
      %v472 = vpop.permute.xlu0 %471
      %474 = vset.pattern.permute.xlu0 2
      %475 = vperm.xlu0 %474, %v339
      %v476 = vpop.permute.xlu0 %475
      %478 = vset.pattern.permute.xlu0 2
      %479 = vperm.xlu0 %478, %v340
      %v480 = vpop.permute.xlu0 %479
      %482 = vset.pattern.permute.xlu0 2
      %483 = vperm.xlu0 %482, %v341
      %v484 = vpop.permute.xlu0 %483
      %v486 = vlaneseq
      %v487 = vshrl.u32 %v486, 7
      %v488 = vsub.s32 0, %v487
      %v489 = vrot.slane %v468, %v488
      %v490 = vlaneseq
      %v491 = vshrl.u32 %v490, 7
      %v492 = vsub.s32 0, %v491
      %v493 = vrot.slane %v469, %v492
      %v494 = vmul.f32 %v472, %v489
      %v495 = vmul.f32 %v472, %v493
      %v496 = vmul.f32 %v476, %v489
      %v497 = vmul.f32 %v476, %v493
      %v498 = vmul.f32 %v480, %v489
      %v499 = vmul.f32 %v480, %v493
      %v500 = vmul.f32 %v484, %v489
      %v501 = vmul.f32 %v484, %v493
      %v502 = vadd.f32 %v440, %v494
      %v503 = vadd.f32 %v441, %v495
      %v504 = vadd.f32 %v442, %v496
      %v505 = vadd.f32 %v443, %v497
      %v506 = vadd.f32 %v444, %v498
      %v507 = vadd.f32 %v445, %v499
      %v508 = vadd.f32 %v446, %v500
      %v509 = vadd.f32 %v447, %v501
      %510 = vrot.lane.b32.xlu0 %v308, 31
      %v511 = vpop.permute.xlu0 %510
      %512 = vrot.lane.b32.xlu0 %v312, 31
      %v513 = vpop.permute.xlu0 %512
      %vm514 = vcmp.lt.s32.totalorder %v320, 31
      %v515 = vsel %vm514, %v511, %v513
      %v516 = vsel %vm514, %v513, %v511
      %s517 = scalar_lea.vmem %s1, 3
      %v518 = vld [vmem:[%s517] ss:$8 sm:$0x3]
      %v520 = vlaneseq
      %v521 = vshrl.u32 %v520, 7
      %v522 = vsub.s32 0, %v521
      %v523 = vrot.slane %v518, %v522
      %v524 = vlaneseq
      %v525 = vshrl.u32 %v524, 7
      %v526 = vsub.s32 1, %v525
      %v527 = vrot.slane %v518, %v526
      %v530 = vmul.f32 %v516, %v523
      %v531 = vmul.f32 %v515, %v527
      %532 = vset.pattern.permute.xlu0 3
      %533 = vperm.xlu0 %532, %v338
      %v534 = vpop.permute.xlu0 %533
      %536 = vset.pattern.permute.xlu0 3
      %537 = vperm.xlu0 %536, %v339
      %v538 = vpop.permute.xlu0 %537
      %540 = vset.pattern.permute.xlu0 3
      %541 = vperm.xlu0 %540, %v340
      %v542 = vpop.permute.xlu0 %541
      %544 = vset.pattern.permute.xlu0 3
      %545 = vperm.xlu0 %544, %v341
      %v546 = vpop.permute.xlu0 %545
      %v548 = vlaneseq
      %v549 = vshrl.u32 %v548, 7
      %v550 = vsub.s32 0, %v549
      %v551 = vrot.slane %v530, %v550
      %v552 = vlaneseq
      %v553 = vshrl.u32 %v552, 7
      %v554 = vsub.s32 0, %v553
      %v555 = vrot.slane %v531, %v554
      %v556 = vmul.f32 %v534, %v551
      %v557 = vmul.f32 %v534, %v555
      %v558 = vmul.f32 %v538, %v551
      %v559 = vmul.f32 %v538, %v555
      %v560 = vmul.f32 %v542, %v551
      %v561 = vmul.f32 %v542, %v555
      %v562 = vmul.f32 %v546, %v551
      %v563 = vmul.f32 %v546, %v555
      %v564 = vadd.f32 %v502, %v556
      %v565 = vadd.f32 %v503, %v557
      %v566 = vadd.f32 %v504, %v558
      %v567 = vadd.f32 %v505, %v559
      %v568 = vadd.f32 %v506, %v560
      %v569 = vadd.f32 %v507, %v561
      %v570 = vadd.f32 %v508, %v562
      %v571 = vadd.f32 %v509, %v563
      %572 = vrot.lane.b32.xlu0 %v308, 30
      %v573 = vpop.permute.xlu0 %572
      %574 = vrot.lane.b32.xlu0 %v312, 30
      %v575 = vpop.permute.xlu0 %574
      %vm576 = vcmp.lt.s32.totalorder %v320, 30
      %v577 = vsel %vm576, %v573, %v575
      %v578 = vsel %vm576, %v575, %v573
      %s579 = scalar_lea.vmem %s1, 4
      %v580 = vld [vmem:[%s579] ss:$8 sm:$0x3]
      %v582 = vlaneseq
      %v583 = vshrl.u32 %v582, 7
      %v584 = vsub.s32 0, %v583
      %v585 = vrot.slane %v580, %v584
      %v586 = vlaneseq
      %v587 = vshrl.u32 %v586, 7
      %v588 = vsub.s32 1, %v587
      %v589 = vrot.slane %v580, %v588
      %v592 = vmul.f32 %v578, %v585
      %v593 = vmul.f32 %v577, %v589
      %594 = vset.pattern.permute.xlu0 4
      %595 = vperm.xlu0 %594, %v338
      %v596 = vpop.permute.xlu0 %595
      %598 = vset.pattern.permute.xlu0 4
      %599 = vperm.xlu0 %598, %v339
      %v600 = vpop.permute.xlu0 %599
      %602 = vset.pattern.permute.xlu0 4
      %603 = vperm.xlu0 %602, %v340
      %v604 = vpop.permute.xlu0 %603
      %606 = vset.pattern.permute.xlu0 4
      %607 = vperm.xlu0 %606, %v341
      %v608 = vpop.permute.xlu0 %607
      %v610 = vlaneseq
      %v611 = vshrl.u32 %v610, 7
      %v612 = vsub.s32 0, %v611
      %v613 = vrot.slane %v592, %v612
      %v614 = vlaneseq
      %v615 = vshrl.u32 %v614, 7
      %v616 = vsub.s32 0, %v615
      %v617 = vrot.slane %v593, %v616
      %v618 = vmul.f32 %v596, %v613
      %v619 = vmul.f32 %v596, %v617
      %v620 = vmul.f32 %v600, %v613
      %v621 = vmul.f32 %v600, %v617
      %v622 = vmul.f32 %v604, %v613
      %v623 = vmul.f32 %v604, %v617
      %v624 = vmul.f32 %v608, %v613
      %v625 = vmul.f32 %v608, %v617
      %v626 = vadd.f32 %v564, %v618
      %v627 = vadd.f32 %v565, %v619
      %v628 = vadd.f32 %v566, %v620
      %v629 = vadd.f32 %v567, %v621
      %v630 = vadd.f32 %v568, %v622
      %v631 = vadd.f32 %v569, %v623
      %v632 = vadd.f32 %v570, %v624
      %v633 = vadd.f32 %v571, %v625
      %634 = vrot.lane.b32.xlu0 %v308, 18
      %v635 = vpop.permute.xlu0 %634
      %636 = vrot.lane.b32.xlu0 %v312, 18
      %v637 = vpop.permute.xlu0 %636
      %vm638 = vcmp.lt.s32.totalorder %v320, 18
      %v639 = vsel %vm638, %v635, %v637
      %v640 = vsel %vm638, %v637, %v635
      %s641 = scalar_lea.vmem %s1, 5
      %v642 = vld [vmem:[%s641] ss:$8 sm:$0x3]
      %v644 = vlaneseq
      %v645 = vshrl.u32 %v644, 7
      %v646 = vsub.s32 0, %v645
      %v647 = vrot.slane %v642, %v646
      %v648 = vlaneseq
      %v649 = vshrl.u32 %v648, 7
      %v650 = vsub.s32 1, %v649
      %v651 = vrot.slane %v642, %v650
      %v654 = vmul.f32 %v640, %v647
      %v655 = vmul.f32 %v639, %v651
      %656 = vset.pattern.permute.xlu0 5
      %657 = vperm.xlu0 %656, %v338
      %v658 = vpop.permute.xlu0 %657
      %660 = vset.pattern.permute.xlu0 5
      %661 = vperm.xlu0 %660, %v339
      %v662 = vpop.permute.xlu0 %661
      %664 = vset.pattern.permute.xlu0 5
      %665 = vperm.xlu0 %664, %v340
      %v666 = vpop.permute.xlu0 %665
      %668 = vset.pattern.permute.xlu0 5
      %669 = vperm.xlu0 %668, %v341
      %v670 = vpop.permute.xlu0 %669
      %v672 = vlaneseq
      %v673 = vshrl.u32 %v672, 7
      %v674 = vsub.s32 0, %v673
      %v675 = vrot.slane %v654, %v674
      %v676 = vlaneseq
      %v677 = vshrl.u32 %v676, 7
      %v678 = vsub.s32 0, %v677
      %v679 = vrot.slane %v655, %v678
      %v680 = vmul.f32 %v658, %v675
      %v681 = vmul.f32 %v658, %v679
      %v682 = vmul.f32 %v662, %v675
      %v683 = vmul.f32 %v662, %v679
      %v684 = vmul.f32 %v666, %v675
      %v685 = vmul.f32 %v666, %v679
      %v686 = vmul.f32 %v670, %v675
      %v687 = vmul.f32 %v670, %v679
      %v688 = vadd.f32 %v626, %v680
      %v689 = vadd.f32 %v627, %v681
      %v690 = vadd.f32 %v628, %v682
      %v691 = vadd.f32 %v629, %v683
      %v692 = vadd.f32 %v630, %v684
      %v693 = vadd.f32 %v631, %v685
      %v694 = vadd.f32 %v632, %v686
      %v695 = vadd.f32 %v633, %v687
      %696 = vrot.lane.b32.xlu0 %v308, 17
      %v697 = vpop.permute.xlu0 %696
      %698 = vrot.lane.b32.xlu0 %v312, 17
      %v699 = vpop.permute.xlu0 %698
      %vm700 = vcmp.lt.s32.totalorder %v320, 17
      %v701 = vsel %vm700, %v697, %v699
      %v702 = vsel %vm700, %v699, %v697
      %s703 = scalar_lea.vmem %s1, 6
      %v704 = vld [vmem:[%s703] ss:$8 sm:$0x3]
      %v706 = vlaneseq
      %v707 = vshrl.u32 %v706, 7
      %v708 = vsub.s32 0, %v707
      %v709 = vrot.slane %v704, %v708
      %v710 = vlaneseq
      %v711 = vshrl.u32 %v710, 7
      %v712 = vsub.s32 1, %v711
      %v713 = vrot.slane %v704, %v712
      %v716 = vmul.f32 %v702, %v709
      %v717 = vmul.f32 %v701, %v713
      %718 = vset.pattern.permute.xlu0 6
      %719 = vperm.xlu0 %718, %v338
      %v720 = vpop.permute.xlu0 %719
      %722 = vset.pattern.permute.xlu0 6
      %723 = vperm.xlu0 %722, %v339
      %v724 = vpop.permute.xlu0 %723
      %726 = vset.pattern.permute.xlu0 6
      %727 = vperm.xlu0 %726, %v340
      %v728 = vpop.permute.xlu0 %727
      %730 = vset.pattern.permute.xlu0 6
      %731 = vperm.xlu0 %730, %v341
      %v732 = vpop.permute.xlu0 %731
      %v734 = vlaneseq
      %v735 = vshrl.u32 %v734, 7
      %v736 = vsub.s32 0, %v735
      %v737 = vrot.slane %v716, %v736
      %v738 = vlaneseq
      %v739 = vshrl.u32 %v738, 7
      %v740 = vsub.s32 0, %v739
      %v741 = vrot.slane %v717, %v740
      %v742 = vmul.f32 %v720, %v737
      %v743 = vmul.f32 %v720, %v741
      %v744 = vmul.f32 %v724, %v737
      %v745 = vmul.f32 %v724, %v741
      %v746 = vmul.f32 %v728, %v737
      %v747 = vmul.f32 %v728, %v741
      %v748 = vmul.f32 %v732, %v737
      %v749 = vmul.f32 %v732, %v741
      %v750 = vadd.f32 %v688, %v742
      %v751 = vadd.f32 %v689, %v743
      %v752 = vadd.f32 %v690, %v744
      %v753 = vadd.f32 %v691, %v745
      %v754 = vadd.f32 %v692, %v746
      %v755 = vadd.f32 %v693, %v747
      %v756 = vadd.f32 %v694, %v748
      %v757 = vadd.f32 %v695, %v749
      %758 = vrot.lane.b32.xlu0 %v308, 16
      %v759 = vpop.permute.xlu0 %758
      %760 = vrot.lane.b32.xlu0 %v312, 16
      %v761 = vpop.permute.xlu0 %760
      %vm762 = vcmp.lt.s32.totalorder %v320, 16
      %v763 = vsel %vm762, %v759, %v761
      %v764 = vsel %vm762, %v761, %v759
      %s765 = scalar_lea.vmem %s1, 7
      %v766 = vld [vmem:[%s765] ss:$8 sm:$0x3]
      %v768 = vlaneseq
      %v769 = vshrl.u32 %v768, 7
      %v770 = vsub.s32 0, %v769
      %v771 = vrot.slane %v766, %v770
      %v772 = vlaneseq
      %v773 = vshrl.u32 %v772, 7
      %v774 = vsub.s32 1, %v773
      %v775 = vrot.slane %v766, %v774
      %v778 = vmul.f32 %v764, %v771
      %v779 = vmul.f32 %v763, %v775
      %780 = vset.pattern.permute.xlu0 7
      %781 = vperm.xlu0 %780, %v338
      %v782 = vpop.permute.xlu0 %781
      %784 = vset.pattern.permute.xlu0 7
      %785 = vperm.xlu0 %784, %v339
      %v786 = vpop.permute.xlu0 %785
      %788 = vset.pattern.permute.xlu0 7
      %789 = vperm.xlu0 %788, %v340
      %v790 = vpop.permute.xlu0 %789
      %792 = vset.pattern.permute.xlu0 7
      %793 = vperm.xlu0 %792, %v341
      %v794 = vpop.permute.xlu0 %793
      %v796 = vlaneseq
      %v797 = vshrl.u32 %v796, 7
      %v798 = vsub.s32 0, %v797
      %v799 = vrot.slane %v778, %v798
      %v800 = vlaneseq
      %v801 = vshrl.u32 %v800, 7
      %v802 = vsub.s32 0, %v801
      %v803 = vrot.slane %v779, %v802
      %v804 = vmul.f32 %v782, %v799
      %v805 = vmul.f32 %v782, %v803
      %v806 = vmul.f32 %v786, %v799
      %v807 = vmul.f32 %v786, %v803
      %v808 = vmul.f32 %v790, %v799
      %v809 = vmul.f32 %v790, %v803
      %v810 = vmul.f32 %v794, %v799
      %v811 = vmul.f32 %v794, %v803
      %v812 = vadd.f32 %v750, %v804
      %v813 = vadd.f32 %v751, %v805
      %v814 = vadd.f32 %v752, %v806
      %v815 = vadd.f32 %v753, %v807
      %v816 = vadd.f32 %v754, %v808
      %v817 = vadd.f32 %v755, %v809
      %v818 = vadd.f32 %v756, %v810
      %v819 = vadd.f32 %v757, %v811
      %820 = vrot.lane.b32.xlu0 %v308, 15
      %v821 = vpop.permute.xlu0 %820
      %822 = vrot.lane.b32.xlu0 %v312, 15
      %v823 = vpop.permute.xlu0 %822
      %vm824 = vcmp.lt.s32.totalorder %v320, 15
      %v825 = vsel %vm824, %v821, %v823
      %v826 = vsel %vm824, %v823, %v821
      %s827 = scalar_lea.vmem %s1, 16
      %v828 = vld [vmem:[%s827] ss:$8 sm:$0x3]
      %v830 = vlaneseq
      %v831 = vshrl.u32 %v830, 7
      %v832 = vsub.s32 0, %v831
      %v833 = vrot.slane %v828, %v832
      %v834 = vlaneseq
      %v835 = vshrl.u32 %v834, 7
      %v836 = vsub.s32 1, %v835
      %v837 = vrot.slane %v828, %v836
      %v840 = vmul.f32 %v826, %v833
      %v841 = vmul.f32 %v825, %v837
      %842 = vset.pattern.permute.xlu0 8
      %843 = vperm.xlu0 %842, %v338
      %v844 = vpop.permute.xlu0 %843
      %846 = vset.pattern.permute.xlu0 8
      %847 = vperm.xlu0 %846, %v339
      %v848 = vpop.permute.xlu0 %847
      %850 = vset.pattern.permute.xlu0 8
      %851 = vperm.xlu0 %850, %v340
      %v852 = vpop.permute.xlu0 %851
      %854 = vset.pattern.permute.xlu0 8
      %855 = vperm.xlu0 %854, %v341
      %v856 = vpop.permute.xlu0 %855
      %v858 = vlaneseq
      %v859 = vshrl.u32 %v858, 7
      %v860 = vsub.s32 0, %v859
      %v861 = vrot.slane %v840, %v860
      %v862 = vlaneseq
      %v863 = vshrl.u32 %v862, 7
      %v864 = vsub.s32 0, %v863
      %v865 = vrot.slane %v841, %v864
      %v866 = vmul.f32 %v844, %v861
      %v867 = vmul.f32 %v844, %v865
      %v868 = vmul.f32 %v848, %v861
      %v869 = vmul.f32 %v848, %v865
      %v870 = vmul.f32 %v852, %v861
      %v871 = vmul.f32 %v852, %v865
      %v872 = vmul.f32 %v856, %v861
      %v873 = vmul.f32 %v856, %v865
      %v874 = vadd.f32 %v812, %v866
      %v875 = vadd.f32 %v813, %v867
      %v876 = vadd.f32 %v814, %v868
      %v877 = vadd.f32 %v815, %v869
      %v878 = vadd.f32 %v816, %v870
      %v879 = vadd.f32 %v817, %v871
      %v880 = vadd.f32 %v818, %v872
      %v881 = vadd.f32 %v819, %v873
      %882 = vrot.lane.b32.xlu0 %v308, 14
      %v883 = vpop.permute.xlu0 %882
      %884 = vrot.lane.b32.xlu0 %v312, 14
      %v885 = vpop.permute.xlu0 %884
      %vm886 = vcmp.lt.s32.totalorder %v320, 14
      %v887 = vsel %vm886, %v883, %v885
      %v888 = vsel %vm886, %v885, %v883
      %s889 = scalar_lea.vmem %s1, 17
      %v890 = vld [vmem:[%s889] ss:$8 sm:$0x3]
      %v892 = vlaneseq
      %v893 = vshrl.u32 %v892, 7
      %v894 = vsub.s32 0, %v893
      %v895 = vrot.slane %v890, %v894
      %v896 = vlaneseq
      %v897 = vshrl.u32 %v896, 7
      %v898 = vsub.s32 1, %v897
      %v899 = vrot.slane %v890, %v898
      %v902 = vmul.f32 %v888, %v895
      %v903 = vmul.f32 %v887, %v899
      %904 = vset.pattern.permute.xlu0 9
      %905 = vperm.xlu0 %904, %v338
      %v906 = vpop.permute.xlu0 %905
      %908 = vset.pattern.permute.xlu0 9
      %909 = vperm.xlu0 %908, %v339
      %v910 = vpop.permute.xlu0 %909
      %912 = vset.pattern.permute.xlu0 9
      %913 = vperm.xlu0 %912, %v340
      %v914 = vpop.permute.xlu0 %913
      %916 = vset.pattern.permute.xlu0 9
      %917 = vperm.xlu0 %916, %v341
      %v918 = vpop.permute.xlu0 %917
      %v920 = vlaneseq
      %v921 = vshrl.u32 %v920, 7
      %v922 = vsub.s32 0, %v921
      %v923 = vrot.slane %v902, %v922
      %v924 = vlaneseq
      %v925 = vshrl.u32 %v924, 7
      %v926 = vsub.s32 0, %v925
      %v927 = vrot.slane %v903, %v926
      %v928 = vmul.f32 %v906, %v923
      %v929 = vmul.f32 %v906, %v927
      %v930 = vmul.f32 %v910, %v923
      %v931 = vmul.f32 %v910, %v927
      %v932 = vmul.f32 %v914, %v923
      %v933 = vmul.f32 %v914, %v927
      %v934 = vmul.f32 %v918, %v923
      %v935 = vmul.f32 %v918, %v927
      %v936 = vadd.f32 %v874, %v928
      %v937 = vadd.f32 %v875, %v929
      %v938 = vadd.f32 %v876, %v930
      %v939 = vadd.f32 %v877, %v931
      %v940 = vadd.f32 %v878, %v932
      %v941 = vadd.f32 %v879, %v933
      %v942 = vadd.f32 %v880, %v934
      %v943 = vadd.f32 %v881, %v935
      %944 = vrot.lane.b32.xlu0 %v308, 2
      %v945 = vpop.permute.xlu0 %944
      %946 = vrot.lane.b32.xlu0 %v312, 2
      %v947 = vpop.permute.xlu0 %946
      %vm948 = vcmp.lt.s32.totalorder %v320, 2
      %v949 = vsel %vm948, %v945, %v947
      %v950 = vsel %vm948, %v947, %v945
      %s951 = scalar_lea.vmem %s1, 18
      %v952 = vld [vmem:[%s951] ss:$8 sm:$0x3]
      %v954 = vlaneseq
      %v955 = vshrl.u32 %v954, 7
      %v956 = vsub.s32 0, %v955
      %v957 = vrot.slane %v952, %v956
      %v958 = vlaneseq
      %v959 = vshrl.u32 %v958, 7
      %v960 = vsub.s32 1, %v959
      %v961 = vrot.slane %v952, %v960
      %v964 = vmul.f32 %v950, %v957
      %v965 = vmul.f32 %v949, %v961
      %966 = vset.pattern.permute.xlu0 10
      %967 = vperm.xlu0 %966, %v338
      %v968 = vpop.permute.xlu0 %967
      %970 = vset.pattern.permute.xlu0 10
      %971 = vperm.xlu0 %970, %v339
      %v972 = vpop.permute.xlu0 %971
      %974 = vset.pattern.permute.xlu0 10
      %975 = vperm.xlu0 %974, %v340
      %v976 = vpop.permute.xlu0 %975
      %978 = vset.pattern.permute.xlu0 10
      %979 = vperm.xlu0 %978, %v341
      %v980 = vpop.permute.xlu0 %979
      %v982 = vlaneseq
      %v983 = vshrl.u32 %v982, 7
      %v984 = vsub.s32 0, %v983
      %v985 = vrot.slane %v964, %v984
      %v986 = vlaneseq
      %v987 = vshrl.u32 %v986, 7
      %v988 = vsub.s32 0, %v987
      %v989 = vrot.slane %v965, %v988
      %v990 = vmul.f32 %v968, %v985
      %v991 = vmul.f32 %v968, %v989
      %v992 = vmul.f32 %v972, %v985
      %v993 = vmul.f32 %v972, %v989
      %v994 = vmul.f32 %v976, %v985
      %v995 = vmul.f32 %v976, %v989
      %v996 = vmul.f32 %v980, %v985
      %v997 = vmul.f32 %v980, %v989
      %v998 = vadd.f32 %v936, %v990
      %v999 = vadd.f32 %v937, %v991
      %v1000 = vadd.f32 %v938, %v992
      %v1001 = vadd.f32 %v939, %v993
      %v1002 = vadd.f32 %v940, %v994
      %v1003 = vadd.f32 %v941, %v995
      %v1004 = vadd.f32 %v942, %v996
      %v1005 = vadd.f32 %v943, %v997
      %1006 = vrot.lane.b32.xlu0 %v308, 1
      %v1007 = vpop.permute.xlu0 %1006
      %1008 = vrot.lane.b32.xlu0 %v312, 1
      %v1009 = vpop.permute.xlu0 %1008
      %vm1010 = vcmp.lt.s32.totalorder %v320, 1
      %v1011 = vsel %vm1010, %v1007, %v1009
      %v1012 = vsel %vm1010, %v1009, %v1007
      %s1013 = scalar_lea.vmem %s1, 19
      %v1014 = vld [vmem:[%s1013] ss:$8 sm:$0x3]
      %v1016 = vlaneseq
      %v1017 = vshrl.u32 %v1016, 7
      %v1018 = vsub.s32 0, %v1017
      %v1019 = vrot.slane %v1014, %v1018
      %v1020 = vlaneseq
      %v1021 = vshrl.u32 %v1020, 7
      %v1022 = vsub.s32 1, %v1021
      %v1023 = vrot.slane %v1014, %v1022
      %v1026 = vmul.f32 %v1012, %v1019
      %v1027 = vmul.f32 %v1011, %v1023
      %1028 = vset.pattern.permute.xlu0 11
      %1029 = vperm.xlu0 %1028, %v338
      %v1030 = vpop.permute.xlu0 %1029
      %1032 = vset.pattern.permute.xlu0 11
      %1033 = vperm.xlu0 %1032, %v339
      %v1034 = vpop.permute.xlu0 %1033
      %1036 = vset.pattern.permute.xlu0 11
      %1037 = vperm.xlu0 %1036, %v340
      %v1038 = vpop.permute.xlu0 %1037
      %1040 = vset.pattern.permute.xlu0 11
      %1041 = vperm.xlu0 %1040, %v341
      %v1042 = vpop.permute.xlu0 %1041
      %v1044 = vlaneseq
      %v1045 = vshrl.u32 %v1044, 7
      %v1046 = vsub.s32 0, %v1045
      %v1047 = vrot.slane %v1026, %v1046
      %v1048 = vlaneseq
      %v1049 = vshrl.u32 %v1048, 7
      %v1050 = vsub.s32 0, %v1049
      %v1051 = vrot.slane %v1027, %v1050
      %v1052 = vmul.f32 %v1030, %v1047
      %v1053 = vmul.f32 %v1030, %v1051
      %v1054 = vmul.f32 %v1034, %v1047
      %v1055 = vmul.f32 %v1034, %v1051
      %v1056 = vmul.f32 %v1038, %v1047
      %v1057 = vmul.f32 %v1038, %v1051
      %v1058 = vmul.f32 %v1042, %v1047
      %v1059 = vmul.f32 %v1042, %v1051
      %v1060 = vadd.f32 %v998, %v1052
      %v1061 = vadd.f32 %v999, %v1053
      %v1062 = vadd.f32 %v1000, %v1054
      %v1063 = vadd.f32 %v1001, %v1055
      %v1064 = vadd.f32 %v1002, %v1056
      %v1065 = vadd.f32 %v1003, %v1057
      %v1066 = vadd.f32 %v1004, %v1058
      %v1067 = vadd.f32 %v1005, %v1059
      %s1068 = scalar_lea.vmem %s1, 20
      %v1069 = vld [vmem:[%s1068] ss:$8 sm:$0x3]
      %v1070 = vmul.f32 %v303, %v1069
      %1071 = vset.pattern.permute.xlu0 12
      %1072 = vperm.xlu0 %1071, %v338
      %v1073 = vpop.permute.xlu0 %1072
      %1075 = vset.pattern.permute.xlu0 12
      %1076 = vperm.xlu0 %1075, %v339
      %v1077 = vpop.permute.xlu0 %1076
      %1079 = vset.pattern.permute.xlu0 12
      %1080 = vperm.xlu0 %1079, %v340
      %v1081 = vpop.permute.xlu0 %1080
      %1083 = vset.pattern.permute.xlu0 12
      %1084 = vperm.xlu0 %1083, %v341
      %v1085 = vpop.permute.xlu0 %1084
      %v1088 = vlaneseq
      %v1089 = vshrl.u32 %v1088, 7
      %v1090 = vsub.s32 0, %v1089
      %v1091 = vrot.slane %v1070, %v1090
      %v1092 = vlaneseq
      %v1093 = vshrl.u32 %v1092, 7
      %v1094 = vsub.s32 1, %v1093
      %v1095 = vrot.slane %v1070, %v1094
      %v1098 = vmul.f32 %v1073, %v1091
      %v1099 = vmul.f32 %v1073, %v1095
      %v1100 = vmul.f32 %v1077, %v1091
      %v1101 = vmul.f32 %v1077, %v1095
      %v1102 = vmul.f32 %v1081, %v1091
      %v1103 = vmul.f32 %v1081, %v1095
      %v1104 = vmul.f32 %v1085, %v1091
      %v1105 = vmul.f32 %v1085, %v1095
      %v1106 = vadd.f32 %v1060, %v1098
      %v1107 = vadd.f32 %v1061, %v1099
      %v1108 = vadd.f32 %v1062, %v1100
      %v1109 = vadd.f32 %v1063, %v1101
      %v1110 = vadd.f32 %v1064, %v1102
      %v1111 = vadd.f32 %v1065, %v1103
      %v1112 = vadd.f32 %v1066, %v1104
      %v1113 = vadd.f32 %v1067, %v1105
      %1114 = vrot.lane.b32.xlu0 %v308, 127
      %v1115 = vpop.permute.xlu0 %1114
      %1116 = vrot.lane.b32.xlu0 %v312, 127
      %v1117 = vpop.permute.xlu0 %1116
      %vm1118 = vcmp.lt.s32.totalorder %v320, 127
      %v1119 = vsel %vm1118, %v1115, %v1117
      %v1120 = vsel %vm1118, %v1117, %v1115
      %s1121 = scalar_lea.vmem %s1, 21
      %v1122 = vld [vmem:[%s1121] ss:$8 sm:$0x3]
      %v1124 = vlaneseq
      %v1125 = vshrl.u32 %v1124, 7
      %v1126 = vsub.s32 0, %v1125
      %v1127 = vrot.slane %v1122, %v1126
      %v1128 = vlaneseq
      %v1129 = vshrl.u32 %v1128, 7
      %v1130 = vsub.s32 1, %v1129
      %v1131 = vrot.slane %v1122, %v1130
      %v1134 = vmul.f32 %v1119, %v1127
      %v1135 = vmul.f32 %v1120, %v1131
      %1136 = vset.pattern.permute.xlu0 13
      %1137 = vperm.xlu0 %1136, %v338
      %v1138 = vpop.permute.xlu0 %1137
      %1140 = vset.pattern.permute.xlu0 13
      %1141 = vperm.xlu0 %1140, %v339
      %v1142 = vpop.permute.xlu0 %1141
      %1144 = vset.pattern.permute.xlu0 13
      %1145 = vperm.xlu0 %1144, %v340
      %v1146 = vpop.permute.xlu0 %1145
      %1148 = vset.pattern.permute.xlu0 13
      %1149 = vperm.xlu0 %1148, %v341
      %v1150 = vpop.permute.xlu0 %1149
      %v1152 = vlaneseq
      %v1153 = vshrl.u32 %v1152, 7
      %v1154 = vsub.s32 0, %v1153
      %v1155 = vrot.slane %v1134, %v1154
      %v1156 = vlaneseq
      %v1157 = vshrl.u32 %v1156, 7
      %v1158 = vsub.s32 0, %v1157
      %v1159 = vrot.slane %v1135, %v1158
      %v1160 = vmul.f32 %v1138, %v1155
      %v1161 = vmul.f32 %v1138, %v1159
      %v1162 = vmul.f32 %v1142, %v1155
      %v1163 = vmul.f32 %v1142, %v1159
      %v1164 = vmul.f32 %v1146, %v1155
      %v1165 = vmul.f32 %v1146, %v1159
      %v1166 = vmul.f32 %v1150, %v1155
      %v1167 = vmul.f32 %v1150, %v1159
      %v1168 = vadd.f32 %v1106, %v1160
      %v1169 = vadd.f32 %v1107, %v1161
      %v1170 = vadd.f32 %v1108, %v1162
      %v1171 = vadd.f32 %v1109, %v1163
      %v1172 = vadd.f32 %v1110, %v1164
      %v1173 = vadd.f32 %v1111, %v1165
      %v1174 = vadd.f32 %v1112, %v1166
      %v1175 = vadd.f32 %v1113, %v1167
      %1176 = vrot.lane.b32.xlu0 %v308, 126
      %v1177 = vpop.permute.xlu0 %1176
      %1178 = vrot.lane.b32.xlu0 %v312, 126
      %v1179 = vpop.permute.xlu0 %1178
      %vm1180 = vcmp.lt.s32.totalorder %v320, 126
      %v1181 = vsel %vm1180, %v1177, %v1179
      %v1182 = vsel %vm1180, %v1179, %v1177
      %s1183 = scalar_lea.vmem %s1, 22
      %v1184 = vld [vmem:[%s1183] ss:$8 sm:$0x3]
      %v1186 = vlaneseq
      %v1187 = vshrl.u32 %v1186, 7
      %v1188 = vsub.s32 0, %v1187
      %v1189 = vrot.slane %v1184, %v1188
      %v1190 = vlaneseq
      %v1191 = vshrl.u32 %v1190, 7
      %v1192 = vsub.s32 1, %v1191
      %v1193 = vrot.slane %v1184, %v1192
      %v1196 = vmul.f32 %v1181, %v1189
      %v1197 = vmul.f32 %v1182, %v1193
      %1198 = vset.pattern.permute.xlu0 14
      %1199 = vperm.xlu0 %1198, %v338
      %v1200 = vpop.permute.xlu0 %1199
      %1202 = vset.pattern.permute.xlu0 14
      %1203 = vperm.xlu0 %1202, %v339
      %v1204 = vpop.permute.xlu0 %1203
      %1206 = vset.pattern.permute.xlu0 14
      %1207 = vperm.xlu0 %1206, %v340
      %v1208 = vpop.permute.xlu0 %1207
      %1210 = vset.pattern.permute.xlu0 14
      %1211 = vperm.xlu0 %1210, %v341
      %v1212 = vpop.permute.xlu0 %1211
      %v1214 = vlaneseq
      %v1215 = vshrl.u32 %v1214, 7
      %v1216 = vsub.s32 0, %v1215
      %v1217 = vrot.slane %v1196, %v1216
      %v1218 = vlaneseq
      %v1219 = vshrl.u32 %v1218, 7
      %v1220 = vsub.s32 0, %v1219
      %v1221 = vrot.slane %v1197, %v1220
      %v1222 = vmul.f32 %v1200, %v1217
      %v1223 = vmul.f32 %v1200, %v1221
      %v1224 = vmul.f32 %v1204, %v1217
      %v1225 = vmul.f32 %v1204, %v1221
      %v1226 = vmul.f32 %v1208, %v1217
      %v1227 = vmul.f32 %v1208, %v1221
      %v1228 = vmul.f32 %v1212, %v1217
      %v1229 = vmul.f32 %v1212, %v1221
      %v1230 = vadd.f32 %v1168, %v1222
      %v1231 = vadd.f32 %v1169, %v1223
      %v1232 = vadd.f32 %v1170, %v1224
      %v1233 = vadd.f32 %v1171, %v1225
      %v1234 = vadd.f32 %v1172, %v1226
      %v1235 = vadd.f32 %v1173, %v1227
      %v1236 = vadd.f32 %v1174, %v1228
      %v1237 = vadd.f32 %v1175, %v1229
      %1238 = vrot.lane.b32.xlu0 %v308, 114
      %v1239 = vpop.permute.xlu0 %1238
      %1240 = vrot.lane.b32.xlu0 %v312, 114
      %v1241 = vpop.permute.xlu0 %1240
      %vm1242 = vcmp.lt.s32.totalorder %v320, 114
      %v1243 = vsel %vm1242, %v1239, %v1241
      %v1244 = vsel %vm1242, %v1241, %v1239
      %s1245 = scalar_lea.vmem %s1, 23
      %v1246 = vld [vmem:[%s1245] ss:$8 sm:$0x3]
      %v1248 = vlaneseq
      %v1249 = vshrl.u32 %v1248, 7
      %v1250 = vsub.s32 0, %v1249
      %v1251 = vrot.slane %v1246, %v1250
      %v1252 = vlaneseq
      %v1253 = vshrl.u32 %v1252, 7
      %v1254 = vsub.s32 1, %v1253
      %v1255 = vrot.slane %v1246, %v1254
      %v1258 = vmul.f32 %v1243, %v1251
      %v1259 = vmul.f32 %v1244, %v1255
      %1260 = vset.pattern.permute.xlu0 15
      %1261 = vperm.xlu0 %1260, %v338
      %v1262 = vpop.permute.xlu0 %1261
      %1264 = vset.pattern.permute.xlu0 15
      %1265 = vperm.xlu0 %1264, %v339
      %v1266 = vpop.permute.xlu0 %1265
      %1268 = vset.pattern.permute.xlu0 15
      %1269 = vperm.xlu0 %1268, %v340
      %v1270 = vpop.permute.xlu0 %1269
      %1272 = vset.pattern.permute.xlu0 15
      %1273 = vperm.xlu0 %1272, %v341
      %v1274 = vpop.permute.xlu0 %1273
      %v1276 = vlaneseq
      %v1277 = vshrl.u32 %v1276, 7
      %v1278 = vsub.s32 0, %v1277
      %v1279 = vrot.slane %v1258, %v1278
      %v1280 = vlaneseq
      %v1281 = vshrl.u32 %v1280, 7
      %v1282 = vsub.s32 0, %v1281
      %v1283 = vrot.slane %v1259, %v1282
      %v1284 = vmul.f32 %v1262, %v1279
      %v1285 = vmul.f32 %v1262, %v1283
      %v1286 = vmul.f32 %v1266, %v1279
      %v1287 = vmul.f32 %v1266, %v1283
      %v1288 = vmul.f32 %v1270, %v1279
      %v1289 = vmul.f32 %v1270, %v1283
      %v1290 = vmul.f32 %v1274, %v1279
      %v1291 = vmul.f32 %v1274, %v1283
      %v1292 = vadd.f32 %v1230, %v1284
      %v1293 = vadd.f32 %v1231, %v1285
      %v1294 = vadd.f32 %v1232, %v1286
      %v1295 = vadd.f32 %v1233, %v1287
      %v1296 = vadd.f32 %v1234, %v1288
      %v1297 = vadd.f32 %v1235, %v1289
      %v1298 = vadd.f32 %v1236, %v1290
      %v1299 = vadd.f32 %v1237, %v1291
      %1300 = vrot.lane.b32.xlu0 %v308, 113
      %v1301 = vpop.permute.xlu0 %1300
      %1302 = vrot.lane.b32.xlu0 %v312, 113
      %v1303 = vpop.permute.xlu0 %1302
      %vm1304 = vcmp.lt.s32.totalorder %v320, 113
      %v1305 = vsel %vm1304, %v1301, %v1303
      %v1306 = vsel %vm1304, %v1303, %v1301
      %s1307 = scalar_lea.vmem %s1, 32
      %v1308 = vld [vmem:[%s1307] ss:$8 sm:$0x3]
      %v1310 = vlaneseq
      %v1311 = vshrl.u32 %v1310, 7
      %v1312 = vsub.s32 0, %v1311
      %v1313 = vrot.slane %v1308, %v1312
      %v1314 = vlaneseq
      %v1315 = vshrl.u32 %v1314, 7
      %v1316 = vsub.s32 1, %v1315
      %v1317 = vrot.slane %v1308, %v1316
      %v1320 = vmul.f32 %v1305, %v1313
      %v1321 = vmul.f32 %v1306, %v1317
      %1322 = vset.pattern.permute.xlu0 16
      %1323 = vperm.xlu0 %1322, %v338
      %v1324 = vpop.permute.xlu0 %1323
      %1326 = vset.pattern.permute.xlu0 16
      %1327 = vperm.xlu0 %1326, %v339
      %v1328 = vpop.permute.xlu0 %1327
      %1330 = vset.pattern.permute.xlu0 16
      %1331 = vperm.xlu0 %1330, %v340
      %v1332 = vpop.permute.xlu0 %1331
      %1334 = vset.pattern.permute.xlu0 16
      %1335 = vperm.xlu0 %1334, %v341
      %v1336 = vpop.permute.xlu0 %1335
      %v1338 = vlaneseq
      %v1339 = vshrl.u32 %v1338, 7
      %v1340 = vsub.s32 0, %v1339
      %v1341 = vrot.slane %v1320, %v1340
      %v1342 = vlaneseq
      %v1343 = vshrl.u32 %v1342, 7
      %v1344 = vsub.s32 0, %v1343
      %v1345 = vrot.slane %v1321, %v1344
      %v1346 = vmul.f32 %v1324, %v1341
      %v1347 = vmul.f32 %v1324, %v1345
      %v1348 = vmul.f32 %v1328, %v1341
      %v1349 = vmul.f32 %v1328, %v1345
      %v1350 = vmul.f32 %v1332, %v1341
      %v1351 = vmul.f32 %v1332, %v1345
      %v1352 = vmul.f32 %v1336, %v1341
      %v1353 = vmul.f32 %v1336, %v1345
      %v1354 = vadd.f32 %v1292, %v1346
      %v1355 = vadd.f32 %v1293, %v1347
      %v1356 = vadd.f32 %v1294, %v1348
      %v1357 = vadd.f32 %v1295, %v1349
      %v1358 = vadd.f32 %v1296, %v1350
      %v1359 = vadd.f32 %v1297, %v1351
      %v1360 = vadd.f32 %v1298, %v1352
      %v1361 = vadd.f32 %v1299, %v1353
      %1362 = vrot.lane.b32.xlu0 %v308, 112
      %v1363 = vpop.permute.xlu0 %1362
      %1364 = vrot.lane.b32.xlu0 %v312, 112
      %v1365 = vpop.permute.xlu0 %1364
      %vm1366 = vcmp.lt.s32.totalorder %v320, 112
      %v1367 = vsel %vm1366, %v1363, %v1365
      %v1368 = vsel %vm1366, %v1365, %v1363
      %s1369 = scalar_lea.vmem %s1, 33
      %v1370 = vld [vmem:[%s1369] ss:$8 sm:$0x3]
      %v1372 = vlaneseq
      %v1373 = vshrl.u32 %v1372, 7
      %v1374 = vsub.s32 0, %v1373
      %v1375 = vrot.slane %v1370, %v1374
      %v1376 = vlaneseq
      %v1377 = vshrl.u32 %v1376, 7
      %v1378 = vsub.s32 1, %v1377
      %v1379 = vrot.slane %v1370, %v1378
      %v1382 = vmul.f32 %v1367, %v1375
      %v1383 = vmul.f32 %v1368, %v1379
      %1384 = vset.pattern.permute.xlu0 17
      %1385 = vperm.xlu0 %1384, %v338
      %v1386 = vpop.permute.xlu0 %1385
      %1388 = vset.pattern.permute.xlu0 17
      %1389 = vperm.xlu0 %1388, %v339
      %v1390 = vpop.permute.xlu0 %1389
      %1392 = vset.pattern.permute.xlu0 17
      %1393 = vperm.xlu0 %1392, %v340
      %v1394 = vpop.permute.xlu0 %1393
      %1396 = vset.pattern.permute.xlu0 17
      %1397 = vperm.xlu0 %1396, %v341
      %v1398 = vpop.permute.xlu0 %1397
      %v1400 = vlaneseq
      %v1401 = vshrl.u32 %v1400, 7
      %v1402 = vsub.s32 0, %v1401
      %v1403 = vrot.slane %v1382, %v1402
      %v1404 = vlaneseq
      %v1405 = vshrl.u32 %v1404, 7
      %v1406 = vsub.s32 0, %v1405
      %v1407 = vrot.slane %v1383, %v1406
      %v1408 = vmul.f32 %v1386, %v1403
      %v1409 = vmul.f32 %v1386, %v1407
      %v1410 = vmul.f32 %v1390, %v1403
      %v1411 = vmul.f32 %v1390, %v1407
      %v1412 = vmul.f32 %v1394, %v1403
      %v1413 = vmul.f32 %v1394, %v1407
      %v1414 = vmul.f32 %v1398, %v1403
      %v1415 = vmul.f32 %v1398, %v1407
      %v1416 = vadd.f32 %v1354, %v1408
      %v1417 = vadd.f32 %v1355, %v1409
      %v1418 = vadd.f32 %v1356, %v1410
      %v1419 = vadd.f32 %v1357, %v1411
      %v1420 = vadd.f32 %v1358, %v1412
      %v1421 = vadd.f32 %v1359, %v1413
      %v1422 = vadd.f32 %v1360, %v1414
      %v1423 = vadd.f32 %v1361, %v1415
      %1424 = vrot.lane.b32.xlu0 %v308, 111
      %v1425 = vpop.permute.xlu0 %1424
      %1426 = vrot.lane.b32.xlu0 %v312, 111
      %v1427 = vpop.permute.xlu0 %1426
      %vm1428 = vcmp.lt.s32.totalorder %v320, 111
      %v1429 = vsel %vm1428, %v1425, %v1427
      %v1430 = vsel %vm1428, %v1427, %v1425
      %s1431 = scalar_lea.vmem %s1, 34
      %v1432 = vld [vmem:[%s1431] ss:$8 sm:$0x3]
      %v1434 = vlaneseq
      %v1435 = vshrl.u32 %v1434, 7
      %v1436 = vsub.s32 0, %v1435
      %v1437 = vrot.slane %v1432, %v1436
      %v1438 = vlaneseq
      %v1439 = vshrl.u32 %v1438, 7
      %v1440 = vsub.s32 1, %v1439
      %v1441 = vrot.slane %v1432, %v1440
      %v1444 = vmul.f32 %v1429, %v1437
      %v1445 = vmul.f32 %v1430, %v1441
      %1446 = vset.pattern.permute.xlu0 18
      %1447 = vperm.xlu0 %1446, %v338
      %v1448 = vpop.permute.xlu0 %1447
      %1450 = vset.pattern.permute.xlu0 18
      %1451 = vperm.xlu0 %1450, %v339
      %v1452 = vpop.permute.xlu0 %1451
      %1454 = vset.pattern.permute.xlu0 18
      %1455 = vperm.xlu0 %1454, %v340
      %v1456 = vpop.permute.xlu0 %1455
      %1458 = vset.pattern.permute.xlu0 18
      %1459 = vperm.xlu0 %1458, %v341
      %v1460 = vpop.permute.xlu0 %1459
      %v1462 = vlaneseq
      %v1463 = vshrl.u32 %v1462, 7
      %v1464 = vsub.s32 0, %v1463
      %v1465 = vrot.slane %v1444, %v1464
      %v1466 = vlaneseq
      %v1467 = vshrl.u32 %v1466, 7
      %v1468 = vsub.s32 0, %v1467
      %v1469 = vrot.slane %v1445, %v1468
      %v1470 = vmul.f32 %v1448, %v1465
      %v1471 = vmul.f32 %v1448, %v1469
      %v1472 = vmul.f32 %v1452, %v1465
      %v1473 = vmul.f32 %v1452, %v1469
      %v1474 = vmul.f32 %v1456, %v1465
      %v1475 = vmul.f32 %v1456, %v1469
      %v1476 = vmul.f32 %v1460, %v1465
      %v1477 = vmul.f32 %v1460, %v1469
      %v1478 = vadd.f32 %v1416, %v1470
      %v1479 = vadd.f32 %v1417, %v1471
      %v1480 = vadd.f32 %v1418, %v1472
      %v1481 = vadd.f32 %v1419, %v1473
      %v1482 = vadd.f32 %v1420, %v1474
      %v1483 = vadd.f32 %v1421, %v1475
      %v1484 = vadd.f32 %v1422, %v1476
      %v1485 = vadd.f32 %v1423, %v1477
      %1486 = vrot.lane.b32.xlu0 %v308, 110
      %v1487 = vpop.permute.xlu0 %1486
      %1488 = vrot.lane.b32.xlu0 %v312, 110
      %v1489 = vpop.permute.xlu0 %1488
      %vm1490 = vcmp.lt.s32.totalorder %v320, 110
      %v1491 = vsel %vm1490, %v1487, %v1489
      %v1492 = vsel %vm1490, %v1489, %v1487
      %s1493 = scalar_lea.vmem %s1, 35
      %v1494 = vld [vmem:[%s1493] ss:$8 sm:$0x3]
      %v1496 = vlaneseq
      %v1497 = vshrl.u32 %v1496, 7
      %v1498 = vsub.s32 0, %v1497
      %v1499 = vrot.slane %v1494, %v1498
      %v1500 = vlaneseq
      %v1501 = vshrl.u32 %v1500, 7
      %v1502 = vsub.s32 1, %v1501
      %v1503 = vrot.slane %v1494, %v1502
      %v1506 = vmul.f32 %v1491, %v1499
      %v1507 = vmul.f32 %v1492, %v1503
      %1508 = vset.pattern.permute.xlu0 19
      %1509 = vperm.xlu0 %1508, %v338
      %v1510 = vpop.permute.xlu0 %1509
      %1512 = vset.pattern.permute.xlu0 19
      %1513 = vperm.xlu0 %1512, %v339
      %v1514 = vpop.permute.xlu0 %1513
      %1516 = vset.pattern.permute.xlu0 19
      %1517 = vperm.xlu0 %1516, %v340
      %v1518 = vpop.permute.xlu0 %1517
      %1520 = vset.pattern.permute.xlu0 19
      %1521 = vperm.xlu0 %1520, %v341
      %v1522 = vpop.permute.xlu0 %1521
      %v1524 = vlaneseq
      %v1525 = vshrl.u32 %v1524, 7
      %v1526 = vsub.s32 0, %v1525
      %v1527 = vrot.slane %v1506, %v1526
      %v1528 = vlaneseq
      %v1529 = vshrl.u32 %v1528, 7
      %v1530 = vsub.s32 0, %v1529
      %v1531 = vrot.slane %v1507, %v1530
      %v1532 = vmul.f32 %v1510, %v1527
      %v1533 = vmul.f32 %v1510, %v1531
      %v1534 = vmul.f32 %v1514, %v1527
      %v1535 = vmul.f32 %v1514, %v1531
      %v1536 = vmul.f32 %v1518, %v1527
      %v1537 = vmul.f32 %v1518, %v1531
      %v1538 = vmul.f32 %v1522, %v1527
      %v1539 = vmul.f32 %v1522, %v1531
      %v1540 = vadd.f32 %v1478, %v1532
      %v1541 = vadd.f32 %v1479, %v1533
      %v1542 = vadd.f32 %v1480, %v1534
      %v1543 = vadd.f32 %v1481, %v1535
      %v1544 = vadd.f32 %v1482, %v1536
      %v1545 = vadd.f32 %v1483, %v1537
      %v1546 = vadd.f32 %v1484, %v1538
      %v1547 = vadd.f32 %v1485, %v1539
      %1548 = vrot.lane.b32.xlu0 %v308, 98
      %v1549 = vpop.permute.xlu0 %1548
      %1550 = vrot.lane.b32.xlu0 %v312, 98
      %v1551 = vpop.permute.xlu0 %1550
      %vm1552 = vcmp.lt.s32.totalorder %v320, 98
      %v1553 = vsel %vm1552, %v1549, %v1551
      %v1554 = vsel %vm1552, %v1551, %v1549
      %s1555 = scalar_lea.vmem %s1, 36
      %v1556 = vld [vmem:[%s1555] ss:$8 sm:$0x3]
      %v1558 = vlaneseq
      %v1559 = vshrl.u32 %v1558, 7
      %v1560 = vsub.s32 0, %v1559
      %v1561 = vrot.slane %v1556, %v1560
      %v1562 = vlaneseq
      %v1563 = vshrl.u32 %v1562, 7
      %v1564 = vsub.s32 1, %v1563
      %v1565 = vrot.slane %v1556, %v1564
      %v1568 = vmul.f32 %v1553, %v1561
      %v1569 = vmul.f32 %v1554, %v1565
      %1570 = vset.pattern.permute.xlu0 20
      %1571 = vperm.xlu0 %1570, %v338
      %v1572 = vpop.permute.xlu0 %1571
      %1574 = vset.pattern.permute.xlu0 20
      %1575 = vperm.xlu0 %1574, %v339
      %v1576 = vpop.permute.xlu0 %1575
      %1578 = vset.pattern.permute.xlu0 20
      %1579 = vperm.xlu0 %1578, %v340
      %v1580 = vpop.permute.xlu0 %1579
      %1582 = vset.pattern.permute.xlu0 20
      %1583 = vperm.xlu0 %1582, %v341
      %v1584 = vpop.permute.xlu0 %1583
      %v1586 = vlaneseq
      %v1587 = vshrl.u32 %v1586, 7
      %v1588 = vsub.s32 0, %v1587
      %v1589 = vrot.slane %v1568, %v1588
      %v1590 = vlaneseq
      %v1591 = vshrl.u32 %v1590, 7
      %v1592 = vsub.s32 0, %v1591
      %v1593 = vrot.slane %v1569, %v1592
      %v1594 = vmul.f32 %v1572, %v1589
      %v1595 = vmul.f32 %v1572, %v1593
      %v1596 = vmul.f32 %v1576, %v1589
      %v1597 = vmul.f32 %v1576, %v1593
      %v1598 = vmul.f32 %v1580, %v1589
      %v1599 = vmul.f32 %v1580, %v1593
      %v1600 = vmul.f32 %v1584, %v1589
      %v1601 = vmul.f32 %v1584, %v1593
      %v1602 = vadd.f32 %v1540, %v1594
      %v1603 = vadd.f32 %v1541, %v1595
      %v1604 = vadd.f32 %v1542, %v1596
      %v1605 = vadd.f32 %v1543, %v1597
      %v1606 = vadd.f32 %v1544, %v1598
      %v1607 = vadd.f32 %v1545, %v1599
      %v1608 = vadd.f32 %v1546, %v1600
      %v1609 = vadd.f32 %v1547, %v1601
      %1610 = vrot.lane.b32.xlu0 %v308, 97
      %v1611 = vpop.permute.xlu0 %1610
      %1612 = vrot.lane.b32.xlu0 %v312, 97
      %v1613 = vpop.permute.xlu0 %1612
      %vm1614 = vcmp.lt.s32.totalorder %v320, 97
      %v1615 = vsel %vm1614, %v1611, %v1613
      %v1616 = vsel %vm1614, %v1613, %v1611
      %s1617 = scalar_lea.vmem %s1, 37
      %v1618 = vld [vmem:[%s1617] ss:$8 sm:$0x3]
      %v1620 = vlaneseq
      %v1621 = vshrl.u32 %v1620, 7
      %v1622 = vsub.s32 0, %v1621
      %v1623 = vrot.slane %v1618, %v1622
      %v1624 = vlaneseq
      %v1625 = vshrl.u32 %v1624, 7
      %v1626 = vsub.s32 1, %v1625
      %v1627 = vrot.slane %v1618, %v1626
      %v1630 = vmul.f32 %v1615, %v1623
      %v1631 = vmul.f32 %v1616, %v1627
      %1632 = vset.pattern.permute.xlu0 21
      %1633 = vperm.xlu0 %1632, %v338
      %v1634 = vpop.permute.xlu0 %1633
      %1636 = vset.pattern.permute.xlu0 21
      %1637 = vperm.xlu0 %1636, %v339
      %v1638 = vpop.permute.xlu0 %1637
      %1640 = vset.pattern.permute.xlu0 21
      %1641 = vperm.xlu0 %1640, %v340
      %v1642 = vpop.permute.xlu0 %1641
      %1644 = vset.pattern.permute.xlu0 21
      %1645 = vperm.xlu0 %1644, %v341
      %v1646 = vpop.permute.xlu0 %1645
      %v1648 = vlaneseq
      %v1649 = vshrl.u32 %v1648, 7
      %v1650 = vsub.s32 0, %v1649
      %v1651 = vrot.slane %v1630, %v1650
      %v1652 = vlaneseq
      %v1653 = vshrl.u32 %v1652, 7
      %v1654 = vsub.s32 0, %v1653
      %v1655 = vrot.slane %v1631, %v1654
      %v1656 = vmul.f32 %v1634, %v1651
      %v1657 = vmul.f32 %v1634, %v1655
      %v1658 = vmul.f32 %v1638, %v1651
      %v1659 = vmul.f32 %v1638, %v1655
      %v1660 = vmul.f32 %v1642, %v1651
      %v1661 = vmul.f32 %v1642, %v1655
      %v1662 = vmul.f32 %v1646, %v1651
      %v1663 = vmul.f32 %v1646, %v1655
      %v1664 = vadd.f32 %v1602, %v1656
      %v1665 = vadd.f32 %v1603, %v1657
      %v1666 = vadd.f32 %v1604, %v1658
      %v1667 = vadd.f32 %v1605, %v1659
      %v1668 = vadd.f32 %v1606, %v1660
      %v1669 = vadd.f32 %v1607, %v1661
      %v1670 = vadd.f32 %v1608, %v1662
      %v1671 = vadd.f32 %v1609, %v1663
      %1672 = vrot.lane.b32.xlu0 %v308, 96
      %v1673 = vpop.permute.xlu0 %1672
      %1674 = vrot.lane.b32.xlu0 %v312, 96
      %v1675 = vpop.permute.xlu0 %1674
      %vm1676 = vcmp.lt.s32.totalorder %v320, 96
      %v1677 = vsel %vm1676, %v1673, %v1675
      %v1678 = vsel %vm1676, %v1675, %v1673
      %s1679 = scalar_lea.vmem %s1, 38
      %v1680 = vld [vmem:[%s1679] ss:$8 sm:$0x3]
      %v1682 = vlaneseq
      %v1683 = vshrl.u32 %v1682, 7
      %v1684 = vsub.s32 0, %v1683
      %v1685 = vrot.slane %v1680, %v1684
      %v1686 = vlaneseq
      %v1687 = vshrl.u32 %v1686, 7
      %v1688 = vsub.s32 1, %v1687
      %v1689 = vrot.slane %v1680, %v1688
      %v1692 = vmul.f32 %v1677, %v1685
      %v1693 = vmul.f32 %v1678, %v1689
      %1694 = vset.pattern.permute.xlu0 22
      %1695 = vperm.xlu0 %1694, %v338
      %v1696 = vpop.permute.xlu0 %1695
      %1698 = vset.pattern.permute.xlu0 22
      %1699 = vperm.xlu0 %1698, %v339
      %v1700 = vpop.permute.xlu0 %1699
      %1702 = vset.pattern.permute.xlu0 22
      %1703 = vperm.xlu0 %1702, %v340
      %v1704 = vpop.permute.xlu0 %1703
      %1706 = vset.pattern.permute.xlu0 22
      %1707 = vperm.xlu0 %1706, %v341
      %v1708 = vpop.permute.xlu0 %1707
      %v1710 = vlaneseq
      %v1711 = vshrl.u32 %v1710, 7
      %v1712 = vsub.s32 0, %v1711
      %v1713 = vrot.slane %v1692, %v1712
      %v1714 = vlaneseq
      %v1715 = vshrl.u32 %v1714, 7
      %v1716 = vsub.s32 0, %v1715
      %v1717 = vrot.slane %v1693, %v1716
      %v1718 = vmul.f32 %v1696, %v1713
      %v1719 = vmul.f32 %v1696, %v1717
      %v1720 = vmul.f32 %v1700, %v1713
      %v1721 = vmul.f32 %v1700, %v1717
      %v1722 = vmul.f32 %v1704, %v1713
      %v1723 = vmul.f32 %v1704, %v1717
      %v1724 = vmul.f32 %v1708, %v1713
      %v1725 = vmul.f32 %v1708, %v1717
      %v1726 = vadd.f32 %v1664, %v1718
      %v1727 = vadd.f32 %v1665, %v1719
      %v1728 = vadd.f32 %v1666, %v1720
      %v1729 = vadd.f32 %v1667, %v1721
      %v1730 = vadd.f32 %v1668, %v1722
      %v1731 = vadd.f32 %v1669, %v1723
      %v1732 = vadd.f32 %v1670, %v1724
      %v1733 = vadd.f32 %v1671, %v1725
      %1734 = vrot.lane.b32.xlu0 %v308, 95
      %v1735 = vpop.permute.xlu0 %1734
      %1736 = vrot.lane.b32.xlu0 %v312, 95
      %v1737 = vpop.permute.xlu0 %1736
      %vm1738 = vcmp.lt.s32.totalorder %v320, 95
      %v1739 = vsel %vm1738, %v1735, %v1737
      %v1740 = vsel %vm1738, %v1737, %v1735
      %s1741 = scalar_lea.vmem %s1, 39
      %v1742 = vld [vmem:[%s1741] ss:$8 sm:$0x3]
      %v1744 = vlaneseq
      %v1745 = vshrl.u32 %v1744, 7
      %v1746 = vsub.s32 0, %v1745
      %v1747 = vrot.slane %v1742, %v1746
      %v1748 = vlaneseq
      %v1749 = vshrl.u32 %v1748, 7
      %v1750 = vsub.s32 1, %v1749
      %v1751 = vrot.slane %v1742, %v1750
      %v1754 = vmul.f32 %v1739, %v1747
      %v1755 = vmul.f32 %v1740, %v1751
      %1756 = vset.pattern.permute.xlu0 23
      %1757 = vperm.xlu0 %1756, %v338
      %v1758 = vpop.permute.xlu0 %1757
      %1760 = vset.pattern.permute.xlu0 23
      %1761 = vperm.xlu0 %1760, %v339
      %v1762 = vpop.permute.xlu0 %1761
      %1764 = vset.pattern.permute.xlu0 23
      %1765 = vperm.xlu0 %1764, %v340
      %v1766 = vpop.permute.xlu0 %1765
      %1768 = vset.pattern.permute.xlu0 23
      %1769 = vperm.xlu0 %1768, %v341
      %v1770 = vpop.permute.xlu0 %1769
      %v1772 = vlaneseq
      %v1773 = vshrl.u32 %v1772, 7
      %v1774 = vsub.s32 0, %v1773
      %v1775 = vrot.slane %v1754, %v1774
      %v1776 = vlaneseq
      %v1777 = vshrl.u32 %v1776, 7
      %v1778 = vsub.s32 0, %v1777
      %v1779 = vrot.slane %v1755, %v1778
      %v1780 = vmul.f32 %v1758, %v1775
      %v1781 = vmul.f32 %v1758, %v1779
      %v1782 = vmul.f32 %v1762, %v1775
      %v1783 = vmul.f32 %v1762, %v1779
      %v1784 = vmul.f32 %v1766, %v1775
      %v1785 = vmul.f32 %v1766, %v1779
      %v1786 = vmul.f32 %v1770, %v1775
      %v1787 = vmul.f32 %v1770, %v1779
      %v1788 = vadd.f32 %v1726, %v1780
      %v1789 = vadd.f32 %v1727, %v1781
      %v1790 = vadd.f32 %v1728, %v1782
      %v1791 = vadd.f32 %v1729, %v1783
      %v1792 = vadd.f32 %v1730, %v1784
      %v1793 = vadd.f32 %v1731, %v1785
      %v1794 = vadd.f32 %v1732, %v1786
      %v1795 = vadd.f32 %v1733, %v1787
      %1796 = vrot.lane.b32.xlu0 %v308, 94
      %v1797 = vpop.permute.xlu0 %1796
      %1798 = vrot.lane.b32.xlu0 %v312, 94
      %v1799 = vpop.permute.xlu0 %1798
      %vm1800 = vcmp.lt.s32.totalorder %v320, 94
      %v1801 = vsel %vm1800, %v1797, %v1799
      %v1802 = vsel %vm1800, %v1799, %v1797
      %s1803 = scalar_lea.vmem %s1, 48
      %v1804 = vld [vmem:[%s1803] ss:$8 sm:$0x3]
      %v1806 = vlaneseq
      %v1807 = vshrl.u32 %v1806, 7
      %v1808 = vsub.s32 0, %v1807
      %v1809 = vrot.slane %v1804, %v1808
      %v1810 = vlaneseq
      %v1811 = vshrl.u32 %v1810, 7
      %v1812 = vsub.s32 1, %v1811
      %v1813 = vrot.slane %v1804, %v1812
      %v1816 = vmul.f32 %v1801, %v1809
      %v1817 = vmul.f32 %v1802, %v1813
      %1818 = vset.pattern.permute.xlu0 24
      %1819 = vperm.xlu0 %1818, %v338
      %v1820 = vpop.permute.xlu0 %1819
      %1822 = vset.pattern.permute.xlu0 24
      %1823 = vperm.xlu0 %1822, %v339
      %v1824 = vpop.permute.xlu0 %1823
      %1826 = vset.pattern.permute.xlu0 24
      %1827 = vperm.xlu0 %1826, %v340
      %v1828 = vpop.permute.xlu0 %1827
      %1830 = vset.pattern.permute.xlu0 24
      %1831 = vperm.xlu0 %1830, %v341
      %v1832 = vpop.permute.xlu0 %1831
      %v1834 = vlaneseq
      %v1835 = vshrl.u32 %v1834, 7
      %v1836 = vsub.s32 0, %v1835
      %v1837 = vrot.slane %v1816, %v1836
      %v1838 = vlaneseq
      %v1839 = vshrl.u32 %v1838, 7
      %v1840 = vsub.s32 0, %v1839
      %v1841 = vrot.slane %v1817, %v1840
      %v1842 = vmul.f32 %v1820, %v1837
      %v1843 = vmul.f32 %v1820, %v1841
      %v1844 = vmul.f32 %v1824, %v1837
      %v1845 = vmul.f32 %v1824, %v1841
      %v1846 = vmul.f32 %v1828, %v1837
      %v1847 = vmul.f32 %v1828, %v1841
      %v1848 = vmul.f32 %v1832, %v1837
      %v1849 = vmul.f32 %v1832, %v1841
      %v1850 = vadd.f32 %v1788, %v1842
      %v1851 = vadd.f32 %v1789, %v1843
      %v1852 = vadd.f32 %v1790, %v1844
      %v1853 = vadd.f32 %v1791, %v1845
      %v1854 = vadd.f32 %v1792, %v1846
      %v1855 = vadd.f32 %v1793, %v1847
      %v1856 = vadd.f32 %v1794, %v1848
      %v1857 = vadd.f32 %v1795, %v1849
      %v1858 = vld [vmem:[%s3] sm:$0xff]
      %v1859 = vld [vmem:[%s3 + $0x8] sm:$0xff]
      %v1860 = vld [vmem:[%s3 + $0x10] sm:$0xff]
      %v1861 = vld [vmem:[%s3 + $0x18] sm:$0xff]
      %1863 = vset.pattern.permute.xlu0 0
      %1864 = vperm.xlu0 %1863, %v1858
      %v1865 = vpop.permute.xlu0 %1864
      %1868 = vset.pattern.permute.xlu0 0
      %1869 = vperm.xlu0 %1868, %v1859
      %v1870 = vpop.permute.xlu0 %1869
      %1873 = vset.pattern.permute.xlu0 0
      %1874 = vperm.xlu0 %1873, %v1860
      %v1875 = vpop.permute.xlu0 %1874
      %1878 = vset.pattern.permute.xlu0 0
      %1879 = vperm.xlu0 %1878, %v1861
      %v1880 = vpop.permute.xlu0 %1879
      %v1882 = vadd.f32 %v1850, %v1865
      %v1883 = vadd.f32 %v1851, %v1865
      %v1884 = vadd.f32 %v1852, %v1870
      %v1885 = vadd.f32 %v1853, %v1870
      %v1886 = vadd.f32 %v1854, %v1875
      %v1887 = vadd.f32 %v1855, %v1875
      %v1888 = vadd.f32 %v1856, %v1880
      %v1889 = vadd.f32 %v1857, %v1880
      %v1890 = vmax.f32 %v1882, 0.0
      %v1891 = vmax.f32 %v1883, 0.0
      %v1892 = vmax.f32 %v1884, 0.0
      %v1893 = vmax.f32 %v1885, 0.0
      %v1894 = vmax.f32 %v1886, 0.0
      %v1895 = vmax.f32 %v1887, 0.0
      %v1896 = vmax.f32 %v1888, 0.0
      %v1897 = vmax.f32 %v1889, 0.0
      %1898 = vrot.lane.b32.xlu0 %v1890, 34
      %v1899 = vpop.permute.xlu0 %1898
      %1900 = vrot.lane.b32.xlu0 %v1892, 34
      %v1901 = vpop.permute.xlu0 %1900
      %1902 = vrot.lane.b32.xlu0 %v1894, 34
      %v1903 = vpop.permute.xlu0 %1902
      %1904 = vrot.lane.b32.xlu0 %v1896, 34
      %v1905 = vpop.permute.xlu0 %1904
      %1906 = vrot.lane.b32.xlu0 %v1891, 34
      %v1907 = vpop.permute.xlu0 %1906
      %1908 = vrot.lane.b32.xlu0 %v1893, 34
      %v1909 = vpop.permute.xlu0 %1908
      %1910 = vrot.lane.b32.xlu0 %v1895, 34
      %v1911 = vpop.permute.xlu0 %1910
      %1912 = vrot.lane.b32.xlu0 %v1897, 34
      %v1913 = vpop.permute.xlu0 %1912
      %v1914 = vsel %vm321, %v1899, %v1907
      %v1915 = vsel %vm321, %v1901, %v1909
      %v1916 = vsel %vm321, %v1903, %v1911
      %v1917 = vsel %vm321, %v1905, %v1913
      %v1918 = vsel %vm321, %v1907, %v1899
      %v1919 = vsel %vm321, %v1909, %v1901
      %v1920 = vsel %vm321, %v1911, %v1903
      %v1921 = vsel %vm321, %v1913, %v1905
      %v1922 = vmul.f32 %v1918, %v329
      %v1923 = vmul.f32 %v1914, %v333
      %v1924 = vmul.f32 %v1919, %v329
      %v1925 = vmul.f32 %v1915, %v333
      %v1926 = vmul.f32 %v1920, %v329
      %v1927 = vmul.f32 %v1916, %v333
      %v1928 = vmul.f32 %v1921, %v329
      %v1929 = vmul.f32 %v1917, %v333
      %v1930 = vld [vmem:[%s4] sm:$0xff]
      %v1931 = vld [vmem:[%s4 + $0x38] sm:$0xff]
      %v1932 = vld [vmem:[%s4 + $0x70] sm:$0xff]
      %v1933 = vld [vmem:[%s4 + $0xa8] sm:$0xff]
      %1934 = vrot.lane.b32.xlu0 %v1890, 33
      %v1935 = vpop.permute.xlu0 %1934
      %1936 = vrot.lane.b32.xlu0 %v1892, 33
      %v1937 = vpop.permute.xlu0 %1936
      %1938 = vrot.lane.b32.xlu0 %v1894, 33
      %v1939 = vpop.permute.xlu0 %1938
      %1940 = vrot.lane.b32.xlu0 %v1896, 33
      %v1941 = vpop.permute.xlu0 %1940
      %1942 = vrot.lane.b32.xlu0 %v1891, 33
      %v1943 = vpop.permute.xlu0 %1942
      %1944 = vrot.lane.b32.xlu0 %v1893, 33
      %v1945 = vpop.permute.xlu0 %1944
      %1946 = vrot.lane.b32.xlu0 %v1895, 33
      %v1947 = vpop.permute.xlu0 %1946
      %1948 = vrot.lane.b32.xlu0 %v1897, 33
      %v1949 = vpop.permute.xlu0 %1948
      %v1950 = vsel %vm390, %v1935, %v1943
      %v1951 = vsel %vm390, %v1937, %v1945
      %v1952 = vsel %vm390, %v1939, %v1947
      %v1953 = vsel %vm390, %v1941, %v1949
      %v1954 = vsel %vm390, %v1943, %v1935
      %v1955 = vsel %vm390, %v1945, %v1937
      %v1956 = vsel %vm390, %v1947, %v1939
      %v1957 = vsel %vm390, %v1949, %v1941
      %v1958 = vmul.f32 %v1954, %v399
      %v1959 = vmul.f32 %v1950, %v403
      %v1960 = vmul.f32 %v1955, %v399
      %v1961 = vmul.f32 %v1951, %v403
      %v1962 = vmul.f32 %v1956, %v399
      %v1963 = vmul.f32 %v1952, %v403
      %v1964 = vmul.f32 %v1957, %v399
      %v1965 = vmul.f32 %v1953, %v403
      %1970 = vrot.lane.b32.xlu0 %v1930, 96
      %v1971 = vpop.permute.xlu0 %1970
      %1972 = vrot.lane.b32.xlu0 %v1931, 96
      %v1973 = vpop.permute.xlu0 %1972
      %1974 = vrot.lane.b32.xlu0 %v1932, 96
      %v1975 = vpop.permute.xlu0 %1974
      %1976 = vrot.lane.b32.xlu0 %v1933, 96
      %v1977 = vpop.permute.xlu0 %1976
      %vm1978 = vcmask 261120
      %v1979 = vsel %vm1978, %v1971, 0
      %v1981 = vsel %vm1978, %v1973, 0
      %v1983 = vsel %vm1978, %v1975, 0
      %v1985 = vsel %vm1978, %v1977, 0
      %1987 = vmatprep.subr.mxu0 %v1959
      %1988 = vmatpush1.msra.mxu0 %v1958
      %1989 = vmatprep.subr.mxu0 %v1961
      %1990 = vmatpush1.msra.mxu0 %v1960
      %1991 = vmatprep.subr.mxu0 %v1963
      %1992 = vmatpush1.msra.mxu0 %v1962
      %1993 = vmatprep.subr.mxu0 %v1965
      %1994 = vmatpush1.msra.mxu0 %v1964
      %1995 = vmatprep.subr.mxu0 0.0
      %1996 = vmatpush1.msra.mxu0 0.0
      %1997 = vmatprep.subr.mxu0 0.0
      %1998 = vmatpush1.msra.mxu0 0.0
      %1999 = vmatprep.subr.mxu0 0.0
      %2000 = vmatpush1.msra.mxu0 0.0
      %2001 = vmatprep.subr.mxu0 0.0
      %2002 = vmatpush1.msra.mxu0 0.0
      %2003 = vmatprep.subr.mxu0 0.0
      %2004 = vmatpush1.msra.mxu0 0.0
      %2005 = vmatprep.subr.mxu0 0.0
      %2006 = vmatpush1.msra.mxu0 0.0
      %2007 = vmatprep.subr.mxu0 0.0
      %2008 = vmatpush1.msra.mxu0 0.0
      %2009 = vmatprep.subr.mxu0 0.0
      %2010 = vmatpush1.msra.mxu0 0.0
      %2011 = vmatprep.subr.mxu0 0.0
      %2012 = vmatpush1.msra.mxu0 0.0
      %2013 = vmatprep.subr.mxu0 0.0
      %2014 = vmatpush1.msra.mxu0 0.0
      %2015 = vmatprep.subr.mxu0 0.0
      %2016 = vmatpush1.msra.mxu0 0.0
      %2017 = vmatprep.subr.mxu0 0.0
      %2018 = vmatpush1.msra.mxu0 0.0
      %2019 = vmatprep.subr.mxu0 0.0
      %2020 = vmatpush1.msra.mxu0 0.0
      %2021 = vmatprep.subr.mxu0 0.0
      %2022 = vmatpush1.msra.mxu0 0.0
      %2023 = vmatprep.subr.mxu0 0.0
      %2024 = vmatpush1.msra.mxu0 0.0
      %2025 = vmatprep.subr.mxu0 0.0
      %2026 = vmatpush1.msra.mxu0 0.0
      %2027 = vmatprep.subr.mxu0 0.0
      %2028 = vmatpush1.msra.mxu0 0.0
      %2029 = vmatprep.subr.mxu0 0.0
      %2030 = vmatpush1.msra.mxu0 0.0
      %2031 = vmatprep.subr.mxu0 0.0
      %2032 = vmatpush1.msra.mxu0 0.0
      %2033 = vmatprep.subr.mxu0 0.0
      %2034 = vmatpush1.msra.mxu0 0.0
      %2035 = vmatprep.subr.mxu0 0.0
      %2036 = vmatpush1.msra.mxu0 0.0
      %2037 = vmatprep.subr.mxu0 0.0
      %2038 = vmatpush1.msra.mxu0 0.0
      %2039 = vmatprep.subr.mxu0 0.0
      %2040 = vmatpush1.msra.mxu0 0.0
      %2041 = vmatprep.subr.mxu0 0.0
      %2042 = vmatpush1.msra.mxu0 0.0
      %2043 = vmatprep.subr.mxu0 0.0
      %2044 = vmatpush1.msra.mxu0 0.0
      %2045 = vmatprep.subr.mxu0 0.0
      %2046 = vmatpush1.msra.mxu0 0.0
      %2047 = vmatprep.subr.mxu0 0.0
      %2048 = vmatpush1.msra.mxu0 0.0
      %2049 = vmatprep.subr.mxu0 0.0
      %2050 = vmatpush1.msra.mxu0 0.0
      %2051 = vmatprep.mubr.f32.mxu0 0.0
      %2052 = vmatmul.mubr.f32.gmra.mrb[0].mxu0 %v1979
      %v2053 = vpop.f32.mrb[0].mxu0
      %v2054 = vadd.f32 0.0, %v2053
      %v2055 = vpop.f32.mrb[0].mxu0
      %v2056 = vadd.f32 0.0, %v2055
      %2057 = vmatprep.mubr.f32.mxu0 0.0
      %2058 = vmatmul.mubr.f32.gmra.mrb[0].mxu0 %v1981
      %v2059 = vpop.f32.mrb[0].mxu0
      %v2060 = vadd.f32 0.0, %v2059
      %v2061 = vpop.f32.mrb[0].mxu0
      %v2062 = vadd.f32 0.0, %v2061
      %2063 = vmatprep.mubr.f32.mxu0 0.0
      %2064 = vmatmul.mubr.f32.gmra.mrb[0].mxu0 %v1983
      %v2065 = vpop.f32.mrb[0].mxu0
      %v2066 = vadd.f32 0.0, %v2065
      %v2067 = vpop.f32.mrb[0].mxu0
      %v2068 = vadd.f32 0.0, %v2067
      %2069 = vmatprep.mubr.f32.mxu0 0.0
      %2070 = vmatmul.mubr.f32.gmra.mrb[0].mxu0 %v1985
      %v2071 = vpop.f32.mrb[0].mxu0
      %v2072 = vadd.f32 0.0, %v2071
      %v2073 = vpop.f32.mrb[0].mxu0
      %v2074 = vadd.f32 0.0, %v2073
      %2075 = vdwg.mxu0
      %v2076 = vsel %vm1978, %v1930, 0
      %v2078 = vsel %vm1978, %v1931, 0
      %v2080 = vsel %vm1978, %v1932, 0
      %v2082 = vsel %vm1978, %v1933, 0
      %2084 = vmatprep.subr.mxu0 %v1923
      %2085 = vmatpush1.msra.mxu0 %v1922
      %2086 = vmatprep.subr.mxu0 %v1925
      %2087 = vmatpush1.msra.mxu0 %v1924
      %2088 = vmatprep.subr.mxu0 %v1927
      %2089 = vmatpush1.msra.mxu0 %v1926
      %2090 = vmatprep.subr.mxu0 %v1929
      %2091 = vmatpush1.msra.mxu0 %v1928
      %2092 = vmatprep.subr.mxu0 0.0
      %2093 = vmatpush1.msra.mxu0 0.0
      %2094 = vmatprep.subr.mxu0 0.0
      %2095 = vmatpush1.msra.mxu0 0.0
      %2096 = vmatprep.subr.mxu0 0.0
      %2097 = vmatpush1.msra.mxu0 0.0
      %2098 = vmatprep.subr.mxu0 0.0
      %2099 = vmatpush1.msra.mxu0 0.0
      %2100 = vmatprep.subr.mxu0 0.0
      %2101 = vmatpush1.msra.mxu0 0.0
      %2102 = vmatprep.subr.mxu0 0.0
      %2103 = vmatpush1.msra.mxu0 0.0
      %2104 = vmatprep.subr.mxu0 0.0
      %2105 = vmatpush1.msra.mxu0 0.0
      %2106 = vmatprep.subr.mxu0 0.0
      %2107 = vmatpush1.msra.mxu0 0.0
      %2108 = vmatprep.subr.mxu0 0.0
      %2109 = vmatpush1.msra.mxu0 0.0
      %2110 = vmatprep.subr.mxu0 0.0
      %2111 = vmatpush1.msra.mxu0 0.0
      %2112 = vmatprep.subr.mxu0 0.0
      %2113 = vmatpush1.msra.mxu0 0.0
      %2114 = vmatprep.subr.mxu0 0.0
      %2115 = vmatpush1.msra.mxu0 0.0
      %2116 = vmatprep.subr.mxu0 0.0
      %2117 = vmatpush1.msra.mxu0 0.0
      %2118 = vmatprep.subr.mxu0 0.0
      %2119 = vmatpush1.msra.mxu0 0.0
      %2120 = vmatprep.subr.mxu0 0.0
      %2121 = vmatpush1.msra.mxu0 0.0
      %2122 = vmatprep.subr.mxu0 0.0
      %2123 = vmatpush1.msra.mxu0 0.0
      %2124 = vmatprep.subr.mxu0 0.0
      %2125 = vmatpush1.msra.mxu0 0.0
      %2126 = vmatprep.subr.mxu0 0.0
      %2127 = vmatpush1.msra.mxu0 0.0
      %2128 = vmatprep.subr.mxu0 0.0
      %2129 = vmatpush1.msra.mxu0 0.0
      %2130 = vmatprep.subr.mxu0 0.0
      %2131 = vmatpush1.msra.mxu0 0.0
      %2132 = vmatprep.subr.mxu0 0.0
      %2133 = vmatpush1.msra.mxu0 0.0
      %2134 = vmatprep.subr.mxu0 0.0
      %2135 = vmatpush1.msra.mxu0 0.0
      %2136 = vmatprep.subr.mxu0 0.0
      %2137 = vmatpush1.msra.mxu0 0.0
      %2138 = vmatprep.subr.mxu0 0.0
      %2139 = vmatpush1.msra.mxu0 0.0
      %2140 = vmatprep.subr.mxu0 0.0
      %2141 = vmatpush1.msra.mxu0 0.0
      %2142 = vmatprep.subr.mxu0 0.0
      %2143 = vmatpush1.msra.mxu0 0.0
      %2144 = vmatprep.subr.mxu0 0.0
      %2145 = vmatpush1.msra.mxu0 0.0
      %2146 = vmatprep.subr.mxu0 0.0
      %2147 = vmatpush1.msra.mxu0 0.0
      %2148 = vmatprep.mubr.f32.mxu0 0.0
      %2149 = vmatmul.mubr.f32.gmra.mrb[0].mxu0 %v2076
      %v2150 = vpop.f32.mrb[0].mxu0
      %v2151 = vadd.f32 %v2054, %v2150
      %v2152 = vpop.f32.mrb[0].mxu0
      %v2153 = vadd.f32 %v2056, %v2152
      %2154 = vmatprep.mubr.f32.mxu0 0.0
      %2155 = vmatmul.mubr.f32.gmra.mrb[0].mxu0 %v2078
      %v2156 = vpop.f32.mrb[0].mxu0
      %v2157 = vadd.f32 %v2060, %v2156
      %v2158 = vpop.f32.mrb[0].mxu0
      %v2159 = vadd.f32 %v2062, %v2158
      %2160 = vmatprep.mubr.f32.mxu0 0.0
      %2161 = vmatmul.mubr.f32.gmra.mrb[0].mxu0 %v2080
      %v2162 = vpop.f32.mrb[0].mxu0
      %v2163 = vadd.f32 %v2066, %v2162
      %v2164 = vpop.f32.mrb[0].mxu0
      %v2165 = vadd.f32 %v2068, %v2164
      %2166 = vmatprep.mubr.f32.mxu0 0.0
      %2167 = vmatmul.mubr.f32.gmra.mrb[0].mxu0 %v2082
      %v2168 = vpop.f32.mrb[0].mxu0
      %v2169 = vadd.f32 %v2072, %v2168
      %v2170 = vpop.f32.mrb[0].mxu0
      %v2171 = vadd.f32 %v2074, %v2170
      %2172 = vdwg.mxu0
      %2173 = vrot.lane.b32.xlu0 %v1890, 32
      %v2174 = vpop.permute.xlu0 %2173
      %2175 = vrot.lane.b32.xlu0 %v1892, 32
      %v2176 = vpop.permute.xlu0 %2175
      %2177 = vrot.lane.b32.xlu0 %v1894, 32
      %v2178 = vpop.permute.xlu0 %2177
      %2179 = vrot.lane.b32.xlu0 %v1896, 32
      %v2180 = vpop.permute.xlu0 %2179
      %2181 = vrot.lane.b32.xlu0 %v1891, 32
      %v2182 = vpop.permute.xlu0 %2181
      %2183 = vrot.lane.b32.xlu0 %v1893, 32
      %v2184 = vpop.permute.xlu0 %2183
      %2185 = vrot.lane.b32.xlu0 %v1895, 32
      %v2186 = vpop.permute.xlu0 %2185
      %2187 = vrot.lane.b32.xlu0 %v1897, 32
      %v2188 = vpop.permute.xlu0 %2187
      %v2189 = vsel %vm452, %v2174, %v2182
      %v2190 = vsel %vm452, %v2176, %v2184
      %v2191 = vsel %vm452, %v2178, %v2186
      %v2192 = vsel %vm452, %v2180, %v2188
      %v2193 = vsel %vm452, %v2182, %v2174
      %v2194 = vsel %vm452, %v2184, %v2176
      %v2195 = vsel %vm452, %v2186, %v2178
      %v2196 = vsel %vm452, %v2188, %v2180
      %v2197 = vmul.f32 %v2193, %v461
      %v2198 = vmul.f32 %v2189, %v465
      %v2199 = vmul.f32 %v2194, %v461
      %v2200 = vmul.f32 %v2190, %v465
      %v2201 = vmul.f32 %v2195, %v461
      %v2202 = vmul.f32 %v2191, %v465
      %v2203 = vmul.f32 %v2196, %v461
      %v2204 = vmul.f32 %v2192, %v465
      %2205 = vrot.lane.b32.xlu0 %v1930, 64
      %v2206 = vpop.permute.xlu0 %2205
      %2207 = vrot.lane.b32.xlu0 %v1931, 64
      %v2208 = vpop.permute.xlu0 %2207
      %2209 = vrot.lane.b32.xlu0 %v1932, 64
      %v2210 = vpop.permute.xlu0 %2209
      %2211 = vrot.lane.b32.xlu0 %v1933, 64
      %v2212 = vpop.permute.xlu0 %2211
      %v2213 = vsel %vm1978, %v2206, 0
      %v2215 = vsel %vm1978, %v2208, 0
      %v2217 = vsel %vm1978, %v2210, 0
      %v2219 = vsel %vm1978, %v2212, 0
      %2221 = vmatprep.subr.mxu0 %v2198
      %2222 = vmatpush1.msra.mxu0 %v2197
      %2223 = vmatprep.subr.mxu0 %v2200
      %2224 = vmatpush1.msra.mxu0 %v2199
      %2225 = vmatprep.subr.mxu0 %v2202
      %2226 = vmatpush1.msra.mxu0 %v2201
      %2227 = vmatprep.subr.mxu0 %v2204
      %2228 = vmatpush1.msra.mxu0 %v2203
      %2229 = vmatprep.subr.mxu0 0.0
      %2230 = vmatpush1.msra.mxu0 0.0
      %2231 = vmatprep.subr.mxu0 0.0
      %2232 = vmatpush1.msra.mxu0 0.0
      %2233 = vmatprep.subr.mxu0 0.0
      %2234 = vmatpush1.msra.mxu0 0.0
      %2235 = vmatprep.subr.mxu0 0.0
      %2236 = vmatpush1.msra.mxu0 0.0
      %2237 = vmatprep.subr.mxu0 0.0
      %2238 = vmatpush1.msra.mxu0 0.0
      %2239 = vmatprep.subr.mxu0 0.0
      %2240 = vmatpush1.msra.mxu0 0.0
      %2241 = vmatprep.subr.mxu0 0.0
      %2242 = vmatpush1.msra.mxu0 0.0
      %2243 = vmatprep.subr.mxu0 0.0
      %2244 = vmatpush1.msra.mxu0 0.0
      %2245 = vmatprep.subr.mxu0 0.0
      %2246 = vmatpush1.msra.mxu0 0.0
      %2247 = vmatprep.subr.mxu0 0.0
      %2248 = vmatpush1.msra.mxu0 0.0
      %2249 = vmatprep.subr.mxu0 0.0
      %2250 = vmatpush1.msra.mxu0 0.0
      %2251 = vmatprep.subr.mxu0 0.0
      %2252 = vmatpush1.msra.mxu0 0.0
      %2253 = vmatprep.subr.mxu0 0.0
      %2254 = vmatpush1.msra.mxu0 0.0
      %2255 = vmatprep.subr.mxu0 0.0
      %2256 = vmatpush1.msra.mxu0 0.0
      %2257 = vmatprep.subr.mxu0 0.0
      %2258 = vmatpush1.msra.mxu0 0.0
      %2259 = vmatprep.subr.mxu0 0.0
      %2260 = vmatpush1.msra.mxu0 0.0
      %2261 = vmatprep.subr.mxu0 0.0
      %2262 = vmatpush1.msra.mxu0 0.0
      %2263 = vmatprep.subr.mxu0 0.0
      %2264 = vmatpush1.msra.mxu0 0.0
      %2265 = vmatprep.subr.mxu0 0.0
      %2266 = vmatpush1.msra.mxu0 0.0
      %2267 = vmatprep.subr.mxu0 0.0
      %2268 = vmatpush1.msra.mxu0 0.0
      %2269 = vmatprep.subr.mxu0 0.0
      %2270 = vmatpush1.msra.mxu0 0.0
      %2271 = vmatprep.subr.mxu0 0.0
      %2272 = vmatpush1.msra.mxu0 0.0
      %2273 = vmatprep.subr.mxu0 0.0
      %2274 = vmatpush1.msra.mxu0 0.0
      %2275 = vmatprep.subr.mxu0 0.0
      %2276 = vmatpush1.msra.mxu0 0.0
      %2277 = vmatprep.subr.mxu0 0.0
      %2278 = vmatpush1.msra.mxu0 0.0
      %2279 = vmatprep.subr.mxu0 0.0
      %2280 = vmatpush1.msra.mxu0 0.0
      %2281 = vmatprep.subr.mxu0 0.0
      %2282 = vmatpush1.msra.mxu0 0.0
      %2283 = vmatprep.subr.mxu0 0.0
      %2284 = vmatpush1.msra.mxu0 0.0
      %2285 = vmatprep.mubr.f32.mxu0 0.0
      %2286 = vmatmul.mubr.f32.gmra.mrb[0].mxu0 %v2213
      %v2287 = vpop.f32.mrb[0].mxu0
      %v2288 = vadd.f32 0.0, %v2287
      %v2289 = vpop.f32.mrb[0].mxu0
      %v2290 = vadd.f32 0.0, %v2289
      %2291 = vmatprep.mubr.f32.mxu0 0.0
      %2292 = vmatmul.mubr.f32.gmra.mrb[0].mxu0 %v2215
      %v2293 = vpop.f32.mrb[0].mxu0
      %v2294 = vadd.f32 0.0, %v2293
      %v2295 = vpop.f32.mrb[0].mxu0
      %v2296 = vadd.f32 0.0, %v2295
      %2297 = vmatprep.mubr.f32.mxu0 0.0
      %2298 = vmatmul.mubr.f32.gmra.mrb[0].mxu0 %v2217
      %v2299 = vpop.f32.mrb[0].mxu0
      %v2300 = vadd.f32 0.0, %v2299
      %v2301 = vpop.f32.mrb[0].mxu0
      %v2302 = vadd.f32 0.0, %v2301
      %2303 = vmatprep.mubr.f32.mxu0 0.0
      %2304 = vmatmul.mubr.f32.gmra.mrb[0].mxu0 %v2219
      %v2305 = vpop.f32.mrb[0].mxu0
      %v2306 = vadd.f32 0.0, %v2305
      %v2307 = vpop.f32.mrb[0].mxu0
      %v2308 = vadd.f32 0.0, %v2307
      %2309 = vdwg.mxu0
      %v2310 = vadd.f32 %v2151, %v2288
      %v2311 = vadd.f32 %v2153, %v2290
      %v2312 = vadd.f32 %v2157, %v2294
      %v2313 = vadd.f32 %v2159, %v2296
      %v2314 = vadd.f32 %v2163, %v2300
      %v2315 = vadd.f32 %v2165, %v2302
      %v2316 = vadd.f32 %v2169, %v2306
      %v2317 = vadd.f32 %v2171, %v2308
      %2318 = vrot.lane.b32.xlu0 %v1890, 31
      %v2319 = vpop.permute.xlu0 %2318
      %2320 = vrot.lane.b32.xlu0 %v1892, 31
      %v2321 = vpop.permute.xlu0 %2320
      %2322 = vrot.lane.b32.xlu0 %v1894, 31
      %v2323 = vpop.permute.xlu0 %2322
      %2324 = vrot.lane.b32.xlu0 %v1896, 31
      %v2325 = vpop.permute.xlu0 %2324
      %2326 = vrot.lane.b32.xlu0 %v1891, 31
      %v2327 = vpop.permute.xlu0 %2326
      %2328 = vrot.lane.b32.xlu0 %v1893, 31
      %v2329 = vpop.permute.xlu0 %2328
      %2330 = vrot.lane.b32.xlu0 %v1895, 31
      %v2331 = vpop.permute.xlu0 %2330
      %2332 = vrot.lane.b32.xlu0 %v1897, 31
      %v2333 = vpop.permute.xlu0 %2332
      %v2334 = vsel %vm514, %v2319, %v2327
      %v2335 = vsel %vm514, %v2321, %v2329
      %v2336 = vsel %vm514, %v2323, %v2331
      %v2337 = vsel %vm514, %v2325, %v2333
      %v2338 = vsel %vm514, %v2327, %v2319
      %v2339 = vsel %vm514, %v2329, %v2321
      %v2340 = vsel %vm514, %v2331, %v2323
      %v2341 = vsel %vm514, %v2333, %v2325
      %v2342 = vmul.f32 %v2338, %v523
      %v2343 = vmul.f32 %v2334, %v527
      %v2344 = vmul.f32 %v2339, %v523
      %v2345 = vmul.f32 %v2335, %v527
      %v2346 = vmul.f32 %v2340, %v523
      %v2347 = vmul.f32 %v2336, %v527
      %v2348 = vmul.f32 %v2341, %v523
      %v2349 = vmul.f32 %v2337, %v527
      %2350 = vrot.lane.b32.xlu0 %v1930, 32
      %v2351 = vpop.permute.xlu0 %2350
      %2352 = vrot.lane.b32.xlu0 %v1931, 32
      %v2353 = vpop.permute.xlu0 %2352
      %2354 = vrot.lane.b32.xlu0 %v1932, 32
      %v2355 = vpop.permute.xlu0 %2354
      %2356 = vrot.lane.b32.xlu0 %v1933, 32
      %v2357 = vpop.permute.xlu0 %2356
      %v2358 = vsel %vm1978, %v2351, 0
      %v2360 = vsel %vm1978, %v2353, 0
      %v2362 = vsel %vm1978, %v2355, 0
      %v2364 = vsel %vm1978, %v2357, 0
      %2366 = vmatprep.subr.mxu0 %v2343
      %2367 = vmatpush1.msra.mxu0 %v2342
      %2368 = vmatprep.subr.mxu0 %v2345
      %2369 = vmatpush1.msra.mxu0 %v2344
      %2370 = vmatprep.subr.mxu0 %v2347
      %2371 = vmatpush1.msra.mxu0 %v2346
      %2372 = vmatprep.subr.mxu0 %v2349
      %2373 = vmatpush1.msra.mxu0 %v2348
      %2374 = vmatprep.subr.mxu0 0.0
      %2375 = vmatpush1.msra.mxu0 0.0
      %2376 = vmatprep.subr.mxu0 0.0
      %2377 = vmatpush1.msra.mxu0 0.0
      %2378 = vmatprep.subr.mxu0 0.0
      %2379 = vmatpush1.msra.mxu0 0.0
      %2380 = vmatprep.subr.mxu0 0.0
      %2381 = vmatpush1.msra.mxu0 0.0
      %2382 = vmatprep.subr.mxu0 0.0
      %2383 = vmatpush1.msra.mxu0 0.0
      %2384 = vmatprep.subr.mxu0 0.0
      %2385 = vmatpush1.msra.mxu0 0.0
      %2386 = vmatprep.subr.mxu0 0.0
      %2387 = vmatpush1.msra.mxu0 0.0
      %2388 = vmatprep.subr.mxu0 0.0
      %2389 = vmatpush1.msra.mxu0 0.0
      %2390 = vmatprep.subr.mxu0 0.0
      %2391 = vmatpush1.msra.mxu0 0.0
      %2392 = vmatprep.subr.mxu0 0.0
      %2393 = vmatpush1.msra.mxu0 0.0
      %2394 = vmatprep.subr.mxu0 0.0
      %2395 = vmatpush1.msra.mxu0 0.0
      %2396 = vmatprep.subr.mxu0 0.0
      %2397 = vmatpush1.msra.mxu0 0.0
      %2398 = vmatprep.subr.mxu0 0.0
      %2399 = vmatpush1.msra.mxu0 0.0
      %2400 = vmatprep.subr.mxu0 0.0
      %2401 = vmatpush1.msra.mxu0 0.0
      %2402 = vmatprep.subr.mxu0 0.0
      %2403 = vmatpush1.msra.mxu0 0.0
      %2404 = vmatprep.subr.mxu0 0.0
      %2405 = vmatpush1.msra.mxu0 0.0
      %2406 = vmatprep.subr.mxu0 0.0
      %2407 = vmatpush1.msra.mxu0 0.0
      %2408 = vmatprep.subr.mxu0 0.0
      %2409 = vmatpush1.msra.mxu0 0.0
      %2410 = vmatprep.subr.mxu0 0.0
      %2411 = vmatpush1.msra.mxu0 0.0
      %2412 = vmatprep.subr.mxu0 0.0
      %2413 = vmatpush1.msra.mxu0 0.0
      %2414 = vmatprep.subr.mxu0 0.0
      %2415 = vmatpush1.msra.mxu0 0.0
      %2416 = vmatprep.subr.mxu0 0.0
      %2417 = vmatpush1.msra.mxu0 0.0
      %2418 = vmatprep.subr.mxu0 0.0
      %2419 = vmatpush1.msra.mxu0 0.0
      %2420 = vmatprep.subr.mxu0 0.0
      %2421 = vmatpush1.msra.mxu0 0.0
      %2422 = vmatprep.subr.mxu0 0.0
      %2423 = vmatpush1.msra.mxu0 0.0
      %2424 = vmatprep.subr.mxu0 0.0
      %2425 = vmatpush1.msra.mxu0 0.0
      %2426 = vmatprep.subr.mxu0 0.0
      %2427 = vmatpush1.msra.mxu0 0.0
      %2428 = vmatprep.subr.mxu0 0.0
      %2429 = vmatpush1.msra.mxu0 0.0
      %2430 = vmatprep.mubr.f32.mxu0 0.0
      %2431 = vmatmul.mubr.f32.gmra.mrb[0].mxu0 %v2358
      %v2432 = vpop.f32.mrb[0].mxu0
      %v2433 = vadd.f32 0.0, %v2432
      %v2434 = vpop.f32.mrb[0].mxu0
      %v2435 = vadd.f32 0.0, %v2434
      %2436 = vmatprep.mubr.f32.mxu0 0.0
      %2437 = vmatmul.mubr.f32.gmra.mrb[0].mxu0 %v2360
      %v2438 = vpop.f32.mrb[0].mxu0
      %v2439 = vadd.f32 0.0, %v2438
      %v2440 = vpop.f32.mrb[0].mxu0
      %v2441 = vadd.f32 0.0, %v2440
      %2442 = vmatprep.mubr.f32.mxu0 0.0
      %2443 = vmatmul.mubr.f32.gmra.mrb[0].mxu0 %v2362
      %v2444 = vpop.f32.mrb[0].mxu0
      %v2445 = vadd.f32 0.0, %v2444
      %v2446 = vpop.f32.mrb[0].mxu0
      %v2447 = vadd.f32 0.0, %v2446
      %2448 = vmatprep.mubr.f32.mxu0 0.0
      %2449 = vmatmul.mubr.f32.gmra.mrb[0].mxu0 %v2364
      %v2450 = vpop.f32.mrb[0].mxu0
      %v2451 = vadd.f32 0.0, %v2450
      %v2452 = vpop.f32.mrb[0].mxu0
      %v2453 = vadd.f32 0.0, %v2452
      %2454 = vdwg.mxu0
      %v2455 = vadd.f32 %v2310, %v2433
      %v2456 = vadd.f32 %v2311, %v2435
      %v2457 = vadd.f32 %v2312, %v2439
      %v2458 = vadd.f32 %v2313, %v2441
      %v2459 = vadd.f32 %v2314, %v2445
      %v2460 = vadd.f32 %v2315, %v2447
      %v2461 = vadd.f32 %v2316, %v2451
      %v2462 = vadd.f32 %v2317, %v2453
      %2463 = vrot.lane.b32.xlu0 %v1890, 30
      %v2464 = vpop.permute.xlu0 %2463
      %2465 = vrot.lane.b32.xlu0 %v1892, 30
      %v2466 = vpop.permute.xlu0 %2465
      %2467 = vrot.lane.b32.xlu0 %v1894, 30
      %v2468 = vpop.permute.xlu0 %2467
      %2469 = vrot.lane.b32.xlu0 %v1896, 30
      %v2470 = vpop.permute.xlu0 %2469
      %2471 = vrot.lane.b32.xlu0 %v1891, 30
      %v2472 = vpop.permute.xlu0 %2471
      %2473 = vrot.lane.b32.xlu0 %v1893, 30
      %v2474 = vpop.permute.xlu0 %2473
      %2475 = vrot.lane.b32.xlu0 %v1895, 30
      %v2476 = vpop.permute.xlu0 %2475
      %2477 = vrot.lane.b32.xlu0 %v1897, 30
      %v2478 = vpop.permute.xlu0 %2477
      %v2479 = vsel %vm576, %v2464, %v2472
      %v2480 = vsel %vm576, %v2466, %v2474
      %v2481 = vsel %vm576, %v2468, %v2476
      %v2482 = vsel %vm576, %v2470, %v2478
      %v2483 = vsel %vm576, %v2472, %v2464
      %v2484 = vsel %vm576, %v2474, %v2466
      %v2485 = vsel %vm576, %v2476, %v2468
      %v2486 = vsel %vm576, %v2478, %v2470
      %v2487 = vmul.f32 %v2483, %v585
      %v2488 = vmul.f32 %v2479, %v589
      %v2489 = vmul.f32 %v2484, %v585
      %v2490 = vmul.f32 %v2480, %v589
      %v2491 = vmul.f32 %v2485, %v585
      %v2492 = vmul.f32 %v2481, %v589
      %v2493 = vmul.f32 %v2486, %v585
      %v2494 = vmul.f32 %v2482, %v589
      %v2495 = vld [vmem:[%s4 + $0x8] sm:$0xff]
      %v2496 = vld [vmem:[%s4 + $0x40] sm:$0xff]
      %v2497 = vld [vmem:[%s4 + $0x78] sm:$0xff]
      %v2498 = vld [vmem:[%s4 + $0xb0] sm:$0xff]
      %v2500 = vsel %vm1978, %v2495, 0
      %v2503 = vsel %vm1978, %v2496, 0
      %v2506 = vsel %vm1978, %v2497, 0
      %v2509 = vsel %vm1978, %v2498, 0
      %2511 = vmatprep.subr.mxu0 %v2488
      %2512 = vmatpush1.msra.mxu0 %v2487
      %2513 = vmatprep.subr.mxu0 %v2490
      %2514 = vmatpush1.msra.mxu0 %v2489
      %2515 = vmatprep.subr.mxu0 %v2492
      %2516 = vmatpush1.msra.mxu0 %v2491
      %2517 = vmatprep.subr.mxu0 %v2494
      %2518 = vmatpush1.msra.mxu0 %v2493
      %2519 = vmatprep.subr.mxu0 0.0
      %2520 = vmatpush1.msra.mxu0 0.0
      %2521 = vmatprep.subr.mxu0 0.0
      %2522 = vmatpush1.msra.mxu0 0.0
      %2523 = vmatprep.subr.mxu0 0.0
      %2524 = vmatpush1.msra.mxu0 0.0
      %2525 = vmatprep.subr.mxu0 0.0
      %2526 = vmatpush1.msra.mxu0 0.0
      %2527 = vmatprep.subr.mxu0 0.0
      %2528 = vmatpush1.msra.mxu0 0.0
      %2529 = vmatprep.subr.mxu0 0.0
      %2530 = vmatpush1.msra.mxu0 0.0
      %2531 = vmatprep.subr.mxu0 0.0
      %2532 = vmatpush1.msra.mxu0 0.0
      %2533 = vmatprep.subr.mxu0 0.0
      %2534 = vmatpush1.msra.mxu0 0.0
      %2535 = vmatprep.subr.mxu0 0.0
      %2536 = vmatpush1.msra.mxu0 0.0
      %2537 = vmatprep.subr.mxu0 0.0
      %2538 = vmatpush1.msra.mxu0 0.0
      %2539 = vmatprep.subr.mxu0 0.0
      %2540 = vmatpush1.msra.mxu0 0.0
      %2541 = vmatprep.subr.mxu0 0.0
      %2542 = vmatpush1.msra.mxu0 0.0
      %2543 = vmatprep.subr.mxu0 0.0
      %2544 = vmatpush1.msra.mxu0 0.0
      %2545 = vmatprep.subr.mxu0 0.0
      %2546 = vmatpush1.msra.mxu0 0.0
      %2547 = vmatprep.subr.mxu0 0.0
      %2548 = vmatpush1.msra.mxu0 0.0
      %2549 = vmatprep.subr.mxu0 0.0
      %2550 = vmatpush1.msra.mxu0 0.0
      %2551 = vmatprep.subr.mxu0 0.0
      %2552 = vmatpush1.msra.mxu0 0.0
      %2553 = vmatprep.subr.mxu0 0.0
      %2554 = vmatpush1.msra.mxu0 0.0
      %2555 = vmatprep.subr.mxu0 0.0
      %2556 = vmatpush1.msra.mxu0 0.0
      %2557 = vmatprep.subr.mxu0 0.0
      %2558 = vmatpush1.msra.mxu0 0.0
      %2559 = vmatprep.subr.mxu0 0.0
      %2560 = vmatpush1.msra.mxu0 0.0
      %2561 = vmatprep.subr.mxu0 0.0
      %2562 = vmatpush1.msra.mxu0 0.0
      %2563 = vmatprep.subr.mxu0 0.0
      %2564 = vmatpush1.msra.mxu0 0.0
      %2565 = vmatprep.subr.mxu0 0.0
      %2566 = vmatpush1.msra.mxu0 0.0
      %2567 = vmatprep.subr.mxu0 0.0
      %2568 = vmatpush1.msra.mxu0 0.0
      %2569 = vmatprep.subr.mxu0 0.0
      %2570 = vmatpush1.msra.mxu0 0.0
      %2571 = vmatprep.subr.mxu0 0.0
      %2572 = vmatpush1.msra.mxu0 0.0
      %2573 = vmatprep.subr.mxu0 0.0
      %2574 = vmatpush1.msra.mxu0 0.0
      %2575 = vmatprep.mubr.f32.mxu0 0.0
      %2576 = vmatmul.mubr.f32.gmra.mrb[0].mxu0 %v2500
      %v2577 = vpop.f32.mrb[0].mxu0
      %v2578 = vadd.f32 0.0, %v2577
      %v2579 = vpop.f32.mrb[0].mxu0
      %v2580 = vadd.f32 0.0, %v2579
      %2581 = vmatprep.mubr.f32.mxu0 0.0
      %2582 = vmatmul.mubr.f32.gmra.mrb[0].mxu0 %v2503
      %v2583 = vpop.f32.mrb[0].mxu0
      %v2584 = vadd.f32 0.0, %v2583
      %v2585 = vpop.f32.mrb[0].mxu0
      %v2586 = vadd.f32 0.0, %v2585
      %2587 = vmatprep.mubr.f32.mxu0 0.0
      %2588 = vmatmul.mubr.f32.gmra.mrb[0].mxu0 %v2506
      %v2589 = vpop.f32.mrb[0].mxu0
      %v2590 = vadd.f32 0.0, %v2589
      %v2591 = vpop.f32.mrb[0].mxu0
      %v2592 = vadd.f32 0.0, %v2591
      %2593 = vmatprep.mubr.f32.mxu0 0.0
      %2594 = vmatmul.mubr.f32.gmra.mrb[0].mxu0 %v2509
      %v2595 = vpop.f32.mrb[0].mxu0
      %v2596 = vadd.f32 0.0, %v2595
      %v2597 = vpop.f32.mrb[0].mxu0
      %v2598 = vadd.f32 0.0, %v2597
      %2599 = vdwg.mxu0
      %v2600 = vadd.f32 %v2455, %v2578
      %v2601 = vadd.f32 %v2456, %v2580
      %v2602 = vadd.f32 %v2457, %v2584
      %v2603 = vadd.f32 %v2458, %v2586
      %v2604 = vadd.f32 %v2459, %v2590
      %v2605 = vadd.f32 %v2460, %v2592
      %v2606 = vadd.f32 %v2461, %v2596
      %v2607 = vadd.f32 %v2462, %v2598
      %2608 = vrot.lane.b32.xlu0 %v1890, 18
      %v2609 = vpop.permute.xlu0 %2608
      %2610 = vrot.lane.b32.xlu0 %v1892, 18
      %v2611 = vpop.permute.xlu0 %2610
      %2612 = vrot.lane.b32.xlu0 %v1894, 18
      %v2613 = vpop.permute.xlu0 %2612
      %2614 = vrot.lane.b32.xlu0 %v1896, 18
      %v2615 = vpop.permute.xlu0 %2614
      %2616 = vrot.lane.b32.xlu0 %v1891, 18
      %v2617 = vpop.permute.xlu0 %2616
      %2618 = vrot.lane.b32.xlu0 %v1893, 18
      %v2619 = vpop.permute.xlu0 %2618
      %2620 = vrot.lane.b32.xlu0 %v1895, 18
      %v2621 = vpop.permute.xlu0 %2620
      %2622 = vrot.lane.b32.xlu0 %v1897, 18
      %v2623 = vpop.permute.xlu0 %2622
      %v2624 = vsel %vm638, %v2609, %v2617
      %v2625 = vsel %vm638, %v2611, %v2619
      %v2626 = vsel %vm638, %v2613, %v2621
      %v2627 = vsel %vm638, %v2615, %v2623
      %v2628 = vsel %vm638, %v2617, %v2609
      %v2629 = vsel %vm638, %v2619, %v2611
      %v2630 = vsel %vm638, %v2621, %v2613
      %v2631 = vsel %vm638, %v2623, %v2615
      %v2632 = vmul.f32 %v2628, %v647
      %v2633 = vmul.f32 %v2624, %v651
      %v2634 = vmul.f32 %v2629, %v647
      %v2635 = vmul.f32 %v2625, %v651
      %v2636 = vmul.f32 %v2630, %v647
      %v2637 = vmul.f32 %v2626, %v651
      %v2638 = vmul.f32 %v2631, %v647
      %v2639 = vmul.f32 %v2627, %v651
      %2640 = vrot.lane.b32.xlu0 %v2495, 96
      %v2641 = vpop.permute.xlu0 %2640
      %2642 = vrot.lane.b32.xlu0 %v2496, 96
      %v2643 = vpop.permute.xlu0 %2642
      %2644 = vrot.lane.b32.xlu0 %v2497, 96
      %v2645 = vpop.permute.xlu0 %2644
      %2646 = vrot.lane.b32.xlu0 %v2498, 96
      %v2647 = vpop.permute.xlu0 %2646
      %v2648 = vsel %vm1978, %v2641, 0
      %v2650 = vsel %vm1978, %v2643, 0
      %v2652 = vsel %vm1978, %v2645, 0
      %v2654 = vsel %vm1978, %v2647, 0
      %2656 = vmatprep.subr.mxu0 %v2633
      %2657 = vmatpush1.msra.mxu0 %v2632
      %2658 = vmatprep.subr.mxu0 %v2635
      %2659 = vmatpush1.msra.mxu0 %v2634
      %2660 = vmatprep.subr.mxu0 %v2637
      %2661 = vmatpush1.msra.mxu0 %v2636
      %2662 = vmatprep.subr.mxu0 %v2639
      %2663 = vmatpush1.msra.mxu0 %v2638
      %2664 = vmatprep.subr.mxu0 0.0
      %2665 = vmatpush1.msra.mxu0 0.0
      %2666 = vmatprep.subr.mxu0 0.0
      %2667 = vmatpush1.msra.mxu0 0.0
      %2668 = vmatprep.subr.mxu0 0.0
      %2669 = vmatpush1.msra.mxu0 0.0
      %2670 = vmatprep.subr.mxu0 0.0
      %2671 = vmatpush1.msra.mxu0 0.0
      %2672 = vmatprep.subr.mxu0 0.0
      %2673 = vmatpush1.msra.mxu0 0.0
      %2674 = vmatprep.subr.mxu0 0.0
      %2675 = vmatpush1.msra.mxu0 0.0
      %2676 = vmatprep.subr.mxu0 0.0
      %2677 = vmatpush1.msra.mxu0 0.0
      %2678 = vmatprep.subr.mxu0 0.0
      %2679 = vmatpush1.msra.mxu0 0.0
      %2680 = vmatprep.subr.mxu0 0.0
      %2681 = vmatpush1.msra.mxu0 0.0
      %2682 = vmatprep.subr.mxu0 0.0
      %2683 = vmatpush1.msra.mxu0 0.0
      %2684 = vmatprep.subr.mxu0 0.0
      %2685 = vmatpush1.msra.mxu0 0.0
      %2686 = vmatprep.subr.mxu0 0.0
      %2687 = vmatpush1.msra.mxu0 0.0
      %2688 = vmatprep.subr.mxu0 0.0
      %2689 = vmatpush1.msra.mxu0 0.0
      %2690 = vmatprep.subr.mxu0 0.0
      %2691 = vmatpush1.msra.mxu0 0.0
      %2692 = vmatprep.subr.mxu0 0.0
      %2693 = vmatpush1.msra.mxu0 0.0
      %2694 = vmatprep.subr.mxu0 0.0
      %2695 = vmatpush1.msra.mxu0 0.0
      %2696 = vmatprep.subr.mxu0 0.0
      %2697 = vmatpush1.msra.mxu0 0.0
      %2698 = vmatprep.subr.mxu0 0.0
      %2699 = vmatpush1.msra.mxu0 0.0
      %2700 = vmatprep.subr.mxu0 0.0
      %2701 = vmatpush1.msra.mxu0 0.0
      %2702 = vmatprep.subr.mxu0 0.0
      %2703 = vmatpush1.msra.mxu0 0.0
      %2704 = vmatprep.subr.mxu0 0.0
      %2705 = vmatpush1.msra.mxu0 0.0
      %2706 = vmatprep.subr.mxu0 0.0
      %2707 = vmatpush1.msra.mxu0 0.0
      %2708 = vmatprep.subr.mxu0 0.0
      %2709 = vmatpush1.msra.mxu0 0.0
      %2710 = vmatprep.subr.mxu0 0.0
      %2711 = vmatpush1.msra.mxu0 0.0
      %2712 = vmatprep.subr.mxu0 0.0
      %2713 = vmatpush1.msra.mxu0 0.0
      %2714 = vmatprep.subr.mxu0 0.0
      %2715 = vmatpush1.msra.mxu0 0.0
      %2716 = vmatprep.subr.mxu0 0.0
      %2717 = vmatpush1.msra.mxu0 0.0
      %2718 = vmatprep.subr.mxu0 0.0
      %2719 = vmatpush1.msra.mxu0 0.0
      %2720 = vmatprep.mubr.f32.mxu0 0.0
      %2721 = vmatmul.mubr.f32.gmra.mrb[0].mxu0 %v2648
      %v2722 = vpop.f32.mrb[0].mxu0
      %v2723 = vadd.f32 0.0, %v2722
      %v2724 = vpop.f32.mrb[0].mxu0
      %v2725 = vadd.f32 0.0, %v2724
      %2726 = vmatprep.mubr.f32.mxu0 0.0
      %2727 = vmatmul.mubr.f32.gmra.mrb[0].mxu0 %v2650
      %v2728 = vpop.f32.mrb[0].mxu0
      %v2729 = vadd.f32 0.0, %v2728
      %v2730 = vpop.f32.mrb[0].mxu0
      %v2731 = vadd.f32 0.0, %v2730
      %2732 = vmatprep.mubr.f32.mxu0 0.0
      %2733 = vmatmul.mubr.f32.gmra.mrb[0].mxu0 %v2652
      %v2734 = vpop.f32.mrb[0].mxu0
      %v2735 = vadd.f32 0.0, %v2734
      %v2736 = vpop.f32.mrb[0].mxu0
      %v2737 = vadd.f32 0.0, %v2736
      %2738 = vmatprep.mubr.f32.mxu0 0.0
      %2739 = vmatmul.mubr.f32.gmra.mrb[0].mxu0 %v2654
      %v2740 = vpop.f32.mrb[0].mxu0
      %v2741 = vadd.f32 0.0, %v2740
      %v2742 = vpop.f32.mrb[0].mxu0
      %v2743 = vadd.f32 0.0, %v2742
      %2744 = vdwg.mxu0
      %v2745 = vadd.f32 %v2600, %v2723
      %v2746 = vadd.f32 %v2601, %v2725
      %v2747 = vadd.f32 %v2602, %v2729
      %v2748 = vadd.f32 %v2603, %v2731
      %v2749 = vadd.f32 %v2604, %v2735
      %v2750 = vadd.f32 %v2605, %v2737
      %v2751 = vadd.f32 %v2606, %v2741
      %v2752 = vadd.f32 %v2607, %v2743
      %2753 = vrot.lane.b32.xlu0 %v1890, 17
      %v2754 = vpop.permute.xlu0 %2753
      %2755 = vrot.lane.b32.xlu0 %v1892, 17
      %v2756 = vpop.permute.xlu0 %2755
      %2757 = vrot.lane.b32.xlu0 %v1894, 17
      %v2758 = vpop.permute.xlu0 %2757
      %2759 = vrot.lane.b32.xlu0 %v1896, 17
      %v2760 = vpop.permute.xlu0 %2759
      %2761 = vrot.lane.b32.xlu0 %v1891, 17
      %v2762 = vpop.permute.xlu0 %2761
      %2763 = vrot.lane.b32.xlu0 %v1893, 17
      %v2764 = vpop.permute.xlu0 %2763
      %2765 = vrot.lane.b32.xlu0 %v1895, 17
      %v2766 = vpop.permute.xlu0 %2765
      %2767 = vrot.lane.b32.xlu0 %v1897, 17
      %v2768 = vpop.permute.xlu0 %2767
      %v2769 = vsel %vm700, %v2754, %v2762
      %v2770 = vsel %vm700, %v2756, %v2764
      %v2771 = vsel %vm700, %v2758, %v2766
      %v2772 = vsel %vm700, %v2760, %v2768
      %v2773 = vsel %vm700, %v2762, %v2754
      %v2774 = vsel %vm700, %v2764, %v2756
      %v2775 = vsel %vm700, %v2766, %v2758
      %v2776 = vsel %vm700, %v2768, %v2760
      %v2777 = vmul.f32 %v2773, %v709
      %v2778 = vmul.f32 %v2769, %v713
      %v2779 = vmul.f32 %v2774, %v709
      %v2780 = vmul.f32 %v2770, %v713
      %v2781 = vmul.f32 %v2775, %v709
      %v2782 = vmul.f32 %v2771, %v713
      %v2783 = vmul.f32 %v2776, %v709
      %v2784 = vmul.f32 %v2772, %v713
      %2785 = vrot.lane.b32.xlu0 %v2495, 64
      %v2786 = vpop.permute.xlu0 %2785
      %2787 = vrot.lane.b32.xlu0 %v2496, 64
      %v2788 = vpop.permute.xlu0 %2787
      %2789 = vrot.lane.b32.xlu0 %v2497, 64
      %v2790 = vpop.permute.xlu0 %2789
      %2791 = vrot.lane.b32.xlu0 %v2498, 64
      %v2792 = vpop.permute.xlu0 %2791
      %v2793 = vsel %vm1978, %v2786, 0
      %v2795 = vsel %vm1978, %v2788, 0
      %v2797 = vsel %vm1978, %v2790, 0
      %v2799 = vsel %vm1978, %v2792, 0
      %2801 = vmatprep.subr.mxu0 %v2778
      %2802 = vmatpush1.msra.mxu0 %v2777
      %2803 = vmatprep.subr.mxu0 %v2780
      %2804 = vmatpush1.msra.mxu0 %v2779
      %2805 = vmatprep.subr.mxu0 %v2782
      %2806 = vmatpush1.msra.mxu0 %v2781
      %2807 = vmatprep.subr.mxu0 %v2784
      %2808 = vmatpush1.msra.mxu0 %v2783
      %2809 = vmatprep.subr.mxu0 0.0
      %2810 = vmatpush1.msra.mxu0 0.0
      %2811 = vmatprep.subr.mxu0 0.0
      %2812 = vmatpush1.msra.mxu0 0.0
      %2813 = vmatprep.subr.mxu0 0.0
      %2814 = vmatpush1.msra.mxu0 0.0
      %2815 = vmatprep.subr.mxu0 0.0
      %2816 = vmatpush1.msra.mxu0 0.0
      %2817 = vmatprep.subr.mxu0 0.0
      %2818 = vmatpush1.msra.mxu0 0.0
      %2819 = vmatprep.subr.mxu0 0.0
      %2820 = vmatpush1.msra.mxu0 0.0
      %2821 = vmatprep.subr.mxu0 0.0
      %2822 = vmatpush1.msra.mxu0 0.0
      %2823 = vmatprep.subr.mxu0 0.0
      %2824 = vmatpush1.msra.mxu0 0.0
      %2825 = vmatprep.subr.mxu0 0.0
      %2826 = vmatpush1.msra.mxu0 0.0
      %2827 = vmatprep.subr.mxu0 0.0
      %2828 = vmatpush1.msra.mxu0 0.0
      %2829 = vmatprep.subr.mxu0 0.0
      %2830 = vmatpush1.msra.mxu0 0.0
      %2831 = vmatprep.subr.mxu0 0.0
      %2832 = vmatpush1.msra.mxu0 0.0
      %2833 = vmatprep.subr.mxu0 0.0
      %2834 = vmatpush1.msra.mxu0 0.0
      %2835 = vmatprep.subr.mxu0 0.0
      %2836 = vmatpush1.msra.mxu0 0.0
      %2837 = vmatprep.subr.mxu0 0.0
      %2838 = vmatpush1.msra.mxu0 0.0
      %2839 = vmatprep.subr.mxu0 0.0
      %2840 = vmatpush1.msra.mxu0 0.0
      %2841 = vmatprep.subr.mxu0 0.0
      %2842 = vmatpush1.msra.mxu0 0.0
      %2843 = vmatprep.subr.mxu0 0.0
      %2844 = vmatpush1.msra.mxu0 0.0
      %2845 = vmatprep.subr.mxu0 0.0
      %2846 = vmatpush1.msra.mxu0 0.0
      %2847 = vmatprep.subr.mxu0 0.0
      %2848 = vmatpush1.msra.mxu0 0.0
      %2849 = vmatprep.subr.mxu0 0.0
      %2850 = vmatpush1.msra.mxu0 0.0
      %2851 = vmatprep.subr.mxu0 0.0
      %2852 = vmatpush1.msra.mxu0 0.0
      %2853 = vmatprep.subr.mxu0 0.0
      %2854 = vmatpush1.msra.mxu0 0.0
      %2855 = vmatprep.subr.mxu0 0.0
      %2856 = vmatpush1.msra.mxu0 0.0
      %2857 = vmatprep.subr.mxu0 0.0
      %2858 = vmatpush1.msra.mxu0 0.0
      %2859 = vmatprep.subr.mxu0 0.0
      %2860 = vmatpush1.msra.mxu0 0.0
      %2861 = vmatprep.subr.mxu0 0.0
      %2862 = vmatpush1.msra.mxu0 0.0
      %2863 = vmatprep.subr.mxu0 0.0
      %2864 = vmatpush1.msra.mxu0 0.0
      %2865 = vmatprep.mubr.f32.mxu0 0.0
      %2866 = vmatmul.mubr.f32.gmra.mrb[0].mxu0 %v2793
      %v2867 = vpop.f32.mrb[0].mxu0
      %v2868 = vadd.f32 0.0, %v2867
      %v2869 = vpop.f32.mrb[0].mxu0
      %v2870 = vadd.f32 0.0, %v2869
      %2871 = vmatprep.mubr.f32.mxu0 0.0
      %2872 = vmatmul.mubr.f32.gmra.mrb[0].mxu0 %v2795
      %v2873 = vpop.f32.mrb[0].mxu0
      %v2874 = vadd.f32 0.0, %v2873
      %v2875 = vpop.f32.mrb[0].mxu0
      %v2876 = vadd.f32 0.0, %v2875
      %2877 = vmatprep.mubr.f32.mxu0 0.0
      %2878 = vmatmul.mubr.f32.gmra.mrb[0].mxu0 %v2797
      %v2879 = vpop.f32.mrb[0].mxu0
      %v2880 = vadd.f32 0.0, %v2879
      %v2881 = vpop.f32.mrb[0].mxu0
      %v2882 = vadd.f32 0.0, %v2881
      %2883 = vmatprep.mubr.f32.mxu0 0.0
      %2884 = vmatmul.mubr.f32.gmra.mrb[0].mxu0 %v2799
      %v2885 = vpop.f32.mrb[0].mxu0
      %v2886 = vadd.f32 0.0, %v2885
      %v2887 = vpop.f32.mrb[0].mxu0
      %v2888 = vadd.f32 0.0, %v2887
      %2889 = vdwg.mxu0
      %v2890 = vadd.f32 %v2745, %v2868
      %v2891 = vadd.f32 %v2746, %v2870
      %v2892 = vadd.f32 %v2747, %v2874
      %v2893 = vadd.f32 %v2748, %v2876
      %v2894 = vadd.f32 %v2749, %v2880
      %v2895 = vadd.f32 %v2750, %v2882
      %v2896 = vadd.f32 %v2751, %v2886
      %v2897 = vadd.f32 %v2752, %v2888
      %2898 = vrot.lane.b32.xlu0 %v1890, 16
      %v2899 = vpop.permute.xlu0 %2898
      %2900 = vrot.lane.b32.xlu0 %v1892, 16
      %v2901 = vpop.permute.xlu0 %2900
      %2902 = vrot.lane.b32.xlu0 %v1894, 16
      %v2903 = vpop.permute.xlu0 %2902
      %2904 = vrot.lane.b32.xlu0 %v1896, 16
      %v2905 = vpop.permute.xlu0 %2904
      %2906 = vrot.lane.b32.xlu0 %v1891, 16
      %v2907 = vpop.permute.xlu0 %2906
      %2908 = vrot.lane.b32.xlu0 %v1893, 16
      %v2909 = vpop.permute.xlu0 %2908
      %2910 = vrot.lane.b32.xlu0 %v1895, 16
      %v2911 = vpop.permute.xlu0 %2910
      %2912 = vrot.lane.b32.xlu0 %v1897, 16
      %v2913 = vpop.permute.xlu0 %2912
      %v2914 = vsel %vm762, %v2899, %v2907
      %v2915 = vsel %vm762, %v2901, %v2909
      %v2916 = vsel %vm762, %v2903, %v2911
      %v2917 = vsel %vm762, %v2905, %v2913
      %v2918 = vsel %vm762, %v2907, %v2899
      %v2919 = vsel %vm762, %v2909, %v2901
      %v2920 = vsel %vm762, %v2911, %v2903
      %v2921 = vsel %vm762, %v2913, %v2905
      %v2922 = vmul.f32 %v2918, %v771
      %v2923 = vmul.f32 %v2914, %v775
      %v2924 = vmul.f32 %v2919, %v771
      %v2925 = vmul.f32 %v2915, %v775
      %v2926 = vmul.f32 %v2920, %v771
      %v2927 = vmul.f32 %v2916, %v775
      %v2928 = vmul.f32 %v2921, %v771
      %v2929 = vmul.f32 %v2917, %v775
      %2930 = vrot.lane.b32.xlu0 %v2495, 32
      %v2931 = vpop.permute.xlu0 %2930
      %2932 = vrot.lane.b32.xlu0 %v2496, 32
      %v2933 = vpop.permute.xlu0 %2932
      %2934 = vrot.lane.b32.xlu0 %v2497, 32
      %v2935 = vpop.permute.xlu0 %2934
      %2936 = vrot.lane.b32.xlu0 %v2498, 32
      %v2937 = vpop.permute.xlu0 %2936
      %v2938 = vsel %vm1978, %v2931, 0
      %v2940 = vsel %vm1978, %v2933, 0
      %v2942 = vsel %vm1978, %v2935, 0
      %v2944 = vsel %vm1978, %v2937, 0
      %2946 = vmatprep.subr.mxu0 %v2923
      %2947 = vmatpush1.msra.mxu0 %v2922
      %2948 = vmatprep.subr.mxu0 %v2925
      %2949 = vmatpush1.msra.mxu0 %v2924
      %2950 = vmatprep.subr.mxu0 %v2927
      %2951 = vmatpush1.msra.mxu0 %v2926
      %2952 = vmatprep.subr.mxu0 %v2929
      %2953 = vmatpush1.msra.mxu0 %v2928
      %2954 = vmatprep.subr.mxu0 0.0
      %2955 = vmatpush1.msra.mxu0 0.0
      %2956 = vmatprep.subr.mxu0 0.0
      %2957 = vmatpush1.msra.mxu0 0.0
      %2958 = vmatprep.subr.mxu0 0.0
      %2959 = vmatpush1.msra.mxu0 0.0
      %2960 = vmatprep.subr.mxu0 0.0
      %2961 = vmatpush1.msra.mxu0 0.0
      %2962 = vmatprep.subr.mxu0 0.0
      %2963 = vmatpush1.msra.mxu0 0.0
      %2964 = vmatprep.subr.mxu0 0.0
      %2965 = vmatpush1.msra.mxu0 0.0
      %2966 = vmatprep.subr.mxu0 0.0
      %2967 = vmatpush1.msra.mxu0 0.0
      %2968 = vmatprep.subr.mxu0 0.0
      %2969 = vmatpush1.msra.mxu0 0.0
      %2970 = vmatprep.subr.mxu0 0.0
      %2971 = vmatpush1.msra.mxu0 0.0
      %2972 = vmatprep.subr.mxu0 0.0
      %2973 = vmatpush1.msra.mxu0 0.0
      %2974 = vmatprep.subr.mxu0 0.0
      %2975 = vmatpush1.msra.mxu0 0.0
      %2976 = vmatprep.subr.mxu0 0.0
      %2977 = vmatpush1.msra.mxu0 0.0
      %2978 = vmatprep.subr.mxu0 0.0
      %2979 = vmatpush1.msra.mxu0 0.0
      %2980 = vmatprep.subr.mxu0 0.0
      %2981 = vmatpush1.msra.mxu0 0.0
      %2982 = vmatprep.subr.mxu0 0.0
      %2983 = vmatpush1.msra.mxu0 0.0
      %2984 = vmatprep.subr.mxu0 0.0
      %2985 = vmatpush1.msra.mxu0 0.0
      %2986 = vmatprep.subr.mxu0 0.0
      %2987 = vmatpush1.msra.mxu0 0.0
      %2988 = vmatprep.subr.mxu0 0.0
      %2989 = vmatpush1.msra.mxu0 0.0
      %2990 = vmatprep.subr.mxu0 0.0
      %2991 = vmatpush1.msra.mxu0 0.0
      %2992 = vmatprep.subr.mxu0 0.0
      %2993 = vmatpush1.msra.mxu0 0.0
      %2994 = vmatprep.subr.mxu0 0.0
      %2995 = vmatpush1.msra.mxu0 0.0
      %2996 = vmatprep.subr.mxu0 0.0
      %2997 = vmatpush1.msra.mxu0 0.0
      %2998 = vmatprep.subr.mxu0 0.0
      %2999 = vmatpush1.msra.mxu0 0.0
      %3000 = vmatprep.subr.mxu0 0.0
      %3001 = vmatpush1.msra.mxu0 0.0
      %3002 = vmatprep.subr.mxu0 0.0
      %3003 = vmatpush1.msra.mxu0 0.0
      %3004 = vmatprep.subr.mxu0 0.0
      %3005 = vmatpush1.msra.mxu0 0.0
      %3006 = vmatprep.subr.mxu0 0.0
      %3007 = vmatpush1.msra.mxu0 0.0
      %3008 = vmatprep.subr.mxu0 0.0
      %3009 = vmatpush1.msra.mxu0 0.0
      %3010 = vmatprep.mubr.f32.mxu0 0.0
      %3011 = vmatmul.mubr.f32.gmra.mrb[0].mxu0 %v2938
      %v3012 = vpop.f32.mrb[0].mxu0
      %v3013 = vadd.f32 0.0, %v3012
      %v3014 = vpop.f32.mrb[0].mxu0
      %v3015 = vadd.f32 0.0, %v3014
      %3016 = vmatprep.mubr.f32.mxu0 0.0
      %3017 = vmatmul.mubr.f32.gmra.mrb[0].mxu0 %v2940
      %v3018 = vpop.f32.mrb[0].mxu0
      %v3019 = vadd.f32 0.0, %v3018
      %v3020 = vpop.f32.mrb[0].mxu0
      %v3021 = vadd.f32 0.0, %v3020
      %3022 = vmatprep.mubr.f32.mxu0 0.0
      %3023 = vmatmul.mubr.f32.gmra.mrb[0].mxu0 %v2942
      %v3024 = vpop.f32.mrb[0].mxu0
      %v3025 = vadd.f32 0.0, %v3024
      %v3026 = vpop.f32.mrb[0].mxu0
      %v3027 = vadd.f32 0.0, %v3026
      %3028 = vmatprep.mubr.f32.mxu0 0.0
      %3029 = vmatmul.mubr.f32.gmra.mrb[0].mxu0 %v2944
      %v3030 = vpop.f32.mrb[0].mxu0
      %v3031 = vadd.f32 0.0, %v3030
      %v3032 = vpop.f32.mrb[0].mxu0
      %v3033 = vadd.f32 0.0, %v3032
      %3034 = vdwg.mxu0
      %v3035 = vadd.f32 %v2890, %v3013
      %v3036 = vadd.f32 %v2891, %v3015
      %v3037 = vadd.f32 %v2892, %v3019
      %v3038 = vadd.f32 %v2893, %v3021
      %v3039 = vadd.f32 %v2894, %v3025
      %v3040 = vadd.f32 %v2895, %v3027
      %v3041 = vadd.f32 %v2896, %v3031
      %v3042 = vadd.f32 %v2897, %v3033
      %3043 = vrot.lane.b32.xlu0 %v1890, 15
      %v3044 = vpop.permute.xlu0 %3043
      %3045 = vrot.lane.b32.xlu0 %v1892, 15
      %v3046 = vpop.permute.xlu0 %3045
      %3047 = vrot.lane.b32.xlu0 %v1894, 15
      %v3048 = vpop.permute.xlu0 %3047
      %3049 = vrot.lane.b32.xlu0 %v1896, 15
      %v3050 = vpop.permute.xlu0 %3049
      %3051 = vrot.lane.b32.xlu0 %v1891, 15
      %v3052 = vpop.permute.xlu0 %3051
      %3053 = vrot.lane.b32.xlu0 %v1893, 15
      %v3054 = vpop.permute.xlu0 %3053
      %3055 = vrot.lane.b32.xlu0 %v1895, 15
      %v3056 = vpop.permute.xlu0 %3055
      %3057 = vrot.lane.b32.xlu0 %v1897, 15
      %v3058 = vpop.permute.xlu0 %3057
      %v3059 = vsel %vm824, %v3044, %v3052
      %v3060 = vsel %vm824, %v3046, %v3054
      %v3061 = vsel %vm824, %v3048, %v3056
      %v3062 = vsel %vm824, %v3050, %v3058
      %v3063 = vsel %vm824, %v3052, %v3044
      %v3064 = vsel %vm824, %v3054, %v3046
      %v3065 = vsel %vm824, %v3056, %v3048
      %v3066 = vsel %vm824, %v3058, %v3050
      %v3067 = vmul.f32 %v3063, %v833
      %v3068 = vmul.f32 %v3059, %v837
      %v3069 = vmul.f32 %v3064, %v833
      %v3070 = vmul.f32 %v3060, %v837
      %v3071 = vmul.f32 %v3065, %v833
      %v3072 = vmul.f32 %v3061, %v837
      %v3073 = vmul.f32 %v3066, %v833
      %v3074 = vmul.f32 %v3062, %v837
      %v3075 = vld [vmem:[%s4 + $0x10] sm:$0xff]
      %v3076 = vld [vmem:[%s4 + $0x48] sm:$0xff]
      %v3077 = vld [vmem:[%s4 + $0x80] sm:$0xff]
      %v3078 = vld [vmem:[%s4 + $0xb8] sm:$0xff]
      %v3080 = vsel %vm1978, %v3075, 0
      %v3083 = vsel %vm1978, %v3076, 0
      %v3086 = vsel %vm1978, %v3077, 0
      %v3089 = vsel %vm1978, %v3078, 0
      %3091 = vmatprep.subr.mxu0 %v3068
      %3092 = vmatpush1.msra.mxu0 %v3067
      %3093 = vmatprep.subr.mxu0 %v3070
      %3094 = vmatpush1.msra.mxu0 %v3069
      %3095 = vmatprep.subr.mxu0 %v3072
      %3096 = vmatpush1.msra.mxu0 %v3071
      %3097 = vmatprep.subr.mxu0 %v3074
      %3098 = vmatpush1.msra.mxu0 %v3073
      %3099 = vmatprep.subr.mxu0 0.0
      %3100 = vmatpush1.msra.mxu0 0.0
      %3101 = vmatprep.subr.mxu0 0.0
      %3102 = vmatpush1.msra.mxu0 0.0
      %3103 = vmatprep.subr.mxu0 0.0
      %3104 = vmatpush1.msra.mxu0 0.0
      %3105 = vmatprep.subr.mxu0 0.0
      %3106 = vmatpush1.msra.mxu0 0.0
      %3107 = vmatprep.subr.mxu0 0.0
      %3108 = vmatpush1.msra.mxu0 0.0
      %3109 = vmatprep.subr.mxu0 0.0
      %3110 = vmatpush1.msra.mxu0 0.0
      %3111 = vmatprep.subr.mxu0 0.0
      %3112 = vmatpush1.msra.mxu0 0.0
      %3113 = vmatprep.subr.mxu0 0.0
      %3114 = vmatpush1.msra.mxu0 0.0
      %3115 = vmatprep.subr.mxu0 0.0
      %3116 = vmatpush1.msra.mxu0 0.0
      %3117 = vmatprep.subr.mxu0 0.0
      %3118 = vmatpush1.msra.mxu0 0.0
      %3119 = vmatprep.subr.mxu0 0.0
      %3120 = vmatpush1.msra.mxu0 0.0
      %3121 = vmatprep.subr.mxu0 0.0
      %3122 = vmatpush1.msra.mxu0 0.0
      %3123 = vmatprep.subr.mxu0 0.0
      %3124 = vmatpush1.msra.mxu0 0.0
      %3125 = vmatprep.subr.mxu0 0.0
      %3126 = vmatpush1.msra.mxu0 0.0
      %3127 = vmatprep.subr.mxu0 0.0
      %3128 = vmatpush1.msra.mxu0 0.0
      %3129 = vmatprep.subr.mxu0 0.0
      %3130 = vmatpush1.msra.mxu0 0.0
      %3131 = vmatprep.subr.mxu0 0.0
      %3132 = vmatpush1.msra.mxu0 0.0
      %3133 = vmatprep.subr.mxu0 0.0
      %3134 = vmatpush1.msra.mxu0 0.0
      %3135 = vmatprep.subr.mxu0 0.0
      %3136 = vmatpush1.msra.mxu0 0.0
      %3137 = vmatprep.subr.mxu0 0.0
      %3138 = vmatpush1.msra.mxu0 0.0
      %3139 = vmatprep.subr.mxu0 0.0
      %3140 = vmatpush1.msra.mxu0 0.0
      %3141 = vmatprep.subr.mxu0 0.0
      %3142 = vmatpush1.msra.mxu0 0.0
      %3143 = vmatprep.subr.mxu0 0.0
      %3144 = vmatpush1.msra.mxu0 0.0
      %3145 = vmatprep.subr.mxu0 0.0
      %3146 = vmatpush1.msra.mxu0 0.0
      %3147 = vmatprep.subr.mxu0 0.0
      %3148 = vmatpush1.msra.mxu0 0.0
      %3149 = vmatprep.subr.mxu0 0.0
      %3150 = vmatpush1.msra.mxu0 0.0
      %3151 = vmatprep.subr.mxu0 0.0
      %3152 = vmatpush1.msra.mxu0 0.0
      %3153 = vmatprep.subr.mxu0 0.0
      %3154 = vmatpush1.msra.mxu0 0.0
      %3155 = vmatprep.mubr.f32.mxu0 0.0
      %3156 = vmatmul.mubr.f32.gmra.mrb[0].mxu0 %v3080
      %v3157 = vpop.f32.mrb[0].mxu0
      %v3158 = vadd.f32 0.0, %v3157
      %v3159 = vpop.f32.mrb[0].mxu0
      %v3160 = vadd.f32 0.0, %v3159
      %3161 = vmatprep.mubr.f32.mxu0 0.0
      %3162 = vmatmul.mubr.f32.gmra.mrb[0].mxu0 %v3083
      %v3163 = vpop.f32.mrb[0].mxu0
      %v3164 = vadd.f32 0.0, %v3163
      %v3165 = vpop.f32.mrb[0].mxu0
      %v3166 = vadd.f32 0.0, %v3165
      %3167 = vmatprep.mubr.f32.mxu0 0.0
      %3168 = vmatmul.mubr.f32.gmra.mrb[0].mxu0 %v3086
      %v3169 = vpop.f32.mrb[0].mxu0
      %v3170 = vadd.f32 0.0, %v3169
      %v3171 = vpop.f32.mrb[0].mxu0
      %v3172 = vadd.f32 0.0, %v3171
      %3173 = vmatprep.mubr.f32.mxu0 0.0
      %3174 = vmatmul.mubr.f32.gmra.mrb[0].mxu0 %v3089
      %v3175 = vpop.f32.mrb[0].mxu0
      %v3176 = vadd.f32 0.0, %v3175
      %v3177 = vpop.f32.mrb[0].mxu0
      %v3178 = vadd.f32 0.0, %v3177
      %3179 = vdwg.mxu0
      %v3180 = vadd.f32 %v3035, %v3158
      %v3181 = vadd.f32 %v3036, %v3160
      %v3182 = vadd.f32 %v3037, %v3164
      %v3183 = vadd.f32 %v3038, %v3166
      %v3184 = vadd.f32 %v3039, %v3170
      %v3185 = vadd.f32 %v3040, %v3172
      %v3186 = vadd.f32 %v3041, %v3176
      %v3187 = vadd.f32 %v3042, %v3178
      %3188 = vrot.lane.b32.xlu0 %v1890, 14
      %v3189 = vpop.permute.xlu0 %3188
      %3190 = vrot.lane.b32.xlu0 %v1892, 14
      %v3191 = vpop.permute.xlu0 %3190
      %3192 = vrot.lane.b32.xlu0 %v1894, 14
      %v3193 = vpop.permute.xlu0 %3192
      %3194 = vrot.lane.b32.xlu0 %v1896, 14
      %v3195 = vpop.permute.xlu0 %3194
      %3196 = vrot.lane.b32.xlu0 %v1891, 14
      %v3197 = vpop.permute.xlu0 %3196
      %3198 = vrot.lane.b32.xlu0 %v1893, 14
      %v3199 = vpop.permute.xlu0 %3198
      %3200 = vrot.lane.b32.xlu0 %v1895, 14
      %v3201 = vpop.permute.xlu0 %3200
      %3202 = vrot.lane.b32.xlu0 %v1897, 14
      %v3203 = vpop.permute.xlu0 %3202
      %v3204 = vsel %vm886, %v3189, %v3197
      %v3205 = vsel %vm886, %v3191, %v3199
      %v3206 = vsel %vm886, %v3193, %v3201
      %v3207 = vsel %vm886, %v3195, %v3203
      %v3208 = vsel %vm886, %v3197, %v3189
      %v3209 = vsel %vm886, %v3199, %v3191
      %v3210 = vsel %vm886, %v3201, %v3193
      %v3211 = vsel %vm886, %v3203, %v3195
      %v3212 = vmul.f32 %v3208, %v895
      %v3213 = vmul.f32 %v3204, %v899
      %v3214 = vmul.f32 %v3209, %v895
      %v3215 = vmul.f32 %v3205, %v899
      %v3216 = vmul.f32 %v3210, %v895
      %v3217 = vmul.f32 %v3206, %v899
      %v3218 = vmul.f32 %v3211, %v895
      %v3219 = vmul.f32 %v3207, %v899
      %3220 = vrot.lane.b32.xlu0 %v3075, 96
      %v3221 = vpop.permute.xlu0 %3220
      %3222 = vrot.lane.b32.xlu0 %v3076, 96
      %v3223 = vpop.permute.xlu0 %3222
      %3224 = vrot.lane.b32.xlu0 %v3077, 96
      %v3225 = vpop.permute.xlu0 %3224
      %3226 = vrot.lane.b32.xlu0 %v3078, 96
      %v3227 = vpop.permute.xlu0 %3226
      %v3228 = vsel %vm1978, %v3221, 0
      %v3230 = vsel %vm1978, %v3223, 0
      %v3232 = vsel %vm1978, %v3225, 0
      %v3234 = vsel %vm1978, %v3227, 0
      %3236 = vmatprep.subr.mxu0 %v3213
      %3237 = vmatpush1.msra.mxu0 %v3212
      %3238 = vmatprep.subr.mxu0 %v3215
      %3239 = vmatpush1.msra.mxu0 %v3214
      %3240 = vmatprep.subr.mxu0 %v3217
      %3241 = vmatpush1.msra.mxu0 %v3216
      %3242 = vmatprep.subr.mxu0 %v3219
      %3243 = vmatpush1.msra.mxu0 %v3218
      %3244 = vmatprep.subr.mxu0 0.0
      %3245 = vmatpush1.msra.mxu0 0.0
      %3246 = vmatprep.subr.mxu0 0.0
      %3247 = vmatpush1.msra.mxu0 0.0
      %3248 = vmatprep.subr.mxu0 0.0
      %3249 = vmatpush1.msra.mxu0 0.0
      %3250 = vmatprep.subr.mxu0 0.0
      %3251 = vmatpush1.msra.mxu0 0.0
      %3252 = vmatprep.subr.mxu0 0.0
      %3253 = vmatpush1.msra.mxu0 0.0
      %3254 = vmatprep.subr.mxu0 0.0
      %3255 = vmatpush1.msra.mxu0 0.0
      %3256 = vmatprep.subr.mxu0 0.0
      %3257 = vmatpush1.msra.mxu0 0.0
      %3258 = vmatprep.subr.mxu0 0.0
      %3259 = vmatpush1.msra.mxu0 0.0
      %3260 = vmatprep.subr.mxu0 0.0
      %3261 = vmatpush1.msra.mxu0 0.0
      %3262 = vmatprep.subr.mxu0 0.0
      %3263 = vmatpush1.msra.mxu0 0.0
      %3264 = vmatprep.subr.mxu0 0.0
      %3265 = vmatpush1.msra.mxu0 0.0
      %3266 = vmatprep.subr.mxu0 0.0
      %3267 = vmatpush1.msra.mxu0 0.0
      %3268 = vmatprep.subr.mxu0 0.0
      %3269 = vmatpush1.msra.mxu0 0.0
      %3270 = vmatprep.subr.mxu0 0.0
      %3271 = vmatpush1.msra.mxu0 0.0
      %3272 = vmatprep.subr.mxu0 0.0
      %3273 = vmatpush1.msra.mxu0 0.0
      %3274 = vmatprep.subr.mxu0 0.0
      %3275 = vmatpush1.msra.mxu0 0.0
      %3276 = vmatprep.subr.mxu0 0.0
      %3277 = vmatpush1.msra.mxu0 0.0
      %3278 = vmatprep.subr.mxu0 0.0
      %3279 = vmatpush1.msra.mxu0 0.0
      %3280 = vmatprep.subr.mxu0 0.0
      %3281 = vmatpush1.msra.mxu0 0.0
      %3282 = vmatprep.subr.mxu0 0.0
      %3283 = vmatpush1.msra.mxu0 0.0
      %3284 = vmatprep.subr.mxu0 0.0
      %3285 = vmatpush1.msra.mxu0 0.0
      %3286 = vmatprep.subr.mxu0 0.0
      %3287 = vmatpush1.msra.mxu0 0.0
      %3288 = vmatprep.subr.mxu0 0.0
      %3289 = vmatpush1.msra.mxu0 0.0
      %3290 = vmatprep.subr.mxu0 0.0
      %3291 = vmatpush1.msra.mxu0 0.0
      %3292 = vmatprep.subr.mxu0 0.0
      %3293 = vmatpush1.msra.mxu0 0.0
      %3294 = vmatprep.subr.mxu0 0.0
      %3295 = vmatpush1.msra.mxu0 0.0
      %3296 = vmatprep.subr.mxu0 0.0
      %3297 = vmatpush1.msra.mxu0 0.0
      %3298 = vmatprep.subr.mxu0 0.0
      %3299 = vmatpush1.msra.mxu0 0.0
      %3300 = vmatprep.mubr.f32.mxu0 0.0
      %3301 = vmatmul.mubr.f32.gmra.mrb[0].mxu0 %v3228
      %v3302 = vpop.f32.mrb[0].mxu0
      %v3303 = vadd.f32 0.0, %v3302
      %v3304 = vpop.f32.mrb[0].mxu0
      %v3305 = vadd.f32 0.0, %v3304
      %3306 = vmatprep.mubr.f32.mxu0 0.0
      %3307 = vmatmul.mubr.f32.gmra.mrb[0].mxu0 %v3230
      %v3308 = vpop.f32.mrb[0].mxu0
      %v3309 = vadd.f32 0.0, %v3308
      %v3310 = vpop.f32.mrb[0].mxu0
      %v3311 = vadd.f32 0.0, %v3310
      %3312 = vmatprep.mubr.f32.mxu0 0.0
      %3313 = vmatmul.mubr.f32.gmra.mrb[0].mxu0 %v3232
      %v3314 = vpop.f32.mrb[0].mxu0
      %v3315 = vadd.f32 0.0, %v3314
      %v3316 = vpop.f32.mrb[0].mxu0
      %v3317 = vadd.f32 0.0, %v3316
      %3318 = vmatprep.mubr.f32.mxu0 0.0
      %3319 = vmatmul.mubr.f32.gmra.mrb[0].mxu0 %v3234
      %v3320 = vpop.f32.mrb[0].mxu0
      %v3321 = vadd.f32 0.0, %v3320
      %v3322 = vpop.f32.mrb[0].mxu0
      %v3323 = vadd.f32 0.0, %v3322
      %3324 = vdwg.mxu0
      %v3325 = vadd.f32 %v3180, %v3303
      %v3326 = vadd.f32 %v3181, %v3305
      %v3327 = vadd.f32 %v3182, %v3309
      %v3328 = vadd.f32 %v3183, %v3311
      %v3329 = vadd.f32 %v3184, %v3315
      %v3330 = vadd.f32 %v3185, %v3317
      %v3331 = vadd.f32 %v3186, %v3321
      %v3332 = vadd.f32 %v3187, %v3323
      %3333 = vrot.lane.b32.xlu0 %v1890, 2
      %v3334 = vpop.permute.xlu0 %3333
      %3335 = vrot.lane.b32.xlu0 %v1892, 2
      %v3336 = vpop.permute.xlu0 %3335
      %3337 = vrot.lane.b32.xlu0 %v1894, 2
      %v3338 = vpop.permute.xlu0 %3337
      %3339 = vrot.lane.b32.xlu0 %v1896, 2
      %v3340 = vpop.permute.xlu0 %3339
      %3341 = vrot.lane.b32.xlu0 %v1891, 2
      %v3342 = vpop.permute.xlu0 %3341
      %3343 = vrot.lane.b32.xlu0 %v1893, 2
      %v3344 = vpop.permute.xlu0 %3343
      %3345 = vrot.lane.b32.xlu0 %v1895, 2
      %v3346 = vpop.permute.xlu0 %3345
      %3347 = vrot.lane.b32.xlu0 %v1897, 2
      %v3348 = vpop.permute.xlu0 %3347
      %v3349 = vsel %vm948, %v3334, %v3342
      %v3350 = vsel %vm948, %v3336, %v3344
      %v3351 = vsel %vm948, %v3338, %v3346
      %v3352 = vsel %vm948, %v3340, %v3348
      %v3353 = vsel %vm948, %v3342, %v3334
      %v3354 = vsel %vm948, %v3344, %v3336
      %v3355 = vsel %vm948, %v3346, %v3338
      %v3356 = vsel %vm948, %v3348, %v3340
      %v3357 = vmul.f32 %v3353, %v957
      %v3358 = vmul.f32 %v3349, %v961
      %v3359 = vmul.f32 %v3354, %v957
      %v3360 = vmul.f32 %v3350, %v961
      %v3361 = vmul.f32 %v3355, %v957
      %v3362 = vmul.f32 %v3351, %v961
      %v3363 = vmul.f32 %v3356, %v957
      %v3364 = vmul.f32 %v3352, %v961
      %3365 = vrot.lane.b32.xlu0 %v3075, 64
      %v3366 = vpop.permute.xlu0 %3365
      %3367 = vrot.lane.b32.xlu0 %v3076, 64
      %v3368 = vpop.permute.xlu0 %3367
      %3369 = vrot.lane.b32.xlu0 %v3077, 64
      %v3370 = vpop.permute.xlu0 %3369
      %3371 = vrot.lane.b32.xlu0 %v3078, 64
      %v3372 = vpop.permute.xlu0 %3371
      %v3373 = vsel %vm1978, %v3366, 0
      %v3375 = vsel %vm1978, %v3368, 0
      %v3377 = vsel %vm1978, %v3370, 0
      %v3379 = vsel %vm1978, %v3372, 0
      %3381 = vmatprep.subr.mxu0 %v3358
      %3382 = vmatpush1.msra.mxu0 %v3357
      %3383 = vmatprep.subr.mxu0 %v3360
      %3384 = vmatpush1.msra.mxu0 %v3359
      %3385 = vmatprep.subr.mxu0 %v3362
      %3386 = vmatpush1.msra.mxu0 %v3361
      %3387 = vmatprep.subr.mxu0 %v3364
      %3388 = vmatpush1.msra.mxu0 %v3363
      %3389 = vmatprep.subr.mxu0 0.0
      %3390 = vmatpush1.msra.mxu0 0.0
      %3391 = vmatprep.subr.mxu0 0.0
      %3392 = vmatpush1.msra.mxu0 0.0
      %3393 = vmatprep.subr.mxu0 0.0
      %3394 = vmatpush1.msra.mxu0 0.0
      %3395 = vmatprep.subr.mxu0 0.0
      %3396 = vmatpush1.msra.mxu0 0.0
      %3397 = vmatprep.subr.mxu0 0.0
      %3398 = vmatpush1.msra.mxu0 0.0
      %3399 = vmatprep.subr.mxu0 0.0
      %3400 = vmatpush1.msra.mxu0 0.0
      %3401 = vmatprep.subr.mxu0 0.0
      %3402 = vmatpush1.msra.mxu0 0.0
      %3403 = vmatprep.subr.mxu0 0.0
      %3404 = vmatpush1.msra.mxu0 0.0
      %3405 = vmatprep.subr.mxu0 0.0
      %3406 = vmatpush1.msra.mxu0 0.0
      %3407 = vmatprep.subr.mxu0 0.0
      %3408 = vmatpush1.msra.mxu0 0.0
      %3409 = vmatprep.subr.mxu0 0.0
      %3410 = vmatpush1.msra.mxu0 0.0
      %3411 = vmatprep.subr.mxu0 0.0
      %3412 = vmatpush1.msra.mxu0 0.0
      %3413 = vmatprep.subr.mxu0 0.0
      %3414 = vmatpush1.msra.mxu0 0.0
      %3415 = vmatprep.subr.mxu0 0.0
      %3416 = vmatpush1.msra.mxu0 0.0
      %3417 = vmatprep.subr.mxu0 0.0
      %3418 = vmatpush1.msra.mxu0 0.0
      %3419 = vmatprep.subr.mxu0 0.0
      %3420 = vmatpush1.msra.mxu0 0.0
      %3421 = vmatprep.subr.mxu0 0.0
      %3422 = vmatpush1.msra.mxu0 0.0
      %3423 = vmatprep.subr.mxu0 0.0
      %3424 = vmatpush1.msra.mxu0 0.0
      %3425 = vmatprep.subr.mxu0 0.0
      %3426 = vmatpush1.msra.mxu0 0.0
      %3427 = vmatprep.subr.mxu0 0.0
      %3428 = vmatpush1.msra.mxu0 0.0
      %3429 = vmatprep.subr.mxu0 0.0
      %3430 = vmatpush1.msra.mxu0 0.0
      %3431 = vmatprep.subr.mxu0 0.0
      %3432 = vmatpush1.msra.mxu0 0.0
      %3433 = vmatprep.subr.mxu0 0.0
      %3434 = vmatpush1.msra.mxu0 0.0
      %3435 = vmatprep.subr.mxu0 0.0
      %3436 = vmatpush1.msra.mxu0 0.0
      %3437 = vmatprep.subr.mxu0 0.0
      %3438 = vmatpush1.msra.mxu0 0.0
      %3439 = vmatprep.subr.mxu0 0.0
      %3440 = vmatpush1.msra.mxu0 0.0
      %3441 = vmatprep.subr.mxu0 0.0
      %3442 = vmatpush1.msra.mxu0 0.0
      %3443 = vmatprep.subr.mxu0 0.0
      %3444 = vmatpush1.msra.mxu0 0.0
      %3445 = vmatprep.mubr.f32.mxu0 0.0
      %3446 = vmatmul.mubr.f32.gmra.mrb[0].mxu0 %v3373
      %v3447 = vpop.f32.mrb[0].mxu0
      %v3448 = vadd.f32 0.0, %v3447
      %v3449 = vpop.f32.mrb[0].mxu0
      %v3450 = vadd.f32 0.0, %v3449
      %3451 = vmatprep.mubr.f32.mxu0 0.0
      %3452 = vmatmul.mubr.f32.gmra.mrb[0].mxu0 %v3375
      %v3453 = vpop.f32.mrb[0].mxu0
      %v3454 = vadd.f32 0.0, %v3453
      %v3455 = vpop.f32.mrb[0].mxu0
      %v3456 = vadd.f32 0.0, %v3455
      %3457 = vmatprep.mubr.f32.mxu0 0.0
      %3458 = vmatmul.mubr.f32.gmra.mrb[0].mxu0 %v3377
      %v3459 = vpop.f32.mrb[0].mxu0
      %v3460 = vadd.f32 0.0, %v3459
      %v3461 = vpop.f32.mrb[0].mxu0
      %v3462 = vadd.f32 0.0, %v3461
      %3463 = vmatprep.mubr.f32.mxu0 0.0
      %3464 = vmatmul.mubr.f32.gmra.mrb[0].mxu0 %v3379
      %v3465 = vpop.f32.mrb[0].mxu0
      %v3466 = vadd.f32 0.0, %v3465
      %v3467 = vpop.f32.mrb[0].mxu0
      %v3468 = vadd.f32 0.0, %v3467
      %3469 = vdwg.mxu0
      %v3470 = vadd.f32 %v3325, %v3448
      %v3471 = vadd.f32 %v3326, %v3450
      %v3472 = vadd.f32 %v3327, %v3454
      %v3473 = vadd.f32 %v3328, %v3456
      %v3474 = vadd.f32 %v3329, %v3460
      %v3475 = vadd.f32 %v3330, %v3462
      %v3476 = vadd.f32 %v3331, %v3466
      %v3477 = vadd.f32 %v3332, %v3468
      %3478 = vrot.lane.b32.xlu0 %v1890, 1
      %v3479 = vpop.permute.xlu0 %3478
      %3480 = vrot.lane.b32.xlu0 %v1892, 1
      %v3481 = vpop.permute.xlu0 %3480
      %3482 = vrot.lane.b32.xlu0 %v1894, 1
      %v3483 = vpop.permute.xlu0 %3482
      %3484 = vrot.lane.b32.xlu0 %v1896, 1
      %v3485 = vpop.permute.xlu0 %3484
      %3486 = vrot.lane.b32.xlu0 %v1891, 1
      %v3487 = vpop.permute.xlu0 %3486
      %3488 = vrot.lane.b32.xlu0 %v1893, 1
      %v3489 = vpop.permute.xlu0 %3488
      %3490 = vrot.lane.b32.xlu0 %v1895, 1
      %v3491 = vpop.permute.xlu0 %3490
      %3492 = vrot.lane.b32.xlu0 %v1897, 1
      %v3493 = vpop.permute.xlu0 %3492
      %v3494 = vsel %vm1010, %v3479, %v3487
      %v3495 = vsel %vm1010, %v3481, %v3489
      %v3496 = vsel %vm1010, %v3483, %v3491
      %v3497 = vsel %vm1010, %v3485, %v3493
      %v3498 = vsel %vm1010, %v3487, %v3479
      %v3499 = vsel %vm1010, %v3489, %v3481
      %v3500 = vsel %vm1010, %v3491, %v3483
      %v3501 = vsel %vm1010, %v3493, %v3485
      %v3502 = vmul.f32 %v3498, %v1019
      %v3503 = vmul.f32 %v3494, %v1023
      %v3504 = vmul.f32 %v3499, %v1019
      %v3505 = vmul.f32 %v3495, %v1023
      %v3506 = vmul.f32 %v3500, %v1019
      %v3507 = vmul.f32 %v3496, %v1023
      %v3508 = vmul.f32 %v3501, %v1019
      %v3509 = vmul.f32 %v3497, %v1023
      %3510 = vrot.lane.b32.xlu0 %v3075, 32
      %v3511 = vpop.permute.xlu0 %3510
      %3512 = vrot.lane.b32.xlu0 %v3076, 32
      %v3513 = vpop.permute.xlu0 %3512
      %3514 = vrot.lane.b32.xlu0 %v3077, 32
      %v3515 = vpop.permute.xlu0 %3514
      %3516 = vrot.lane.b32.xlu0 %v3078, 32
      %v3517 = vpop.permute.xlu0 %3516
      %v3518 = vsel %vm1978, %v3511, 0
      %v3520 = vsel %vm1978, %v3513, 0
      %v3522 = vsel %vm1978, %v3515, 0
      %v3524 = vsel %vm1978, %v3517, 0
      %3526 = vmatprep.subr.mxu0 %v3503
      %3527 = vmatpush1.msra.mxu0 %v3502
      %3528 = vmatprep.subr.mxu0 %v3505
      %3529 = vmatpush1.msra.mxu0 %v3504
      %3530 = vmatprep.subr.mxu0 %v3507
      %3531 = vmatpush1.msra.mxu0 %v3506
      %3532 = vmatprep.subr.mxu0 %v3509
      %3533 = vmatpush1.msra.mxu0 %v3508
      %3534 = vmatprep.subr.mxu0 0.0
      %3535 = vmatpush1.msra.mxu0 0.0
      %3536 = vmatprep.subr.mxu0 0.0
      %3537 = vmatpush1.msra.mxu0 0.0
      %3538 = vmatprep.subr.mxu0 0.0
      %3539 = vmatpush1.msra.mxu0 0.0
      %3540 = vmatprep.subr.mxu0 0.0
      %3541 = vmatpush1.msra.mxu0 0.0
      %3542 = vmatprep.subr.mxu0 0.0
      %3543 = vmatpush1.msra.mxu0 0.0
      %3544 = vmatprep.subr.mxu0 0.0
      %3545 = vmatpush1.msra.mxu0 0.0
      %3546 = vmatprep.subr.mxu0 0.0
      %3547 = vmatpush1.msra.mxu0 0.0
      %3548 = vmatprep.subr.mxu0 0.0
      %3549 = vmatpush1.msra.mxu0 0.0
      %3550 = vmatprep.subr.mxu0 0.0
      %3551 = vmatpush1.msra.mxu0 0.0
      %3552 = vmatprep.subr.mxu0 0.0
      %3553 = vmatpush1.msra.mxu0 0.0
      %3554 = vmatprep.subr.mxu0 0.0
      %3555 = vmatpush1.msra.mxu0 0.0
      %3556 = vmatprep.subr.mxu0 0.0
      %3557 = vmatpush1.msra.mxu0 0.0
      %3558 = vmatprep.subr.mxu0 0.0
      %3559 = vmatpush1.msra.mxu0 0.0
      %3560 = vmatprep.subr.mxu0 0.0
      %3561 = vmatpush1.msra.mxu0 0.0
      %3562 = vmatprep.subr.mxu0 0.0
      %3563 = vmatpush1.msra.mxu0 0.0
      %3564 = vmatprep.subr.mxu0 0.0
      %3565 = vmatpush1.msra.mxu0 0.0
      %3566 = vmatprep.subr.mxu0 0.0
      %3567 = vmatpush1.msra.mxu0 0.0
      %3568 = vmatprep.subr.mxu0 0.0
      %3569 = vmatpush1.msra.mxu0 0.0
      %3570 = vmatprep.subr.mxu0 0.0
      %3571 = vmatpush1.msra.mxu0 0.0
      %3572 = vmatprep.subr.mxu0 0.0
      %3573 = vmatpush1.msra.mxu0 0.0
      %3574 = vmatprep.subr.mxu0 0.0
      %3575 = vmatpush1.msra.mxu0 0.0
      %3576 = vmatprep.subr.mxu0 0.0
      %3577 = vmatpush1.msra.mxu0 0.0
      %3578 = vmatprep.subr.mxu0 0.0
      %3579 = vmatpush1.msra.mxu0 0.0
      %3580 = vmatprep.subr.mxu0 0.0
      %3581 = vmatpush1.msra.mxu0 0.0
      %3582 = vmatprep.subr.mxu0 0.0
      %3583 = vmatpush1.msra.mxu0 0.0
      %3584 = vmatprep.subr.mxu0 0.0
      %3585 = vmatpush1.msra.mxu0 0.0
      %3586 = vmatprep.subr.mxu0 0.0
      %3587 = vmatpush1.msra.mxu0 0.0
      %3588 = vmatprep.subr.mxu0 0.0
      %3589 = vmatpush1.msra.mxu0 0.0
      %3590 = vmatprep.mubr.f32.mxu0 0.0
      %3591 = vmatmul.mubr.f32.gmra.mrb[0].mxu0 %v3518
      %v3592 = vpop.f32.mrb[0].mxu0
      %v3593 = vadd.f32 0.0, %v3592
      %v3594 = vpop.f32.mrb[0].mxu0
      %v3595 = vadd.f32 0.0, %v3594
      %3596 = vmatprep.mubr.f32.mxu0 0.0
      %3597 = vmatmul.mubr.f32.gmra.mrb[0].mxu0 %v3520
      %v3598 = vpop.f32.mrb[0].mxu0
      %v3599 = vadd.f32 0.0, %v3598
      %v3600 = vpop.f32.mrb[0].mxu0
      %v3601 = vadd.f32 0.0, %v3600
      %3602 = vmatprep.mubr.f32.mxu0 0.0
      %3603 = vmatmul.mubr.f32.gmra.mrb[0].mxu0 %v3522
      %v3604 = vpop.f32.mrb[0].mxu0
      %v3605 = vadd.f32 0.0, %v3604
      %v3606 = vpop.f32.mrb[0].mxu0
      %v3607 = vadd.f32 0.0, %v3606
      %3608 = vmatprep.mubr.f32.mxu0 0.0
      %3609 = vmatmul.mubr.f32.gmra.mrb[0].mxu0 %v3524
      %v3610 = vpop.f32.mrb[0].mxu0
      %v3611 = vadd.f32 0.0, %v3610
      %v3612 = vpop.f32.mrb[0].mxu0
      %v3613 = vadd.f32 0.0, %v3612
      %3614 = vdwg.mxu0
      %v3615 = vadd.f32 %v3470, %v3593
      %v3616 = vadd.f32 %v3471, %v3595
      %v3617 = vadd.f32 %v3472, %v3599
      %v3618 = vadd.f32 %v3473, %v3601
      %v3619 = vadd.f32 %v3474, %v3605
      %v3620 = vadd.f32 %v3475, %v3607
      %v3621 = vadd.f32 %v3476, %v3611
      %v3622 = vadd.f32 %v3477, %v3613
      %v3624 = vlaneseq
      %v3625 = vshrl.u32 %v3624, 7
      %v3626 = vsub.s32 0, %v3625
      %v3627 = vrot.slane %v1069, %v3626
      %v3628 = vlaneseq
      %v3629 = vshrl.u32 %v3628, 7
      %v3630 = vsub.s32 1, %v3629
      %v3631 = vrot.slane %v1069, %v3630
      %v3634 = vmul.f32 %v1890, %v3627
      %v3635 = vmul.f32 %v1891, %v3631
      %v3636 = vmul.f32 %v1892, %v3627
      %v3637 = vmul.f32 %v1893, %v3631
      %v3638 = vmul.f32 %v1894, %v3627
      %v3639 = vmul.f32 %v1895, %v3631
      %v3640 = vmul.f32 %v1896, %v3627
      %v3641 = vmul.f32 %v1897, %v3631
      %v3642 = vld [vmem:[%s4 + $0x18] sm:$0xff]
      %v3643 = vld [vmem:[%s4 + $0x50] sm:$0xff]
      %v3644 = vld [vmem:[%s4 + $0x88] sm:$0xff]
      %v3645 = vld [vmem:[%s4 + $0xc0] sm:$0xff]
      %v3647 = vsel %vm1978, %v3642, 0
      %v3650 = vsel %vm1978, %v3643, 0
      %v3653 = vsel %vm1978, %v3644, 0
      %v3656 = vsel %vm1978, %v3645, 0
      %3658 = vmatprep.subr.mxu0 %v3635
      %3659 = vmatpush1.msra.mxu0 %v3634
      %3660 = vmatprep.subr.mxu0 %v3637
      %3661 = vmatpush1.msra.mxu0 %v3636
      %3662 = vmatprep.subr.mxu0 %v3639
      %3663 = vmatpush1.msra.mxu0 %v3638
      %3664 = vmatprep.subr.mxu0 %v3641
      %3665 = vmatpush1.msra.mxu0 %v3640
      %3666 = vmatprep.subr.mxu0 0.0
      %3667 = vmatpush1.msra.mxu0 0.0
      %3668 = vmatprep.subr.mxu0 0.0
      %3669 = vmatpush1.msra.mxu0 0.0
      %3670 = vmatprep.subr.mxu0 0.0
      %3671 = vmatpush1.msra.mxu0 0.0
      %3672 = vmatprep.subr.mxu0 0.0
      %3673 = vmatpush1.msra.mxu0 0.0
      %3674 = vmatprep.subr.mxu0 0.0
      %3675 = vmatpush1.msra.mxu0 0.0
      %3676 = vmatprep.subr.mxu0 0.0
      %3677 = vmatpush1.msra.mxu0 0.0
      %3678 = vmatprep.subr.mxu0 0.0
      %3679 = vmatpush1.msra.mxu0 0.0
      %3680 = vmatprep.subr.mxu0 0.0
      %3681 = vmatpush1.msra.mxu0 0.0
      %3682 = vmatprep.subr.mxu0 0.0
      %3683 = vmatpush1.msra.mxu0 0.0
      %3684 = vmatprep.subr.mxu0 0.0
      %3685 = vmatpush1.msra.mxu0 0.0
      %3686 = vmatprep.subr.mxu0 0.0
      %3687 = vmatpush1.msra.mxu0 0.0
      %3688 = vmatprep.subr.mxu0 0.0
      %3689 = vmatpush1.msra.mxu0 0.0
      %3690 = vmatprep.subr.mxu0 0.0
      %3691 = vmatpush1.msra.mxu0 0.0
      %3692 = vmatprep.subr.mxu0 0.0
      %3693 = vmatpush1.msra.mxu0 0.0
      %3694 = vmatprep.subr.mxu0 0.0
      %3695 = vmatpush1.msra.mxu0 0.0
      %3696 = vmatprep.subr.mxu0 0.0
      %3697 = vmatpush1.msra.mxu0 0.0
      %3698 = vmatprep.subr.mxu0 0.0
      %3699 = vmatpush1.msra.mxu0 0.0
      %3700 = vmatprep.subr.mxu0 0.0
      %3701 = vmatpush1.msra.mxu0 0.0
      %3702 = vmatprep.subr.mxu0 0.0
      %3703 = vmatpush1.msra.mxu0 0.0
      %3704 = vmatprep.subr.mxu0 0.0
      %3705 = vmatpush1.msra.mxu0 0.0
      %3706 = vmatprep.subr.mxu0 0.0
      %3707 = vmatpush1.msra.mxu0 0.0
      %3708 = vmatprep.subr.mxu0 0.0
      %3709 = vmatpush1.msra.mxu0 0.0
      %3710 = vmatprep.subr.mxu0 0.0
      %3711 = vmatpush1.msra.mxu0 0.0
      %3712 = vmatprep.subr.mxu0 0.0
      %3713 = vmatpush1.msra.mxu0 0.0
      %3714 = vmatprep.subr.mxu0 0.0
      %3715 = vmatpush1.msra.mxu0 0.0
      %3716 = vmatprep.subr.mxu0 0.0
      %3717 = vmatpush1.msra.mxu0 0.0
      %3718 = vmatprep.subr.mxu0 0.0
      %3719 = vmatpush1.msra.mxu0 0.0
      %3720 = vmatprep.subr.mxu0 0.0
      %3721 = vmatpush1.msra.mxu0 0.0
      %3722 = vmatprep.mubr.f32.mxu0 0.0
      %3723 = vmatmul.mubr.f32.gmra.mrb[0].mxu0 %v3647
      %v3724 = vpop.f32.mrb[0].mxu0
      %v3725 = vadd.f32 0.0, %v3724
      %v3726 = vpop.f32.mrb[0].mxu0
      %v3727 = vadd.f32 0.0, %v3726
      %3728 = vmatprep.mubr.f32.mxu0 0.0
      %3729 = vmatmul.mubr.f32.gmra.mrb[0].mxu0 %v3650
      %v3730 = vpop.f32.mrb[0].mxu0
      %v3731 = vadd.f32 0.0, %v3730
      %v3732 = vpop.f32.mrb[0].mxu0
      %v3733 = vadd.f32 0.0, %v3732
      %3734 = vmatprep.mubr.f32.mxu0 0.0
      %3735 = vmatmul.mubr.f32.gmra.mrb[0].mxu0 %v3653
      %v3736 = vpop.f32.mrb[0].mxu0
      %v3737 = vadd.f32 0.0, %v3736
      %v3738 = vpop.f32.mrb[0].mxu0
      %v3739 = vadd.f32 0.0, %v3738
      %3740 = vmatprep.mubr.f32.mxu0 0.0
      %3741 = vmatmul.mubr.f32.gmra.mrb[0].mxu0 %v3656
      %v3742 = vpop.f32.mrb[0].mxu0
      %v3743 = vadd.f32 0.0, %v3742
      %v3744 = vpop.f32.mrb[0].mxu0
      %v3745 = vadd.f32 0.0, %v3744
      %3746 = vdwg.mxu0
      %v3747 = vadd.f32 %v3615, %v3725
      %v3748 = vadd.f32 %v3616, %v3727
      %v3749 = vadd.f32 %v3617, %v3731
      %v3750 = vadd.f32 %v3618, %v3733
      %v3751 = vadd.f32 %v3619, %v3737
      %v3752 = vadd.f32 %v3620, %v3739
      %v3753 = vadd.f32 %v3621, %v3743
      %v3754 = vadd.f32 %v3622, %v3745
      %3755 = vrot.lane.b32.xlu0 %v1890, 127
      %v3756 = vpop.permute.xlu0 %3755
      %3757 = vrot.lane.b32.xlu0 %v1892, 127
      %v3758 = vpop.permute.xlu0 %3757
      %3759 = vrot.lane.b32.xlu0 %v1894, 127
      %v3760 = vpop.permute.xlu0 %3759
      %3761 = vrot.lane.b32.xlu0 %v1896, 127
      %v3762 = vpop.permute.xlu0 %3761
      %3763 = vrot.lane.b32.xlu0 %v1891, 127
      %v3764 = vpop.permute.xlu0 %3763
      %3765 = vrot.lane.b32.xlu0 %v1893, 127
      %v3766 = vpop.permute.xlu0 %3765
      %3767 = vrot.lane.b32.xlu0 %v1895, 127
      %v3768 = vpop.permute.xlu0 %3767
      %3769 = vrot.lane.b32.xlu0 %v1897, 127
      %v3770 = vpop.permute.xlu0 %3769
      %v3771 = vsel %vm1118, %v3756, %v3764
      %v3772 = vsel %vm1118, %v3758, %v3766
      %v3773 = vsel %vm1118, %v3760, %v3768
      %v3774 = vsel %vm1118, %v3762, %v3770
      %v3775 = vsel %vm1118, %v3764, %v3756
      %v3776 = vsel %vm1118, %v3766, %v3758
      %v3777 = vsel %vm1118, %v3768, %v3760
      %v3778 = vsel %vm1118, %v3770, %v3762
      %v3779 = vmul.f32 %v3771, %v1127
      %v3780 = vmul.f32 %v3775, %v1131
      %v3781 = vmul.f32 %v3772, %v1127
      %v3782 = vmul.f32 %v3776, %v1131
      %v3783 = vmul.f32 %v3773, %v1127
      %v3784 = vmul.f32 %v3777, %v1131
      %v3785 = vmul.f32 %v3774, %v1127
      %v3786 = vmul.f32 %v3778, %v1131
      %3787 = vrot.lane.b32.xlu0 %v3642, 96
      %v3788 = vpop.permute.xlu0 %3787
      %3789 = vrot.lane.b32.xlu0 %v3643, 96
      %v3790 = vpop.permute.xlu0 %3789
      %3791 = vrot.lane.b32.xlu0 %v3644, 96
      %v3792 = vpop.permute.xlu0 %3791
      %3793 = vrot.lane.b32.xlu0 %v3645, 96
      %v3794 = vpop.permute.xlu0 %3793
      %v3795 = vsel %vm1978, %v3788, 0
      %v3797 = vsel %vm1978, %v3790, 0
      %v3799 = vsel %vm1978, %v3792, 0
      %v3801 = vsel %vm1978, %v3794, 0
      %3803 = vmatprep.subr.mxu0 %v3780
      %3804 = vmatpush1.msra.mxu0 %v3779
      %3805 = vmatprep.subr.mxu0 %v3782
      %3806 = vmatpush1.msra.mxu0 %v3781
      %3807 = vmatprep.subr.mxu0 %v3784
      %3808 = vmatpush1.msra.mxu0 %v3783
      %3809 = vmatprep.subr.mxu0 %v3786
      %3810 = vmatpush1.msra.mxu0 %v3785
      %3811 = vmatprep.subr.mxu0 0.0
      %3812 = vmatpush1.msra.mxu0 0.0
      %3813 = vmatprep.subr.mxu0 0.0
      %3814 = vmatpush1.msra.mxu0 0.0
      %3815 = vmatprep.subr.mxu0 0.0
      %3816 = vmatpush1.msra.mxu0 0.0
      %3817 = vmatprep.subr.mxu0 0.0
      %3818 = vmatpush1.msra.mxu0 0.0
      %3819 = vmatprep.subr.mxu0 0.0
      %3820 = vmatpush1.msra.mxu0 0.0
      %3821 = vmatprep.subr.mxu0 0.0
      %3822 = vmatpush1.msra.mxu0 0.0
      %3823 = vmatprep.subr.mxu0 0.0
      %3824 = vmatpush1.msra.mxu0 0.0
      %3825 = vmatprep.subr.mxu0 0.0
      %3826 = vmatpush1.msra.mxu0 0.0
      %3827 = vmatprep.subr.mxu0 0.0
      %3828 = vmatpush1.msra.mxu0 0.0
      %3829 = vmatprep.subr.mxu0 0.0
      %3830 = vmatpush1.msra.mxu0 0.0
      %3831 = vmatprep.subr.mxu0 0.0
      %3832 = vmatpush1.msra.mxu0 0.0
      %3833 = vmatprep.subr.mxu0 0.0
      %3834 = vmatpush1.msra.mxu0 0.0
      %3835 = vmatprep.subr.mxu0 0.0
      %3836 = vmatpush1.msra.mxu0 0.0
      %3837 = vmatprep.subr.mxu0 0.0
      %3838 = vmatpush1.msra.mxu0 0.0
      %3839 = vmatprep.subr.mxu0 0.0
      %3840 = vmatpush1.msra.mxu0 0.0
      %3841 = vmatprep.subr.mxu0 0.0
      %3842 = vmatpush1.msra.mxu0 0.0
      %3843 = vmatprep.subr.mxu0 0.0
      %3844 = vmatpush1.msra.mxu0 0.0
      %3845 = vmatprep.subr.mxu0 0.0
      %3846 = vmatpush1.msra.mxu0 0.0
      %3847 = vmatprep.subr.mxu0 0.0
      %3848 = vmatpush1.msra.mxu0 0.0
      %3849 = vmatprep.subr.mxu0 0.0
      %3850 = vmatpush1.msra.mxu0 0.0
      %3851 = vmatprep.subr.mxu0 0.0
      %3852 = vmatpush1.msra.mxu0 0.0
      %3853 = vmatprep.subr.mxu0 0.0
      %3854 = vmatpush1.msra.mxu0 0.0
      %3855 = vmatprep.subr.mxu0 0.0
      %3856 = vmatpush1.msra.mxu0 0.0
      %3857 = vmatprep.subr.mxu0 0.0
      %3858 = vmatpush1.msra.mxu0 0.0
      %3859 = vmatprep.subr.mxu0 0.0
      %3860 = vmatpush1.msra.mxu0 0.0
      %3861 = vmatprep.subr.mxu0 0.0
      %3862 = vmatpush1.msra.mxu0 0.0
      %3863 = vmatprep.subr.mxu0 0.0
      %3864 = vmatpush1.msra.mxu0 0.0
      %3865 = vmatprep.subr.mxu0 0.0
      %3866 = vmatpush1.msra.mxu0 0.0
      %3867 = vmatprep.mubr.f32.mxu0 0.0
      %3868 = vmatmul.mubr.f32.gmra.mrb[0].mxu0 %v3795
      %v3869 = vpop.f32.mrb[0].mxu0
      %v3870 = vadd.f32 0.0, %v3869
      %v3871 = vpop.f32.mrb[0].mxu0
      %v3872 = vadd.f32 0.0, %v3871
      %3873 = vmatprep.mubr.f32.mxu0 0.0
      %3874 = vmatmul.mubr.f32.gmra.mrb[0].mxu0 %v3797
      %v3875 = vpop.f32.mrb[0].mxu0
      %v3876 = vadd.f32 0.0, %v3875
      %v3877 = vpop.f32.mrb[0].mxu0
      %v3878 = vadd.f32 0.0, %v3877
      %3879 = vmatprep.mubr.f32.mxu0 0.0
      %3880 = vmatmul.mubr.f32.gmra.mrb[0].mxu0 %v3799
      %v3881 = vpop.f32.mrb[0].mxu0
      %v3882 = vadd.f32 0.0, %v3881
      %v3883 = vpop.f32.mrb[0].mxu0
      %v3884 = vadd.f32 0.0, %v3883
      %3885 = vmatprep.mubr.f32.mxu0 0.0
      %3886 = vmatmul.mubr.f32.gmra.mrb[0].mxu0 %v3801
      %v3887 = vpop.f32.mrb[0].mxu0
      %v3888 = vadd.f32 0.0, %v3887
      %v3889 = vpop.f32.mrb[0].mxu0
      %v3890 = vadd.f32 0.0, %v3889
      %3891 = vdwg.mxu0
      %v3892 = vadd.f32 %v3747, %v3870
      %v3893 = vadd.f32 %v3748, %v3872
      %v3894 = vadd.f32 %v3749, %v3876
      %v3895 = vadd.f32 %v3750, %v3878
      %v3896 = vadd.f32 %v3751, %v3882
      %v3897 = vadd.f32 %v3752, %v3884
      %v3898 = vadd.f32 %v3753, %v3888
      %v3899 = vadd.f32 %v3754, %v3890
      %3900 = vrot.lane.b32.xlu0 %v1890, 126
      %v3901 = vpop.permute.xlu0 %3900
      %3902 = vrot.lane.b32.xlu0 %v1892, 126
      %v3903 = vpop.permute.xlu0 %3902
      %3904 = vrot.lane.b32.xlu0 %v1894, 126
      %v3905 = vpop.permute.xlu0 %3904
      %3906 = vrot.lane.b32.xlu0 %v1896, 126
      %v3907 = vpop.permute.xlu0 %3906
      %3908 = vrot.lane.b32.xlu0 %v1891, 126
      %v3909 = vpop.permute.xlu0 %3908
      %3910 = vrot.lane.b32.xlu0 %v1893, 126
      %v3911 = vpop.permute.xlu0 %3910
      %3912 = vrot.lane.b32.xlu0 %v1895, 126
      %v3913 = vpop.permute.xlu0 %3912
      %3914 = vrot.lane.b32.xlu0 %v1897, 126
      %v3915 = vpop.permute.xlu0 %3914
      %v3916 = vsel %vm1180, %v3901, %v3909
      %v3917 = vsel %vm1180, %v3903, %v3911
      %v3918 = vsel %vm1180, %v3905, %v3913
      %v3919 = vsel %vm1180, %v3907, %v3915
      %v3920 = vsel %vm1180, %v3909, %v3901
      %v3921 = vsel %vm1180, %v3911, %v3903
      %v3922 = vsel %vm1180, %v3913, %v3905
      %v3923 = vsel %vm1180, %v3915, %v3907
      %v3924 = vmul.f32 %v3916, %v1189
      %v3925 = vmul.f32 %v3920, %v1193
      %v3926 = vmul.f32 %v3917, %v1189
      %v3927 = vmul.f32 %v3921, %v1193
      %v3928 = vmul.f32 %v3918, %v1189
      %v3929 = vmul.f32 %v3922, %v1193
      %v3930 = vmul.f32 %v3919, %v1189
      %v3931 = vmul.f32 %v3923, %v1193
      %3932 = vrot.lane.b32.xlu0 %v3642, 64
      %v3933 = vpop.permute.xlu0 %3932
      %3934 = vrot.lane.b32.xlu0 %v3643, 64
      %v3935 = vpop.permute.xlu0 %3934
      %3936 = vrot.lane.b32.xlu0 %v3644, 64
      %v3937 = vpop.permute.xlu0 %3936
      %3938 = vrot.lane.b32.xlu0 %v3645, 64
      %v3939 = vpop.permute.xlu0 %3938
      %v3940 = vsel %vm1978, %v3933, 0
      %v3942 = vsel %vm1978, %v3935, 0
      %v3944 = vsel %vm1978, %v3937, 0
      %v3946 = vsel %vm1978, %v3939, 0
      %3948 = vmatprep.subr.mxu0 %v3925
      %3949 = vmatpush1.msra.mxu0 %v3924
      %3950 = vmatprep.subr.mxu0 %v3927
      %3951 = vmatpush1.msra.mxu0 %v3926
      %3952 = vmatprep.subr.mxu0 %v3929
      %3953 = vmatpush1.msra.mxu0 %v3928
      %3954 = vmatprep.subr.mxu0 %v3931
      %3955 = vmatpush1.msra.mxu0 %v3930
      %3956 = vmatprep.subr.mxu0 0.0
      %3957 = vmatpush1.msra.mxu0 0.0
      %3958 = vmatprep.subr.mxu0 0.0
      %3959 = vmatpush1.msra.mxu0 0.0
      %3960 = vmatprep.subr.mxu0 0.0
      %3961 = vmatpush1.msra.mxu0 0.0
      %3962 = vmatprep.subr.mxu0 0.0
      %3963 = vmatpush1.msra.mxu0 0.0
      %3964 = vmatprep.subr.mxu0 0.0
      %3965 = vmatpush1.msra.mxu0 0.0
      %3966 = vmatprep.subr.mxu0 0.0
      %3967 = vmatpush1.msra.mxu0 0.0
      %3968 = vmatprep.subr.mxu0 0.0
      %3969 = vmatpush1.msra.mxu0 0.0
      %3970 = vmatprep.subr.mxu0 0.0
      %3971 = vmatpush1.msra.mxu0 0.0
      %3972 = vmatprep.subr.mxu0 0.0
      %3973 = vmatpush1.msra.mxu0 0.0
      %3974 = vmatprep.subr.mxu0 0.0
      %3975 = vmatpush1.msra.mxu0 0.0
      %3976 = vmatprep.subr.mxu0 0.0
      %3977 = vmatpush1.msra.mxu0 0.0
      %3978 = vmatprep.subr.mxu0 0.0
      %3979 = vmatpush1.msra.mxu0 0.0
      %3980 = vmatprep.subr.mxu0 0.0
      %3981 = vmatpush1.msra.mxu0 0.0
      %3982 = vmatprep.subr.mxu0 0.0
      %3983 = vmatpush1.msra.mxu0 0.0
      %3984 = vmatprep.subr.mxu0 0.0
      %3985 = vmatpush1.msra.mxu0 0.0
      %3986 = vmatprep.subr.mxu0 0.0
      %3987 = vmatpush1.msra.mxu0 0.0
      %3988 = vmatprep.subr.mxu0 0.0
      %3989 = vmatpush1.msra.mxu0 0.0
      %3990 = vmatprep.subr.mxu0 0.0
      %3991 = vmatpush1.msra.mxu0 0.0
      %3992 = vmatprep.subr.mxu0 0.0
      %3993 = vmatpush1.msra.mxu0 0.0
      %3994 = vmatprep.subr.mxu0 0.0
      %3995 = vmatpush1.msra.mxu0 0.0
      %3996 = vmatprep.subr.mxu0 0.0
      %3997 = vmatpush1.msra.mxu0 0.0
      %3998 = vmatprep.subr.mxu0 0.0
      %3999 = vmatpush1.msra.mxu0 0.0
      %4000 = vmatprep.subr.mxu0 0.0
      %4001 = vmatpush1.msra.mxu0 0.0
      %4002 = vmatprep.subr.mxu0 0.0
      %4003 = vmatpush1.msra.mxu0 0.0
      %4004 = vmatprep.subr.mxu0 0.0
      %4005 = vmatpush1.msra.mxu0 0.0
      %4006 = vmatprep.subr.mxu0 0.0
      %4007 = vmatpush1.msra.mxu0 0.0
      %4008 = vmatprep.subr.mxu0 0.0
      %4009 = vmatpush1.msra.mxu0 0.0
      %4010 = vmatprep.subr.mxu0 0.0
      %4011 = vmatpush1.msra.mxu0 0.0
      %4012 = vmatprep.mubr.f32.mxu0 0.0
      %4013 = vmatmul.mubr.f32.gmra.mrb[0].mxu0 %v3940
      %v4014 = vpop.f32.mrb[0].mxu0
      %v4015 = vadd.f32 0.0, %v4014
      %v4016 = vpop.f32.mrb[0].mxu0
      %v4017 = vadd.f32 0.0, %v4016
      %4018 = vmatprep.mubr.f32.mxu0 0.0
      %4019 = vmatmul.mubr.f32.gmra.mrb[0].mxu0 %v3942
      %v4020 = vpop.f32.mrb[0].mxu0
      %v4021 = vadd.f32 0.0, %v4020
      %v4022 = vpop.f32.mrb[0].mxu0
      %v4023 = vadd.f32 0.0, %v4022
      %4024 = vmatprep.mubr.f32.mxu0 0.0
      %4025 = vmatmul.mubr.f32.gmra.mrb[0].mxu0 %v3944
      %v4026 = vpop.f32.mrb[0].mxu0
      %v4027 = vadd.f32 0.0, %v4026
      %v4028 = vpop.f32.mrb[0].mxu0
      %v4029 = vadd.f32 0.0, %v4028
      %4030 = vmatprep.mubr.f32.mxu0 0.0
      %4031 = vmatmul.mubr.f32.gmra.mrb[0].mxu0 %v3946
      %v4032 = vpop.f32.mrb[0].mxu0
      %v4033 = vadd.f32 0.0, %v4032
      %v4034 = vpop.f32.mrb[0].mxu0
      %v4035 = vadd.f32 0.0, %v4034
      %4036 = vdwg.mxu0
      %v4037 = vadd.f32 %v3892, %v4015
      %v4038 = vadd.f32 %v3893, %v4017
      %v4039 = vadd.f32 %v3894, %v4021
      %v4040 = vadd.f32 %v3895, %v4023
      %v4041 = vadd.f32 %v3896, %v4027
      %v4042 = vadd.f32 %v3897, %v4029
      %v4043 = vadd.f32 %v3898, %v4033
      %v4044 = vadd.f32 %v3899, %v4035
      %4045 = vrot.lane.b32.xlu0 %v1890, 114
      %v4046 = vpop.permute.xlu0 %4045
      %4047 = vrot.lane.b32.xlu0 %v1892, 114
      %v4048 = vpop.permute.xlu0 %4047
      %4049 = vrot.lane.b32.xlu0 %v1894, 114
      %v4050 = vpop.permute.xlu0 %4049
      %4051 = vrot.lane.b32.xlu0 %v1896, 114
      %v4052 = vpop.permute.xlu0 %4051
      %4053 = vrot.lane.b32.xlu0 %v1891, 114
      %v4054 = vpop.permute.xlu0 %4053
      %4055 = vrot.lane.b32.xlu0 %v1893, 114
      %v4056 = vpop.permute.xlu0 %4055
      %4057 = vrot.lane.b32.xlu0 %v1895, 114
      %v4058 = vpop.permute.xlu0 %4057
      %4059 = vrot.lane.b32.xlu0 %v1897, 114
      %v4060 = vpop.permute.xlu0 %4059
      %v4061 = vsel %vm1242, %v4046, %v4054
      %v4062 = vsel %vm1242, %v4048, %v4056
      %v4063 = vsel %vm1242, %v4050, %v4058
      %v4064 = vsel %vm1242, %v4052, %v4060
      %v4065 = vsel %vm1242, %v4054, %v4046
      %v4066 = vsel %vm1242, %v4056, %v4048
      %v4067 = vsel %vm1242, %v4058, %v4050
      %v4068 = vsel %vm1242, %v4060, %v4052
      %v4069 = vmul.f32 %v4061, %v1251
      %v4070 = vmul.f32 %v4065, %v1255
      %v4071 = vmul.f32 %v4062, %v1251
      %v4072 = vmul.f32 %v4066, %v1255
      %v4073 = vmul.f32 %v4063, %v1251
      %v4074 = vmul.f32 %v4067, %v1255
      %v4075 = vmul.f32 %v4064, %v1251
      %v4076 = vmul.f32 %v4068, %v1255
      %4077 = vrot.lane.b32.xlu0 %v3642, 32
      %v4078 = vpop.permute.xlu0 %4077
      %4079 = vrot.lane.b32.xlu0 %v3643, 32
      %v4080 = vpop.permute.xlu0 %4079
      %4081 = vrot.lane.b32.xlu0 %v3644, 32
      %v4082 = vpop.permute.xlu0 %4081
      %4083 = vrot.lane.b32.xlu0 %v3645, 32
      %v4084 = vpop.permute.xlu0 %4083
      %v4085 = vsel %vm1978, %v4078, 0
      %v4087 = vsel %vm1978, %v4080, 0
      %v4089 = vsel %vm1978, %v4082, 0
      %v4091 = vsel %vm1978, %v4084, 0
      %4093 = vmatprep.subr.mxu0 %v4070
      %4094 = vmatpush1.msra.mxu0 %v4069
      %4095 = vmatprep.subr.mxu0 %v4072
      %4096 = vmatpush1.msra.mxu0 %v4071
      %4097 = vmatprep.subr.mxu0 %v4074
      %4098 = vmatpush1.msra.mxu0 %v4073
      %4099 = vmatprep.subr.mxu0 %v4076
      %4100 = vmatpush1.msra.mxu0 %v4075
      %4101 = vmatprep.subr.mxu0 0.0
      %4102 = vmatpush1.msra.mxu0 0.0
      %4103 = vmatprep.subr.mxu0 0.0
      %4104 = vmatpush1.msra.mxu0 0.0
      %4105 = vmatprep.subr.mxu0 0.0
      %4106 = vmatpush1.msra.mxu0 0.0
      %4107 = vmatprep.subr.mxu0 0.0
      %4108 = vmatpush1.msra.mxu0 0.0
      %4109 = vmatprep.subr.mxu0 0.0
      %4110 = vmatpush1.msra.mxu0 0.0
      %4111 = vmatprep.subr.mxu0 0.0
      %4112 = vmatpush1.msra.mxu0 0.0
      %4113 = vmatprep.subr.mxu0 0.0
      %4114 = vmatpush1.msra.mxu0 0.0
      %4115 = vmatprep.subr.mxu0 0.0
      %4116 = vmatpush1.msra.mxu0 0.0
      %4117 = vmatprep.subr.mxu0 0.0
      %4118 = vmatpush1.msra.mxu0 0.0
      %4119 = vmatprep.subr.mxu0 0.0
      %4120 = vmatpush1.msra.mxu0 0.0
      %4121 = vmatprep.subr.mxu0 0.0
      %4122 = vmatpush1.msra.mxu0 0.0
      %4123 = vmatprep.subr.mxu0 0.0
      %4124 = vmatpush1.msra.mxu0 0.0
      %4125 = vmatprep.subr.mxu0 0.0
      %4126 = vmatpush1.msra.mxu0 0.0
      %4127 = vmatprep.subr.mxu0 0.0
      %4128 = vmatpush1.msra.mxu0 0.0
      %4129 = vmatprep.subr.mxu0 0.0
      %4130 = vmatpush1.msra.mxu0 0.0
      %4131 = vmatprep.subr.mxu0 0.0
      %4132 = vmatpush1.msra.mxu0 0.0
      %4133 = vmatprep.subr.mxu0 0.0
      %4134 = vmatpush1.msra.mxu0 0.0
      %4135 = vmatprep.subr.mxu0 0.0
      %4136 = vmatpush1.msra.mxu0 0.0
      %4137 = vmatprep.subr.mxu0 0.0
      %4138 = vmatpush1.msra.mxu0 0.0
      %4139 = vmatprep.subr.mxu0 0.0
      %4140 = vmatpush1.msra.mxu0 0.0
      %4141 = vmatprep.subr.mxu0 0.0
      %4142 = vmatpush1.msra.mxu0 0.0
      %4143 = vmatprep.subr.mxu0 0.0
      %4144 = vmatpush1.msra.mxu0 0.0
      %4145 = vmatprep.subr.mxu0 0.0
      %4146 = vmatpush1.msra.mxu0 0.0
      %4147 = vmatprep.subr.mxu0 0.0
      %4148 = vmatpush1.msra.mxu0 0.0
      %4149 = vmatprep.subr.mxu0 0.0
      %4150 = vmatpush1.msra.mxu0 0.0
      %4151 = vmatprep.subr.mxu0 0.0
      %4152 = vmatpush1.msra.mxu0 0.0
      %4153 = vmatprep.subr.mxu0 0.0
      %4154 = vmatpush1.msra.mxu0 0.0
      %4155 = vmatprep.subr.mxu0 0.0
      %4156 = vmatpush1.msra.mxu0 0.0
      %4157 = vmatprep.mubr.f32.mxu0 0.0
      %4158 = vmatmul.mubr.f32.gmra.mrb[0].mxu0 %v4085
      %v4159 = vpop.f32.mrb[0].mxu0
      %v4160 = vadd.f32 0.0, %v4159
      %v4161 = vpop.f32.mrb[0].mxu0
      %v4162 = vadd.f32 0.0, %v4161
      %4163 = vmatprep.mubr.f32.mxu0 0.0
      %4164 = vmatmul.mubr.f32.gmra.mrb[0].mxu0 %v4087
      %v4165 = vpop.f32.mrb[0].mxu0
      %v4166 = vadd.f32 0.0, %v4165
      %v4167 = vpop.f32.mrb[0].mxu0
      %v4168 = vadd.f32 0.0, %v4167
      %4169 = vmatprep.mubr.f32.mxu0 0.0
      %4170 = vmatmul.mubr.f32.gmra.mrb[0].mxu0 %v4089
      %v4171 = vpop.f32.mrb[0].mxu0
      %v4172 = vadd.f32 0.0, %v4171
      %v4173 = vpop.f32.mrb[0].mxu0
      %v4174 = vadd.f32 0.0, %v4173
      %4175 = vmatprep.mubr.f32.mxu0 0.0
      %4176 = vmatmul.mubr.f32.gmra.mrb[0].mxu0 %v4091
      %v4177 = vpop.f32.mrb[0].mxu0
      %v4178 = vadd.f32 0.0, %v4177
      %v4179 = vpop.f32.mrb[0].mxu0
      %v4180 = vadd.f32 0.0, %v4179
      %4181 = vdwg.mxu0
      %v4182 = vadd.f32 %v4037, %v4160
      %v4183 = vadd.f32 %v4038, %v4162
      %v4184 = vadd.f32 %v4039, %v4166
      %v4185 = vadd.f32 %v4040, %v4168
      %v4186 = vadd.f32 %v4041, %v4172
      %v4187 = vadd.f32 %v4042, %v4174
      %v4188 = vadd.f32 %v4043, %v4178
      %v4189 = vadd.f32 %v4044, %v4180
      %4190 = vrot.lane.b32.xlu0 %v1890, 113
      %v4191 = vpop.permute.xlu0 %4190
      %4192 = vrot.lane.b32.xlu0 %v1892, 113
      %v4193 = vpop.permute.xlu0 %4192
      %4194 = vrot.lane.b32.xlu0 %v1894, 113
      %v4195 = vpop.permute.xlu0 %4194
      %4196 = vrot.lane.b32.xlu0 %v1896, 113
      %v4197 = vpop.permute.xlu0 %4196
      %4198 = vrot.lane.b32.xlu0 %v1891, 113
      %v4199 = vpop.permute.xlu0 %4198
      %4200 = vrot.lane.b32.xlu0 %v1893, 113
      %v4201 = vpop.permute.xlu0 %4200
      %4202 = vrot.lane.b32.xlu0 %v1895, 113
      %v4203 = vpop.permute.xlu0 %4202
      %4204 = vrot.lane.b32.xlu0 %v1897, 113
      %v4205 = vpop.permute.xlu0 %4204
      %v4206 = vsel %vm1304, %v4191, %v4199
      %v4207 = vsel %vm1304, %v4193, %v4201
      %v4208 = vsel %vm1304, %v4195, %v4203
      %v4209 = vsel %vm1304, %v4197, %v4205
      %v4210 = vsel %vm1304, %v4199, %v4191
      %v4211 = vsel %vm1304, %v4201, %v4193
      %v4212 = vsel %vm1304, %v4203, %v4195
      %v4213 = vsel %vm1304, %v4205, %v4197
      %v4214 = vmul.f32 %v4206, %v1313
      %v4215 = vmul.f32 %v4210, %v1317
      %v4216 = vmul.f32 %v4207, %v1313
      %v4217 = vmul.f32 %v4211, %v1317
      %v4218 = vmul.f32 %v4208, %v1313
      %v4219 = vmul.f32 %v4212, %v1317
      %v4220 = vmul.f32 %v4209, %v1313
      %v4221 = vmul.f32 %v4213, %v1317
      %v4222 = vld [vmem:[%s4 + $0x20] sm:$0xff]
      %v4223 = vld [vmem:[%s4 + $0x58] sm:$0xff]
      %v4224 = vld [vmem:[%s4 + $0x90] sm:$0xff]
      %v4225 = vld [vmem:[%s4 + $0xc8] sm:$0xff]
      %v4227 = vsel %vm1978, %v4222, 0
      %v4230 = vsel %vm1978, %v4223, 0
      %v4233 = vsel %vm1978, %v4224, 0
      %v4236 = vsel %vm1978, %v4225, 0
      %4238 = vmatprep.subr.mxu0 %v4215
      %4239 = vmatpush1.msra.mxu0 %v4214
      %4240 = vmatprep.subr.mxu0 %v4217
      %4241 = vmatpush1.msra.mxu0 %v4216
      %4242 = vmatprep.subr.mxu0 %v4219
      %4243 = vmatpush1.msra.mxu0 %v4218
      %4244 = vmatprep.subr.mxu0 %v4221
      %4245 = vmatpush1.msra.mxu0 %v4220
      %4246 = vmatprep.subr.mxu0 0.0
      %4247 = vmatpush1.msra.mxu0 0.0
      %4248 = vmatprep.subr.mxu0 0.0
      %4249 = vmatpush1.msra.mxu0 0.0
      %4250 = vmatprep.subr.mxu0 0.0
      %4251 = vmatpush1.msra.mxu0 0.0
      %4252 = vmatprep.subr.mxu0 0.0
      %4253 = vmatpush1.msra.mxu0 0.0
      %4254 = vmatprep.subr.mxu0 0.0
      %4255 = vmatpush1.msra.mxu0 0.0
      %4256 = vmatprep.subr.mxu0 0.0
      %4257 = vmatpush1.msra.mxu0 0.0
      %4258 = vmatprep.subr.mxu0 0.0
      %4259 = vmatpush1.msra.mxu0 0.0
      %4260 = vmatprep.subr.mxu0 0.0
      %4261 = vmatpush1.msra.mxu0 0.0
      %4262 = vmatprep.subr.mxu0 0.0
      %4263 = vmatpush1.msra.mxu0 0.0
      %4264 = vmatprep.subr.mxu0 0.0
      %4265 = vmatpush1.msra.mxu0 0.0
      %4266 = vmatprep.subr.mxu0 0.0
      %4267 = vmatpush1.msra.mxu0 0.0
      %4268 = vmatprep.subr.mxu0 0.0
      %4269 = vmatpush1.msra.mxu0 0.0
      %4270 = vmatprep.subr.mxu0 0.0
      %4271 = vmatpush1.msra.mxu0 0.0
      %4272 = vmatprep.subr.mxu0 0.0
      %4273 = vmatpush1.msra.mxu0 0.0
      %4274 = vmatprep.subr.mxu0 0.0
      %4275 = vmatpush1.msra.mxu0 0.0
      %4276 = vmatprep.subr.mxu0 0.0
      %4277 = vmatpush1.msra.mxu0 0.0
      %4278 = vmatprep.subr.mxu0 0.0
      %4279 = vmatpush1.msra.mxu0 0.0
      %4280 = vmatprep.subr.mxu0 0.0
      %4281 = vmatpush1.msra.mxu0 0.0
      %4282 = vmatprep.subr.mxu0 0.0
      %4283 = vmatpush1.msra.mxu0 0.0
      %4284 = vmatprep.subr.mxu0 0.0
      %4285 = vmatpush1.msra.mxu0 0.0
      %4286 = vmatprep.subr.mxu0 0.0
      %4287 = vmatpush1.msra.mxu0 0.0
      %4288 = vmatprep.subr.mxu0 0.0
      %4289 = vmatpush1.msra.mxu0 0.0
      %4290 = vmatprep.subr.mxu0 0.0
      %4291 = vmatpush1.msra.mxu0 0.0
      %4292 = vmatprep.subr.mxu0 0.0
      %4293 = vmatpush1.msra.mxu0 0.0
      %4294 = vmatprep.subr.mxu0 0.0
      %4295 = vmatpush1.msra.mxu0 0.0
      %4296 = vmatprep.subr.mxu0 0.0
      %4297 = vmatpush1.msra.mxu0 0.0
      %4298 = vmatprep.subr.mxu0 0.0
      %4299 = vmatpush1.msra.mxu0 0.0
      %4300 = vmatprep.subr.mxu0 0.0
      %4301 = vmatpush1.msra.mxu0 0.0
      %4302 = vmatprep.mubr.f32.mxu0 0.0
      %4303 = vmatmul.mubr.f32.gmra.mrb[0].mxu0 %v4227
      %v4304 = vpop.f32.mrb[0].mxu0
      %v4305 = vadd.f32 0.0, %v4304
      %v4306 = vpop.f32.mrb[0].mxu0
      %v4307 = vadd.f32 0.0, %v4306
      %4308 = vmatprep.mubr.f32.mxu0 0.0
      %4309 = vmatmul.mubr.f32.gmra.mrb[0].mxu0 %v4230
      %v4310 = vpop.f32.mrb[0].mxu0
      %v4311 = vadd.f32 0.0, %v4310
      %v4312 = vpop.f32.mrb[0].mxu0
      %v4313 = vadd.f32 0.0, %v4312
      %4314 = vmatprep.mubr.f32.mxu0 0.0
      %4315 = vmatmul.mubr.f32.gmra.mrb[0].mxu0 %v4233
      %v4316 = vpop.f32.mrb[0].mxu0
      %v4317 = vadd.f32 0.0, %v4316
      %v4318 = vpop.f32.mrb[0].mxu0
      %v4319 = vadd.f32 0.0, %v4318
      %4320 = vmatprep.mubr.f32.mxu0 0.0
      %4321 = vmatmul.mubr.f32.gmra.mrb[0].mxu0 %v4236
      %v4322 = vpop.f32.mrb[0].mxu0
      %v4323 = vadd.f32 0.0, %v4322
      %v4324 = vpop.f32.mrb[0].mxu0
      %v4325 = vadd.f32 0.0, %v4324
      %4326 = vdwg.mxu0
      %v4327 = vadd.f32 %v4182, %v4305
      %v4328 = vadd.f32 %v4183, %v4307
      %v4329 = vadd.f32 %v4184, %v4311
      %v4330 = vadd.f32 %v4185, %v4313
      %v4331 = vadd.f32 %v4186, %v4317
      %v4332 = vadd.f32 %v4187, %v4319
      %v4333 = vadd.f32 %v4188, %v4323
      %v4334 = vadd.f32 %v4189, %v4325
      %4335 = vrot.lane.b32.xlu0 %v1890, 112
      %v4336 = vpop.permute.xlu0 %4335
      %4337 = vrot.lane.b32.xlu0 %v1892, 112
      %v4338 = vpop.permute.xlu0 %4337
      %4339 = vrot.lane.b32.xlu0 %v1894, 112
      %v4340 = vpop.permute.xlu0 %4339
      %4341 = vrot.lane.b32.xlu0 %v1896, 112
      %v4342 = vpop.permute.xlu0 %4341
      %4343 = vrot.lane.b32.xlu0 %v1891, 112
      %v4344 = vpop.permute.xlu0 %4343
      %4345 = vrot.lane.b32.xlu0 %v1893, 112
      %v4346 = vpop.permute.xlu0 %4345
      %4347 = vrot.lane.b32.xlu0 %v1895, 112
      %v4348 = vpop.permute.xlu0 %4347
      %4349 = vrot.lane.b32.xlu0 %v1897, 112
      %v4350 = vpop.permute.xlu0 %4349
      %v4351 = vsel %vm1366, %v4336, %v4344
      %v4352 = vsel %vm1366, %v4338, %v4346
      %v4353 = vsel %vm1366, %v4340, %v4348
      %v4354 = vsel %vm1366, %v4342, %v4350
      %v4355 = vsel %vm1366, %v4344, %v4336
      %v4356 = vsel %vm1366, %v4346, %v4338
      %v4357 = vsel %vm1366, %v4348, %v4340
      %v4358 = vsel %vm1366, %v4350, %v4342
      %v4359 = vmul.f32 %v4351, %v1375
      %v4360 = vmul.f32 %v4355, %v1379
      %v4361 = vmul.f32 %v4352, %v1375
      %v4362 = vmul.f32 %v4356, %v1379
      %v4363 = vmul.f32 %v4353, %v1375
      %v4364 = vmul.f32 %v4357, %v1379
      %v4365 = vmul.f32 %v4354, %v1375
      %v4366 = vmul.f32 %v4358, %v1379
      %4367 = vrot.lane.b32.xlu0 %v4222, 96
      %v4368 = vpop.permute.xlu0 %4367
      %4369 = vrot.lane.b32.xlu0 %v4223, 96
      %v4370 = vpop.permute.xlu0 %4369
      %4371 = vrot.lane.b32.xlu0 %v4224, 96
      %v4372 = vpop.permute.xlu0 %4371
      %4373 = vrot.lane.b32.xlu0 %v4225, 96
      %v4374 = vpop.permute.xlu0 %4373
      %v4375 = vsel %vm1978, %v4368, 0
      %v4377 = vsel %vm1978, %v4370, 0
      %v4379 = vsel %vm1978, %v4372, 0
      %v4381 = vsel %vm1978, %v4374, 0
      %4383 = vmatprep.subr.mxu0 %v4360
      %4384 = vmatpush1.msra.mxu0 %v4359
      %4385 = vmatprep.subr.mxu0 %v4362
      %4386 = vmatpush1.msra.mxu0 %v4361
      %4387 = vmatprep.subr.mxu0 %v4364
      %4388 = vmatpush1.msra.mxu0 %v4363
      %4389 = vmatprep.subr.mxu0 %v4366
      %4390 = vmatpush1.msra.mxu0 %v4365
      %4391 = vmatprep.subr.mxu0 0.0
      %4392 = vmatpush1.msra.mxu0 0.0
      %4393 = vmatprep.subr.mxu0 0.0
      %4394 = vmatpush1.msra.mxu0 0.0
      %4395 = vmatprep.subr.mxu0 0.0
      %4396 = vmatpush1.msra.mxu0 0.0
      %4397 = vmatprep.subr.mxu0 0.0
      %4398 = vmatpush1.msra.mxu0 0.0
      %4399 = vmatprep.subr.mxu0 0.0
      %4400 = vmatpush1.msra.mxu0 0.0
      %4401 = vmatprep.subr.mxu0 0.0
      %4402 = vmatpush1.msra.mxu0 0.0
      %4403 = vmatprep.subr.mxu0 0.0
      %4404 = vmatpush1.msra.mxu0 0.0
      %4405 = vmatprep.subr.mxu0 0.0
      %4406 = vmatpush1.msra.mxu0 0.0
      %4407 = vmatprep.subr.mxu0 0.0
      %4408 = vmatpush1.msra.mxu0 0.0
      %4409 = vmatprep.subr.mxu0 0.0
      %4410 = vmatpush1.msra.mxu0 0.0
      %4411 = vmatprep.subr.mxu0 0.0
      %4412 = vmatpush1.msra.mxu0 0.0
      %4413 = vmatprep.subr.mxu0 0.0
      %4414 = vmatpush1.msra.mxu0 0.0
      %4415 = vmatprep.subr.mxu0 0.0
      %4416 = vmatpush1.msra.mxu0 0.0
      %4417 = vmatprep.subr.mxu0 0.0
      %4418 = vmatpush1.msra.mxu0 0.0
      %4419 = vmatprep.subr.mxu0 0.0
      %4420 = vmatpush1.msra.mxu0 0.0
      %4421 = vmatprep.subr.mxu0 0.0
      %4422 = vmatpush1.msra.mxu0 0.0
      %4423 = vmatprep.subr.mxu0 0.0
      %4424 = vmatpush1.msra.mxu0 0.0
      %4425 = vmatprep.subr.mxu0 0.0
      %4426 = vmatpush1.msra.mxu0 0.0
      %4427 = vmatprep.subr.mxu0 0.0
      %4428 = vmatpush1.msra.mxu0 0.0
      %4429 = vmatprep.subr.mxu0 0.0
      %4430 = vmatpush1.msra.mxu0 0.0
      %4431 = vmatprep.subr.mxu0 0.0
      %4432 = vmatpush1.msra.mxu0 0.0
      %4433 = vmatprep.subr.mxu0 0.0
      %4434 = vmatpush1.msra.mxu0 0.0
      %4435 = vmatprep.subr.mxu0 0.0
      %4436 = vmatpush1.msra.mxu0 0.0
      %4437 = vmatprep.subr.mxu0 0.0
      %4438 = vmatpush1.msra.mxu0 0.0
      %4439 = vmatprep.subr.mxu0 0.0
      %4440 = vmatpush1.msra.mxu0 0.0
      %4441 = vmatprep.subr.mxu0 0.0
      %4442 = vmatpush1.msra.mxu0 0.0
      %4443 = vmatprep.subr.mxu0 0.0
      %4444 = vmatpush1.msra.mxu0 0.0
      %4445 = vmatprep.subr.mxu0 0.0
      %4446 = vmatpush1.msra.mxu0 0.0
      %4447 = vmatprep.mubr.f32.mxu0 0.0
      %4448 = vmatmul.mubr.f32.gmra.mrb[0].mxu0 %v4375
      %v4449 = vpop.f32.mrb[0].mxu0
      %v4450 = vadd.f32 0.0, %v4449
      %v4451 = vpop.f32.mrb[0].mxu0
      %v4452 = vadd.f32 0.0, %v4451
      %4453 = vmatprep.mubr.f32.mxu0 0.0
      %4454 = vmatmul.mubr.f32.gmra.mrb[0].mxu0 %v4377
      %v4455 = vpop.f32.mrb[0].mxu0
      %v4456 = vadd.f32 0.0, %v4455
      %v4457 = vpop.f32.mrb[0].mxu0
      %v4458 = vadd.f32 0.0, %v4457
      %4459 = vmatprep.mubr.f32.mxu0 0.0
      %4460 = vmatmul.mubr.f32.gmra.mrb[0].mxu0 %v4379
      %v4461 = vpop.f32.mrb[0].mxu0
      %v4462 = vadd.f32 0.0, %v4461
      %v4463 = vpop.f32.mrb[0].mxu0
      %v4464 = vadd.f32 0.0, %v4463
      %4465 = vmatprep.mubr.f32.mxu0 0.0
      %4466 = vmatmul.mubr.f32.gmra.mrb[0].mxu0 %v4381
      %v4467 = vpop.f32.mrb[0].mxu0
      %v4468 = vadd.f32 0.0, %v4467
      %v4469 = vpop.f32.mrb[0].mxu0
      %v4470 = vadd.f32 0.0, %v4469
      %4471 = vdwg.mxu0
      %v4472 = vadd.f32 %v4327, %v4450
      %v4473 = vadd.f32 %v4328, %v4452
      %v4474 = vadd.f32 %v4329, %v4456
      %v4475 = vadd.f32 %v4330, %v4458
      %v4476 = vadd.f32 %v4331, %v4462
      %v4477 = vadd.f32 %v4332, %v4464
      %v4478 = vadd.f32 %v4333, %v4468
      %v4479 = vadd.f32 %v4334, %v4470
      %4480 = vrot.lane.b32.xlu0 %v1890, 111
      %v4481 = vpop.permute.xlu0 %4480
      %4482 = vrot.lane.b32.xlu0 %v1892, 111
      %v4483 = vpop.permute.xlu0 %4482
      %4484 = vrot.lane.b32.xlu0 %v1894, 111
      %v4485 = vpop.permute.xlu0 %4484
      %4486 = vrot.lane.b32.xlu0 %v1896, 111
      %v4487 = vpop.permute.xlu0 %4486
      %4488 = vrot.lane.b32.xlu0 %v1891, 111
      %v4489 = vpop.permute.xlu0 %4488
      %4490 = vrot.lane.b32.xlu0 %v1893, 111
      %v4491 = vpop.permute.xlu0 %4490
      %4492 = vrot.lane.b32.xlu0 %v1895, 111
      %v4493 = vpop.permute.xlu0 %4492
      %4494 = vrot.lane.b32.xlu0 %v1897, 111
      %v4495 = vpop.permute.xlu0 %4494
      %v4496 = vsel %vm1428, %v4481, %v4489
      %v4497 = vsel %vm1428, %v4483, %v4491
      %v4498 = vsel %vm1428, %v4485, %v4493
      %v4499 = vsel %vm1428, %v4487, %v4495
      %v4500 = vsel %vm1428, %v4489, %v4481
      %v4501 = vsel %vm1428, %v4491, %v4483
      %v4502 = vsel %vm1428, %v4493, %v4485
      %v4503 = vsel %vm1428, %v4495, %v4487
      %v4504 = vmul.f32 %v4496, %v1437
      %v4505 = vmul.f32 %v4500, %v1441
      %v4506 = vmul.f32 %v4497, %v1437
      %v4507 = vmul.f32 %v4501, %v1441
      %v4508 = vmul.f32 %v4498, %v1437
      %v4509 = vmul.f32 %v4502, %v1441
      %v4510 = vmul.f32 %v4499, %v1437
      %v4511 = vmul.f32 %v4503, %v1441
      %4512 = vrot.lane.b32.xlu0 %v4222, 64
      %v4513 = vpop.permute.xlu0 %4512
      %4514 = vrot.lane.b32.xlu0 %v4223, 64
      %v4515 = vpop.permute.xlu0 %4514
      %4516 = vrot.lane.b32.xlu0 %v4224, 64
      %v4517 = vpop.permute.xlu0 %4516
      %4518 = vrot.lane.b32.xlu0 %v4225, 64
      %v4519 = vpop.permute.xlu0 %4518
      %v4520 = vsel %vm1978, %v4513, 0
      %v4522 = vsel %vm1978, %v4515, 0
      %v4524 = vsel %vm1978, %v4517, 0
      %v4526 = vsel %vm1978, %v4519, 0
      %4528 = vmatprep.subr.mxu0 %v4505
      %4529 = vmatpush1.msra.mxu0 %v4504
      %4530 = vmatprep.subr.mxu0 %v4507
      %4531 = vmatpush1.msra.mxu0 %v4506
      %4532 = vmatprep.subr.mxu0 %v4509
      %4533 = vmatpush1.msra.mxu0 %v4508
      %4534 = vmatprep.subr.mxu0 %v4511
      %4535 = vmatpush1.msra.mxu0 %v4510
      %4536 = vmatprep.subr.mxu0 0.0
      %4537 = vmatpush1.msra.mxu0 0.0
      %4538 = vmatprep.subr.mxu0 0.0
      %4539 = vmatpush1.msra.mxu0 0.0
      %4540 = vmatprep.subr.mxu0 0.0
      %4541 = vmatpush1.msra.mxu0 0.0
      %4542 = vmatprep.subr.mxu0 0.0
      %4543 = vmatpush1.msra.mxu0 0.0
      %4544 = vmatprep.subr.mxu0 0.0
      %4545 = vmatpush1.msra.mxu0 0.0
      %4546 = vmatprep.subr.mxu0 0.0
      %4547 = vmatpush1.msra.mxu0 0.0
      %4548 = vmatprep.subr.mxu0 0.0
      %4549 = vmatpush1.msra.mxu0 0.0
      %4550 = vmatprep.subr.mxu0 0.0
      %4551 = vmatpush1.msra.mxu0 0.0
      %4552 = vmatprep.subr.mxu0 0.0
      %4553 = vmatpush1.msra.mxu0 0.0
      %4554 = vmatprep.subr.mxu0 0.0
      %4555 = vmatpush1.msra.mxu0 0.0
      %4556 = vmatprep.subr.mxu0 0.0
      %4557 = vmatpush1.msra.mxu0 0.0
      %4558 = vmatprep.subr.mxu0 0.0
      %4559 = vmatpush1.msra.mxu0 0.0
      %4560 = vmatprep.subr.mxu0 0.0
      %4561 = vmatpush1.msra.mxu0 0.0
      %4562 = vmatprep.subr.mxu0 0.0
      %4563 = vmatpush1.msra.mxu0 0.0
      %4564 = vmatprep.subr.mxu0 0.0
      %4565 = vmatpush1.msra.mxu0 0.0
      %4566 = vmatprep.subr.mxu0 0.0
      %4567 = vmatpush1.msra.mxu0 0.0
      %4568 = vmatprep.subr.mxu0 0.0
      %4569 = vmatpush1.msra.mxu0 0.0
      %4570 = vmatprep.subr.mxu0 0.0
      %4571 = vmatpush1.msra.mxu0 0.0
      %4572 = vmatprep.subr.mxu0 0.0
      %4573 = vmatpush1.msra.mxu0 0.0
      %4574 = vmatprep.subr.mxu0 0.0
      %4575 = vmatpush1.msra.mxu0 0.0
      %4576 = vmatprep.subr.mxu0 0.0
      %4577 = vmatpush1.msra.mxu0 0.0
      %4578 = vmatprep.subr.mxu0 0.0
      %4579 = vmatpush1.msra.mxu0 0.0
      %4580 = vmatprep.subr.mxu0 0.0
      %4581 = vmatpush1.msra.mxu0 0.0
      %4582 = vmatprep.subr.mxu0 0.0
      %4583 = vmatpush1.msra.mxu0 0.0
      %4584 = vmatprep.subr.mxu0 0.0
      %4585 = vmatpush1.msra.mxu0 0.0
      %4586 = vmatprep.subr.mxu0 0.0
      %4587 = vmatpush1.msra.mxu0 0.0
      %4588 = vmatprep.subr.mxu0 0.0
      %4589 = vmatpush1.msra.mxu0 0.0
      %4590 = vmatprep.subr.mxu0 0.0
      %4591 = vmatpush1.msra.mxu0 0.0
      %4592 = vmatprep.mubr.f32.mxu0 0.0
      %4593 = vmatmul.mubr.f32.gmra.mrb[0].mxu0 %v4520
      %v4594 = vpop.f32.mrb[0].mxu0
      %v4595 = vadd.f32 0.0, %v4594
      %v4596 = vpop.f32.mrb[0].mxu0
      %v4597 = vadd.f32 0.0, %v4596
      %4598 = vmatprep.mubr.f32.mxu0 0.0
      %4599 = vmatmul.mubr.f32.gmra.mrb[0].mxu0 %v4522
      %v4600 = vpop.f32.mrb[0].mxu0
      %v4601 = vadd.f32 0.0, %v4600
      %v4602 = vpop.f32.mrb[0].mxu0
      %v4603 = vadd.f32 0.0, %v4602
      %4604 = vmatprep.mubr.f32.mxu0 0.0
      %4605 = vmatmul.mubr.f32.gmra.mrb[0].mxu0 %v4524
      %v4606 = vpop.f32.mrb[0].mxu0
      %v4607 = vadd.f32 0.0, %v4606
      %v4608 = vpop.f32.mrb[0].mxu0
      %v4609 = vadd.f32 0.0, %v4608
      %4610 = vmatprep.mubr.f32.mxu0 0.0
      %4611 = vmatmul.mubr.f32.gmra.mrb[0].mxu0 %v4526
      %v4612 = vpop.f32.mrb[0].mxu0
      %v4613 = vadd.f32 0.0, %v4612
      %v4614 = vpop.f32.mrb[0].mxu0
      %v4615 = vadd.f32 0.0, %v4614
      %4616 = vdwg.mxu0
      %v4617 = vadd.f32 %v4472, %v4595
      %v4618 = vadd.f32 %v4473, %v4597
      %v4619 = vadd.f32 %v4474, %v4601
      %v4620 = vadd.f32 %v4475, %v4603
      %v4621 = vadd.f32 %v4476, %v4607
      %v4622 = vadd.f32 %v4477, %v4609
      %v4623 = vadd.f32 %v4478, %v4613
      %v4624 = vadd.f32 %v4479, %v4615
      %4625 = vrot.lane.b32.xlu0 %v1890, 110
      %v4626 = vpop.permute.xlu0 %4625
      %4627 = vrot.lane.b32.xlu0 %v1892, 110
      %v4628 = vpop.permute.xlu0 %4627
      %4629 = vrot.lane.b32.xlu0 %v1894, 110
      %v4630 = vpop.permute.xlu0 %4629
      %4631 = vrot.lane.b32.xlu0 %v1896, 110
      %v4632 = vpop.permute.xlu0 %4631
      %4633 = vrot.lane.b32.xlu0 %v1891, 110
      %v4634 = vpop.permute.xlu0 %4633
      %4635 = vrot.lane.b32.xlu0 %v1893, 110
      %v4636 = vpop.permute.xlu0 %4635
      %4637 = vrot.lane.b32.xlu0 %v1895, 110
      %v4638 = vpop.permute.xlu0 %4637
      %4639 = vrot.lane.b32.xlu0 %v1897, 110
      %v4640 = vpop.permute.xlu0 %4639
      %v4641 = vsel %vm1490, %v4626, %v4634
      %v4642 = vsel %vm1490, %v4628, %v4636
      %v4643 = vsel %vm1490, %v4630, %v4638
      %v4644 = vsel %vm1490, %v4632, %v4640
      %v4645 = vsel %vm1490, %v4634, %v4626
      %v4646 = vsel %vm1490, %v4636, %v4628
      %v4647 = vsel %vm1490, %v4638, %v4630
      %v4648 = vsel %vm1490, %v4640, %v4632
      %v4649 = vmul.f32 %v4641, %v1499
      %v4650 = vmul.f32 %v4645, %v1503
      %v4651 = vmul.f32 %v4642, %v1499
      %v4652 = vmul.f32 %v4646, %v1503
      %v4653 = vmul.f32 %v4643, %v1499
      %v4654 = vmul.f32 %v4647, %v1503
      %v4655 = vmul.f32 %v4644, %v1499
      %v4656 = vmul.f32 %v4648, %v1503
      %4657 = vrot.lane.b32.xlu0 %v4222, 32
      %v4658 = vpop.permute.xlu0 %4657
      %4659 = vrot.lane.b32.xlu0 %v4223, 32
      %v4660 = vpop.permute.xlu0 %4659
      %4661 = vrot.lane.b32.xlu0 %v4224, 32
      %v4662 = vpop.permute.xlu0 %4661
      %4663 = vrot.lane.b32.xlu0 %v4225, 32
      %v4664 = vpop.permute.xlu0 %4663
      %v4665 = vsel %vm1978, %v4658, 0
      %v4667 = vsel %vm1978, %v4660, 0
      %v4669 = vsel %vm1978, %v4662, 0
      %v4671 = vsel %vm1978, %v4664, 0
      %4673 = vmatprep.subr.mxu0 %v4650
      %4674 = vmatpush1.msra.mxu0 %v4649
      %4675 = vmatprep.subr.mxu0 %v4652
      %4676 = vmatpush1.msra.mxu0 %v4651
      %4677 = vmatprep.subr.mxu0 %v4654
      %4678 = vmatpush1.msra.mxu0 %v4653
      %4679 = vmatprep.subr.mxu0 %v4656
      %4680 = vmatpush1.msra.mxu0 %v4655
      %4681 = vmatprep.subr.mxu0 0.0
      %4682 = vmatpush1.msra.mxu0 0.0
      %4683 = vmatprep.subr.mxu0 0.0
      %4684 = vmatpush1.msra.mxu0 0.0
      %4685 = vmatprep.subr.mxu0 0.0
      %4686 = vmatpush1.msra.mxu0 0.0
      %4687 = vmatprep.subr.mxu0 0.0
      %4688 = vmatpush1.msra.mxu0 0.0
      %4689 = vmatprep.subr.mxu0 0.0
      %4690 = vmatpush1.msra.mxu0 0.0
      %4691 = vmatprep.subr.mxu0 0.0
      %4692 = vmatpush1.msra.mxu0 0.0
      %4693 = vmatprep.subr.mxu0 0.0
      %4694 = vmatpush1.msra.mxu0 0.0
      %4695 = vmatprep.subr.mxu0 0.0
      %4696 = vmatpush1.msra.mxu0 0.0
      %4697 = vmatprep.subr.mxu0 0.0
      %4698 = vmatpush1.msra.mxu0 0.0
      %4699 = vmatprep.subr.mxu0 0.0
      %4700 = vmatpush1.msra.mxu0 0.0
      %4701 = vmatprep.subr.mxu0 0.0
      %4702 = vmatpush1.msra.mxu0 0.0
      %4703 = vmatprep.subr.mxu0 0.0
      %4704 = vmatpush1.msra.mxu0 0.0
      %4705 = vmatprep.subr.mxu0 0.0
      %4706 = vmatpush1.msra.mxu0 0.0
      %4707 = vmatprep.subr.mxu0 0.0
      %4708 = vmatpush1.msra.mxu0 0.0
      %4709 = vmatprep.subr.mxu0 0.0
      %4710 = vmatpush1.msra.mxu0 0.0
      %4711 = vmatprep.subr.mxu0 0.0
      %4712 = vmatpush1.msra.mxu0 0.0
      %4713 = vmatprep.subr.mxu0 0.0
      %4714 = vmatpush1.msra.mxu0 0.0
      %4715 = vmatprep.subr.mxu0 0.0
      %4716 = vmatpush1.msra.mxu0 0.0
      %4717 = vmatprep.subr.mxu0 0.0
      %4718 = vmatpush1.msra.mxu0 0.0
      %4719 = vmatprep.subr.mxu0 0.0
      %4720 = vmatpush1.msra.mxu0 0.0
      %4721 = vmatprep.subr.mxu0 0.0
      %4722 = vmatpush1.msra.mxu0 0.0
      %4723 = vmatprep.subr.mxu0 0.0
      %4724 = vmatpush1.msra.mxu0 0.0
      %4725 = vmatprep.subr.mxu0 0.0
      %4726 = vmatpush1.msra.mxu0 0.0
      %4727 = vmatprep.subr.mxu0 0.0
      %4728 = vmatpush1.msra.mxu0 0.0
      %4729 = vmatprep.subr.mxu0 0.0
      %4730 = vmatpush1.msra.mxu0 0.0
      %4731 = vmatprep.subr.mxu0 0.0
      %4732 = vmatpush1.msra.mxu0 0.0
      %4733 = vmatprep.subr.mxu0 0.0
      %4734 = vmatpush1.msra.mxu0 0.0
      %4735 = vmatprep.subr.mxu0 0.0
      %4736 = vmatpush1.msra.mxu0 0.0
      %4737 = vmatprep.mubr.f32.mxu0 0.0
      %4738 = vmatmul.mubr.f32.gmra.mrb[0].mxu0 %v4665
      %v4739 = vpop.f32.mrb[0].mxu0
      %v4740 = vadd.f32 0.0, %v4739
      %v4741 = vpop.f32.mrb[0].mxu0
      %v4742 = vadd.f32 0.0, %v4741
      %4743 = vmatprep.mubr.f32.mxu0 0.0
      %4744 = vmatmul.mubr.f32.gmra.mrb[0].mxu0 %v4667
      %v4745 = vpop.f32.mrb[0].mxu0
      %v4746 = vadd.f32 0.0, %v4745
      %v4747 = vpop.f32.mrb[0].mxu0
      %v4748 = vadd.f32 0.0, %v4747
      %4749 = vmatprep.mubr.f32.mxu0 0.0
      %4750 = vmatmul.mubr.f32.gmra.mrb[0].mxu0 %v4669
      %v4751 = vpop.f32.mrb[0].mxu0
      %v4752 = vadd.f32 0.0, %v4751
      %v4753 = vpop.f32.mrb[0].mxu0
      %v4754 = vadd.f32 0.0, %v4753
      %4755 = vmatprep.mubr.f32.mxu0 0.0
      %4756 = vmatmul.mubr.f32.gmra.mrb[0].mxu0 %v4671
      %v4757 = vpop.f32.mrb[0].mxu0
      %v4758 = vadd.f32 0.0, %v4757
      %v4759 = vpop.f32.mrb[0].mxu0
      %v4760 = vadd.f32 0.0, %v4759
      %4761 = vdwg.mxu0
      %v4762 = vadd.f32 %v4617, %v4740
      %v4763 = vadd.f32 %v4618, %v4742
      %v4764 = vadd.f32 %v4619, %v4746
      %v4765 = vadd.f32 %v4620, %v4748
      %v4766 = vadd.f32 %v4621, %v4752
      %v4767 = vadd.f32 %v4622, %v4754
      %v4768 = vadd.f32 %v4623, %v4758
      %v4769 = vadd.f32 %v4624, %v4760
      %4770 = vrot.lane.b32.xlu0 %v1890, 98
      %v4771 = vpop.permute.xlu0 %4770
      %4772 = vrot.lane.b32.xlu0 %v1892, 98
      %v4773 = vpop.permute.xlu0 %4772
      %4774 = vrot.lane.b32.xlu0 %v1894, 98
      %v4775 = vpop.permute.xlu0 %4774
      %4776 = vrot.lane.b32.xlu0 %v1896, 98
      %v4777 = vpop.permute.xlu0 %4776
      %4778 = vrot.lane.b32.xlu0 %v1891, 98
      %v4779 = vpop.permute.xlu0 %4778
      %4780 = vrot.lane.b32.xlu0 %v1893, 98
      %v4781 = vpop.permute.xlu0 %4780
      %4782 = vrot.lane.b32.xlu0 %v1895, 98
      %v4783 = vpop.permute.xlu0 %4782
      %4784 = vrot.lane.b32.xlu0 %v1897, 98
      %v4785 = vpop.permute.xlu0 %4784
      %v4786 = vsel %vm1552, %v4771, %v4779
      %v4787 = vsel %vm1552, %v4773, %v4781
      %v4788 = vsel %vm1552, %v4775, %v4783
      %v4789 = vsel %vm1552, %v4777, %v4785
      %v4790 = vsel %vm1552, %v4779, %v4771
      %v4791 = vsel %vm1552, %v4781, %v4773
      %v4792 = vsel %vm1552, %v4783, %v4775
      %v4793 = vsel %vm1552, %v4785, %v4777
      %v4794 = vmul.f32 %v4786, %v1561
      %v4795 = vmul.f32 %v4790, %v1565
      %v4796 = vmul.f32 %v4787, %v1561
      %v4797 = vmul.f32 %v4791, %v1565
      %v4798 = vmul.f32 %v4788, %v1561
      %v4799 = vmul.f32 %v4792, %v1565
      %v4800 = vmul.f32 %v4789, %v1561
      %v4801 = vmul.f32 %v4793, %v1565
      %v4802 = vld [vmem:[%s4 + $0x28] sm:$0xff]
      %v4803 = vld [vmem:[%s4 + $0x60] sm:$0xff]
      %v4804 = vld [vmem:[%s4 + $0x98] sm:$0xff]
      %v4805 = vld [vmem:[%s4 + $0xd0] sm:$0xff]
      %v4807 = vsel %vm1978, %v4802, 0
      %v4810 = vsel %vm1978, %v4803, 0
      %v4813 = vsel %vm1978, %v4804, 0
      %v4816 = vsel %vm1978, %v4805, 0
      %4818 = vmatprep.subr.mxu0 %v4795
      %4819 = vmatpush1.msra.mxu0 %v4794
      %4820 = vmatprep.subr.mxu0 %v4797
      %4821 = vmatpush1.msra.mxu0 %v4796
      %4822 = vmatprep.subr.mxu0 %v4799
      %4823 = vmatpush1.msra.mxu0 %v4798
      %4824 = vmatprep.subr.mxu0 %v4801
      %4825 = vmatpush1.msra.mxu0 %v4800
      %4826 = vmatprep.subr.mxu0 0.0
      %4827 = vmatpush1.msra.mxu0 0.0
      %4828 = vmatprep.subr.mxu0 0.0
      %4829 = vmatpush1.msra.mxu0 0.0
      %4830 = vmatprep.subr.mxu0 0.0
      %4831 = vmatpush1.msra.mxu0 0.0
      %4832 = vmatprep.subr.mxu0 0.0
      %4833 = vmatpush1.msra.mxu0 0.0
      %4834 = vmatprep.subr.mxu0 0.0
      %4835 = vmatpush1.msra.mxu0 0.0
      %4836 = vmatprep.subr.mxu0 0.0
      %4837 = vmatpush1.msra.mxu0 0.0
      %4838 = vmatprep.subr.mxu0 0.0
      %4839 = vmatpush1.msra.mxu0 0.0
      %4840 = vmatprep.subr.mxu0 0.0
      %4841 = vmatpush1.msra.mxu0 0.0
      %4842 = vmatprep.subr.mxu0 0.0
      %4843 = vmatpush1.msra.mxu0 0.0
      %4844 = vmatprep.subr.mxu0 0.0
      %4845 = vmatpush1.msra.mxu0 0.0
      %4846 = vmatprep.subr.mxu0 0.0
      %4847 = vmatpush1.msra.mxu0 0.0
      %4848 = vmatprep.subr.mxu0 0.0
      %4849 = vmatpush1.msra.mxu0 0.0
      %4850 = vmatprep.subr.mxu0 0.0
      %4851 = vmatpush1.msra.mxu0 0.0
      %4852 = vmatprep.subr.mxu0 0.0
      %4853 = vmatpush1.msra.mxu0 0.0
      %4854 = vmatprep.subr.mxu0 0.0
      %4855 = vmatpush1.msra.mxu0 0.0
      %4856 = vmatprep.subr.mxu0 0.0
      %4857 = vmatpush1.msra.mxu0 0.0
      %4858 = vmatprep.subr.mxu0 0.0
      %4859 = vmatpush1.msra.mxu0 0.0
      %4860 = vmatprep.subr.mxu0 0.0
      %4861 = vmatpush1.msra.mxu0 0.0
      %4862 = vmatprep.subr.mxu0 0.0
      %4863 = vmatpush1.msra.mxu0 0.0
      %4864 = vmatprep.subr.mxu0 0.0
      %4865 = vmatpush1.msra.mxu0 0.0
      %4866 = vmatprep.subr.mxu0 0.0
      %4867 = vmatpush1.msra.mxu0 0.0
      %4868 = vmatprep.subr.mxu0 0.0
      %4869 = vmatpush1.msra.mxu0 0.0
      %4870 = vmatprep.subr.mxu0 0.0
      %4871 = vmatpush1.msra.mxu0 0.0
      %4872 = vmatprep.subr.mxu0 0.0
      %4873 = vmatpush1.msra.mxu0 0.0
      %4874 = vmatprep.subr.mxu0 0.0
      %4875 = vmatpush1.msra.mxu0 0.0
      %4876 = vmatprep.subr.mxu0 0.0
      %4877 = vmatpush1.msra.mxu0 0.0
      %4878 = vmatprep.subr.mxu0 0.0
      %4879 = vmatpush1.msra.mxu0 0.0
      %4880 = vmatprep.subr.mxu0 0.0
      %4881 = vmatpush1.msra.mxu0 0.0
      %4882 = vmatprep.mubr.f32.mxu0 0.0
      %4883 = vmatmul.mubr.f32.gmra.mrb[0].mxu0 %v4807
      %v4884 = vpop.f32.mrb[0].mxu0
      %v4885 = vadd.f32 0.0, %v4884
      %v4886 = vpop.f32.mrb[0].mxu0
      %v4887 = vadd.f32 0.0, %v4886
      %4888 = vmatprep.mubr.f32.mxu0 0.0
      %4889 = vmatmul.mubr.f32.gmra.mrb[0].mxu0 %v4810
      %v4890 = vpop.f32.mrb[0].mxu0
      %v4891 = vadd.f32 0.0, %v4890
      %v4892 = vpop.f32.mrb[0].mxu0
      %v4893 = vadd.f32 0.0, %v4892
      %4894 = vmatprep.mubr.f32.mxu0 0.0
      %4895 = vmatmul.mubr.f32.gmra.mrb[0].mxu0 %v4813
      %v4896 = vpop.f32.mrb[0].mxu0
      %v4897 = vadd.f32 0.0, %v4896
      %v4898 = vpop.f32.mrb[0].mxu0
      %v4899 = vadd.f32 0.0, %v4898
      %4900 = vmatprep.mubr.f32.mxu0 0.0
      %4901 = vmatmul.mubr.f32.gmra.mrb[0].mxu0 %v4816
      %v4902 = vpop.f32.mrb[0].mxu0
      %v4903 = vadd.f32 0.0, %v4902
      %v4904 = vpop.f32.mrb[0].mxu0
      %v4905 = vadd.f32 0.0, %v4904
      %4906 = vdwg.mxu0
      %v4907 = vadd.f32 %v4762, %v4885
      %v4908 = vadd.f32 %v4763, %v4887
      %v4909 = vadd.f32 %v4764, %v4891
      %v4910 = vadd.f32 %v4765, %v4893
      %v4911 = vadd.f32 %v4766, %v4897
      %v4912 = vadd.f32 %v4767, %v4899
      %v4913 = vadd.f32 %v4768, %v4903
      %v4914 = vadd.f32 %v4769, %v4905
      %4915 = vrot.lane.b32.xlu0 %v1890, 97
      %v4916 = vpop.permute.xlu0 %4915
      %4917 = vrot.lane.b32.xlu0 %v1892, 97
      %v4918 = vpop.permute.xlu0 %4917
      %4919 = vrot.lane.b32.xlu0 %v1894, 97
      %v4920 = vpop.permute.xlu0 %4919
      %4921 = vrot.lane.b32.xlu0 %v1896, 97
      %v4922 = vpop.permute.xlu0 %4921
      %4923 = vrot.lane.b32.xlu0 %v1891, 97
      %v4924 = vpop.permute.xlu0 %4923
      %4925 = vrot.lane.b32.xlu0 %v1893, 97
      %v4926 = vpop.permute.xlu0 %4925
      %4927 = vrot.lane.b32.xlu0 %v1895, 97
      %v4928 = vpop.permute.xlu0 %4927
      %4929 = vrot.lane.b32.xlu0 %v1897, 97
      %v4930 = vpop.permute.xlu0 %4929
      %v4931 = vsel %vm1614, %v4916, %v4924
      %v4932 = vsel %vm1614, %v4918, %v4926
      %v4933 = vsel %vm1614, %v4920, %v4928
      %v4934 = vsel %vm1614, %v4922, %v4930
      %v4935 = vsel %vm1614, %v4924, %v4916
      %v4936 = vsel %vm1614, %v4926, %v4918
      %v4937 = vsel %vm1614, %v4928, %v4920
      %v4938 = vsel %vm1614, %v4930, %v4922
      %v4939 = vmul.f32 %v4931, %v1623
      %v4940 = vmul.f32 %v4935, %v1627
      %v4941 = vmul.f32 %v4932, %v1623
      %v4942 = vmul.f32 %v4936, %v1627
      %v4943 = vmul.f32 %v4933, %v1623
      %v4944 = vmul.f32 %v4937, %v1627
      %v4945 = vmul.f32 %v4934, %v1623
      %v4946 = vmul.f32 %v4938, %v1627
      %4947 = vrot.lane.b32.xlu0 %v4802, 96
      %v4948 = vpop.permute.xlu0 %4947
      %4949 = vrot.lane.b32.xlu0 %v4803, 96
      %v4950 = vpop.permute.xlu0 %4949
      %4951 = vrot.lane.b32.xlu0 %v4804, 96
      %v4952 = vpop.permute.xlu0 %4951
      %4953 = vrot.lane.b32.xlu0 %v4805, 96
      %v4954 = vpop.permute.xlu0 %4953
      %v4955 = vsel %vm1978, %v4948, 0
      %v4957 = vsel %vm1978, %v4950, 0
      %v4959 = vsel %vm1978, %v4952, 0
      %v4961 = vsel %vm1978, %v4954, 0
      %4963 = vmatprep.subr.mxu0 %v4940
      %4964 = vmatpush1.msra.mxu0 %v4939
      %4965 = vmatprep.subr.mxu0 %v4942
      %4966 = vmatpush1.msra.mxu0 %v4941
      %4967 = vmatprep.subr.mxu0 %v4944
      %4968 = vmatpush1.msra.mxu0 %v4943
      %4969 = vmatprep.subr.mxu0 %v4946
      %4970 = vmatpush1.msra.mxu0 %v4945
      %4971 = vmatprep.subr.mxu0 0.0
      %4972 = vmatpush1.msra.mxu0 0.0
      %4973 = vmatprep.subr.mxu0 0.0
      %4974 = vmatpush1.msra.mxu0 0.0
      %4975 = vmatprep.subr.mxu0 0.0
      %4976 = vmatpush1.msra.mxu0 0.0
      %4977 = vmatprep.subr.mxu0 0.0
      %4978 = vmatpush1.msra.mxu0 0.0
      %4979 = vmatprep.subr.mxu0 0.0
      %4980 = vmatpush1.msra.mxu0 0.0
      %4981 = vmatprep.subr.mxu0 0.0
      %4982 = vmatpush1.msra.mxu0 0.0
      %4983 = vmatprep.subr.mxu0 0.0
      %4984 = vmatpush1.msra.mxu0 0.0
      %4985 = vmatprep.subr.mxu0 0.0
      %4986 = vmatpush1.msra.mxu0 0.0
      %4987 = vmatprep.subr.mxu0 0.0
      %4988 = vmatpush1.msra.mxu0 0.0
      %4989 = vmatprep.subr.mxu0 0.0
      %4990 = vmatpush1.msra.mxu0 0.0
      %4991 = vmatprep.subr.mxu0 0.0
      %4992 = vmatpush1.msra.mxu0 0.0
      %4993 = vmatprep.subr.mxu0 0.0
      %4994 = vmatpush1.msra.mxu0 0.0
      %4995 = vmatprep.subr.mxu0 0.0
      %4996 = vmatpush1.msra.mxu0 0.0
      %4997 = vmatprep.subr.mxu0 0.0
      %4998 = vmatpush1.msra.mxu0 0.0
      %4999 = vmatprep.subr.mxu0 0.0
      %5000 = vmatpush1.msra.mxu0 0.0
      %5001 = vmatprep.subr.mxu0 0.0
      %5002 = vmatpush1.msra.mxu0 0.0
      %5003 = vmatprep.subr.mxu0 0.0
      %5004 = vmatpush1.msra.mxu0 0.0
      %5005 = vmatprep.subr.mxu0 0.0
      %5006 = vmatpush1.msra.mxu0 0.0
      %5007 = vmatprep.subr.mxu0 0.0
      %5008 = vmatpush1.msra.mxu0 0.0
      %5009 = vmatprep.subr.mxu0 0.0
      %5010 = vmatpush1.msra.mxu0 0.0
      %5011 = vmatprep.subr.mxu0 0.0
      %5012 = vmatpush1.msra.mxu0 0.0
      %5013 = vmatprep.subr.mxu0 0.0
      %5014 = vmatpush1.msra.mxu0 0.0
      %5015 = vmatprep.subr.mxu0 0.0
      %5016 = vmatpush1.msra.mxu0 0.0
      %5017 = vmatprep.subr.mxu0 0.0
      %5018 = vmatpush1.msra.mxu0 0.0
      %5019 = vmatprep.subr.mxu0 0.0
      %5020 = vmatpush1.msra.mxu0 0.0
      %5021 = vmatprep.subr.mxu0 0.0
      %5022 = vmatpush1.msra.mxu0 0.0
      %5023 = vmatprep.subr.mxu0 0.0
      %5024 = vmatpush1.msra.mxu0 0.0
      %5025 = vmatprep.subr.mxu0 0.0
      %5026 = vmatpush1.msra.mxu0 0.0
      %5027 = vmatprep.mubr.f32.mxu0 0.0
      %5028 = vmatmul.mubr.f32.gmra.mrb[0].mxu0 %v4955
      %v5029 = vpop.f32.mrb[0].mxu0
      %v5030 = vadd.f32 0.0, %v5029
      %v5031 = vpop.f32.mrb[0].mxu0
      %v5032 = vadd.f32 0.0, %v5031
      %5033 = vmatprep.mubr.f32.mxu0 0.0
      %5034 = vmatmul.mubr.f32.gmra.mrb[0].mxu0 %v4957
      %v5035 = vpop.f32.mrb[0].mxu0
      %v5036 = vadd.f32 0.0, %v5035
      %v5037 = vpop.f32.mrb[0].mxu0
      %v5038 = vadd.f32 0.0, %v5037
      %5039 = vmatprep.mubr.f32.mxu0 0.0
      %5040 = vmatmul.mubr.f32.gmra.mrb[0].mxu0 %v4959
      %v5041 = vpop.f32.mrb[0].mxu0
      %v5042 = vadd.f32 0.0, %v5041
      %v5043 = vpop.f32.mrb[0].mxu0
      %v5044 = vadd.f32 0.0, %v5043
      %5045 = vmatprep.mubr.f32.mxu0 0.0
      %5046 = vmatmul.mubr.f32.gmra.mrb[0].mxu0 %v4961
      %v5047 = vpop.f32.mrb[0].mxu0
      %v5048 = vadd.f32 0.0, %v5047
      %v5049 = vpop.f32.mrb[0].mxu0
      %v5050 = vadd.f32 0.0, %v5049
      %5051 = vdwg.mxu0
      %v5052 = vadd.f32 %v4907, %v5030
      %v5053 = vadd.f32 %v4908, %v5032
      %v5054 = vadd.f32 %v4909, %v5036
      %v5055 = vadd.f32 %v4910, %v5038
      %v5056 = vadd.f32 %v4911, %v5042
      %v5057 = vadd.f32 %v4912, %v5044
      %v5058 = vadd.f32 %v4913, %v5048
      %v5059 = vadd.f32 %v4914, %v5050
      %5060 = vrot.lane.b32.xlu0 %v1890, 96
      %v5061 = vpop.permute.xlu0 %5060
      %5062 = vrot.lane.b32.xlu0 %v1892, 96
      %v5063 = vpop.permute.xlu0 %5062
      %5064 = vrot.lane.b32.xlu0 %v1894, 96
      %v5065 = vpop.permute.xlu0 %5064
      %5066 = vrot.lane.b32.xlu0 %v1896, 96
      %v5067 = vpop.permute.xlu0 %5066
      %5068 = vrot.lane.b32.xlu0 %v1891, 96
      %v5069 = vpop.permute.xlu0 %5068
      %5070 = vrot.lane.b32.xlu0 %v1893, 96
      %v5071 = vpop.permute.xlu0 %5070
      %5072 = vrot.lane.b32.xlu0 %v1895, 96
      %v5073 = vpop.permute.xlu0 %5072
      %5074 = vrot.lane.b32.xlu0 %v1897, 96
      %v5075 = vpop.permute.xlu0 %5074
      %v5076 = vsel %vm1676, %v5061, %v5069
      %v5077 = vsel %vm1676, %v5063, %v5071
      %v5078 = vsel %vm1676, %v5065, %v5073
      %v5079 = vsel %vm1676, %v5067, %v5075
      %v5080 = vsel %vm1676, %v5069, %v5061
      %v5081 = vsel %vm1676, %v5071, %v5063
      %v5082 = vsel %vm1676, %v5073, %v5065
      %v5083 = vsel %vm1676, %v5075, %v5067
      %v5084 = vmul.f32 %v5076, %v1685
      %v5085 = vmul.f32 %v5080, %v1689
      %v5086 = vmul.f32 %v5077, %v1685
      %v5087 = vmul.f32 %v5081, %v1689
      %v5088 = vmul.f32 %v5078, %v1685
      %v5089 = vmul.f32 %v5082, %v1689
      %v5090 = vmul.f32 %v5079, %v1685
      %v5091 = vmul.f32 %v5083, %v1689
      %5092 = vrot.lane.b32.xlu0 %v4802, 64
      %v5093 = vpop.permute.xlu0 %5092
      %5094 = vrot.lane.b32.xlu0 %v4803, 64
      %v5095 = vpop.permute.xlu0 %5094
      %5096 = vrot.lane.b32.xlu0 %v4804, 64
      %v5097 = vpop.permute.xlu0 %5096
      %5098 = vrot.lane.b32.xlu0 %v4805, 64
      %v5099 = vpop.permute.xlu0 %5098
      %v5100 = vsel %vm1978, %v5093, 0
      %v5102 = vsel %vm1978, %v5095, 0
      %v5104 = vsel %vm1978, %v5097, 0
      %v5106 = vsel %vm1978, %v5099, 0
      %5108 = vmatprep.subr.mxu0 %v5085
      %5109 = vmatpush1.msra.mxu0 %v5084
      %5110 = vmatprep.subr.mxu0 %v5087
      %5111 = vmatpush1.msra.mxu0 %v5086
      %5112 = vmatprep.subr.mxu0 %v5089
      %5113 = vmatpush1.msra.mxu0 %v5088
      %5114 = vmatprep.subr.mxu0 %v5091
      %5115 = vmatpush1.msra.mxu0 %v5090
      %5116 = vmatprep.subr.mxu0 0.0
      %5117 = vmatpush1.msra.mxu0 0.0
      %5118 = vmatprep.subr.mxu0 0.0
      %5119 = vmatpush1.msra.mxu0 0.0
      %5120 = vmatprep.subr.mxu0 0.0
      %5121 = vmatpush1.msra.mxu0 0.0
      %5122 = vmatprep.subr.mxu0 0.0
      %5123 = vmatpush1.msra.mxu0 0.0
      %5124 = vmatprep.subr.mxu0 0.0
      %5125 = vmatpush1.msra.mxu0 0.0
      %5126 = vmatprep.subr.mxu0 0.0
      %5127 = vmatpush1.msra.mxu0 0.0
      %5128 = vmatprep.subr.mxu0 0.0
      %5129 = vmatpush1.msra.mxu0 0.0
      %5130 = vmatprep.subr.mxu0 0.0
      %5131 = vmatpush1.msra.mxu0 0.0
      %5132 = vmatprep.subr.mxu0 0.0
      %5133 = vmatpush1.msra.mxu0 0.0
      %5134 = vmatprep.subr.mxu0 0.0
      %5135 = vmatpush1.msra.mxu0 0.0
      %5136 = vmatprep.subr.mxu0 0.0
      %5137 = vmatpush1.msra.mxu0 0.0
      %5138 = vmatprep.subr.mxu0 0.0
      %5139 = vmatpush1.msra.mxu0 0.0
      %5140 = vmatprep.subr.mxu0 0.0
      %5141 = vmatpush1.msra.mxu0 0.0
      %5142 = vmatprep.subr.mxu0 0.0
      %5143 = vmatpush1.msra.mxu0 0.0
      %5144 = vmatprep.subr.mxu0 0.0
      %5145 = vmatpush1.msra.mxu0 0.0
      %5146 = vmatprep.subr.mxu0 0.0
      %5147 = vmatpush1.msra.mxu0 0.0
      %5148 = vmatprep.subr.mxu0 0.0
      %5149 = vmatpush1.msra.mxu0 0.0
      %5150 = vmatprep.subr.mxu0 0.0
      %5151 = vmatpush1.msra.mxu0 0.0
      %5152 = vmatprep.subr.mxu0 0.0
      %5153 = vmatpush1.msra.mxu0 0.0
      %5154 = vmatprep.subr.mxu0 0.0
      %5155 = vmatpush1.msra.mxu0 0.0
      %5156 = vmatprep.subr.mxu0 0.0
      %5157 = vmatpush1.msra.mxu0 0.0
      %5158 = vmatprep.subr.mxu0 0.0
      %5159 = vmatpush1.msra.mxu0 0.0
      %5160 = vmatprep.subr.mxu0 0.0
      %5161 = vmatpush1.msra.mxu0 0.0
      %5162 = vmatprep.subr.mxu0 0.0
      %5163 = vmatpush1.msra.mxu0 0.0
      %5164 = vmatprep.subr.mxu0 0.0
      %5165 = vmatpush1.msra.mxu0 0.0
      %5166 = vmatprep.subr.mxu0 0.0
      %5167 = vmatpush1.msra.mxu0 0.0
      %5168 = vmatprep.subr.mxu0 0.0
      %5169 = vmatpush1.msra.mxu0 0.0
      %5170 = vmatprep.subr.mxu0 0.0
      %5171 = vmatpush1.msra.mxu0 0.0
      %5172 = vmatprep.mubr.f32.mxu0 0.0
      %5173 = vmatmul.mubr.f32.gmra.mrb[0].mxu0 %v5100
      %v5174 = vpop.f32.mrb[0].mxu0
      %v5175 = vadd.f32 0.0, %v5174
      %v5176 = vpop.f32.mrb[0].mxu0
      %v5177 = vadd.f32 0.0, %v5176
      %5178 = vmatprep.mubr.f32.mxu0 0.0
      %5179 = vmatmul.mubr.f32.gmra.mrb[0].mxu0 %v5102
      %v5180 = vpop.f32.mrb[0].mxu0
      %v5181 = vadd.f32 0.0, %v5180
      %v5182 = vpop.f32.mrb[0].mxu0
      %v5183 = vadd.f32 0.0, %v5182
      %5184 = vmatprep.mubr.f32.mxu0 0.0
      %5185 = vmatmul.mubr.f32.gmra.mrb[0].mxu0 %v5104
      %v5186 = vpop.f32.mrb[0].mxu0
      %v5187 = vadd.f32 0.0, %v5186
      %v5188 = vpop.f32.mrb[0].mxu0
      %v5189 = vadd.f32 0.0, %v5188
      %5190 = vmatprep.mubr.f32.mxu0 0.0
      %5191 = vmatmul.mubr.f32.gmra.mrb[0].mxu0 %v5106
      %v5192 = vpop.f32.mrb[0].mxu0
      %v5193 = vadd.f32 0.0, %v5192
      %v5194 = vpop.f32.mrb[0].mxu0
      %v5195 = vadd.f32 0.0, %v5194
      %5196 = vdwg.mxu0
      %v5197 = vadd.f32 %v5052, %v5175
      %v5198 = vadd.f32 %v5053, %v5177
      %v5199 = vadd.f32 %v5054, %v5181
      %v5200 = vadd.f32 %v5055, %v5183
      %v5201 = vadd.f32 %v5056, %v5187
      %v5202 = vadd.f32 %v5057, %v5189
      %v5203 = vadd.f32 %v5058, %v5193
      %v5204 = vadd.f32 %v5059, %v5195
      %5205 = vrot.lane.b32.xlu0 %v1890, 95
      %v5206 = vpop.permute.xlu0 %5205
      %5207 = vrot.lane.b32.xlu0 %v1892, 95
      %v5208 = vpop.permute.xlu0 %5207
      %5209 = vrot.lane.b32.xlu0 %v1894, 95
      %v5210 = vpop.permute.xlu0 %5209
      %5211 = vrot.lane.b32.xlu0 %v1896, 95
      %v5212 = vpop.permute.xlu0 %5211
      %5213 = vrot.lane.b32.xlu0 %v1891, 95
      %v5214 = vpop.permute.xlu0 %5213
      %5215 = vrot.lane.b32.xlu0 %v1893, 95
      %v5216 = vpop.permute.xlu0 %5215
      %5217 = vrot.lane.b32.xlu0 %v1895, 95
      %v5218 = vpop.permute.xlu0 %5217
      %5219 = vrot.lane.b32.xlu0 %v1897, 95
      %v5220 = vpop.permute.xlu0 %5219
      %v5221 = vsel %vm1738, %v5206, %v5214
      %v5222 = vsel %vm1738, %v5208, %v5216
      %v5223 = vsel %vm1738, %v5210, %v5218
      %v5224 = vsel %vm1738, %v5212, %v5220
      %v5225 = vsel %vm1738, %v5214, %v5206
      %v5226 = vsel %vm1738, %v5216, %v5208
      %v5227 = vsel %vm1738, %v5218, %v5210
      %v5228 = vsel %vm1738, %v5220, %v5212
      %v5229 = vmul.f32 %v5221, %v1747
      %v5230 = vmul.f32 %v5225, %v1751
      %v5231 = vmul.f32 %v5222, %v1747
      %v5232 = vmul.f32 %v5226, %v1751
      %v5233 = vmul.f32 %v5223, %v1747
      %v5234 = vmul.f32 %v5227, %v1751
      %v5235 = vmul.f32 %v5224, %v1747
      %v5236 = vmul.f32 %v5228, %v1751
      %5237 = vrot.lane.b32.xlu0 %v4802, 32
      %v5238 = vpop.permute.xlu0 %5237
      %5239 = vrot.lane.b32.xlu0 %v4803, 32
      %v5240 = vpop.permute.xlu0 %5239
      %5241 = vrot.lane.b32.xlu0 %v4804, 32
      %v5242 = vpop.permute.xlu0 %5241
      %5243 = vrot.lane.b32.xlu0 %v4805, 32
      %v5244 = vpop.permute.xlu0 %5243
      %v5245 = vsel %vm1978, %v5238, 0
      %v5247 = vsel %vm1978, %v5240, 0
      %v5249 = vsel %vm1978, %v5242, 0
      %v5251 = vsel %vm1978, %v5244, 0
      %5253 = vmatprep.subr.mxu0 %v5230
      %5254 = vmatpush1.msra.mxu0 %v5229
      %5255 = vmatprep.subr.mxu0 %v5232
      %5256 = vmatpush1.msra.mxu0 %v5231
      %5257 = vmatprep.subr.mxu0 %v5234
      %5258 = vmatpush1.msra.mxu0 %v5233
      %5259 = vmatprep.subr.mxu0 %v5236
      %5260 = vmatpush1.msra.mxu0 %v5235
      %5261 = vmatprep.subr.mxu0 0.0
      %5262 = vmatpush1.msra.mxu0 0.0
      %5263 = vmatprep.subr.mxu0 0.0
      %5264 = vmatpush1.msra.mxu0 0.0
      %5265 = vmatprep.subr.mxu0 0.0
      %5266 = vmatpush1.msra.mxu0 0.0
      %5267 = vmatprep.subr.mxu0 0.0
      %5268 = vmatpush1.msra.mxu0 0.0
      %5269 = vmatprep.subr.mxu0 0.0
      %5270 = vmatpush1.msra.mxu0 0.0
      %5271 = vmatprep.subr.mxu0 0.0
      %5272 = vmatpush1.msra.mxu0 0.0
      %5273 = vmatprep.subr.mxu0 0.0
      %5274 = vmatpush1.msra.mxu0 0.0
      %5275 = vmatprep.subr.mxu0 0.0
      %5276 = vmatpush1.msra.mxu0 0.0
      %5277 = vmatprep.subr.mxu0 0.0
      %5278 = vmatpush1.msra.mxu0 0.0
      %5279 = vmatprep.subr.mxu0 0.0
      %5280 = vmatpush1.msra.mxu0 0.0
      %5281 = vmatprep.subr.mxu0 0.0
      %5282 = vmatpush1.msra.mxu0 0.0
      %5283 = vmatprep.subr.mxu0 0.0
      %5284 = vmatpush1.msra.mxu0 0.0
      %5285 = vmatprep.subr.mxu0 0.0
      %5286 = vmatpush1.msra.mxu0 0.0
      %5287 = vmatprep.subr.mxu0 0.0
      %5288 = vmatpush1.msra.mxu0 0.0
      %5289 = vmatprep.subr.mxu0 0.0
      %5290 = vmatpush1.msra.mxu0 0.0
      %5291 = vmatprep.subr.mxu0 0.0
      %5292 = vmatpush1.msra.mxu0 0.0
      %5293 = vmatprep.subr.mxu0 0.0
      %5294 = vmatpush1.msra.mxu0 0.0
      %5295 = vmatprep.subr.mxu0 0.0
      %5296 = vmatpush1.msra.mxu0 0.0
      %5297 = vmatprep.subr.mxu0 0.0
      %5298 = vmatpush1.msra.mxu0 0.0
      %5299 = vmatprep.subr.mxu0 0.0
      %5300 = vmatpush1.msra.mxu0 0.0
      %5301 = vmatprep.subr.mxu0 0.0
      %5302 = vmatpush1.msra.mxu0 0.0
      %5303 = vmatprep.subr.mxu0 0.0
      %5304 = vmatpush1.msra.mxu0 0.0
      %5305 = vmatprep.subr.mxu0 0.0
      %5306 = vmatpush1.msra.mxu0 0.0
      %5307 = vmatprep.subr.mxu0 0.0
      %5308 = vmatpush1.msra.mxu0 0.0
      %5309 = vmatprep.subr.mxu0 0.0
      %5310 = vmatpush1.msra.mxu0 0.0
      %5311 = vmatprep.subr.mxu0 0.0
      %5312 = vmatpush1.msra.mxu0 0.0
      %5313 = vmatprep.subr.mxu0 0.0
      %5314 = vmatpush1.msra.mxu0 0.0
      %5315 = vmatprep.subr.mxu0 0.0
      %5316 = vmatpush1.msra.mxu0 0.0
      %5317 = vmatprep.mubr.f32.mxu0 0.0
      %5318 = vmatmul.mubr.f32.gmra.mrb[0].mxu0 %v5245
      %v5319 = vpop.f32.mrb[0].mxu0
      %v5320 = vadd.f32 0.0, %v5319
      %v5321 = vpop.f32.mrb[0].mxu0
      %v5322 = vadd.f32 0.0, %v5321
      %5323 = vmatprep.mubr.f32.mxu0 0.0
      %5324 = vmatmul.mubr.f32.gmra.mrb[0].mxu0 %v5247
      %v5325 = vpop.f32.mrb[0].mxu0
      %v5326 = vadd.f32 0.0, %v5325
      %v5327 = vpop.f32.mrb[0].mxu0
      %v5328 = vadd.f32 0.0, %v5327
      %5329 = vmatprep.mubr.f32.mxu0 0.0
      %5330 = vmatmul.mubr.f32.gmra.mrb[0].mxu0 %v5249
      %v5331 = vpop.f32.mrb[0].mxu0
      %v5332 = vadd.f32 0.0, %v5331
      %v5333 = vpop.f32.mrb[0].mxu0
      %v5334 = vadd.f32 0.0, %v5333
      %5335 = vmatprep.mubr.f32.mxu0 0.0
      %5336 = vmatmul.mubr.f32.gmra.mrb[0].mxu0 %v5251
      %v5337 = vpop.f32.mrb[0].mxu0
      %v5338 = vadd.f32 0.0, %v5337
      %v5339 = vpop.f32.mrb[0].mxu0
      %v5340 = vadd.f32 0.0, %v5339
      %5341 = vdwg.mxu0
      %v5342 = vadd.f32 %v5197, %v5320
      %v5343 = vadd.f32 %v5198, %v5322
      %v5344 = vadd.f32 %v5199, %v5326
      %v5345 = vadd.f32 %v5200, %v5328
      %v5346 = vadd.f32 %v5201, %v5332
      %v5347 = vadd.f32 %v5202, %v5334
      %v5348 = vadd.f32 %v5203, %v5338
      %v5349 = vadd.f32 %v5204, %v5340
      %5350 = vrot.lane.b32.xlu0 %v1890, 94
      %v5351 = vpop.permute.xlu0 %5350
      %5352 = vrot.lane.b32.xlu0 %v1892, 94
      %v5353 = vpop.permute.xlu0 %5352
      %5354 = vrot.lane.b32.xlu0 %v1894, 94
      %v5355 = vpop.permute.xlu0 %5354
      %5356 = vrot.lane.b32.xlu0 %v1896, 94
      %v5357 = vpop.permute.xlu0 %5356
      %5358 = vrot.lane.b32.xlu0 %v1891, 94
      %v5359 = vpop.permute.xlu0 %5358
      %5360 = vrot.lane.b32.xlu0 %v1893, 94
      %v5361 = vpop.permute.xlu0 %5360
      %5362 = vrot.lane.b32.xlu0 %v1895, 94
      %v5363 = vpop.permute.xlu0 %5362
      %5364 = vrot.lane.b32.xlu0 %v1897, 94
      %v5365 = vpop.permute.xlu0 %5364
      %v5366 = vsel %vm1800, %v5351, %v5359
      %v5367 = vsel %vm1800, %v5353, %v5361
      %v5368 = vsel %vm1800, %v5355, %v5363
      %v5369 = vsel %vm1800, %v5357, %v5365
      %v5370 = vsel %vm1800, %v5359, %v5351
      %v5371 = vsel %vm1800, %v5361, %v5353
      %v5372 = vsel %vm1800, %v5363, %v5355
      %v5373 = vsel %vm1800, %v5365, %v5357
      %v5374 = vmul.f32 %v5366, %v1809
      %v5375 = vmul.f32 %v5370, %v1813
      %v5376 = vmul.f32 %v5367, %v1809
      %v5377 = vmul.f32 %v5371, %v1813
      %v5378 = vmul.f32 %v5368, %v1809
      %v5379 = vmul.f32 %v5372, %v1813
      %v5380 = vmul.f32 %v5369, %v1809
      %v5381 = vmul.f32 %v5373, %v1813
      %v5382 = vld [vmem:[%s4 + $0x30] sm:$0xff]
      %v5383 = vld [vmem:[%s4 + $0x68] sm:$0xff]
      %v5384 = vld [vmem:[%s4 + $0xa0] sm:$0xff]
      %v5385 = vld [vmem:[%s4 + $0xd8] sm:$0xff]
      %v5387 = vsel %vm1978, %v5382, 0
      %v5390 = vsel %vm1978, %v5383, 0
      %v5393 = vsel %vm1978, %v5384, 0
      %v5396 = vsel %vm1978, %v5385, 0
      %5398 = vmatprep.subr.mxu0 %v5375
      %5399 = vmatpush1.msra.mxu0 %v5374
      %5400 = vmatprep.subr.mxu0 %v5377
      %5401 = vmatpush1.msra.mxu0 %v5376
      %5402 = vmatprep.subr.mxu0 %v5379
      %5403 = vmatpush1.msra.mxu0 %v5378
      %5404 = vmatprep.subr.mxu0 %v5381
      %5405 = vmatpush1.msra.mxu0 %v5380
      %5406 = vmatprep.subr.mxu0 0.0
      %5407 = vmatpush1.msra.mxu0 0.0
      %5408 = vmatprep.subr.mxu0 0.0
      %5409 = vmatpush1.msra.mxu0 0.0
      %5410 = vmatprep.subr.mxu0 0.0
      %5411 = vmatpush1.msra.mxu0 0.0
      %5412 = vmatprep.subr.mxu0 0.0
      %5413 = vmatpush1.msra.mxu0 0.0
      %5414 = vmatprep.subr.mxu0 0.0
      %5415 = vmatpush1.msra.mxu0 0.0
      %5416 = vmatprep.subr.mxu0 0.0
      %5417 = vmatpush1.msra.mxu0 0.0
      %5418 = vmatprep.subr.mxu0 0.0
      %5419 = vmatpush1.msra.mxu0 0.0
      %5420 = vmatprep.subr.mxu0 0.0
      %5421 = vmatpush1.msra.mxu0 0.0
      %5422 = vmatprep.subr.mxu0 0.0
      %5423 = vmatpush1.msra.mxu0 0.0
      %5424 = vmatprep.subr.mxu0 0.0
      %5425 = vmatpush1.msra.mxu0 0.0
      %5426 = vmatprep.subr.mxu0 0.0
      %5427 = vmatpush1.msra.mxu0 0.0
      %5428 = vmatprep.subr.mxu0 0.0
      %5429 = vmatpush1.msra.mxu0 0.0
      %5430 = vmatprep.subr.mxu0 0.0
      %5431 = vmatpush1.msra.mxu0 0.0
      %5432 = vmatprep.subr.mxu0 0.0
      %5433 = vmatpush1.msra.mxu0 0.0
      %5434 = vmatprep.subr.mxu0 0.0
      %5435 = vmatpush1.msra.mxu0 0.0
      %5436 = vmatprep.subr.mxu0 0.0
      %5437 = vmatpush1.msra.mxu0 0.0
      %5438 = vmatprep.subr.mxu0 0.0
      %5439 = vmatpush1.msra.mxu0 0.0
      %5440 = vmatprep.subr.mxu0 0.0
      %5441 = vmatpush1.msra.mxu0 0.0
      %5442 = vmatprep.subr.mxu0 0.0
      %5443 = vmatpush1.msra.mxu0 0.0
      %5444 = vmatprep.subr.mxu0 0.0
      %5445 = vmatpush1.msra.mxu0 0.0
      %5446 = vmatprep.subr.mxu0 0.0
      %5447 = vmatpush1.msra.mxu0 0.0
      %5448 = vmatprep.subr.mxu0 0.0
      %5449 = vmatpush1.msra.mxu0 0.0
      %5450 = vmatprep.subr.mxu0 0.0
      %5451 = vmatpush1.msra.mxu0 0.0
      %5452 = vmatprep.subr.mxu0 0.0
      %5453 = vmatpush1.msra.mxu0 0.0
      %5454 = vmatprep.subr.mxu0 0.0
      %5455 = vmatpush1.msra.mxu0 0.0
      %5456 = vmatprep.subr.mxu0 0.0
      %5457 = vmatpush1.msra.mxu0 0.0
      %5458 = vmatprep.subr.mxu0 0.0
      %5459 = vmatpush1.msra.mxu0 0.0
      %5460 = vmatprep.subr.mxu0 0.0
      %5461 = vmatpush1.msra.mxu0 0.0
      %5462 = vmatprep.mubr.f32.mxu0 0.0
      %5463 = vmatmul.mubr.f32.gmra.mrb[0].mxu0 %v5387
      %v5464 = vpop.f32.mrb[0].mxu0
      %v5465 = vadd.f32 0.0, %v5464
      %v5466 = vpop.f32.mrb[0].mxu0
      %v5467 = vadd.f32 0.0, %v5466
      %5468 = vmatprep.mubr.f32.mxu0 0.0
      %5469 = vmatmul.mubr.f32.gmra.mrb[0].mxu0 %v5390
      %v5470 = vpop.f32.mrb[0].mxu0
      %v5471 = vadd.f32 0.0, %v5470
      %v5472 = vpop.f32.mrb[0].mxu0
      %v5473 = vadd.f32 0.0, %v5472
      %5474 = vmatprep.mubr.f32.mxu0 0.0
      %5475 = vmatmul.mubr.f32.gmra.mrb[0].mxu0 %v5393
      %v5476 = vpop.f32.mrb[0].mxu0
      %v5477 = vadd.f32 0.0, %v5476
      %v5478 = vpop.f32.mrb[0].mxu0
      %v5479 = vadd.f32 0.0, %v5478
      %5480 = vmatprep.mubr.f32.mxu0 0.0
      %5481 = vmatmul.mubr.f32.gmra.mrb[0].mxu0 %v5396
      %v5482 = vpop.f32.mrb[0].mxu0
      %v5483 = vadd.f32 0.0, %v5482
      %v5484 = vpop.f32.mrb[0].mxu0
      %v5485 = vadd.f32 0.0, %v5484
      %5486 = vdwg.mxu0
      %v5487 = vadd.f32 %v5342, %v5465
      %v5488 = vadd.f32 %v5343, %v5467
      %v5489 = vadd.f32 %v5344, %v5471
      %v5490 = vadd.f32 %v5345, %v5473
      %v5491 = vadd.f32 %v5346, %v5477
      %v5492 = vadd.f32 %v5347, %v5479
      %v5493 = vadd.f32 %v5348, %v5483
      %v5494 = vadd.f32 %v5349, %v5485
      %v5495 = vld [vmem:[%s5] sm:$0xff]
      %v5496 = vld [vmem:[%s5 + $0x8] sm:$0xff]
      %v5497 = vld [vmem:[%s5 + $0x10] sm:$0xff]
      %v5498 = vld [vmem:[%s5 + $0x18] sm:$0xff]
      %5500 = vset.pattern.permute.xlu0 0
      %5501 = vperm.xlu0 %5500, %v5495
      %v5502 = vpop.permute.xlu0 %5501
      %5505 = vset.pattern.permute.xlu0 0
      %5506 = vperm.xlu0 %5505, %v5496
      %v5507 = vpop.permute.xlu0 %5506
      %5510 = vset.pattern.permute.xlu0 0
      %5511 = vperm.xlu0 %5510, %v5497
      %v5512 = vpop.permute.xlu0 %5511
      %5515 = vset.pattern.permute.xlu0 0
      %5516 = vperm.xlu0 %5515, %v5498
      %v5517 = vpop.permute.xlu0 %5516
      %v5519 = vadd.f32 %v5487, %v5502
      %v5520 = vadd.f32 %v5488, %v5502
      %v5521 = vadd.f32 %v5489, %v5507
      %v5522 = vadd.f32 %v5490, %v5507
      %v5523 = vadd.f32 %v5491, %v5512
      %v5524 = vadd.f32 %v5492, %v5512
      %v5525 = vadd.f32 %v5493, %v5517
      %v5526 = vadd.f32 %v5494, %v5517
      %v5527 = vmax.f32 %v5519, 0.0
      %v5528 = vmax.f32 %v5520, 0.0
      %v5529 = vmax.f32 %v5521, 0.0
      %v5530 = vmax.f32 %v5522, 0.0
      %v5531 = vmax.f32 %v5523, 0.0
      %v5532 = vmax.f32 %v5524, 0.0
      %v5533 = vmax.f32 %v5525, 0.0
      %v5534 = vmax.f32 %v5526, 0.0
      %5535 = vrot.lane.b32.xlu0 %v5527, 34
      %v5536 = vpop.permute.xlu0 %5535
      %5537 = vrot.lane.b32.xlu0 %v5529, 34
      %v5538 = vpop.permute.xlu0 %5537
      %5539 = vrot.lane.b32.xlu0 %v5531, 34
      %v5540 = vpop.permute.xlu0 %5539
      %5541 = vrot.lane.b32.xlu0 %v5533, 34
      %v5542 = vpop.permute.xlu0 %5541
      %5543 = vrot.lane.b32.xlu0 %v5528, 34
      %v5544 = vpop.permute.xlu0 %5543
      %5545 = vrot.lane.b32.xlu0 %v5530, 34
      %v5546 = vpop.permute.xlu0 %5545
      %5547 = vrot.lane.b32.xlu0 %v5532, 34
      %v5548 = vpop.permute.xlu0 %5547
      %5549 = vrot.lane.b32.xlu0 %v5534, 34
      %v5550 = vpop.permute.xlu0 %5549
      %v5551 = vsel %vm321, %v5536, %v5544
      %v5552 = vsel %vm321, %v5538, %v5546
      %v5553 = vsel %vm321, %v5540, %v5548
      %v5554 = vsel %vm321, %v5542, %v5550
      %v5555 = vsel %vm321, %v5544, %v5536
      %v5556 = vsel %vm321, %v5546, %v5538
      %v5557 = vsel %vm321, %v5548, %v5540
      %v5558 = vsel %vm321, %v5550, %v5542
      %v5559 = vmul.f32 %v5555, %v329
      %v5560 = vmul.f32 %v5551, %v333
      %v5561 = vmul.f32 %v5556, %v329
      %v5562 = vmul.f32 %v5552, %v333
      %v5563 = vmul.f32 %v5557, %v329
      %v5564 = vmul.f32 %v5553, %v333
      %v5565 = vmul.f32 %v5558, %v329
      %v5566 = vmul.f32 %v5554, %v333
      %v5567 = vld [vmem:[%s6] sm:$0x1]
      %5568 = vrot.lane.b32.xlu0 %v5527, 33
      %v5569 = vpop.permute.xlu0 %5568
      %5570 = vrot.lane.b32.xlu0 %v5529, 33
      %v5571 = vpop.permute.xlu0 %5570
      %5572 = vrot.lane.b32.xlu0 %v5531, 33
      %v5573 = vpop.permute.xlu0 %5572
      %5574 = vrot.lane.b32.xlu0 %v5533, 33
      %v5575 = vpop.permute.xlu0 %5574
      %5576 = vrot.lane.b32.xlu0 %v5528, 33
      %v5577 = vpop.permute.xlu0 %5576
      %5578 = vrot.lane.b32.xlu0 %v5530, 33
      %v5579 = vpop.permute.xlu0 %5578
      %5580 = vrot.lane.b32.xlu0 %v5532, 33
      %v5581 = vpop.permute.xlu0 %5580
      %5582 = vrot.lane.b32.xlu0 %v5534, 33
      %v5583 = vpop.permute.xlu0 %5582
      %v5584 = vsel %vm390, %v5569, %v5577
      %v5585 = vsel %vm390, %v5571, %v5579
      %v5586 = vsel %vm390, %v5573, %v5581
      %v5587 = vsel %vm390, %v5575, %v5583
      %v5588 = vsel %vm390, %v5577, %v5569
      %v5589 = vsel %vm390, %v5579, %v5571
      %v5590 = vsel %vm390, %v5581, %v5573
      %v5591 = vsel %vm390, %v5583, %v5575
      %v5592 = vmul.f32 %v5588, %v399
      %v5593 = vmul.f32 %v5584, %v403
      %v5594 = vmul.f32 %v5589, %v399
      %v5595 = vmul.f32 %v5585, %v403
      %v5596 = vmul.f32 %v5590, %v399
      %v5597 = vmul.f32 %v5586, %v403
      %v5598 = vmul.f32 %v5591, %v399
      %v5599 = vmul.f32 %v5587, %v403
      %v5601 = vlaneseq
      %v5602 = vshrl.u32 %v5601, 7
      %v5603 = vsub.s32 0, %v5602
      %v5604 = vrot.slane %v5567, %v5603
      %5605 = vrot.lane.b32.xlu0 %v5604, 96
      %v5606 = vpop.permute.xlu0 %5605
      %v5607 = vsel %vm1978, %v5606, 0
      %5609 = vmatprep.subr.mxu0 %v5593
      %5610 = vmatpush1.msra.mxu0 %v5592
      %5611 = vmatprep.subr.mxu0 %v5595
      %5612 = vmatpush1.msra.mxu0 %v5594
      %5613 = vmatprep.subr.mxu0 %v5597
      %5614 = vmatpush1.msra.mxu0 %v5596
      %5615 = vmatprep.subr.mxu0 %v5599
      %5616 = vmatpush1.msra.mxu0 %v5598
      %5617 = vmatprep.subr.mxu0 0.0
      %5618 = vmatpush1.msra.mxu0 0.0
      %5619 = vmatprep.subr.mxu0 0.0
      %5620 = vmatpush1.msra.mxu0 0.0
      %5621 = vmatprep.subr.mxu0 0.0
      %5622 = vmatpush1.msra.mxu0 0.0
      %5623 = vmatprep.subr.mxu0 0.0
      %5624 = vmatpush1.msra.mxu0 0.0
      %5625 = vmatprep.subr.mxu0 0.0
      %5626 = vmatpush1.msra.mxu0 0.0
      %5627 = vmatprep.subr.mxu0 0.0
      %5628 = vmatpush1.msra.mxu0 0.0
      %5629 = vmatprep.subr.mxu0 0.0
      %5630 = vmatpush1.msra.mxu0 0.0
      %5631 = vmatprep.subr.mxu0 0.0
      %5632 = vmatpush1.msra.mxu0 0.0
      %5633 = vmatprep.subr.mxu0 0.0
      %5634 = vmatpush1.msra.mxu0 0.0
      %5635 = vmatprep.subr.mxu0 0.0
      %5636 = vmatpush1.msra.mxu0 0.0
      %5637 = vmatprep.subr.mxu0 0.0
      %5638 = vmatpush1.msra.mxu0 0.0
      %5639 = vmatprep.subr.mxu0 0.0
      %5640 = vmatpush1.msra.mxu0 0.0
      %5641 = vmatprep.subr.mxu0 0.0
      %5642 = vmatpush1.msra.mxu0 0.0
      %5643 = vmatprep.subr.mxu0 0.0
      %5644 = vmatpush1.msra.mxu0 0.0
      %5645 = vmatprep.subr.mxu0 0.0
      %5646 = vmatpush1.msra.mxu0 0.0
      %5647 = vmatprep.subr.mxu0 0.0
      %5648 = vmatpush1.msra.mxu0 0.0
      %5649 = vmatprep.subr.mxu0 0.0
      %5650 = vmatpush1.msra.mxu0 0.0
      %5651 = vmatprep.subr.mxu0 0.0
      %5652 = vmatpush1.msra.mxu0 0.0
      %5653 = vmatprep.subr.mxu0 0.0
      %5654 = vmatpush1.msra.mxu0 0.0
      %5655 = vmatprep.subr.mxu0 0.0
      %5656 = vmatpush1.msra.mxu0 0.0
      %5657 = vmatprep.subr.mxu0 0.0
      %5658 = vmatpush1.msra.mxu0 0.0
      %5659 = vmatprep.subr.mxu0 0.0
      %5660 = vmatpush1.msra.mxu0 0.0
      %5661 = vmatprep.subr.mxu0 0.0
      %5662 = vmatpush1.msra.mxu0 0.0
      %5663 = vmatprep.subr.mxu0 0.0
      %5664 = vmatpush1.msra.mxu0 0.0
      %5665 = vmatprep.subr.mxu0 0.0
      %5666 = vmatpush1.msra.mxu0 0.0
      %5667 = vmatprep.subr.mxu0 0.0
      %5668 = vmatpush1.msra.mxu0 0.0
      %5669 = vmatprep.subr.mxu0 0.0
      %5670 = vmatpush1.msra.mxu0 0.0
      %5671 = vmatprep.subr.mxu0 0.0
      %5672 = vmatpush1.msra.mxu0 0.0
      %5673 = vmatprep.mubr.f32.mxu0 0.0
      %5674 = vmatmul.mubr.f32.gmra.mrb[0].mxu0 %v5607
      %v5675 = vpop.f32.mrb[0].mxu0
      %v5676 = vadd.f32 0.0, %v5675
      %v5677 = vpop.f32.mrb[0].mxu0
      %v5678 = vadd.f32 0.0, %v5677
      %5679 = vdwg.mxu0
      %v5680 = vsel %vm1978, %v5567, 0
      %5682 = vmatprep.subr.mxu0 %v5560
      %5683 = vmatpush1.msra.mxu0 %v5559
      %5684 = vmatprep.subr.mxu0 %v5562
      %5685 = vmatpush1.msra.mxu0 %v5561
      %5686 = vmatprep.subr.mxu0 %v5564
      %5687 = vmatpush1.msra.mxu0 %v5563
      %5688 = vmatprep.subr.mxu0 %v5566
      %5689 = vmatpush1.msra.mxu0 %v5565
      %5690 = vmatprep.subr.mxu0 0.0
      %5691 = vmatpush1.msra.mxu0 0.0
      %5692 = vmatprep.subr.mxu0 0.0
      %5693 = vmatpush1.msra.mxu0 0.0
      %5694 = vmatprep.subr.mxu0 0.0
      %5695 = vmatpush1.msra.mxu0 0.0
      %5696 = vmatprep.subr.mxu0 0.0
      %5697 = vmatpush1.msra.mxu0 0.0
      %5698 = vmatprep.subr.mxu0 0.0
      %5699 = vmatpush1.msra.mxu0 0.0
      %5700 = vmatprep.subr.mxu0 0.0
      %5701 = vmatpush1.msra.mxu0 0.0
      %5702 = vmatprep.subr.mxu0 0.0
      %5703 = vmatpush1.msra.mxu0 0.0
      %5704 = vmatprep.subr.mxu0 0.0
      %5705 = vmatpush1.msra.mxu0 0.0
      %5706 = vmatprep.subr.mxu0 0.0
      %5707 = vmatpush1.msra.mxu0 0.0
      %5708 = vmatprep.subr.mxu0 0.0
      %5709 = vmatpush1.msra.mxu0 0.0
      %5710 = vmatprep.subr.mxu0 0.0
      %5711 = vmatpush1.msra.mxu0 0.0
      %5712 = vmatprep.subr.mxu0 0.0
      %5713 = vmatpush1.msra.mxu0 0.0
      %5714 = vmatprep.subr.mxu0 0.0
      %5715 = vmatpush1.msra.mxu0 0.0
      %5716 = vmatprep.subr.mxu0 0.0
      %5717 = vmatpush1.msra.mxu0 0.0
      %5718 = vmatprep.subr.mxu0 0.0
      %5719 = vmatpush1.msra.mxu0 0.0
      %5720 = vmatprep.subr.mxu0 0.0
      %5721 = vmatpush1.msra.mxu0 0.0
      %5722 = vmatprep.subr.mxu0 0.0
      %5723 = vmatpush1.msra.mxu0 0.0
      %5724 = vmatprep.subr.mxu0 0.0
      %5725 = vmatpush1.msra.mxu0 0.0
      %5726 = vmatprep.subr.mxu0 0.0
      %5727 = vmatpush1.msra.mxu0 0.0
      %5728 = vmatprep.subr.mxu0 0.0
      %5729 = vmatpush1.msra.mxu0 0.0
      %5730 = vmatprep.subr.mxu0 0.0
      %5731 = vmatpush1.msra.mxu0 0.0
      %5732 = vmatprep.subr.mxu0 0.0
      %5733 = vmatpush1.msra.mxu0 0.0
      %5734 = vmatprep.subr.mxu0 0.0
      %5735 = vmatpush1.msra.mxu0 0.0
      %5736 = vmatprep.subr.mxu0 0.0
      %5737 = vmatpush1.msra.mxu0 0.0
      %5738 = vmatprep.subr.mxu0 0.0
      %5739 = vmatpush1.msra.mxu0 0.0
      %5740 = vmatprep.subr.mxu0 0.0
      %5741 = vmatpush1.msra.mxu0 0.0
      %5742 = vmatprep.subr.mxu0 0.0
      %5743 = vmatpush1.msra.mxu0 0.0
      %5744 = vmatprep.subr.mxu0 0.0
      %5745 = vmatpush1.msra.mxu0 0.0
      %5746 = vmatprep.mubr.f32.mxu0 0.0
      %5747 = vmatmul.mubr.f32.gmra.mrb[0].mxu0 %v5680
      %v5748 = vpop.f32.mrb[0].mxu0
      %v5749 = vadd.f32 %v5676, %v5748
      %v5750 = vpop.f32.mrb[0].mxu0
      %v5751 = vadd.f32 %v5678, %v5750
      %5752 = vdwg.mxu0
      %5753 = vrot.lane.b32.xlu0 %v5527, 32
      %v5754 = vpop.permute.xlu0 %5753
      %5755 = vrot.lane.b32.xlu0 %v5529, 32
      %v5756 = vpop.permute.xlu0 %5755
      %5757 = vrot.lane.b32.xlu0 %v5531, 32
      %v5758 = vpop.permute.xlu0 %5757
      %5759 = vrot.lane.b32.xlu0 %v5533, 32
      %v5760 = vpop.permute.xlu0 %5759
      %5761 = vrot.lane.b32.xlu0 %v5528, 32
      %v5762 = vpop.permute.xlu0 %5761
      %5763 = vrot.lane.b32.xlu0 %v5530, 32
      %v5764 = vpop.permute.xlu0 %5763
      %5765 = vrot.lane.b32.xlu0 %v5532, 32
      %v5766 = vpop.permute.xlu0 %5765
      %5767 = vrot.lane.b32.xlu0 %v5534, 32
      %v5768 = vpop.permute.xlu0 %5767
      %v5769 = vsel %vm452, %v5754, %v5762
      %v5770 = vsel %vm452, %v5756, %v5764
      %v5771 = vsel %vm452, %v5758, %v5766
      %v5772 = vsel %vm452, %v5760, %v5768
      %v5773 = vsel %vm452, %v5762, %v5754
      %v5774 = vsel %vm452, %v5764, %v5756
      %v5775 = vsel %vm452, %v5766, %v5758
      %v5776 = vsel %vm452, %v5768, %v5760
      %v5777 = vmul.f32 %v5773, %v461
      %v5778 = vmul.f32 %v5769, %v465
      %v5779 = vmul.f32 %v5774, %v461
      %v5780 = vmul.f32 %v5770, %v465
      %v5781 = vmul.f32 %v5775, %v461
      %v5782 = vmul.f32 %v5771, %v465
      %v5783 = vmul.f32 %v5776, %v461
      %v5784 = vmul.f32 %v5772, %v465
      %5785 = vrot.lane.b32.xlu0 %v5604, 64
      %v5786 = vpop.permute.xlu0 %5785
      %v5787 = vsel %vm1978, %v5786, 0
      %5789 = vmatprep.subr.mxu0 %v5778
      %5790 = vmatpush1.msra.mxu0 %v5777
      %5791 = vmatprep.subr.mxu0 %v5780
      %5792 = vmatpush1.msra.mxu0 %v5779
      %5793 = vmatprep.subr.mxu0 %v5782
      %5794 = vmatpush1.msra.mxu0 %v5781
      %5795 = vmatprep.subr.mxu0 %v5784
      %5796 = vmatpush1.msra.mxu0 %v5783
      %5797 = vmatprep.subr.mxu0 0.0
      %5798 = vmatpush1.msra.mxu0 0.0
      %5799 = vmatprep.subr.mxu0 0.0
      %5800 = vmatpush1.msra.mxu0 0.0
      %5801 = vmatprep.subr.mxu0 0.0
      %5802 = vmatpush1.msra.mxu0 0.0
      %5803 = vmatprep.subr.mxu0 0.0
      %5804 = vmatpush1.msra.mxu0 0.0
      %5805 = vmatprep.subr.mxu0 0.0
      %5806 = vmatpush1.msra.mxu0 0.0
      %5807 = vmatprep.subr.mxu0 0.0
      %5808 = vmatpush1.msra.mxu0 0.0
      %5809 = vmatprep.subr.mxu0 0.0
      %5810 = vmatpush1.msra.mxu0 0.0
      %5811 = vmatprep.subr.mxu0 0.0
      %5812 = vmatpush1.msra.mxu0 0.0
      %5813 = vmatprep.subr.mxu0 0.0
      %5814 = vmatpush1.msra.mxu0 0.0
      %5815 = vmatprep.subr.mxu0 0.0
      %5816 = vmatpush1.msra.mxu0 0.0
      %5817 = vmatprep.subr.mxu0 0.0
      %5818 = vmatpush1.msra.mxu0 0.0
      %5819 = vmatprep.subr.mxu0 0.0
      %5820 = vmatpush1.msra.mxu0 0.0
      %5821 = vmatprep.subr.mxu0 0.0
      %5822 = vmatpush1.msra.mxu0 0.0
      %5823 = vmatprep.subr.mxu0 0.0
      %5824 = vmatpush1.msra.mxu0 0.0
      %5825 = vmatprep.subr.mxu0 0.0
      %5826 = vmatpush1.msra.mxu0 0.0
      %5827 = vmatprep.subr.mxu0 0.0
      %5828 = vmatpush1.msra.mxu0 0.0
      %5829 = vmatprep.subr.mxu0 0.0
      %5830 = vmatpush1.msra.mxu0 0.0
      %5831 = vmatprep.subr.mxu0 0.0
      %5832 = vmatpush1.msra.mxu0 0.0
      %5833 = vmatprep.subr.mxu0 0.0
      %5834 = vmatpush1.msra.mxu0 0.0
      %5835 = vmatprep.subr.mxu0 0.0
      %5836 = vmatpush1.msra.mxu0 0.0
      %5837 = vmatprep.subr.mxu0 0.0
      %5838 = vmatpush1.msra.mxu0 0.0
      %5839 = vmatprep.subr.mxu0 0.0
      %5840 = vmatpush1.msra.mxu0 0.0
      %5841 = vmatprep.subr.mxu0 0.0
      %5842 = vmatpush1.msra.mxu0 0.0
      %5843 = vmatprep.subr.mxu0 0.0
      %5844 = vmatpush1.msra.mxu0 0.0
      %5845 = vmatprep.subr.mxu0 0.0
      %5846 = vmatpush1.msra.mxu0 0.0
      %5847 = vmatprep.subr.mxu0 0.0
      %5848 = vmatpush1.msra.mxu0 0.0
      %5849 = vmatprep.subr.mxu0 0.0
      %5850 = vmatpush1.msra.mxu0 0.0
      %5851 = vmatprep.subr.mxu0 0.0
      %5852 = vmatpush1.msra.mxu0 0.0
      %5853 = vmatprep.mubr.f32.mxu0 0.0
      %5854 = vmatmul.mubr.f32.gmra.mrb[0].mxu0 %v5787
      %v5855 = vpop.f32.mrb[0].mxu0
      %v5856 = vadd.f32 0.0, %v5855
      %v5857 = vpop.f32.mrb[0].mxu0
      %v5858 = vadd.f32 0.0, %v5857
      %5859 = vdwg.mxu0
      %v5860 = vadd.f32 %v5749, %v5856
      %v5861 = vadd.f32 %v5751, %v5858
      %5862 = vrot.lane.b32.xlu0 %v5527, 31
      %v5863 = vpop.permute.xlu0 %5862
      %5864 = vrot.lane.b32.xlu0 %v5529, 31
      %v5865 = vpop.permute.xlu0 %5864
      %5866 = vrot.lane.b32.xlu0 %v5531, 31
      %v5867 = vpop.permute.xlu0 %5866
      %5868 = vrot.lane.b32.xlu0 %v5533, 31
      %v5869 = vpop.permute.xlu0 %5868
      %5870 = vrot.lane.b32.xlu0 %v5528, 31
      %v5871 = vpop.permute.xlu0 %5870
      %5872 = vrot.lane.b32.xlu0 %v5530, 31
      %v5873 = vpop.permute.xlu0 %5872
      %5874 = vrot.lane.b32.xlu0 %v5532, 31
      %v5875 = vpop.permute.xlu0 %5874
      %5876 = vrot.lane.b32.xlu0 %v5534, 31
      %v5877 = vpop.permute.xlu0 %5876
      %v5878 = vsel %vm514, %v5863, %v5871
      %v5879 = vsel %vm514, %v5865, %v5873
      %v5880 = vsel %vm514, %v5867, %v5875
      %v5881 = vsel %vm514, %v5869, %v5877
      %v5882 = vsel %vm514, %v5871, %v5863
      %v5883 = vsel %vm514, %v5873, %v5865
      %v5884 = vsel %vm514, %v5875, %v5867
      %v5885 = vsel %vm514, %v5877, %v5869
      %v5886 = vmul.f32 %v5882, %v523
      %v5887 = vmul.f32 %v5878, %v527
      %v5888 = vmul.f32 %v5883, %v523
      %v5889 = vmul.f32 %v5879, %v527
      %v5890 = vmul.f32 %v5884, %v523
      %v5891 = vmul.f32 %v5880, %v527
      %v5892 = vmul.f32 %v5885, %v523
      %v5893 = vmul.f32 %v5881, %v527
      %5894 = vrot.lane.b32.xlu0 %v5604, 32
      %v5895 = vpop.permute.xlu0 %5894
      %v5896 = vsel %vm1978, %v5895, 0
      %5898 = vmatprep.subr.mxu0 %v5887
      %5899 = vmatpush1.msra.mxu0 %v5886
      %5900 = vmatprep.subr.mxu0 %v5889
      %5901 = vmatpush1.msra.mxu0 %v5888
      %5902 = vmatprep.subr.mxu0 %v5891
      %5903 = vmatpush1.msra.mxu0 %v5890
      %5904 = vmatprep.subr.mxu0 %v5893
      %5905 = vmatpush1.msra.mxu0 %v5892
      %5906 = vmatprep.subr.mxu0 0.0
      %5907 = vmatpush1.msra.mxu0 0.0
      %5908 = vmatprep.subr.mxu0 0.0
      %5909 = vmatpush1.msra.mxu0 0.0
      %5910 = vmatprep.subr.mxu0 0.0
      %5911 = vmatpush1.msra.mxu0 0.0
      %5912 = vmatprep.subr.mxu0 0.0
      %5913 = vmatpush1.msra.mxu0 0.0
      %5914 = vmatprep.subr.mxu0 0.0
      %5915 = vmatpush1.msra.mxu0 0.0
      %5916 = vmatprep.subr.mxu0 0.0
      %5917 = vmatpush1.msra.mxu0 0.0
      %5918 = vmatprep.subr.mxu0 0.0
      %5919 = vmatpush1.msra.mxu0 0.0
      %5920 = vmatprep.subr.mxu0 0.0
      %5921 = vmatpush1.msra.mxu0 0.0
      %5922 = vmatprep.subr.mxu0 0.0
      %5923 = vmatpush1.msra.mxu0 0.0
      %5924 = vmatprep.subr.mxu0 0.0
      %5925 = vmatpush1.msra.mxu0 0.0
      %5926 = vmatprep.subr.mxu0 0.0
      %5927 = vmatpush1.msra.mxu0 0.0
      %5928 = vmatprep.subr.mxu0 0.0
      %5929 = vmatpush1.msra.mxu0 0.0
      %5930 = vmatprep.subr.mxu0 0.0
      %5931 = vmatpush1.msra.mxu0 0.0
      %5932 = vmatprep.subr.mxu0 0.0
      %5933 = vmatpush1.msra.mxu0 0.0
      %5934 = vmatprep.subr.mxu0 0.0
      %5935 = vmatpush1.msra.mxu0 0.0
      %5936 = vmatprep.subr.mxu0 0.0
      %5937 = vmatpush1.msra.mxu0 0.0
      %5938 = vmatprep.subr.mxu0 0.0
      %5939 = vmatpush1.msra.mxu0 0.0
      %5940 = vmatprep.subr.mxu0 0.0
      %5941 = vmatpush1.msra.mxu0 0.0
      %5942 = vmatprep.subr.mxu0 0.0
      %5943 = vmatpush1.msra.mxu0 0.0
      %5944 = vmatprep.subr.mxu0 0.0
      %5945 = vmatpush1.msra.mxu0 0.0
      %5946 = vmatprep.subr.mxu0 0.0
      %5947 = vmatpush1.msra.mxu0 0.0
      %5948 = vmatprep.subr.mxu0 0.0
      %5949 = vmatpush1.msra.mxu0 0.0
      %5950 = vmatprep.subr.mxu0 0.0
      %5951 = vmatpush1.msra.mxu0 0.0
      %5952 = vmatprep.subr.mxu0 0.0
      %5953 = vmatpush1.msra.mxu0 0.0
      %5954 = vmatprep.subr.mxu0 0.0
      %5955 = vmatpush1.msra.mxu0 0.0
      %5956 = vmatprep.subr.mxu0 0.0
      %5957 = vmatpush1.msra.mxu0 0.0
      %5958 = vmatprep.subr.mxu0 0.0
      %5959 = vmatpush1.msra.mxu0 0.0
      %5960 = vmatprep.subr.mxu0 0.0
      %5961 = vmatpush1.msra.mxu0 0.0
      %5962 = vmatprep.mubr.f32.mxu0 0.0
      %5963 = vmatmul.mubr.f32.gmra.mrb[0].mxu0 %v5896
      %v5964 = vpop.f32.mrb[0].mxu0
      %v5965 = vadd.f32 0.0, %v5964
      %v5966 = vpop.f32.mrb[0].mxu0
      %v5967 = vadd.f32 0.0, %v5966
      %5968 = vdwg.mxu0
      %v5969 = vadd.f32 %v5860, %v5965
      %v5970 = vadd.f32 %v5861, %v5967
      %5971 = vrot.lane.b32.xlu0 %v5527, 30
      %v5972 = vpop.permute.xlu0 %5971
      %5973 = vrot.lane.b32.xlu0 %v5529, 30
      %v5974 = vpop.permute.xlu0 %5973
      %5975 = vrot.lane.b32.xlu0 %v5531, 30
      %v5976 = vpop.permute.xlu0 %5975
      %5977 = vrot.lane.b32.xlu0 %v5533, 30
      %v5978 = vpop.permute.xlu0 %5977
      %5979 = vrot.lane.b32.xlu0 %v5528, 30
      %v5980 = vpop.permute.xlu0 %5979
      %5981 = vrot.lane.b32.xlu0 %v5530, 30
      %v5982 = vpop.permute.xlu0 %5981
      %5983 = vrot.lane.b32.xlu0 %v5532, 30
      %v5984 = vpop.permute.xlu0 %5983
      %5985 = vrot.lane.b32.xlu0 %v5534, 30
      %v5986 = vpop.permute.xlu0 %5985
      %v5987 = vsel %vm576, %v5972, %v5980
      %v5988 = vsel %vm576, %v5974, %v5982
      %v5989 = vsel %vm576, %v5976, %v5984
      %v5990 = vsel %vm576, %v5978, %v5986
      %v5991 = vsel %vm576, %v5980, %v5972
      %v5992 = vsel %vm576, %v5982, %v5974
      %v5993 = vsel %vm576, %v5984, %v5976
      %v5994 = vsel %vm576, %v5986, %v5978
      %v5995 = vmul.f32 %v5991, %v585
      %v5996 = vmul.f32 %v5987, %v589
      %v5997 = vmul.f32 %v5992, %v585
      %v5998 = vmul.f32 %v5988, %v589
      %v5999 = vmul.f32 %v5993, %v585
      %v6000 = vmul.f32 %v5989, %v589
      %v6001 = vmul.f32 %v5994, %v585
      %v6002 = vmul.f32 %v5990, %v589
      %v6003 = vld [vmem:[%s6 + $0x1] sm:$0x1]
      %v6005 = vsel %vm1978, %v6003, 0
      %6007 = vmatprep.subr.mxu0 %v5996
      %6008 = vmatpush1.msra.mxu0 %v5995
      %6009 = vmatprep.subr.mxu0 %v5998
      %6010 = vmatpush1.msra.mxu0 %v5997
      %6011 = vmatprep.subr.mxu0 %v6000
      %6012 = vmatpush1.msra.mxu0 %v5999
      %6013 = vmatprep.subr.mxu0 %v6002
      %6014 = vmatpush1.msra.mxu0 %v6001
      %6015 = vmatprep.subr.mxu0 0.0
      %6016 = vmatpush1.msra.mxu0 0.0
      %6017 = vmatprep.subr.mxu0 0.0
      %6018 = vmatpush1.msra.mxu0 0.0
      %6019 = vmatprep.subr.mxu0 0.0
      %6020 = vmatpush1.msra.mxu0 0.0
      %6021 = vmatprep.subr.mxu0 0.0
      %6022 = vmatpush1.msra.mxu0 0.0
      %6023 = vmatprep.subr.mxu0 0.0
      %6024 = vmatpush1.msra.mxu0 0.0
      %6025 = vmatprep.subr.mxu0 0.0
      %6026 = vmatpush1.msra.mxu0 0.0
      %6027 = vmatprep.subr.mxu0 0.0
      %6028 = vmatpush1.msra.mxu0 0.0
      %6029 = vmatprep.subr.mxu0 0.0
      %6030 = vmatpush1.msra.mxu0 0.0
      %6031 = vmatprep.subr.mxu0 0.0
      %6032 = vmatpush1.msra.mxu0 0.0
      %6033 = vmatprep.subr.mxu0 0.0
      %6034 = vmatpush1.msra.mxu0 0.0
      %6035 = vmatprep.subr.mxu0 0.0
      %6036 = vmatpush1.msra.mxu0 0.0
      %6037 = vmatprep.subr.mxu0 0.0
      %6038 = vmatpush1.msra.mxu0 0.0
      %6039 = vmatprep.subr.mxu0 0.0
      %6040 = vmatpush1.msra.mxu0 0.0
      %6041 = vmatprep.subr.mxu0 0.0
      %6042 = vmatpush1.msra.mxu0 0.0
      %6043 = vmatprep.subr.mxu0 0.0
      %6044 = vmatpush1.msra.mxu0 0.0
      %6045 = vmatprep.subr.mxu0 0.0
      %6046 = vmatpush1.msra.mxu0 0.0
      %6047 = vmatprep.subr.mxu0 0.0
      %6048 = vmatpush1.msra.mxu0 0.0
      %6049 = vmatprep.subr.mxu0 0.0
      %6050 = vmatpush1.msra.mxu0 0.0
      %6051 = vmatprep.subr.mxu0 0.0
      %6052 = vmatpush1.msra.mxu0 0.0
      %6053 = vmatprep.subr.mxu0 0.0
      %6054 = vmatpush1.msra.mxu0 0.0
      %6055 = vmatprep.subr.mxu0 0.0
      %6056 = vmatpush1.msra.mxu0 0.0
      %6057 = vmatprep.subr.mxu0 0.0
      %6058 = vmatpush1.msra.mxu0 0.0
      %6059 = vmatprep.subr.mxu0 0.0
      %6060 = vmatpush1.msra.mxu0 0.0
      %6061 = vmatprep.subr.mxu0 0.0
      %6062 = vmatpush1.msra.mxu0 0.0
      %6063 = vmatprep.subr.mxu0 0.0
      %6064 = vmatpush1.msra.mxu0 0.0
      %6065 = vmatprep.subr.mxu0 0.0
      %6066 = vmatpush1.msra.mxu0 0.0
      %6067 = vmatprep.subr.mxu0 0.0
      %6068 = vmatpush1.msra.mxu0 0.0
      %6069 = vmatprep.subr.mxu0 0.0
      %6070 = vmatpush1.msra.mxu0 0.0
      %6071 = vmatprep.mubr.f32.mxu0 0.0
      %6072 = vmatmul.mubr.f32.gmra.mrb[0].mxu0 %v6005
      %v6073 = vpop.f32.mrb[0].mxu0
      %v6074 = vadd.f32 0.0, %v6073
      %v6075 = vpop.f32.mrb[0].mxu0
      %v6076 = vadd.f32 0.0, %v6075
      %6077 = vdwg.mxu0
      %v6078 = vadd.f32 %v5969, %v6074
      %v6079 = vadd.f32 %v5970, %v6076
      %6080 = vrot.lane.b32.xlu0 %v5527, 18
      %v6081 = vpop.permute.xlu0 %6080
      %6082 = vrot.lane.b32.xlu0 %v5529, 18
      %v6083 = vpop.permute.xlu0 %6082
      %6084 = vrot.lane.b32.xlu0 %v5531, 18
      %v6085 = vpop.permute.xlu0 %6084
      %6086 = vrot.lane.b32.xlu0 %v5533, 18
      %v6087 = vpop.permute.xlu0 %6086
      %6088 = vrot.lane.b32.xlu0 %v5528, 18
      %v6089 = vpop.permute.xlu0 %6088
      %6090 = vrot.lane.b32.xlu0 %v5530, 18
      %v6091 = vpop.permute.xlu0 %6090
      %6092 = vrot.lane.b32.xlu0 %v5532, 18
      %v6093 = vpop.permute.xlu0 %6092
      %6094 = vrot.lane.b32.xlu0 %v5534, 18
      %v6095 = vpop.permute.xlu0 %6094
      %v6096 = vsel %vm638, %v6081, %v6089
      %v6097 = vsel %vm638, %v6083, %v6091
      %v6098 = vsel %vm638, %v6085, %v6093
      %v6099 = vsel %vm638, %v6087, %v6095
      %v6100 = vsel %vm638, %v6089, %v6081
      %v6101 = vsel %vm638, %v6091, %v6083
      %v6102 = vsel %vm638, %v6093, %v6085
      %v6103 = vsel %vm638, %v6095, %v6087
      %v6104 = vmul.f32 %v6100, %v647
      %v6105 = vmul.f32 %v6096, %v651
      %v6106 = vmul.f32 %v6101, %v647
      %v6107 = vmul.f32 %v6097, %v651
      %v6108 = vmul.f32 %v6102, %v647
      %v6109 = vmul.f32 %v6098, %v651
      %v6110 = vmul.f32 %v6103, %v647
      %v6111 = vmul.f32 %v6099, %v651
      %v6112 = vlaneseq
      %v6113 = vshrl.u32 %v6112, 7
      %v6114 = vsub.s32 0, %v6113
      %v6115 = vrot.slane %v6003, %v6114
      %6116 = vrot.lane.b32.xlu0 %v6115, 96
      %v6117 = vpop.permute.xlu0 %6116
      %v6118 = vsel %vm1978, %v6117, 0
      %6120 = vmatprep.subr.mxu0 %v6105
      %6121 = vmatpush1.msra.mxu0 %v6104
      %6122 = vmatprep.subr.mxu0 %v6107
      %6123 = vmatpush1.msra.mxu0 %v6106
      %6124 = vmatprep.subr.mxu0 %v6109
      %6125 = vmatpush1.msra.mxu0 %v6108
      %6126 = vmatprep.subr.mxu0 %v6111
      %6127 = vmatpush1.msra.mxu0 %v6110
      %6128 = vmatprep.subr.mxu0 0.0
      %6129 = vmatpush1.msra.mxu0 0.0
      %6130 = vmatprep.subr.mxu0 0.0
      %6131 = vmatpush1.msra.mxu0 0.0
      %6132 = vmatprep.subr.mxu0 0.0
      %6133 = vmatpush1.msra.mxu0 0.0
      %6134 = vmatprep.subr.mxu0 0.0
      %6135 = vmatpush1.msra.mxu0 0.0
      %6136 = vmatprep.subr.mxu0 0.0
      %6137 = vmatpush1.msra.mxu0 0.0
      %6138 = vmatprep.subr.mxu0 0.0
      %6139 = vmatpush1.msra.mxu0 0.0
      %6140 = vmatprep.subr.mxu0 0.0
      %6141 = vmatpush1.msra.mxu0 0.0
      %6142 = vmatprep.subr.mxu0 0.0
      %6143 = vmatpush1.msra.mxu0 0.0
      %6144 = vmatprep.subr.mxu0 0.0
      %6145 = vmatpush1.msra.mxu0 0.0
      %6146 = vmatprep.subr.mxu0 0.0
      %6147 = vmatpush1.msra.mxu0 0.0
      %6148 = vmatprep.subr.mxu0 0.0
      %6149 = vmatpush1.msra.mxu0 0.0
      %6150 = vmatprep.subr.mxu0 0.0
      %6151 = vmatpush1.msra.mxu0 0.0
      %6152 = vmatprep.subr.mxu0 0.0
      %6153 = vmatpush1.msra.mxu0 0.0
      %6154 = vmatprep.subr.mxu0 0.0
      %6155 = vmatpush1.msra.mxu0 0.0
      %6156 = vmatprep.subr.mxu0 0.0
      %6157 = vmatpush1.msra.mxu0 0.0
      %6158 = vmatprep.subr.mxu0 0.0
      %6159 = vmatpush1.msra.mxu0 0.0
      %6160 = vmatprep.subr.mxu0 0.0
      %6161 = vmatpush1.msra.mxu0 0.0
      %6162 = vmatprep.subr.mxu0 0.0
      %6163 = vmatpush1.msra.mxu0 0.0
      %6164 = vmatprep.subr.mxu0 0.0
      %6165 = vmatpush1.msra.mxu0 0.0
      %6166 = vmatprep.subr.mxu0 0.0
      %6167 = vmatpush1.msra.mxu0 0.0
      %6168 = vmatprep.subr.mxu0 0.0
      %6169 = vmatpush1.msra.mxu0 0.0
      %6170 = vmatprep.subr.mxu0 0.0
      %6171 = vmatpush1.msra.mxu0 0.0
      %6172 = vmatprep.subr.mxu0 0.0
      %6173 = vmatpush1.msra.mxu0 0.0
      %6174 = vmatprep.subr.mxu0 0.0
      %6175 = vmatpush1.msra.mxu0 0.0
      %6176 = vmatprep.subr.mxu0 0.0
      %6177 = vmatpush1.msra.mxu0 0.0
      %6178 = vmatprep.subr.mxu0 0.0
      %6179 = vmatpush1.msra.mxu0 0.0
      %6180 = vmatprep.subr.mxu0 0.0
      %6181 = vmatpush1.msra.mxu0 0.0
      %6182 = vmatprep.subr.mxu0 0.0
      %6183 = vmatpush1.msra.mxu0 0.0
      %6184 = vmatprep.mubr.f32.mxu0 0.0
      %6185 = vmatmul.mubr.f32.gmra.mrb[0].mxu0 %v6118
      %v6186 = vpop.f32.mrb[0].mxu0
      %v6187 = vadd.f32 0.0, %v6186
      %v6188 = vpop.f32.mrb[0].mxu0
      %v6189 = vadd.f32 0.0, %v6188
      %6190 = vdwg.mxu0
      %v6191 = vadd.f32 %v6078, %v6187
      %v6192 = vadd.f32 %v6079, %v6189
      %6193 = vrot.lane.b32.xlu0 %v5527, 17
      %v6194 = vpop.permute.xlu0 %6193
      %6195 = vrot.lane.b32.xlu0 %v5529, 17
      %v6196 = vpop.permute.xlu0 %6195
      %6197 = vrot.lane.b32.xlu0 %v5531, 17
      %v6198 = vpop.permute.xlu0 %6197
      %6199 = vrot.lane.b32.xlu0 %v5533, 17
      %v6200 = vpop.permute.xlu0 %6199
      %6201 = vrot.lane.b32.xlu0 %v5528, 17
      %v6202 = vpop.permute.xlu0 %6201
      %6203 = vrot.lane.b32.xlu0 %v5530, 17
      %v6204 = vpop.permute.xlu0 %6203
      %6205 = vrot.lane.b32.xlu0 %v5532, 17
      %v6206 = vpop.permute.xlu0 %6205
      %6207 = vrot.lane.b32.xlu0 %v5534, 17
      %v6208 = vpop.permute.xlu0 %6207
      %v6209 = vsel %vm700, %v6194, %v6202
      %v6210 = vsel %vm700, %v6196, %v6204
      %v6211 = vsel %vm700, %v6198, %v6206
      %v6212 = vsel %vm700, %v6200, %v6208
      %v6213 = vsel %vm700, %v6202, %v6194
      %v6214 = vsel %vm700, %v6204, %v6196
      %v6215 = vsel %vm700, %v6206, %v6198
      %v6216 = vsel %vm700, %v6208, %v6200
      %v6217 = vmul.f32 %v6213, %v709
      %v6218 = vmul.f32 %v6209, %v713
      %v6219 = vmul.f32 %v6214, %v709
      %v6220 = vmul.f32 %v6210, %v713
      %v6221 = vmul.f32 %v6215, %v709
      %v6222 = vmul.f32 %v6211, %v713
      %v6223 = vmul.f32 %v6216, %v709
      %v6224 = vmul.f32 %v6212, %v713
      %6225 = vrot.lane.b32.xlu0 %v6115, 64
      %v6226 = vpop.permute.xlu0 %6225
      %v6227 = vsel %vm1978, %v6226, 0
      %6229 = vmatprep.subr.mxu0 %v6218
      %6230 = vmatpush1.msra.mxu0 %v6217
      %6231 = vmatprep.subr.mxu0 %v6220
      %6232 = vmatpush1.msra.mxu0 %v6219
      %6233 = vmatprep.subr.mxu0 %v6222
      %6234 = vmatpush1.msra.mxu0 %v6221
      %6235 = vmatprep.subr.mxu0 %v6224
      %6236 = vmatpush1.msra.mxu0 %v6223
      %6237 = vmatprep.subr.mxu0 0.0
      %6238 = vmatpush1.msra.mxu0 0.0
      %6239 = vmatprep.subr.mxu0 0.0
      %6240 = vmatpush1.msra.mxu0 0.0
      %6241 = vmatprep.subr.mxu0 0.0
      %6242 = vmatpush1.msra.mxu0 0.0
      %6243 = vmatprep.subr.mxu0 0.0
      %6244 = vmatpush1.msra.mxu0 0.0
      %6245 = vmatprep.subr.mxu0 0.0
      %6246 = vmatpush1.msra.mxu0 0.0
      %6247 = vmatprep.subr.mxu0 0.0
      %6248 = vmatpush1.msra.mxu0 0.0
      %6249 = vmatprep.subr.mxu0 0.0
      %6250 = vmatpush1.msra.mxu0 0.0
      %6251 = vmatprep.subr.mxu0 0.0
      %6252 = vmatpush1.msra.mxu0 0.0
      %6253 = vmatprep.subr.mxu0 0.0
      %6254 = vmatpush1.msra.mxu0 0.0
      %6255 = vmatprep.subr.mxu0 0.0
      %6256 = vmatpush1.msra.mxu0 0.0
      %6257 = vmatprep.subr.mxu0 0.0
      %6258 = vmatpush1.msra.mxu0 0.0
      %6259 = vmatprep.subr.mxu0 0.0
      %6260 = vmatpush1.msra.mxu0 0.0
      %6261 = vmatprep.subr.mxu0 0.0
      %6262 = vmatpush1.msra.mxu0 0.0
      %6263 = vmatprep.subr.mxu0 0.0
      %6264 = vmatpush1.msra.mxu0 0.0
      %6265 = vmatprep.subr.mxu0 0.0
      %6266 = vmatpush1.msra.mxu0 0.0
      %6267 = vmatprep.subr.mxu0 0.0
      %6268 = vmatpush1.msra.mxu0 0.0
      %6269 = vmatprep.subr.mxu0 0.0
      %6270 = vmatpush1.msra.mxu0 0.0
      %6271 = vmatprep.subr.mxu0 0.0
      %6272 = vmatpush1.msra.mxu0 0.0
      %6273 = vmatprep.subr.mxu0 0.0
      %6274 = vmatpush1.msra.mxu0 0.0
      %6275 = vmatprep.subr.mxu0 0.0
      %6276 = vmatpush1.msra.mxu0 0.0
      %6277 = vmatprep.subr.mxu0 0.0
      %6278 = vmatpush1.msra.mxu0 0.0
      %6279 = vmatprep.subr.mxu0 0.0
      %6280 = vmatpush1.msra.mxu0 0.0
      %6281 = vmatprep.subr.mxu0 0.0
      %6282 = vmatpush1.msra.mxu0 0.0
      %6283 = vmatprep.subr.mxu0 0.0
      %6284 = vmatpush1.msra.mxu0 0.0
      %6285 = vmatprep.subr.mxu0 0.0
      %6286 = vmatpush1.msra.mxu0 0.0
      %6287 = vmatprep.subr.mxu0 0.0
      %6288 = vmatpush1.msra.mxu0 0.0
      %6289 = vmatprep.subr.mxu0 0.0
      %6290 = vmatpush1.msra.mxu0 0.0
      %6291 = vmatprep.subr.mxu0 0.0
      %6292 = vmatpush1.msra.mxu0 0.0
      %6293 = vmatprep.mubr.f32.mxu0 0.0
      %6294 = vmatmul.mubr.f32.gmra.mrb[0].mxu0 %v6227
      %v6295 = vpop.f32.mrb[0].mxu0
      %v6296 = vadd.f32 0.0, %v6295
      %v6297 = vpop.f32.mrb[0].mxu0
      %v6298 = vadd.f32 0.0, %v6297
      %6299 = vdwg.mxu0
      %v6300 = vadd.f32 %v6191, %v6296
      %v6301 = vadd.f32 %v6192, %v6298
      %6302 = vrot.lane.b32.xlu0 %v5527, 16
      %v6303 = vpop.permute.xlu0 %6302
      %6304 = vrot.lane.b32.xlu0 %v5529, 16
      %v6305 = vpop.permute.xlu0 %6304
      %6306 = vrot.lane.b32.xlu0 %v5531, 16
      %v6307 = vpop.permute.xlu0 %6306
      %6308 = vrot.lane.b32.xlu0 %v5533, 16
      %v6309 = vpop.permute.xlu0 %6308
      %6310 = vrot.lane.b32.xlu0 %v5528, 16
      %v6311 = vpop.permute.xlu0 %6310
      %6312 = vrot.lane.b32.xlu0 %v5530, 16
      %v6313 = vpop.permute.xlu0 %6312
      %6314 = vrot.lane.b32.xlu0 %v5532, 16
      %v6315 = vpop.permute.xlu0 %6314
      %6316 = vrot.lane.b32.xlu0 %v5534, 16
      %v6317 = vpop.permute.xlu0 %6316
      %v6318 = vsel %vm762, %v6303, %v6311
      %v6319 = vsel %vm762, %v6305, %v6313
      %v6320 = vsel %vm762, %v6307, %v6315
      %v6321 = vsel %vm762, %v6309, %v6317
      %v6322 = vsel %vm762, %v6311, %v6303
      %v6323 = vsel %vm762, %v6313, %v6305
      %v6324 = vsel %vm762, %v6315, %v6307
      %v6325 = vsel %vm762, %v6317, %v6309
      %v6326 = vmul.f32 %v6322, %v771
      %v6327 = vmul.f32 %v6318, %v775
      %v6328 = vmul.f32 %v6323, %v771
      %v6329 = vmul.f32 %v6319, %v775
      %v6330 = vmul.f32 %v6324, %v771
      %v6331 = vmul.f32 %v6320, %v775
      %v6332 = vmul.f32 %v6325, %v771
      %v6333 = vmul.f32 %v6321, %v775
      %6334 = vrot.lane.b32.xlu0 %v6115, 32
      %v6335 = vpop.permute.xlu0 %6334
      %v6336 = vsel %vm1978, %v6335, 0
      %6338 = vmatprep.subr.mxu0 %v6327
      %6339 = vmatpush1.msra.mxu0 %v6326
      %6340 = vmatprep.subr.mxu0 %v6329
      %6341 = vmatpush1.msra.mxu0 %v6328
      %6342 = vmatprep.subr.mxu0 %v6331
      %6343 = vmatpush1.msra.mxu0 %v6330
      %6344 = vmatprep.subr.mxu0 %v6333
      %6345 = vmatpush1.msra.mxu0 %v6332
      %6346 = vmatprep.subr.mxu0 0.0
      %6347 = vmatpush1.msra.mxu0 0.0
      %6348 = vmatprep.subr.mxu0 0.0
      %6349 = vmatpush1.msra.mxu0 0.0
      %6350 = vmatprep.subr.mxu0 0.0
      %6351 = vmatpush1.msra.mxu0 0.0
      %6352 = vmatprep.subr.mxu0 0.0
      %6353 = vmatpush1.msra.mxu0 0.0
      %6354 = vmatprep.subr.mxu0 0.0
      %6355 = vmatpush1.msra.mxu0 0.0
      %6356 = vmatprep.subr.mxu0 0.0
      %6357 = vmatpush1.msra.mxu0 0.0
      %6358 = vmatprep.subr.mxu0 0.0
      %6359 = vmatpush1.msra.mxu0 0.0
      %6360 = vmatprep.subr.mxu0 0.0
      %6361 = vmatpush1.msra.mxu0 0.0
      %6362 = vmatprep.subr.mxu0 0.0
      %6363 = vmatpush1.msra.mxu0 0.0
      %6364 = vmatprep.subr.mxu0 0.0
      %6365 = vmatpush1.msra.mxu0 0.0
      %6366 = vmatprep.subr.mxu0 0.0
      %6367 = vmatpush1.msra.mxu0 0.0
      %6368 = vmatprep.subr.mxu0 0.0
      %6369 = vmatpush1.msra.mxu0 0.0
      %6370 = vmatprep.subr.mxu0 0.0
      %6371 = vmatpush1.msra.mxu0 0.0
      %6372 = vmatprep.subr.mxu0 0.0
      %6373 = vmatpush1.msra.mxu0 0.0
      %6374 = vmatprep.subr.mxu0 0.0
      %6375 = vmatpush1.msra.mxu0 0.0
      %6376 = vmatprep.subr.mxu0 0.0
      %6377 = vmatpush1.msra.mxu0 0.0
      %6378 = vmatprep.subr.mxu0 0.0
      %6379 = vmatpush1.msra.mxu0 0.0
      %6380 = vmatprep.subr.mxu0 0.0
      %6381 = vmatpush1.msra.mxu0 0.0
      %6382 = vmatprep.subr.mxu0 0.0
      %6383 = vmatpush1.msra.mxu0 0.0
      %6384 = vmatprep.subr.mxu0 0.0
      %6385 = vmatpush1.msra.mxu0 0.0
      %6386 = vmatprep.subr.mxu0 0.0
      %6387 = vmatpush1.msra.mxu0 0.0
      %6388 = vmatprep.subr.mxu0 0.0
      %6389 = vmatpush1.msra.mxu0 0.0
      %6390 = vmatprep.subr.mxu0 0.0
      %6391 = vmatpush1.msra.mxu0 0.0
      %6392 = vmatprep.subr.mxu0 0.0
      %6393 = vmatpush1.msra.mxu0 0.0
      %6394 = vmatprep.subr.mxu0 0.0
      %6395 = vmatpush1.msra.mxu0 0.0
      %6396 = vmatprep.subr.mxu0 0.0
      %6397 = vmatpush1.msra.mxu0 0.0
      %6398 = vmatprep.subr.mxu0 0.0
      %6399 = vmatpush1.msra.mxu0 0.0
      %6400 = vmatprep.subr.mxu0 0.0
      %6401 = vmatpush1.msra.mxu0 0.0
      %6402 = vmatprep.mubr.f32.mxu0 0.0
      %6403 = vmatmul.mubr.f32.gmra.mrb[0].mxu0 %v6336
      %v6404 = vpop.f32.mrb[0].mxu0
      %v6405 = vadd.f32 0.0, %v6404
      %v6406 = vpop.f32.mrb[0].mxu0
      %v6407 = vadd.f32 0.0, %v6406
      %6408 = vdwg.mxu0
      %v6409 = vadd.f32 %v6300, %v6405
      %v6410 = vadd.f32 %v6301, %v6407
      %6411 = vrot.lane.b32.xlu0 %v5527, 15
      %v6412 = vpop.permute.xlu0 %6411
      %6413 = vrot.lane.b32.xlu0 %v5529, 15
      %v6414 = vpop.permute.xlu0 %6413
      %6415 = vrot.lane.b32.xlu0 %v5531, 15
      %v6416 = vpop.permute.xlu0 %6415
      %6417 = vrot.lane.b32.xlu0 %v5533, 15
      %v6418 = vpop.permute.xlu0 %6417
      %6419 = vrot.lane.b32.xlu0 %v5528, 15
      %v6420 = vpop.permute.xlu0 %6419
      %6421 = vrot.lane.b32.xlu0 %v5530, 15
      %v6422 = vpop.permute.xlu0 %6421
      %6423 = vrot.lane.b32.xlu0 %v5532, 15
      %v6424 = vpop.permute.xlu0 %6423
      %6425 = vrot.lane.b32.xlu0 %v5534, 15
      %v6426 = vpop.permute.xlu0 %6425
      %v6427 = vsel %vm824, %v6412, %v6420
      %v6428 = vsel %vm824, %v6414, %v6422
      %v6429 = vsel %vm824, %v6416, %v6424
      %v6430 = vsel %vm824, %v6418, %v6426
      %v6431 = vsel %vm824, %v6420, %v6412
      %v6432 = vsel %vm824, %v6422, %v6414
      %v6433 = vsel %vm824, %v6424, %v6416
      %v6434 = vsel %vm824, %v6426, %v6418
      %v6435 = vmul.f32 %v6431, %v833
      %v6436 = vmul.f32 %v6427, %v837
      %v6437 = vmul.f32 %v6432, %v833
      %v6438 = vmul.f32 %v6428, %v837
      %v6439 = vmul.f32 %v6433, %v833
      %v6440 = vmul.f32 %v6429, %v837
      %v6441 = vmul.f32 %v6434, %v833
      %v6442 = vmul.f32 %v6430, %v837
      %v6443 = vld [vmem:[%s6 + $0x2] sm:$0x1]
      %v6445 = vsel %vm1978, %v6443, 0
      %6447 = vmatprep.subr.mxu0 %v6436
      %6448 = vmatpush1.msra.mxu0 %v6435
      %6449 = vmatprep.subr.mxu0 %v6438
      %6450 = vmatpush1.msra.mxu0 %v6437
      %6451 = vmatprep.subr.mxu0 %v6440
      %6452 = vmatpush1.msra.mxu0 %v6439
      %6453 = vmatprep.subr.mxu0 %v6442
      %6454 = vmatpush1.msra.mxu0 %v6441
      %6455 = vmatprep.subr.mxu0 0.0
      %6456 = vmatpush1.msra.mxu0 0.0
      %6457 = vmatprep.subr.mxu0 0.0
      %6458 = vmatpush1.msra.mxu0 0.0
      %6459 = vmatprep.subr.mxu0 0.0
      %6460 = vmatpush1.msra.mxu0 0.0
      %6461 = vmatprep.subr.mxu0 0.0
      %6462 = vmatpush1.msra.mxu0 0.0
      %6463 = vmatprep.subr.mxu0 0.0
      %6464 = vmatpush1.msra.mxu0 0.0
      %6465 = vmatprep.subr.mxu0 0.0
      %6466 = vmatpush1.msra.mxu0 0.0
      %6467 = vmatprep.subr.mxu0 0.0
      %6468 = vmatpush1.msra.mxu0 0.0
      %6469 = vmatprep.subr.mxu0 0.0
      %6470 = vmatpush1.msra.mxu0 0.0
      %6471 = vmatprep.subr.mxu0 0.0
      %6472 = vmatpush1.msra.mxu0 0.0
      %6473 = vmatprep.subr.mxu0 0.0
      %6474 = vmatpush1.msra.mxu0 0.0
      %6475 = vmatprep.subr.mxu0 0.0
      %6476 = vmatpush1.msra.mxu0 0.0
      %6477 = vmatprep.subr.mxu0 0.0
      %6478 = vmatpush1.msra.mxu0 0.0
      %6479 = vmatprep.subr.mxu0 0.0
      %6480 = vmatpush1.msra.mxu0 0.0
      %6481 = vmatprep.subr.mxu0 0.0
      %6482 = vmatpush1.msra.mxu0 0.0
      %6483 = vmatprep.subr.mxu0 0.0
      %6484 = vmatpush1.msra.mxu0 0.0
      %6485 = vmatprep.subr.mxu0 0.0
      %6486 = vmatpush1.msra.mxu0 0.0
      %6487 = vmatprep.subr.mxu0 0.0
      %6488 = vmatpush1.msra.mxu0 0.0
      %6489 = vmatprep.subr.mxu0 0.0
      %6490 = vmatpush1.msra.mxu0 0.0
      %6491 = vmatprep.subr.mxu0 0.0
      %6492 = vmatpush1.msra.mxu0 0.0
      %6493 = vmatprep.subr.mxu0 0.0
      %6494 = vmatpush1.msra.mxu0 0.0
      %6495 = vmatprep.subr.mxu0 0.0
      %6496 = vmatpush1.msra.mxu0 0.0
      %6497 = vmatprep.subr.mxu0 0.0
      %6498 = vmatpush1.msra.mxu0 0.0
      %6499 = vmatprep.subr.mxu0 0.0
      %6500 = vmatpush1.msra.mxu0 0.0
      %6501 = vmatprep.subr.mxu0 0.0
      %6502 = vmatpush1.msra.mxu0 0.0
      %6503 = vmatprep.subr.mxu0 0.0
      %6504 = vmatpush1.msra.mxu0 0.0
      %6505 = vmatprep.subr.mxu0 0.0
      %6506 = vmatpush1.msra.mxu0 0.0
      %6507 = vmatprep.subr.mxu0 0.0
      %6508 = vmatpush1.msra.mxu0 0.0
      %6509 = vmatprep.subr.mxu0 0.0
      %6510 = vmatpush1.msra.mxu0 0.0
      %6511 = vmatprep.mubr.f32.mxu0 0.0
      %6512 = vmatmul.mubr.f32.gmra.mrb[0].mxu0 %v6445
      %v6513 = vpop.f32.mrb[0].mxu0
      %v6514 = vadd.f32 0.0, %v6513
      %v6515 = vpop.f32.mrb[0].mxu0
      %v6516 = vadd.f32 0.0, %v6515
      %6517 = vdwg.mxu0
      %v6518 = vadd.f32 %v6409, %v6514
      %v6519 = vadd.f32 %v6410, %v6516
      %6520 = vrot.lane.b32.xlu0 %v5527, 14
      %v6521 = vpop.permute.xlu0 %6520
      %6522 = vrot.lane.b32.xlu0 %v5529, 14
      %v6523 = vpop.permute.xlu0 %6522
      %6524 = vrot.lane.b32.xlu0 %v5531, 14
      %v6525 = vpop.permute.xlu0 %6524
      %6526 = vrot.lane.b32.xlu0 %v5533, 14
      %v6527 = vpop.permute.xlu0 %6526
      %6528 = vrot.lane.b32.xlu0 %v5528, 14
      %v6529 = vpop.permute.xlu0 %6528
      %6530 = vrot.lane.b32.xlu0 %v5530, 14
      %v6531 = vpop.permute.xlu0 %6530
      %6532 = vrot.lane.b32.xlu0 %v5532, 14
      %v6533 = vpop.permute.xlu0 %6532
      %6534 = vrot.lane.b32.xlu0 %v5534, 14
      %v6535 = vpop.permute.xlu0 %6534
      %v6536 = vsel %vm886, %v6521, %v6529
      %v6537 = vsel %vm886, %v6523, %v6531
      %v6538 = vsel %vm886, %v6525, %v6533
      %v6539 = vsel %vm886, %v6527, %v6535
      %v6540 = vsel %vm886, %v6529, %v6521
      %v6541 = vsel %vm886, %v6531, %v6523
      %v6542 = vsel %vm886, %v6533, %v6525
      %v6543 = vsel %vm886, %v6535, %v6527
      %v6544 = vmul.f32 %v6540, %v895
      %v6545 = vmul.f32 %v6536, %v899
      %v6546 = vmul.f32 %v6541, %v895
      %v6547 = vmul.f32 %v6537, %v899
      %v6548 = vmul.f32 %v6542, %v895
      %v6549 = vmul.f32 %v6538, %v899
      %v6550 = vmul.f32 %v6543, %v895
      %v6551 = vmul.f32 %v6539, %v899
      %v6552 = vlaneseq
      %v6553 = vshrl.u32 %v6552, 7
      %v6554 = vsub.s32 0, %v6553
      %v6555 = vrot.slane %v6443, %v6554
      %6556 = vrot.lane.b32.xlu0 %v6555, 96
      %v6557 = vpop.permute.xlu0 %6556
      %v6558 = vsel %vm1978, %v6557, 0
      %6560 = vmatprep.subr.mxu0 %v6545
      %6561 = vmatpush1.msra.mxu0 %v6544
      %6562 = vmatprep.subr.mxu0 %v6547
      %6563 = vmatpush1.msra.mxu0 %v6546
      %6564 = vmatprep.subr.mxu0 %v6549
      %6565 = vmatpush1.msra.mxu0 %v6548
      %6566 = vmatprep.subr.mxu0 %v6551
      %6567 = vmatpush1.msra.mxu0 %v6550
      %6568 = vmatprep.subr.mxu0 0.0
      %6569 = vmatpush1.msra.mxu0 0.0
      %6570 = vmatprep.subr.mxu0 0.0
      %6571 = vmatpush1.msra.mxu0 0.0
      %6572 = vmatprep.subr.mxu0 0.0
      %6573 = vmatpush1.msra.mxu0 0.0
      %6574 = vmatprep.subr.mxu0 0.0
      %6575 = vmatpush1.msra.mxu0 0.0
      %6576 = vmatprep.subr.mxu0 0.0
      %6577 = vmatpush1.msra.mxu0 0.0
      %6578 = vmatprep.subr.mxu0 0.0
      %6579 = vmatpush1.msra.mxu0 0.0
      %6580 = vmatprep.subr.mxu0 0.0
      %6581 = vmatpush1.msra.mxu0 0.0
      %6582 = vmatprep.subr.mxu0 0.0
      %6583 = vmatpush1.msra.mxu0 0.0
      %6584 = vmatprep.subr.mxu0 0.0
      %6585 = vmatpush1.msra.mxu0 0.0
      %6586 = vmatprep.subr.mxu0 0.0
      %6587 = vmatpush1.msra.mxu0 0.0
      %6588 = vmatprep.subr.mxu0 0.0
      %6589 = vmatpush1.msra.mxu0 0.0
      %6590 = vmatprep.subr.mxu0 0.0
      %6591 = vmatpush1.msra.mxu0 0.0
      %6592 = vmatprep.subr.mxu0 0.0
      %6593 = vmatpush1.msra.mxu0 0.0
      %6594 = vmatprep.subr.mxu0 0.0
      %6595 = vmatpush1.msra.mxu0 0.0
      %6596 = vmatprep.subr.mxu0 0.0
      %6597 = vmatpush1.msra.mxu0 0.0
      %6598 = vmatprep.subr.mxu0 0.0
      %6599 = vmatpush1.msra.mxu0 0.0
      %6600 = vmatprep.subr.mxu0 0.0
      %6601 = vmatpush1.msra.mxu0 0.0
      %6602 = vmatprep.subr.mxu0 0.0
      %6603 = vmatpush1.msra.mxu0 0.0
      %6604 = vmatprep.subr.mxu0 0.0
      %6605 = vmatpush1.msra.mxu0 0.0
      %6606 = vmatprep.subr.mxu0 0.0
      %6607 = vmatpush1.msra.mxu0 0.0
      %6608 = vmatprep.subr.mxu0 0.0
      %6609 = vmatpush1.msra.mxu0 0.0
      %6610 = vmatprep.subr.mxu0 0.0
      %6611 = vmatpush1.msra.mxu0 0.0
      %6612 = vmatprep.subr.mxu0 0.0
      %6613 = vmatpush1.msra.mxu0 0.0
      %6614 = vmatprep.subr.mxu0 0.0
      %6615 = vmatpush1.msra.mxu0 0.0
      %6616 = vmatprep.subr.mxu0 0.0
      %6617 = vmatpush1.msra.mxu0 0.0
      %6618 = vmatprep.subr.mxu0 0.0
      %6619 = vmatpush1.msra.mxu0 0.0
      %6620 = vmatprep.subr.mxu0 0.0
      %6621 = vmatpush1.msra.mxu0 0.0
      %6622 = vmatprep.subr.mxu0 0.0
      %6623 = vmatpush1.msra.mxu0 0.0
      %6624 = vmatprep.mubr.f32.mxu0 0.0
      %6625 = vmatmul.mubr.f32.gmra.mrb[0].mxu0 %v6558
      %v6626 = vpop.f32.mrb[0].mxu0
      %v6627 = vadd.f32 0.0, %v6626
      %v6628 = vpop.f32.mrb[0].mxu0
      %v6629 = vadd.f32 0.0, %v6628
      %6630 = vdwg.mxu0
      %v6631 = vadd.f32 %v6518, %v6627
      %v6632 = vadd.f32 %v6519, %v6629
      %6633 = vrot.lane.b32.xlu0 %v5527, 2
      %v6634 = vpop.permute.xlu0 %6633
      %6635 = vrot.lane.b32.xlu0 %v5529, 2
      %v6636 = vpop.permute.xlu0 %6635
      %6637 = vrot.lane.b32.xlu0 %v5531, 2
      %v6638 = vpop.permute.xlu0 %6637
      %6639 = vrot.lane.b32.xlu0 %v5533, 2
      %v6640 = vpop.permute.xlu0 %6639
      %6641 = vrot.lane.b32.xlu0 %v5528, 2
      %v6642 = vpop.permute.xlu0 %6641
      %6643 = vrot.lane.b32.xlu0 %v5530, 2
      %v6644 = vpop.permute.xlu0 %6643
      %6645 = vrot.lane.b32.xlu0 %v5532, 2
      %v6646 = vpop.permute.xlu0 %6645
      %6647 = vrot.lane.b32.xlu0 %v5534, 2
      %v6648 = vpop.permute.xlu0 %6647
      %v6649 = vsel %vm948, %v6634, %v6642
      %v6650 = vsel %vm948, %v6636, %v6644
      %v6651 = vsel %vm948, %v6638, %v6646
      %v6652 = vsel %vm948, %v6640, %v6648
      %v6653 = vsel %vm948, %v6642, %v6634
      %v6654 = vsel %vm948, %v6644, %v6636
      %v6655 = vsel %vm948, %v6646, %v6638
      %v6656 = vsel %vm948, %v6648, %v6640
      %v6657 = vmul.f32 %v6653, %v957
      %v6658 = vmul.f32 %v6649, %v961
      %v6659 = vmul.f32 %v6654, %v957
      %v6660 = vmul.f32 %v6650, %v961
      %v6661 = vmul.f32 %v6655, %v957
      %v6662 = vmul.f32 %v6651, %v961
      %v6663 = vmul.f32 %v6656, %v957
      %v6664 = vmul.f32 %v6652, %v961
      %6665 = vrot.lane.b32.xlu0 %v6555, 64
      %v6666 = vpop.permute.xlu0 %6665
      %v6667 = vsel %vm1978, %v6666, 0
      %6669 = vmatprep.subr.mxu0 %v6658
      %6670 = vmatpush1.msra.mxu0 %v6657
      %6671 = vmatprep.subr.mxu0 %v6660
      %6672 = vmatpush1.msra.mxu0 %v6659
      %6673 = vmatprep.subr.mxu0 %v6662
      %6674 = vmatpush1.msra.mxu0 %v6661
      %6675 = vmatprep.subr.mxu0 %v6664
      %6676 = vmatpush1.msra.mxu0 %v6663
      %6677 = vmatprep.subr.mxu0 0.0
      %6678 = vmatpush1.msra.mxu0 0.0
      %6679 = vmatprep.subr.mxu0 0.0
      %6680 = vmatpush1.msra.mxu0 0.0
      %6681 = vmatprep.subr.mxu0 0.0
      %6682 = vmatpush1.msra.mxu0 0.0
      %6683 = vmatprep.subr.mxu0 0.0
      %6684 = vmatpush1.msra.mxu0 0.0
      %6685 = vmatprep.subr.mxu0 0.0
      %6686 = vmatpush1.msra.mxu0 0.0
      %6687 = vmatprep.subr.mxu0 0.0
      %6688 = vmatpush1.msra.mxu0 0.0
      %6689 = vmatprep.subr.mxu0 0.0
      %6690 = vmatpush1.msra.mxu0 0.0
      %6691 = vmatprep.subr.mxu0 0.0
      %6692 = vmatpush1.msra.mxu0 0.0
      %6693 = vmatprep.subr.mxu0 0.0
      %6694 = vmatpush1.msra.mxu0 0.0
      %6695 = vmatprep.subr.mxu0 0.0
      %6696 = vmatpush1.msra.mxu0 0.0
      %6697 = vmatprep.subr.mxu0 0.0
      %6698 = vmatpush1.msra.mxu0 0.0
      %6699 = vmatprep.subr.mxu0 0.0
      %6700 = vmatpush1.msra.mxu0 0.0
      %6701 = vmatprep.subr.mxu0 0.0
      %6702 = vmatpush1.msra.mxu0 0.0
      %6703 = vmatprep.subr.mxu0 0.0
      %6704 = vmatpush1.msra.mxu0 0.0
      %6705 = vmatprep.subr.mxu0 0.0
      %6706 = vmatpush1.msra.mxu0 0.0
      %6707 = vmatprep.subr.mxu0 0.0
      %6708 = vmatpush1.msra.mxu0 0.0
      %6709 = vmatprep.subr.mxu0 0.0
      %6710 = vmatpush1.msra.mxu0 0.0
      %6711 = vmatprep.subr.mxu0 0.0
      %6712 = vmatpush1.msra.mxu0 0.0
      %6713 = vmatprep.subr.mxu0 0.0
      %6714 = vmatpush1.msra.mxu0 0.0
      %6715 = vmatprep.subr.mxu0 0.0
      %6716 = vmatpush1.msra.mxu0 0.0
      %6717 = vmatprep.subr.mxu0 0.0
      %6718 = vmatpush1.msra.mxu0 0.0
      %6719 = vmatprep.subr.mxu0 0.0
      %6720 = vmatpush1.msra.mxu0 0.0
      %6721 = vmatprep.subr.mxu0 0.0
      %6722 = vmatpush1.msra.mxu0 0.0
      %6723 = vmatprep.subr.mxu0 0.0
      %6724 = vmatpush1.msra.mxu0 0.0
      %6725 = vmatprep.subr.mxu0 0.0
      %6726 = vmatpush1.msra.mxu0 0.0
      %6727 = vmatprep.subr.mxu0 0.0
      %6728 = vmatpush1.msra.mxu0 0.0
      %6729 = vmatprep.subr.mxu0 0.0
      %6730 = vmatpush1.msra.mxu0 0.0
      %6731 = vmatprep.subr.mxu0 0.0
      %6732 = vmatpush1.msra.mxu0 0.0
      %6733 = vmatprep.mubr.f32.mxu0 0.0
      %6734 = vmatmul.mubr.f32.gmra.mrb[0].mxu0 %v6667
      %v6735 = vpop.f32.mrb[0].mxu0
      %v6736 = vadd.f32 0.0, %v6735
      %v6737 = vpop.f32.mrb[0].mxu0
      %v6738 = vadd.f32 0.0, %v6737
      %6739 = vdwg.mxu0
      %v6740 = vadd.f32 %v6631, %v6736
      %v6741 = vadd.f32 %v6632, %v6738
      %6742 = vrot.lane.b32.xlu0 %v5527, 1
      %v6743 = vpop.permute.xlu0 %6742
      %6744 = vrot.lane.b32.xlu0 %v5529, 1
      %v6745 = vpop.permute.xlu0 %6744
      %6746 = vrot.lane.b32.xlu0 %v5531, 1
      %v6747 = vpop.permute.xlu0 %6746
      %6748 = vrot.lane.b32.xlu0 %v5533, 1
      %v6749 = vpop.permute.xlu0 %6748
      %6750 = vrot.lane.b32.xlu0 %v5528, 1
      %v6751 = vpop.permute.xlu0 %6750
      %6752 = vrot.lane.b32.xlu0 %v5530, 1
      %v6753 = vpop.permute.xlu0 %6752
      %6754 = vrot.lane.b32.xlu0 %v5532, 1
      %v6755 = vpop.permute.xlu0 %6754
      %6756 = vrot.lane.b32.xlu0 %v5534, 1
      %v6757 = vpop.permute.xlu0 %6756
      %v6758 = vsel %vm1010, %v6743, %v6751
      %v6759 = vsel %vm1010, %v6745, %v6753
      %v6760 = vsel %vm1010, %v6747, %v6755
      %v6761 = vsel %vm1010, %v6749, %v6757
      %v6762 = vsel %vm1010, %v6751, %v6743
      %v6763 = vsel %vm1010, %v6753, %v6745
      %v6764 = vsel %vm1010, %v6755, %v6747
      %v6765 = vsel %vm1010, %v6757, %v6749
      %v6766 = vmul.f32 %v6762, %v1019
      %v6767 = vmul.f32 %v6758, %v1023
      %v6768 = vmul.f32 %v6763, %v1019
      %v6769 = vmul.f32 %v6759, %v1023
      %v6770 = vmul.f32 %v6764, %v1019
      %v6771 = vmul.f32 %v6760, %v1023
      %v6772 = vmul.f32 %v6765, %v1019
      %v6773 = vmul.f32 %v6761, %v1023
      %6774 = vrot.lane.b32.xlu0 %v6555, 32
      %v6775 = vpop.permute.xlu0 %6774
      %v6776 = vsel %vm1978, %v6775, 0
      %6778 = vmatprep.subr.mxu0 %v6767
      %6779 = vmatpush1.msra.mxu0 %v6766
      %6780 = vmatprep.subr.mxu0 %v6769
      %6781 = vmatpush1.msra.mxu0 %v6768
      %6782 = vmatprep.subr.mxu0 %v6771
      %6783 = vmatpush1.msra.mxu0 %v6770
      %6784 = vmatprep.subr.mxu0 %v6773
      %6785 = vmatpush1.msra.mxu0 %v6772
      %6786 = vmatprep.subr.mxu0 0.0
      %6787 = vmatpush1.msra.mxu0 0.0
      %6788 = vmatprep.subr.mxu0 0.0
      %6789 = vmatpush1.msra.mxu0 0.0
      %6790 = vmatprep.subr.mxu0 0.0
      %6791 = vmatpush1.msra.mxu0 0.0
      %6792 = vmatprep.subr.mxu0 0.0
      %6793 = vmatpush1.msra.mxu0 0.0
      %6794 = vmatprep.subr.mxu0 0.0
      %6795 = vmatpush1.msra.mxu0 0.0
      %6796 = vmatprep.subr.mxu0 0.0
      %6797 = vmatpush1.msra.mxu0 0.0
      %6798 = vmatprep.subr.mxu0 0.0
      %6799 = vmatpush1.msra.mxu0 0.0
      %6800 = vmatprep.subr.mxu0 0.0
      %6801 = vmatpush1.msra.mxu0 0.0
      %6802 = vmatprep.subr.mxu0 0.0
      %6803 = vmatpush1.msra.mxu0 0.0
      %6804 = vmatprep.subr.mxu0 0.0
      %6805 = vmatpush1.msra.mxu0 0.0
      %6806 = vmatprep.subr.mxu0 0.0
      %6807 = vmatpush1.msra.mxu0 0.0
      %6808 = vmatprep.subr.mxu0 0.0
      %6809 = vmatpush1.msra.mxu0 0.0
      %6810 = vmatprep.subr.mxu0 0.0
      %6811 = vmatpush1.msra.mxu0 0.0
      %6812 = vmatprep.subr.mxu0 0.0
      %6813 = vmatpush1.msra.mxu0 0.0
      %6814 = vmatprep.subr.mxu0 0.0
      %6815 = vmatpush1.msra.mxu0 0.0
      %6816 = vmatprep.subr.mxu0 0.0
      %6817 = vmatpush1.msra.mxu0 0.0
      %6818 = vmatprep.subr.mxu0 0.0
      %6819 = vmatpush1.msra.mxu0 0.0
      %6820 = vmatprep.subr.mxu0 0.0
      %6821 = vmatpush1.msra.mxu0 0.0
      %6822 = vmatprep.subr.mxu0 0.0
      %6823 = vmatpush1.msra.mxu0 0.0
      %6824 = vmatprep.subr.mxu0 0.0
      %6825 = vmatpush1.msra.mxu0 0.0
      %6826 = vmatprep.subr.mxu0 0.0
      %6827 = vmatpush1.msra.mxu0 0.0
      %6828 = vmatprep.subr.mxu0 0.0
      %6829 = vmatpush1.msra.mxu0 0.0
      %6830 = vmatprep.subr.mxu0 0.0
      %6831 = vmatpush1.msra.mxu0 0.0
      %6832 = vmatprep.subr.mxu0 0.0
      %6833 = vmatpush1.msra.mxu0 0.0
      %6834 = vmatprep.subr.mxu0 0.0
      %6835 = vmatpush1.msra.mxu0 0.0
      %6836 = vmatprep.subr.mxu0 0.0
      %6837 = vmatpush1.msra.mxu0 0.0
      %6838 = vmatprep.subr.mxu0 0.0
      %6839 = vmatpush1.msra.mxu0 0.0
      %6840 = vmatprep.subr.mxu0 0.0
      %6841 = vmatpush1.msra.mxu0 0.0
      %6842 = vmatprep.mubr.f32.mxu0 0.0
      %6843 = vmatmul.mubr.f32.gmra.mrb[0].mxu0 %v6776
      %v6844 = vpop.f32.mrb[0].mxu0
      %v6845 = vadd.f32 0.0, %v6844
      %v6846 = vpop.f32.mrb[0].mxu0
      %v6847 = vadd.f32 0.0, %v6846
      %6848 = vdwg.mxu0
      %v6849 = vadd.f32 %v6740, %v6845
      %v6850 = vadd.f32 %v6741, %v6847
      %v6851 = vmul.f32 %v5527, %v3627
      %v6852 = vmul.f32 %v5528, %v3631
      %v6853 = vmul.f32 %v5529, %v3627
      %v6854 = vmul.f32 %v5530, %v3631
      %v6855 = vmul.f32 %v5531, %v3627
      %v6856 = vmul.f32 %v5532, %v3631
      %v6857 = vmul.f32 %v5533, %v3627
      %v6858 = vmul.f32 %v5534, %v3631
      %v6859 = vld [vmem:[%s6 + $0x3] sm:$0x1]
      %v6861 = vsel %vm1978, %v6859, 0
      %6863 = vmatprep.subr.mxu0 %v6852
      %6864 = vmatpush1.msra.mxu0 %v6851
      %6865 = vmatprep.subr.mxu0 %v6854
      %6866 = vmatpush1.msra.mxu0 %v6853
      %6867 = vmatprep.subr.mxu0 %v6856
      %6868 = vmatpush1.msra.mxu0 %v6855
      %6869 = vmatprep.subr.mxu0 %v6858
      %6870 = vmatpush1.msra.mxu0 %v6857
      %6871 = vmatprep.subr.mxu0 0.0
      %6872 = vmatpush1.msra.mxu0 0.0
      %6873 = vmatprep.subr.mxu0 0.0
      %6874 = vmatpush1.msra.mxu0 0.0
      %6875 = vmatprep.subr.mxu0 0.0
      %6876 = vmatpush1.msra.mxu0 0.0
      %6877 = vmatprep.subr.mxu0 0.0
      %6878 = vmatpush1.msra.mxu0 0.0
      %6879 = vmatprep.subr.mxu0 0.0
      %6880 = vmatpush1.msra.mxu0 0.0
      %6881 = vmatprep.subr.mxu0 0.0
      %6882 = vmatpush1.msra.mxu0 0.0
      %6883 = vmatprep.subr.mxu0 0.0
      %6884 = vmatpush1.msra.mxu0 0.0
      %6885 = vmatprep.subr.mxu0 0.0
      %6886 = vmatpush1.msra.mxu0 0.0
      %6887 = vmatprep.subr.mxu0 0.0
      %6888 = vmatpush1.msra.mxu0 0.0
      %6889 = vmatprep.subr.mxu0 0.0
      %6890 = vmatpush1.msra.mxu0 0.0
      %6891 = vmatprep.subr.mxu0 0.0
      %6892 = vmatpush1.msra.mxu0 0.0
      %6893 = vmatprep.subr.mxu0 0.0
      %6894 = vmatpush1.msra.mxu0 0.0
      %6895 = vmatprep.subr.mxu0 0.0
      %6896 = vmatpush1.msra.mxu0 0.0
      %6897 = vmatprep.subr.mxu0 0.0
      %6898 = vmatpush1.msra.mxu0 0.0
      %6899 = vmatprep.subr.mxu0 0.0
      %6900 = vmatpush1.msra.mxu0 0.0
      %6901 = vmatprep.subr.mxu0 0.0
      %6902 = vmatpush1.msra.mxu0 0.0
      %6903 = vmatprep.subr.mxu0 0.0
      %6904 = vmatpush1.msra.mxu0 0.0
      %6905 = vmatprep.subr.mxu0 0.0
      %6906 = vmatpush1.msra.mxu0 0.0
      %6907 = vmatprep.subr.mxu0 0.0
      %6908 = vmatpush1.msra.mxu0 0.0
      %6909 = vmatprep.subr.mxu0 0.0
      %6910 = vmatpush1.msra.mxu0 0.0
      %6911 = vmatprep.subr.mxu0 0.0
      %6912 = vmatpush1.msra.mxu0 0.0
      %6913 = vmatprep.subr.mxu0 0.0
      %6914 = vmatpush1.msra.mxu0 0.0
      %6915 = vmatprep.subr.mxu0 0.0
      %6916 = vmatpush1.msra.mxu0 0.0
      %6917 = vmatprep.subr.mxu0 0.0
      %6918 = vmatpush1.msra.mxu0 0.0
      %6919 = vmatprep.subr.mxu0 0.0
      %6920 = vmatpush1.msra.mxu0 0.0
      %6921 = vmatprep.subr.mxu0 0.0
      %6922 = vmatpush1.msra.mxu0 0.0
      %6923 = vmatprep.subr.mxu0 0.0
      %6924 = vmatpush1.msra.mxu0 0.0
      %6925 = vmatprep.subr.mxu0 0.0
      %6926 = vmatpush1.msra.mxu0 0.0
      %6927 = vmatprep.mubr.f32.mxu0 0.0
      %6928 = vmatmul.mubr.f32.gmra.mrb[0].mxu0 %v6861
      %v6929 = vpop.f32.mrb[0].mxu0
      %v6930 = vadd.f32 0.0, %v6929
      %v6931 = vpop.f32.mrb[0].mxu0
      %v6932 = vadd.f32 0.0, %v6931
      %6933 = vdwg.mxu0
      %v6934 = vadd.f32 %v6849, %v6930
      %v6935 = vadd.f32 %v6850, %v6932
      %6936 = vrot.lane.b32.xlu0 %v5527, 127
      %v6937 = vpop.permute.xlu0 %6936
      %6938 = vrot.lane.b32.xlu0 %v5529, 127
      %v6939 = vpop.permute.xlu0 %6938
      %6940 = vrot.lane.b32.xlu0 %v5531, 127
      %v6941 = vpop.permute.xlu0 %6940
      %6942 = vrot.lane.b32.xlu0 %v5533, 127
      %v6943 = vpop.permute.xlu0 %6942
      %6944 = vrot.lane.b32.xlu0 %v5528, 127
      %v6945 = vpop.permute.xlu0 %6944
      %6946 = vrot.lane.b32.xlu0 %v5530, 127
      %v6947 = vpop.permute.xlu0 %6946
      %6948 = vrot.lane.b32.xlu0 %v5532, 127
      %v6949 = vpop.permute.xlu0 %6948
      %6950 = vrot.lane.b32.xlu0 %v5534, 127
      %v6951 = vpop.permute.xlu0 %6950
      %v6952 = vsel %vm1118, %v6937, %v6945
      %v6953 = vsel %vm1118, %v6939, %v6947
      %v6954 = vsel %vm1118, %v6941, %v6949
      %v6955 = vsel %vm1118, %v6943, %v6951
      %v6956 = vsel %vm1118, %v6945, %v6937
      %v6957 = vsel %vm1118, %v6947, %v6939
      %v6958 = vsel %vm1118, %v6949, %v6941
      %v6959 = vsel %vm1118, %v6951, %v6943
      %v6960 = vmul.f32 %v6952, %v1127
      %v6961 = vmul.f32 %v6956, %v1131
      %v6962 = vmul.f32 %v6953, %v1127
      %v6963 = vmul.f32 %v6957, %v1131
      %v6964 = vmul.f32 %v6954, %v1127
      %v6965 = vmul.f32 %v6958, %v1131
      %v6966 = vmul.f32 %v6955, %v1127
      %v6967 = vmul.f32 %v6959, %v1131
      %v6968 = vlaneseq
      %v6969 = vshrl.u32 %v6968, 7
      %v6970 = vsub.s32 0, %v6969
      %v6971 = vrot.slane %v6859, %v6970
      %6972 = vrot.lane.b32.xlu0 %v6971, 96
      %v6973 = vpop.permute.xlu0 %6972
      %v6974 = vsel %vm1978, %v6973, 0
      %6976 = vmatprep.subr.mxu0 %v6961
      %6977 = vmatpush1.msra.mxu0 %v6960
      %6978 = vmatprep.subr.mxu0 %v6963
      %6979 = vmatpush1.msra.mxu0 %v6962
      %6980 = vmatprep.subr.mxu0 %v6965
      %6981 = vmatpush1.msra.mxu0 %v6964
      %6982 = vmatprep.subr.mxu0 %v6967
      %6983 = vmatpush1.msra.mxu0 %v6966
      %6984 = vmatprep.subr.mxu0 0.0
      %6985 = vmatpush1.msra.mxu0 0.0
      %6986 = vmatprep.subr.mxu0 0.0
      %6987 = vmatpush1.msra.mxu0 0.0
      %6988 = vmatprep.subr.mxu0 0.0
      %6989 = vmatpush1.msra.mxu0 0.0
      %6990 = vmatprep.subr.mxu0 0.0
      %6991 = vmatpush1.msra.mxu0 0.0
      %6992 = vmatprep.subr.mxu0 0.0
      %6993 = vmatpush1.msra.mxu0 0.0
      %6994 = vmatprep.subr.mxu0 0.0
      %6995 = vmatpush1.msra.mxu0 0.0
      %6996 = vmatprep.subr.mxu0 0.0
      %6997 = vmatpush1.msra.mxu0 0.0
      %6998 = vmatprep.subr.mxu0 0.0
      %6999 = vmatpush1.msra.mxu0 0.0
      %7000 = vmatprep.subr.mxu0 0.0
      %7001 = vmatpush1.msra.mxu0 0.0
      %7002 = vmatprep.subr.mxu0 0.0
      %7003 = vmatpush1.msra.mxu0 0.0
      %7004 = vmatprep.subr.mxu0 0.0
      %7005 = vmatpush1.msra.mxu0 0.0
      %7006 = vmatprep.subr.mxu0 0.0
      %7007 = vmatpush1.msra.mxu0 0.0
      %7008 = vmatprep.subr.mxu0 0.0
      %7009 = vmatpush1.msra.mxu0 0.0
      %7010 = vmatprep.subr.mxu0 0.0
      %7011 = vmatpush1.msra.mxu0 0.0
      %7012 = vmatprep.subr.mxu0 0.0
      %7013 = vmatpush1.msra.mxu0 0.0
      %7014 = vmatprep.subr.mxu0 0.0
      %7015 = vmatpush1.msra.mxu0 0.0
      %7016 = vmatprep.subr.mxu0 0.0
      %7017 = vmatpush1.msra.mxu0 0.0
      %7018 = vmatprep.subr.mxu0 0.0
      %7019 = vmatpush1.msra.mxu0 0.0
      %7020 = vmatprep.subr.mxu0 0.0
      %7021 = vmatpush1.msra.mxu0 0.0
      %7022 = vmatprep.subr.mxu0 0.0
      %7023 = vmatpush1.msra.mxu0 0.0
      %7024 = vmatprep.subr.mxu0 0.0
      %7025 = vmatpush1.msra.mxu0 0.0
      %7026 = vmatprep.subr.mxu0 0.0
      %7027 = vmatpush1.msra.mxu0 0.0
      %7028 = vmatprep.subr.mxu0 0.0
      %7029 = vmatpush1.msra.mxu0 0.0
      %7030 = vmatprep.subr.mxu0 0.0
      %7031 = vmatpush1.msra.mxu0 0.0
      %7032 = vmatprep.subr.mxu0 0.0
      %7033 = vmatpush1.msra.mxu0 0.0
      %7034 = vmatprep.subr.mxu0 0.0
      %7035 = vmatpush1.msra.mxu0 0.0
      %7036 = vmatprep.subr.mxu0 0.0
      %7037 = vmatpush1.msra.mxu0 0.0
      %7038 = vmatprep.subr.mxu0 0.0
      %7039 = vmatpush1.msra.mxu0 0.0
      %7040 = vmatprep.mubr.f32.mxu0 0.0
      %7041 = vmatmul.mubr.f32.gmra.mrb[0].mxu0 %v6974
      %v7042 = vpop.f32.mrb[0].mxu0
      %v7043 = vadd.f32 0.0, %v7042
      %v7044 = vpop.f32.mrb[0].mxu0
      %v7045 = vadd.f32 0.0, %v7044
      %7046 = vdwg.mxu0
      %v7047 = vadd.f32 %v6934, %v7043
      %v7048 = vadd.f32 %v6935, %v7045
      %7049 = vrot.lane.b32.xlu0 %v5527, 126
      %v7050 = vpop.permute.xlu0 %7049
      %7051 = vrot.lane.b32.xlu0 %v5529, 126
      %v7052 = vpop.permute.xlu0 %7051
      %7053 = vrot.lane.b32.xlu0 %v5531, 126
      %v7054 = vpop.permute.xlu0 %7053
      %7055 = vrot.lane.b32.xlu0 %v5533, 126
      %v7056 = vpop.permute.xlu0 %7055
      %7057 = vrot.lane.b32.xlu0 %v5528, 126
      %v7058 = vpop.permute.xlu0 %7057
      %7059 = vrot.lane.b32.xlu0 %v5530, 126
      %v7060 = vpop.permute.xlu0 %7059
      %7061 = vrot.lane.b32.xlu0 %v5532, 126
      %v7062 = vpop.permute.xlu0 %7061
      %7063 = vrot.lane.b32.xlu0 %v5534, 126
      %v7064 = vpop.permute.xlu0 %7063
      %v7065 = vsel %vm1180, %v7050, %v7058
      %v7066 = vsel %vm1180, %v7052, %v7060
      %v7067 = vsel %vm1180, %v7054, %v7062
      %v7068 = vsel %vm1180, %v7056, %v7064
      %v7069 = vsel %vm1180, %v7058, %v7050
      %v7070 = vsel %vm1180, %v7060, %v7052
      %v7071 = vsel %vm1180, %v7062, %v7054
      %v7072 = vsel %vm1180, %v7064, %v7056
      %v7073 = vmul.f32 %v7065, %v1189
      %v7074 = vmul.f32 %v7069, %v1193
      %v7075 = vmul.f32 %v7066, %v1189
      %v7076 = vmul.f32 %v7070, %v1193
      %v7077 = vmul.f32 %v7067, %v1189
      %v7078 = vmul.f32 %v7071, %v1193
      %v7079 = vmul.f32 %v7068, %v1189
      %v7080 = vmul.f32 %v7072, %v1193
      %7081 = vrot.lane.b32.xlu0 %v6971, 64
      %v7082 = vpop.permute.xlu0 %7081
      %v7083 = vsel %vm1978, %v7082, 0
      %7085 = vmatprep.subr.mxu0 %v7074
      %7086 = vmatpush1.msra.mxu0 %v7073
      %7087 = vmatprep.subr.mxu0 %v7076
      %7088 = vmatpush1.msra.mxu0 %v7075
      %7089 = vmatprep.subr.mxu0 %v7078
      %7090 = vmatpush1.msra.mxu0 %v7077
      %7091 = vmatprep.subr.mxu0 %v7080
      %7092 = vmatpush1.msra.mxu0 %v7079
      %7093 = vmatprep.subr.mxu0 0.0
      %7094 = vmatpush1.msra.mxu0 0.0
      %7095 = vmatprep.subr.mxu0 0.0
      %7096 = vmatpush1.msra.mxu0 0.0
      %7097 = vmatprep.subr.mxu0 0.0
      %7098 = vmatpush1.msra.mxu0 0.0
      %7099 = vmatprep.subr.mxu0 0.0
      %7100 = vmatpush1.msra.mxu0 0.0
      %7101 = vmatprep.subr.mxu0 0.0
      %7102 = vmatpush1.msra.mxu0 0.0
      %7103 = vmatprep.subr.mxu0 0.0
      %7104 = vmatpush1.msra.mxu0 0.0
      %7105 = vmatprep.subr.mxu0 0.0
      %7106 = vmatpush1.msra.mxu0 0.0
      %7107 = vmatprep.subr.mxu0 0.0
      %7108 = vmatpush1.msra.mxu0 0.0
      %7109 = vmatprep.subr.mxu0 0.0
      %7110 = vmatpush1.msra.mxu0 0.0
      %7111 = vmatprep.subr.mxu0 0.0
      %7112 = vmatpush1.msra.mxu0 0.0
      %7113 = vmatprep.subr.mxu0 0.0
      %7114 = vmatpush1.msra.mxu0 0.0
      %7115 = vmatprep.subr.mxu0 0.0
      %7116 = vmatpush1.msra.mxu0 0.0
      %7117 = vmatprep.subr.mxu0 0.0
      %7118 = vmatpush1.msra.mxu0 0.0
      %7119 = vmatprep.subr.mxu0 0.0
      %7120 = vmatpush1.msra.mxu0 0.0
      %7121 = vmatprep.subr.mxu0 0.0
      %7122 = vmatpush1.msra.mxu0 0.0
      %7123 = vmatprep.subr.mxu0 0.0
      %7124 = vmatpush1.msra.mxu0 0.0
      %7125 = vmatprep.subr.mxu0 0.0
      %7126 = vmatpush1.msra.mxu0 0.0
      %7127 = vmatprep.subr.mxu0 0.0
      %7128 = vmatpush1.msra.mxu0 0.0
      %7129 = vmatprep.subr.mxu0 0.0
      %7130 = vmatpush1.msra.mxu0 0.0
      %7131 = vmatprep.subr.mxu0 0.0
      %7132 = vmatpush1.msra.mxu0 0.0
      %7133 = vmatprep.subr.mxu0 0.0
      %7134 = vmatpush1.msra.mxu0 0.0
      %7135 = vmatprep.subr.mxu0 0.0
      %7136 = vmatpush1.msra.mxu0 0.0
      %7137 = vmatprep.subr.mxu0 0.0
      %7138 = vmatpush1.msra.mxu0 0.0
      %7139 = vmatprep.subr.mxu0 0.0
      %7140 = vmatpush1.msra.mxu0 0.0
      %7141 = vmatprep.subr.mxu0 0.0
      %7142 = vmatpush1.msra.mxu0 0.0
      %7143 = vmatprep.subr.mxu0 0.0
      %7144 = vmatpush1.msra.mxu0 0.0
      %7145 = vmatprep.subr.mxu0 0.0
      %7146 = vmatpush1.msra.mxu0 0.0
      %7147 = vmatprep.subr.mxu0 0.0
      %7148 = vmatpush1.msra.mxu0 0.0
      %7149 = vmatprep.mubr.f32.mxu0 0.0
      %7150 = vmatmul.mubr.f32.gmra.mrb[0].mxu0 %v7083
      %v7151 = vpop.f32.mrb[0].mxu0
      %v7152 = vadd.f32 0.0, %v7151
      %v7153 = vpop.f32.mrb[0].mxu0
      %v7154 = vadd.f32 0.0, %v7153
      %7155 = vdwg.mxu0
      %v7156 = vadd.f32 %v7047, %v7152
      %v7157 = vadd.f32 %v7048, %v7154
      %7158 = vrot.lane.b32.xlu0 %v5527, 114
      %v7159 = vpop.permute.xlu0 %7158
      %7160 = vrot.lane.b32.xlu0 %v5529, 114
      %v7161 = vpop.permute.xlu0 %7160
      %7162 = vrot.lane.b32.xlu0 %v5531, 114
      %v7163 = vpop.permute.xlu0 %7162
      %7164 = vrot.lane.b32.xlu0 %v5533, 114
      %v7165 = vpop.permute.xlu0 %7164
      %7166 = vrot.lane.b32.xlu0 %v5528, 114
      %v7167 = vpop.permute.xlu0 %7166
      %7168 = vrot.lane.b32.xlu0 %v5530, 114
      %v7169 = vpop.permute.xlu0 %7168
      %7170 = vrot.lane.b32.xlu0 %v5532, 114
      %v7171 = vpop.permute.xlu0 %7170
      %7172 = vrot.lane.b32.xlu0 %v5534, 114
      %v7173 = vpop.permute.xlu0 %7172
      %v7174 = vsel %vm1242, %v7159, %v7167
      %v7175 = vsel %vm1242, %v7161, %v7169
      %v7176 = vsel %vm1242, %v7163, %v7171
      %v7177 = vsel %vm1242, %v7165, %v7173
      %v7178 = vsel %vm1242, %v7167, %v7159
      %v7179 = vsel %vm1242, %v7169, %v7161
      %v7180 = vsel %vm1242, %v7171, %v7163
      %v7181 = vsel %vm1242, %v7173, %v7165
      %v7182 = vmul.f32 %v7174, %v1251
      %v7183 = vmul.f32 %v7178, %v1255
      %v7184 = vmul.f32 %v7175, %v1251
      %v7185 = vmul.f32 %v7179, %v1255
      %v7186 = vmul.f32 %v7176, %v1251
      %v7187 = vmul.f32 %v7180, %v1255
      %v7188 = vmul.f32 %v7177, %v1251
      %v7189 = vmul.f32 %v7181, %v1255
      %7190 = vrot.lane.b32.xlu0 %v6971, 32
      %v7191 = vpop.permute.xlu0 %7190
      %v7192 = vsel %vm1978, %v7191, 0
      %7194 = vmatprep.subr.mxu0 %v7183
      %7195 = vmatpush1.msra.mxu0 %v7182
      %7196 = vmatprep.subr.mxu0 %v7185
      %7197 = vmatpush1.msra.mxu0 %v7184
      %7198 = vmatprep.subr.mxu0 %v7187
      %7199 = vmatpush1.msra.mxu0 %v7186
      %7200 = vmatprep.subr.mxu0 %v7189
      %7201 = vmatpush1.msra.mxu0 %v7188
      %7202 = vmatprep.subr.mxu0 0.0
      %7203 = vmatpush1.msra.mxu0 0.0
      %7204 = vmatprep.subr.mxu0 0.0
      %7205 = vmatpush1.msra.mxu0 0.0
      %7206 = vmatprep.subr.mxu0 0.0
      %7207 = vmatpush1.msra.mxu0 0.0
      %7208 = vmatprep.subr.mxu0 0.0
      %7209 = vmatpush1.msra.mxu0 0.0
      %7210 = vmatprep.subr.mxu0 0.0
      %7211 = vmatpush1.msra.mxu0 0.0
      %7212 = vmatprep.subr.mxu0 0.0
      %7213 = vmatpush1.msra.mxu0 0.0
      %7214 = vmatprep.subr.mxu0 0.0
      %7215 = vmatpush1.msra.mxu0 0.0
      %7216 = vmatprep.subr.mxu0 0.0
      %7217 = vmatpush1.msra.mxu0 0.0
      %7218 = vmatprep.subr.mxu0 0.0
      %7219 = vmatpush1.msra.mxu0 0.0
      %7220 = vmatprep.subr.mxu0 0.0
      %7221 = vmatpush1.msra.mxu0 0.0
      %7222 = vmatprep.subr.mxu0 0.0
      %7223 = vmatpush1.msra.mxu0 0.0
      %7224 = vmatprep.subr.mxu0 0.0
      %7225 = vmatpush1.msra.mxu0 0.0
      %7226 = vmatprep.subr.mxu0 0.0
      %7227 = vmatpush1.msra.mxu0 0.0
      %7228 = vmatprep.subr.mxu0 0.0
      %7229 = vmatpush1.msra.mxu0 0.0
      %7230 = vmatprep.subr.mxu0 0.0
      %7231 = vmatpush1.msra.mxu0 0.0
      %7232 = vmatprep.subr.mxu0 0.0
      %7233 = vmatpush1.msra.mxu0 0.0
      %7234 = vmatprep.subr.mxu0 0.0
      %7235 = vmatpush1.msra.mxu0 0.0
      %7236 = vmatprep.subr.mxu0 0.0
      %7237 = vmatpush1.msra.mxu0 0.0
      %7238 = vmatprep.subr.mxu0 0.0
      %7239 = vmatpush1.msra.mxu0 0.0
      %7240 = vmatprep.subr.mxu0 0.0
      %7241 = vmatpush1.msra.mxu0 0.0
      %7242 = vmatprep.subr.mxu0 0.0
      %7243 = vmatpush1.msra.mxu0 0.0
      %7244 = vmatprep.subr.mxu0 0.0
      %7245 = vmatpush1.msra.mxu0 0.0
      %7246 = vmatprep.subr.mxu0 0.0
      %7247 = vmatpush1.msra.mxu0 0.0
      %7248 = vmatprep.subr.mxu0 0.0
      %7249 = vmatpush1.msra.mxu0 0.0
      %7250 = vmatprep.subr.mxu0 0.0
      %7251 = vmatpush1.msra.mxu0 0.0
      %7252 = vmatprep.subr.mxu0 0.0
      %7253 = vmatpush1.msra.mxu0 0.0
      %7254 = vmatprep.subr.mxu0 0.0
      %7255 = vmatpush1.msra.mxu0 0.0
      %7256 = vmatprep.subr.mxu0 0.0
      %7257 = vmatpush1.msra.mxu0 0.0
      %7258 = vmatprep.mubr.f32.mxu0 0.0
      %7259 = vmatmul.mubr.f32.gmra.mrb[0].mxu0 %v7192
      %v7260 = vpop.f32.mrb[0].mxu0
      %v7261 = vadd.f32 0.0, %v7260
      %v7262 = vpop.f32.mrb[0].mxu0
      %v7263 = vadd.f32 0.0, %v7262
      %7264 = vdwg.mxu0
      %v7265 = vadd.f32 %v7156, %v7261
      %v7266 = vadd.f32 %v7157, %v7263
      %7267 = vrot.lane.b32.xlu0 %v5527, 113
      %v7268 = vpop.permute.xlu0 %7267
      %7269 = vrot.lane.b32.xlu0 %v5529, 113
      %v7270 = vpop.permute.xlu0 %7269
      %7271 = vrot.lane.b32.xlu0 %v5531, 113
      %v7272 = vpop.permute.xlu0 %7271
      %7273 = vrot.lane.b32.xlu0 %v5533, 113
      %v7274 = vpop.permute.xlu0 %7273
      %7275 = vrot.lane.b32.xlu0 %v5528, 113
      %v7276 = vpop.permute.xlu0 %7275
      %7277 = vrot.lane.b32.xlu0 %v5530, 113
      %v7278 = vpop.permute.xlu0 %7277
      %7279 = vrot.lane.b32.xlu0 %v5532, 113
      %v7280 = vpop.permute.xlu0 %7279
      %7281 = vrot.lane.b32.xlu0 %v5534, 113
      %v7282 = vpop.permute.xlu0 %7281
      %v7283 = vsel %vm1304, %v7268, %v7276
      %v7284 = vsel %vm1304, %v7270, %v7278
      %v7285 = vsel %vm1304, %v7272, %v7280
      %v7286 = vsel %vm1304, %v7274, %v7282
      %v7287 = vsel %vm1304, %v7276, %v7268
      %v7288 = vsel %vm1304, %v7278, %v7270
      %v7289 = vsel %vm1304, %v7280, %v7272
      %v7290 = vsel %vm1304, %v7282, %v7274
      %v7291 = vmul.f32 %v7283, %v1313
      %v7292 = vmul.f32 %v7287, %v1317
      %v7293 = vmul.f32 %v7284, %v1313
      %v7294 = vmul.f32 %v7288, %v1317
      %v7295 = vmul.f32 %v7285, %v1313
      %v7296 = vmul.f32 %v7289, %v1317
      %v7297 = vmul.f32 %v7286, %v1313
      %v7298 = vmul.f32 %v7290, %v1317
      %v7299 = vld [vmem:[%s6 + $0x4] sm:$0x1]
      %v7301 = vsel %vm1978, %v7299, 0
      %7303 = vmatprep.subr.mxu0 %v7292
      %7304 = vmatpush1.msra.mxu0 %v7291
      %7305 = vmatprep.subr.mxu0 %v7294
      %7306 = vmatpush1.msra.mxu0 %v7293
      %7307 = vmatprep.subr.mxu0 %v7296
      %7308 = vmatpush1.msra.mxu0 %v7295
      %7309 = vmatprep.subr.mxu0 %v7298
      %7310 = vmatpush1.msra.mxu0 %v7297
      %7311 = vmatprep.subr.mxu0 0.0
      %7312 = vmatpush1.msra.mxu0 0.0
      %7313 = vmatprep.subr.mxu0 0.0
      %7314 = vmatpush1.msra.mxu0 0.0
      %7315 = vmatprep.subr.mxu0 0.0
      %7316 = vmatpush1.msra.mxu0 0.0
      %7317 = vmatprep.subr.mxu0 0.0
      %7318 = vmatpush1.msra.mxu0 0.0
      %7319 = vmatprep.subr.mxu0 0.0
      %7320 = vmatpush1.msra.mxu0 0.0
      %7321 = vmatprep.subr.mxu0 0.0
      %7322 = vmatpush1.msra.mxu0 0.0
      %7323 = vmatprep.subr.mxu0 0.0
      %7324 = vmatpush1.msra.mxu0 0.0
      %7325 = vmatprep.subr.mxu0 0.0
      %7326 = vmatpush1.msra.mxu0 0.0
      %7327 = vmatprep.subr.mxu0 0.0
      %7328 = vmatpush1.msra.mxu0 0.0
      %7329 = vmatprep.subr.mxu0 0.0
      %7330 = vmatpush1.msra.mxu0 0.0
      %7331 = vmatprep.subr.mxu0 0.0
      %7332 = vmatpush1.msra.mxu0 0.0
      %7333 = vmatprep.subr.mxu0 0.0
      %7334 = vmatpush1.msra.mxu0 0.0
      %7335 = vmatprep.subr.mxu0 0.0
      %7336 = vmatpush1.msra.mxu0 0.0
      %7337 = vmatprep.subr.mxu0 0.0
      %7338 = vmatpush1.msra.mxu0 0.0
      %7339 = vmatprep.subr.mxu0 0.0
      %7340 = vmatpush1.msra.mxu0 0.0
      %7341 = vmatprep.subr.mxu0 0.0
      %7342 = vmatpush1.msra.mxu0 0.0
      %7343 = vmatprep.subr.mxu0 0.0
      %7344 = vmatpush1.msra.mxu0 0.0
      %7345 = vmatprep.subr.mxu0 0.0
      %7346 = vmatpush1.msra.mxu0 0.0
      %7347 = vmatprep.subr.mxu0 0.0
      %7348 = vmatpush1.msra.mxu0 0.0
      %7349 = vmatprep.subr.mxu0 0.0
      %7350 = vmatpush1.msra.mxu0 0.0
      %7351 = vmatprep.subr.mxu0 0.0
      %7352 = vmatpush1.msra.mxu0 0.0
      %7353 = vmatprep.subr.mxu0 0.0
      %7354 = vmatpush1.msra.mxu0 0.0
      %7355 = vmatprep.subr.mxu0 0.0
      %7356 = vmatpush1.msra.mxu0 0.0
      %7357 = vmatprep.subr.mxu0 0.0
      %7358 = vmatpush1.msra.mxu0 0.0
      %7359 = vmatprep.subr.mxu0 0.0
      %7360 = vmatpush1.msra.mxu0 0.0
      %7361 = vmatprep.subr.mxu0 0.0
      %7362 = vmatpush1.msra.mxu0 0.0
      %7363 = vmatprep.subr.mxu0 0.0
      %7364 = vmatpush1.msra.mxu0 0.0
      %7365 = vmatprep.subr.mxu0 0.0
      %7366 = vmatpush1.msra.mxu0 0.0
      %7367 = vmatprep.mubr.f32.mxu0 0.0
      %7368 = vmatmul.mubr.f32.gmra.mrb[0].mxu0 %v7301
      %v7369 = vpop.f32.mrb[0].mxu0
      %v7370 = vadd.f32 0.0, %v7369
      %v7371 = vpop.f32.mrb[0].mxu0
      %v7372 = vadd.f32 0.0, %v7371
      %7373 = vdwg.mxu0
      %v7374 = vadd.f32 %v7265, %v7370
      %v7375 = vadd.f32 %v7266, %v7372
      %7376 = vrot.lane.b32.xlu0 %v5527, 112
      %v7377 = vpop.permute.xlu0 %7376
      %7378 = vrot.lane.b32.xlu0 %v5529, 112
      %v7379 = vpop.permute.xlu0 %7378
      %7380 = vrot.lane.b32.xlu0 %v5531, 112
      %v7381 = vpop.permute.xlu0 %7380
      %7382 = vrot.lane.b32.xlu0 %v5533, 112
      %v7383 = vpop.permute.xlu0 %7382
      %7384 = vrot.lane.b32.xlu0 %v5528, 112
      %v7385 = vpop.permute.xlu0 %7384
      %7386 = vrot.lane.b32.xlu0 %v5530, 112
      %v7387 = vpop.permute.xlu0 %7386
      %7388 = vrot.lane.b32.xlu0 %v5532, 112
      %v7389 = vpop.permute.xlu0 %7388
      %7390 = vrot.lane.b32.xlu0 %v5534, 112
      %v7391 = vpop.permute.xlu0 %7390
      %v7392 = vsel %vm1366, %v7377, %v7385
      %v7393 = vsel %vm1366, %v7379, %v7387
      %v7394 = vsel %vm1366, %v7381, %v7389
      %v7395 = vsel %vm1366, %v7383, %v7391
      %v7396 = vsel %vm1366, %v7385, %v7377
      %v7397 = vsel %vm1366, %v7387, %v7379
      %v7398 = vsel %vm1366, %v7389, %v7381
      %v7399 = vsel %vm1366, %v7391, %v7383
      %v7400 = vmul.f32 %v7392, %v1375
      %v7401 = vmul.f32 %v7396, %v1379
      %v7402 = vmul.f32 %v7393, %v1375
      %v7403 = vmul.f32 %v7397, %v1379
      %v7404 = vmul.f32 %v7394, %v1375
      %v7405 = vmul.f32 %v7398, %v1379
      %v7406 = vmul.f32 %v7395, %v1375
      %v7407 = vmul.f32 %v7399, %v1379
      %v7408 = vlaneseq
      %v7409 = vshrl.u32 %v7408, 7
      %v7410 = vsub.s32 0, %v7409
      %v7411 = vrot.slane %v7299, %v7410
      %7412 = vrot.lane.b32.xlu0 %v7411, 96
      %v7413 = vpop.permute.xlu0 %7412
      %v7414 = vsel %vm1978, %v7413, 0
      %7416 = vmatprep.subr.mxu0 %v7401
      %7417 = vmatpush1.msra.mxu0 %v7400
      %7418 = vmatprep.subr.mxu0 %v7403
      %7419 = vmatpush1.msra.mxu0 %v7402
      %7420 = vmatprep.subr.mxu0 %v7405
      %7421 = vmatpush1.msra.mxu0 %v7404
      %7422 = vmatprep.subr.mxu0 %v7407
      %7423 = vmatpush1.msra.mxu0 %v7406
      %7424 = vmatprep.subr.mxu0 0.0
      %7425 = vmatpush1.msra.mxu0 0.0
      %7426 = vmatprep.subr.mxu0 0.0
      %7427 = vmatpush1.msra.mxu0 0.0
      %7428 = vmatprep.subr.mxu0 0.0
      %7429 = vmatpush1.msra.mxu0 0.0
      %7430 = vmatprep.subr.mxu0 0.0
      %7431 = vmatpush1.msra.mxu0 0.0
      %7432 = vmatprep.subr.mxu0 0.0
      %7433 = vmatpush1.msra.mxu0 0.0
      %7434 = vmatprep.subr.mxu0 0.0
      %7435 = vmatpush1.msra.mxu0 0.0
      %7436 = vmatprep.subr.mxu0 0.0
      %7437 = vmatpush1.msra.mxu0 0.0
      %7438 = vmatprep.subr.mxu0 0.0
      %7439 = vmatpush1.msra.mxu0 0.0
      %7440 = vmatprep.subr.mxu0 0.0
      %7441 = vmatpush1.msra.mxu0 0.0
      %7442 = vmatprep.subr.mxu0 0.0
      %7443 = vmatpush1.msra.mxu0 0.0
      %7444 = vmatprep.subr.mxu0 0.0
      %7445 = vmatpush1.msra.mxu0 0.0
      %7446 = vmatprep.subr.mxu0 0.0
      %7447 = vmatpush1.msra.mxu0 0.0
      %7448 = vmatprep.subr.mxu0 0.0
      %7449 = vmatpush1.msra.mxu0 0.0
      %7450 = vmatprep.subr.mxu0 0.0
      %7451 = vmatpush1.msra.mxu0 0.0
      %7452 = vmatprep.subr.mxu0 0.0
      %7453 = vmatpush1.msra.mxu0 0.0
      %7454 = vmatprep.subr.mxu0 0.0
      %7455 = vmatpush1.msra.mxu0 0.0
      %7456 = vmatprep.subr.mxu0 0.0
      %7457 = vmatpush1.msra.mxu0 0.0
      %7458 = vmatprep.subr.mxu0 0.0
      %7459 = vmatpush1.msra.mxu0 0.0
      %7460 = vmatprep.subr.mxu0 0.0
      %7461 = vmatpush1.msra.mxu0 0.0
      %7462 = vmatprep.subr.mxu0 0.0
      %7463 = vmatpush1.msra.mxu0 0.0
      %7464 = vmatprep.subr.mxu0 0.0
      %7465 = vmatpush1.msra.mxu0 0.0
      %7466 = vmatprep.subr.mxu0 0.0
      %7467 = vmatpush1.msra.mxu0 0.0
      %7468 = vmatprep.subr.mxu0 0.0
      %7469 = vmatpush1.msra.mxu0 0.0
      %7470 = vmatprep.subr.mxu0 0.0
      %7471 = vmatpush1.msra.mxu0 0.0
      %7472 = vmatprep.subr.mxu0 0.0
      %7473 = vmatpush1.msra.mxu0 0.0
      %7474 = vmatprep.subr.mxu0 0.0
      %7475 = vmatpush1.msra.mxu0 0.0
      %7476 = vmatprep.subr.mxu0 0.0
      %7477 = vmatpush1.msra.mxu0 0.0
      %7478 = vmatprep.subr.mxu0 0.0
      %7479 = vmatpush1.msra.mxu0 0.0
      %7480 = vmatprep.mubr.f32.mxu0 0.0
      %7481 = vmatmul.mubr.f32.gmra.mrb[0].mxu0 %v7414
      %v7482 = vpop.f32.mrb[0].mxu0
      %v7483 = vadd.f32 0.0, %v7482
      %v7484 = vpop.f32.mrb[0].mxu0
      %v7485 = vadd.f32 0.0, %v7484
      %7486 = vdwg.mxu0
      %v7487 = vadd.f32 %v7374, %v7483
      %v7488 = vadd.f32 %v7375, %v7485
      %7489 = vrot.lane.b32.xlu0 %v5527, 111
      %v7490 = vpop.permute.xlu0 %7489
      %7491 = vrot.lane.b32.xlu0 %v5529, 111
      %v7492 = vpop.permute.xlu0 %7491
      %7493 = vrot.lane.b32.xlu0 %v5531, 111
      %v7494 = vpop.permute.xlu0 %7493
      %7495 = vrot.lane.b32.xlu0 %v5533, 111
      %v7496 = vpop.permute.xlu0 %7495
      %7497 = vrot.lane.b32.xlu0 %v5528, 111
      %v7498 = vpop.permute.xlu0 %7497
      %7499 = vrot.lane.b32.xlu0 %v5530, 111
      %v7500 = vpop.permute.xlu0 %7499
      %7501 = vrot.lane.b32.xlu0 %v5532, 111
      %v7502 = vpop.permute.xlu0 %7501
      %7503 = vrot.lane.b32.xlu0 %v5534, 111
      %v7504 = vpop.permute.xlu0 %7503
      %v7505 = vsel %vm1428, %v7490, %v7498
      %v7506 = vsel %vm1428, %v7492, %v7500
      %v7507 = vsel %vm1428, %v7494, %v7502
      %v7508 = vsel %vm1428, %v7496, %v7504
      %v7509 = vsel %vm1428, %v7498, %v7490
      %v7510 = vsel %vm1428, %v7500, %v7492
      %v7511 = vsel %vm1428, %v7502, %v7494
      %v7512 = vsel %vm1428, %v7504, %v7496
      %v7513 = vmul.f32 %v7505, %v1437
      %v7514 = vmul.f32 %v7509, %v1441
      %v7515 = vmul.f32 %v7506, %v1437
      %v7516 = vmul.f32 %v7510, %v1441
      %v7517 = vmul.f32 %v7507, %v1437
      %v7518 = vmul.f32 %v7511, %v1441
      %v7519 = vmul.f32 %v7508, %v1437
      %v7520 = vmul.f32 %v7512, %v1441
      %7521 = vrot.lane.b32.xlu0 %v7411, 64
      %v7522 = vpop.permute.xlu0 %7521
      %v7523 = vsel %vm1978, %v7522, 0
      %7525 = vmatprep.subr.mxu0 %v7514
      %7526 = vmatpush1.msra.mxu0 %v7513
      %7527 = vmatprep.subr.mxu0 %v7516
      %7528 = vmatpush1.msra.mxu0 %v7515
      %7529 = vmatprep.subr.mxu0 %v7518
      %7530 = vmatpush1.msra.mxu0 %v7517
      %7531 = vmatprep.subr.mxu0 %v7520
      %7532 = vmatpush1.msra.mxu0 %v7519
      %7533 = vmatprep.subr.mxu0 0.0
      %7534 = vmatpush1.msra.mxu0 0.0
      %7535 = vmatprep.subr.mxu0 0.0
      %7536 = vmatpush1.msra.mxu0 0.0
      %7537 = vmatprep.subr.mxu0 0.0
      %7538 = vmatpush1.msra.mxu0 0.0
      %7539 = vmatprep.subr.mxu0 0.0
      %7540 = vmatpush1.msra.mxu0 0.0
      %7541 = vmatprep.subr.mxu0 0.0
      %7542 = vmatpush1.msra.mxu0 0.0
      %7543 = vmatprep.subr.mxu0 0.0
      %7544 = vmatpush1.msra.mxu0 0.0
      %7545 = vmatprep.subr.mxu0 0.0
      %7546 = vmatpush1.msra.mxu0 0.0
      %7547 = vmatprep.subr.mxu0 0.0
      %7548 = vmatpush1.msra.mxu0 0.0
      %7549 = vmatprep.subr.mxu0 0.0
      %7550 = vmatpush1.msra.mxu0 0.0
      %7551 = vmatprep.subr.mxu0 0.0
      %7552 = vmatpush1.msra.mxu0 0.0
      %7553 = vmatprep.subr.mxu0 0.0
      %7554 = vmatpush1.msra.mxu0 0.0
      %7555 = vmatprep.subr.mxu0 0.0
      %7556 = vmatpush1.msra.mxu0 0.0
      %7557 = vmatprep.subr.mxu0 0.0
      %7558 = vmatpush1.msra.mxu0 0.0
      %7559 = vmatprep.subr.mxu0 0.0
      %7560 = vmatpush1.msra.mxu0 0.0
      %7561 = vmatprep.subr.mxu0 0.0
      %7562 = vmatpush1.msra.mxu0 0.0
      %7563 = vmatprep.subr.mxu0 0.0
      %7564 = vmatpush1.msra.mxu0 0.0
      %7565 = vmatprep.subr.mxu0 0.0
      %7566 = vmatpush1.msra.mxu0 0.0
      %7567 = vmatprep.subr.mxu0 0.0
      %7568 = vmatpush1.msra.mxu0 0.0
      %7569 = vmatprep.subr.mxu0 0.0
      %7570 = vmatpush1.msra.mxu0 0.0
      %7571 = vmatprep.subr.mxu0 0.0
      %7572 = vmatpush1.msra.mxu0 0.0
      %7573 = vmatprep.subr.mxu0 0.0
      %7574 = vmatpush1.msra.mxu0 0.0
      %7575 = vmatprep.subr.mxu0 0.0
      %7576 = vmatpush1.msra.mxu0 0.0
      %7577 = vmatprep.subr.mxu0 0.0
      %7578 = vmatpush1.msra.mxu0 0.0
      %7579 = vmatprep.subr.mxu0 0.0
      %7580 = vmatpush1.msra.mxu0 0.0
      %7581 = vmatprep.subr.mxu0 0.0
      %7582 = vmatpush1.msra.mxu0 0.0
      %7583 = vmatprep.subr.mxu0 0.0
      %7584 = vmatpush1.msra.mxu0 0.0
      %7585 = vmatprep.subr.mxu0 0.0
      %7586 = vmatpush1.msra.mxu0 0.0
      %7587 = vmatprep.subr.mxu0 0.0
      %7588 = vmatpush1.msra.mxu0 0.0
      %7589 = vmatprep.mubr.f32.mxu0 0.0
      %7590 = vmatmul.mubr.f32.gmra.mrb[0].mxu0 %v7523
      %v7591 = vpop.f32.mrb[0].mxu0
      %v7592 = vadd.f32 0.0, %v7591
      %v7593 = vpop.f32.mrb[0].mxu0
      %v7594 = vadd.f32 0.0, %v7593
      %7595 = vdwg.mxu0
      %v7596 = vadd.f32 %v7487, %v7592
      %v7597 = vadd.f32 %v7488, %v7594
      %7598 = vrot.lane.b32.xlu0 %v5527, 110
      %v7599 = vpop.permute.xlu0 %7598
      %7600 = vrot.lane.b32.xlu0 %v5529, 110
      %v7601 = vpop.permute.xlu0 %7600
      %7602 = vrot.lane.b32.xlu0 %v5531, 110
      %v7603 = vpop.permute.xlu0 %7602
      %7604 = vrot.lane.b32.xlu0 %v5533, 110
      %v7605 = vpop.permute.xlu0 %7604
      %7606 = vrot.lane.b32.xlu0 %v5528, 110
      %v7607 = vpop.permute.xlu0 %7606
      %7608 = vrot.lane.b32.xlu0 %v5530, 110
      %v7609 = vpop.permute.xlu0 %7608
      %7610 = vrot.lane.b32.xlu0 %v5532, 110
      %v7611 = vpop.permute.xlu0 %7610
      %7612 = vrot.lane.b32.xlu0 %v5534, 110
      %v7613 = vpop.permute.xlu0 %7612
      %v7614 = vsel %vm1490, %v7599, %v7607
      %v7615 = vsel %vm1490, %v7601, %v7609
      %v7616 = vsel %vm1490, %v7603, %v7611
      %v7617 = vsel %vm1490, %v7605, %v7613
      %v7618 = vsel %vm1490, %v7607, %v7599
      %v7619 = vsel %vm1490, %v7609, %v7601
      %v7620 = vsel %vm1490, %v7611, %v7603
      %v7621 = vsel %vm1490, %v7613, %v7605
      %v7622 = vmul.f32 %v7614, %v1499
      %v7623 = vmul.f32 %v7618, %v1503
      %v7624 = vmul.f32 %v7615, %v1499
      %v7625 = vmul.f32 %v7619, %v1503
      %v7626 = vmul.f32 %v7616, %v1499
      %v7627 = vmul.f32 %v7620, %v1503
      %v7628 = vmul.f32 %v7617, %v1499
      %v7629 = vmul.f32 %v7621, %v1503
      %7630 = vrot.lane.b32.xlu0 %v7411, 32
      %v7631 = vpop.permute.xlu0 %7630
      %v7632 = vsel %vm1978, %v7631, 0
      %7634 = vmatprep.subr.mxu0 %v7623
      %7635 = vmatpush1.msra.mxu0 %v7622
      %7636 = vmatprep.subr.mxu0 %v7625
      %7637 = vmatpush1.msra.mxu0 %v7624
      %7638 = vmatprep.subr.mxu0 %v7627
      %7639 = vmatpush1.msra.mxu0 %v7626
      %7640 = vmatprep.subr.mxu0 %v7629
      %7641 = vmatpush1.msra.mxu0 %v7628
      %7642 = vmatprep.subr.mxu0 0.0
      %7643 = vmatpush1.msra.mxu0 0.0
      %7644 = vmatprep.subr.mxu0 0.0
      %7645 = vmatpush1.msra.mxu0 0.0
      %7646 = vmatprep.subr.mxu0 0.0
      %7647 = vmatpush1.msra.mxu0 0.0
      %7648 = vmatprep.subr.mxu0 0.0
      %7649 = vmatpush1.msra.mxu0 0.0
      %7650 = vmatprep.subr.mxu0 0.0
      %7651 = vmatpush1.msra.mxu0 0.0
      %7652 = vmatprep.subr.mxu0 0.0
      %7653 = vmatpush1.msra.mxu0 0.0
      %7654 = vmatprep.subr.mxu0 0.0
      %7655 = vmatpush1.msra.mxu0 0.0
      %7656 = vmatprep.subr.mxu0 0.0
      %7657 = vmatpush1.msra.mxu0 0.0
      %7658 = vmatprep.subr.mxu0 0.0
      %7659 = vmatpush1.msra.mxu0 0.0
      %7660 = vmatprep.subr.mxu0 0.0
      %7661 = vmatpush1.msra.mxu0 0.0
      %7662 = vmatprep.subr.mxu0 0.0
      %7663 = vmatpush1.msra.mxu0 0.0
      %7664 = vmatprep.subr.mxu0 0.0
      %7665 = vmatpush1.msra.mxu0 0.0
      %7666 = vmatprep.subr.mxu0 0.0
      %7667 = vmatpush1.msra.mxu0 0.0
      %7668 = vmatprep.subr.mxu0 0.0
      %7669 = vmatpush1.msra.mxu0 0.0
      %7670 = vmatprep.subr.mxu0 0.0
      %7671 = vmatpush1.msra.mxu0 0.0
      %7672 = vmatprep.subr.mxu0 0.0
      %7673 = vmatpush1.msra.mxu0 0.0
      %7674 = vmatprep.subr.mxu0 0.0
      %7675 = vmatpush1.msra.mxu0 0.0
      %7676 = vmatprep.subr.mxu0 0.0
      %7677 = vmatpush1.msra.mxu0 0.0
      %7678 = vmatprep.subr.mxu0 0.0
      %7679 = vmatpush1.msra.mxu0 0.0
      %7680 = vmatprep.subr.mxu0 0.0
      %7681 = vmatpush1.msra.mxu0 0.0
      %7682 = vmatprep.subr.mxu0 0.0
      %7683 = vmatpush1.msra.mxu0 0.0
      %7684 = vmatprep.subr.mxu0 0.0
      %7685 = vmatpush1.msra.mxu0 0.0
      %7686 = vmatprep.subr.mxu0 0.0
      %7687 = vmatpush1.msra.mxu0 0.0
      %7688 = vmatprep.subr.mxu0 0.0
      %7689 = vmatpush1.msra.mxu0 0.0
      %7690 = vmatprep.subr.mxu0 0.0
      %7691 = vmatpush1.msra.mxu0 0.0
      %7692 = vmatprep.subr.mxu0 0.0
      %7693 = vmatpush1.msra.mxu0 0.0
      %7694 = vmatprep.subr.mxu0 0.0
      %7695 = vmatpush1.msra.mxu0 0.0
      %7696 = vmatprep.subr.mxu0 0.0
      %7697 = vmatpush1.msra.mxu0 0.0
      %7698 = vmatprep.mubr.f32.mxu0 0.0
      %7699 = vmatmul.mubr.f32.gmra.mrb[0].mxu0 %v7632
      %v7700 = vpop.f32.mrb[0].mxu0
      %v7701 = vadd.f32 0.0, %v7700
      %v7702 = vpop.f32.mrb[0].mxu0
      %v7703 = vadd.f32 0.0, %v7702
      %7704 = vdwg.mxu0
      %v7705 = vadd.f32 %v7596, %v7701
      %v7706 = vadd.f32 %v7597, %v7703
      %7707 = vrot.lane.b32.xlu0 %v5527, 98
      %v7708 = vpop.permute.xlu0 %7707
      %7709 = vrot.lane.b32.xlu0 %v5529, 98
      %v7710 = vpop.permute.xlu0 %7709
      %7711 = vrot.lane.b32.xlu0 %v5531, 98
      %v7712 = vpop.permute.xlu0 %7711
      %7713 = vrot.lane.b32.xlu0 %v5533, 98
      %v7714 = vpop.permute.xlu0 %7713
      %7715 = vrot.lane.b32.xlu0 %v5528, 98
      %v7716 = vpop.permute.xlu0 %7715
      %7717 = vrot.lane.b32.xlu0 %v5530, 98
      %v7718 = vpop.permute.xlu0 %7717
      %7719 = vrot.lane.b32.xlu0 %v5532, 98
      %v7720 = vpop.permute.xlu0 %7719
      %7721 = vrot.lane.b32.xlu0 %v5534, 98
      %v7722 = vpop.permute.xlu0 %7721
      %v7723 = vsel %vm1552, %v7708, %v7716
      %v7724 = vsel %vm1552, %v7710, %v7718
      %v7725 = vsel %vm1552, %v7712, %v7720
      %v7726 = vsel %vm1552, %v7714, %v7722
      %v7727 = vsel %vm1552, %v7716, %v7708
      %v7728 = vsel %vm1552, %v7718, %v7710
      %v7729 = vsel %vm1552, %v7720, %v7712
      %v7730 = vsel %vm1552, %v7722, %v7714
      %v7731 = vmul.f32 %v7723, %v1561
      %v7732 = vmul.f32 %v7727, %v1565
      %v7733 = vmul.f32 %v7724, %v1561
      %v7734 = vmul.f32 %v7728, %v1565
      %v7735 = vmul.f32 %v7725, %v1561
      %v7736 = vmul.f32 %v7729, %v1565
      %v7737 = vmul.f32 %v7726, %v1561
      %v7738 = vmul.f32 %v7730, %v1565
      %v7739 = vld [vmem:[%s6 + $0x5] sm:$0x1]
      %v7741 = vsel %vm1978, %v7739, 0
      %7743 = vmatprep.subr.mxu0 %v7732
      %7744 = vmatpush1.msra.mxu0 %v7731
      %7745 = vmatprep.subr.mxu0 %v7734
      %7746 = vmatpush1.msra.mxu0 %v7733
      %7747 = vmatprep.subr.mxu0 %v7736
      %7748 = vmatpush1.msra.mxu0 %v7735
      %7749 = vmatprep.subr.mxu0 %v7738
      %7750 = vmatpush1.msra.mxu0 %v7737
      %7751 = vmatprep.subr.mxu0 0.0
      %7752 = vmatpush1.msra.mxu0 0.0
      %7753 = vmatprep.subr.mxu0 0.0
      %7754 = vmatpush1.msra.mxu0 0.0
      %7755 = vmatprep.subr.mxu0 0.0
      %7756 = vmatpush1.msra.mxu0 0.0
      %7757 = vmatprep.subr.mxu0 0.0
      %7758 = vmatpush1.msra.mxu0 0.0
      %7759 = vmatprep.subr.mxu0 0.0
      %7760 = vmatpush1.msra.mxu0 0.0
      %7761 = vmatprep.subr.mxu0 0.0
      %7762 = vmatpush1.msra.mxu0 0.0
      %7763 = vmatprep.subr.mxu0 0.0
      %7764 = vmatpush1.msra.mxu0 0.0
      %7765 = vmatprep.subr.mxu0 0.0
      %7766 = vmatpush1.msra.mxu0 0.0
      %7767 = vmatprep.subr.mxu0 0.0
      %7768 = vmatpush1.msra.mxu0 0.0
      %7769 = vmatprep.subr.mxu0 0.0
      %7770 = vmatpush1.msra.mxu0 0.0
      %7771 = vmatprep.subr.mxu0 0.0
      %7772 = vmatpush1.msra.mxu0 0.0
      %7773 = vmatprep.subr.mxu0 0.0
      %7774 = vmatpush1.msra.mxu0 0.0
      %7775 = vmatprep.subr.mxu0 0.0
      %7776 = vmatpush1.msra.mxu0 0.0
      %7777 = vmatprep.subr.mxu0 0.0
      %7778 = vmatpush1.msra.mxu0 0.0
      %7779 = vmatprep.subr.mxu0 0.0
      %7780 = vmatpush1.msra.mxu0 0.0
      %7781 = vmatprep.subr.mxu0 0.0
      %7782 = vmatpush1.msra.mxu0 0.0
      %7783 = vmatprep.subr.mxu0 0.0
      %7784 = vmatpush1.msra.mxu0 0.0
      %7785 = vmatprep.subr.mxu0 0.0
      %7786 = vmatpush1.msra.mxu0 0.0
      %7787 = vmatprep.subr.mxu0 0.0
      %7788 = vmatpush1.msra.mxu0 0.0
      %7789 = vmatprep.subr.mxu0 0.0
      %7790 = vmatpush1.msra.mxu0 0.0
      %7791 = vmatprep.subr.mxu0 0.0
      %7792 = vmatpush1.msra.mxu0 0.0
      %7793 = vmatprep.subr.mxu0 0.0
      %7794 = vmatpush1.msra.mxu0 0.0
      %7795 = vmatprep.subr.mxu0 0.0
      %7796 = vmatpush1.msra.mxu0 0.0
      %7797 = vmatprep.subr.mxu0 0.0
      %7798 = vmatpush1.msra.mxu0 0.0
      %7799 = vmatprep.subr.mxu0 0.0
      %7800 = vmatpush1.msra.mxu0 0.0
      %7801 = vmatprep.subr.mxu0 0.0
      %7802 = vmatpush1.msra.mxu0 0.0
      %7803 = vmatprep.subr.mxu0 0.0
      %7804 = vmatpush1.msra.mxu0 0.0
      %7805 = vmatprep.subr.mxu0 0.0
      %7806 = vmatpush1.msra.mxu0 0.0
      %7807 = vmatprep.mubr.f32.mxu0 0.0
      %7808 = vmatmul.mubr.f32.gmra.mrb[0].mxu0 %v7741
      %v7809 = vpop.f32.mrb[0].mxu0
      %v7810 = vadd.f32 0.0, %v7809
      %v7811 = vpop.f32.mrb[0].mxu0
      %v7812 = vadd.f32 0.0, %v7811
      %7813 = vdwg.mxu0
      %v7814 = vadd.f32 %v7705, %v7810
      %v7815 = vadd.f32 %v7706, %v7812
      %7816 = vrot.lane.b32.xlu0 %v5527, 97
      %v7817 = vpop.permute.xlu0 %7816
      %7818 = vrot.lane.b32.xlu0 %v5529, 97
      %v7819 = vpop.permute.xlu0 %7818
      %7820 = vrot.lane.b32.xlu0 %v5531, 97
      %v7821 = vpop.permute.xlu0 %7820
      %7822 = vrot.lane.b32.xlu0 %v5533, 97
      %v7823 = vpop.permute.xlu0 %7822
      %7824 = vrot.lane.b32.xlu0 %v5528, 97
      %v7825 = vpop.permute.xlu0 %7824
      %7826 = vrot.lane.b32.xlu0 %v5530, 97
      %v7827 = vpop.permute.xlu0 %7826
      %7828 = vrot.lane.b32.xlu0 %v5532, 97
      %v7829 = vpop.permute.xlu0 %7828
      %7830 = vrot.lane.b32.xlu0 %v5534, 97
      %v7831 = vpop.permute.xlu0 %7830
      %v7832 = vsel %vm1614, %v7817, %v7825
      %v7833 = vsel %vm1614, %v7819, %v7827
      %v7834 = vsel %vm1614, %v7821, %v7829
      %v7835 = vsel %vm1614, %v7823, %v7831
      %v7836 = vsel %vm1614, %v7825, %v7817
      %v7837 = vsel %vm1614, %v7827, %v7819
      %v7838 = vsel %vm1614, %v7829, %v7821
      %v7839 = vsel %vm1614, %v7831, %v7823
      %v7840 = vmul.f32 %v7832, %v1623
      %v7841 = vmul.f32 %v7836, %v1627
      %v7842 = vmul.f32 %v7833, %v1623
      %v7843 = vmul.f32 %v7837, %v1627
      %v7844 = vmul.f32 %v7834, %v1623
      %v7845 = vmul.f32 %v7838, %v1627
      %v7846 = vmul.f32 %v7835, %v1623
      %v7847 = vmul.f32 %v7839, %v1627
      %v7848 = vlaneseq
      %v7849 = vshrl.u32 %v7848, 7
      %v7850 = vsub.s32 0, %v7849
      %v7851 = vrot.slane %v7739, %v7850
      %7852 = vrot.lane.b32.xlu0 %v7851, 96
      %v7853 = vpop.permute.xlu0 %7852
      %v7854 = vsel %vm1978, %v7853, 0
      %7856 = vmatprep.subr.mxu0 %v7841
      %7857 = vmatpush1.msra.mxu0 %v7840
      %7858 = vmatprep.subr.mxu0 %v7843
      %7859 = vmatpush1.msra.mxu0 %v7842
      %7860 = vmatprep.subr.mxu0 %v7845
      %7861 = vmatpush1.msra.mxu0 %v7844
      %7862 = vmatprep.subr.mxu0 %v7847
      %7863 = vmatpush1.msra.mxu0 %v7846
      %7864 = vmatprep.subr.mxu0 0.0
      %7865 = vmatpush1.msra.mxu0 0.0
      %7866 = vmatprep.subr.mxu0 0.0
      %7867 = vmatpush1.msra.mxu0 0.0
      %7868 = vmatprep.subr.mxu0 0.0
      %7869 = vmatpush1.msra.mxu0 0.0
      %7870 = vmatprep.subr.mxu0 0.0
      %7871 = vmatpush1.msra.mxu0 0.0
      %7872 = vmatprep.subr.mxu0 0.0
      %7873 = vmatpush1.msra.mxu0 0.0
      %7874 = vmatprep.subr.mxu0 0.0
      %7875 = vmatpush1.msra.mxu0 0.0
      %7876 = vmatprep.subr.mxu0 0.0
      %7877 = vmatpush1.msra.mxu0 0.0
      %7878 = vmatprep.subr.mxu0 0.0
      %7879 = vmatpush1.msra.mxu0 0.0
      %7880 = vmatprep.subr.mxu0 0.0
      %7881 = vmatpush1.msra.mxu0 0.0
      %7882 = vmatprep.subr.mxu0 0.0
      %7883 = vmatpush1.msra.mxu0 0.0
      %7884 = vmatprep.subr.mxu0 0.0
      %7885 = vmatpush1.msra.mxu0 0.0
      %7886 = vmatprep.subr.mxu0 0.0
      %7887 = vmatpush1.msra.mxu0 0.0
      %7888 = vmatprep.subr.mxu0 0.0
      %7889 = vmatpush1.msra.mxu0 0.0
      %7890 = vmatprep.subr.mxu0 0.0
      %7891 = vmatpush1.msra.mxu0 0.0
      %7892 = vmatprep.subr.mxu0 0.0
      %7893 = vmatpush1.msra.mxu0 0.0
      %7894 = vmatprep.subr.mxu0 0.0
      %7895 = vmatpush1.msra.mxu0 0.0
      %7896 = vmatprep.subr.mxu0 0.0
      %7897 = vmatpush1.msra.mxu0 0.0
      %7898 = vmatprep.subr.mxu0 0.0
      %7899 = vmatpush1.msra.mxu0 0.0
      %7900 = vmatprep.subr.mxu0 0.0
      %7901 = vmatpush1.msra.mxu0 0.0
      %7902 = vmatprep.subr.mxu0 0.0
      %7903 = vmatpush1.msra.mxu0 0.0
      %7904 = vmatprep.subr.mxu0 0.0
      %7905 = vmatpush1.msra.mxu0 0.0
      %7906 = vmatprep.subr.mxu0 0.0
      %7907 = vmatpush1.msra.mxu0 0.0
      %7908 = vmatprep.subr.mxu0 0.0
      %7909 = vmatpush1.msra.mxu0 0.0
      %7910 = vmatprep.subr.mxu0 0.0
      %7911 = vmatpush1.msra.mxu0 0.0
      %7912 = vmatprep.subr.mxu0 0.0
      %7913 = vmatpush1.msra.mxu0 0.0
      %7914 = vmatprep.subr.mxu0 0.0
      %7915 = vmatpush1.msra.mxu0 0.0
      %7916 = vmatprep.subr.mxu0 0.0
      %7917 = vmatpush1.msra.mxu0 0.0
      %7918 = vmatprep.subr.mxu0 0.0
      %7919 = vmatpush1.msra.mxu0 0.0
      %7920 = vmatprep.mubr.f32.mxu0 0.0
      %7921 = vmatmul.mubr.f32.gmra.mrb[0].mxu0 %v7854
      %v7922 = vpop.f32.mrb[0].mxu0
      %v7923 = vadd.f32 0.0, %v7922
      %v7924 = vpop.f32.mrb[0].mxu0
      %v7925 = vadd.f32 0.0, %v7924
      %7926 = vdwg.mxu0
      %v7927 = vadd.f32 %v7814, %v7923
      %v7928 = vadd.f32 %v7815, %v7925
      %7929 = vrot.lane.b32.xlu0 %v5527, 96
      %v7930 = vpop.permute.xlu0 %7929
      %7931 = vrot.lane.b32.xlu0 %v5529, 96
      %v7932 = vpop.permute.xlu0 %7931
      %7933 = vrot.lane.b32.xlu0 %v5531, 96
      %v7934 = vpop.permute.xlu0 %7933
      %7935 = vrot.lane.b32.xlu0 %v5533, 96
      %v7936 = vpop.permute.xlu0 %7935
      %7937 = vrot.lane.b32.xlu0 %v5528, 96
      %v7938 = vpop.permute.xlu0 %7937
      %7939 = vrot.lane.b32.xlu0 %v5530, 96
      %v7940 = vpop.permute.xlu0 %7939
      %7941 = vrot.lane.b32.xlu0 %v5532, 96
      %v7942 = vpop.permute.xlu0 %7941
      %7943 = vrot.lane.b32.xlu0 %v5534, 96
      %v7944 = vpop.permute.xlu0 %7943
      %v7945 = vsel %vm1676, %v7930, %v7938
      %v7946 = vsel %vm1676, %v7932, %v7940
      %v7947 = vsel %vm1676, %v7934, %v7942
      %v7948 = vsel %vm1676, %v7936, %v7944
      %v7949 = vsel %vm1676, %v7938, %v7930
      %v7950 = vsel %vm1676, %v7940, %v7932
      %v7951 = vsel %vm1676, %v7942, %v7934
      %v7952 = vsel %vm1676, %v7944, %v7936
      %v7953 = vmul.f32 %v7945, %v1685
      %v7954 = vmul.f32 %v7949, %v1689
      %v7955 = vmul.f32 %v7946, %v1685
      %v7956 = vmul.f32 %v7950, %v1689
      %v7957 = vmul.f32 %v7947, %v1685
      %v7958 = vmul.f32 %v7951, %v1689
      %v7959 = vmul.f32 %v7948, %v1685
      %v7960 = vmul.f32 %v7952, %v1689
      %7961 = vrot.lane.b32.xlu0 %v7851, 64
      %v7962 = vpop.permute.xlu0 %7961
      %v7963 = vsel %vm1978, %v7962, 0
      %7965 = vmatprep.subr.mxu0 %v7954
      %7966 = vmatpush1.msra.mxu0 %v7953
      %7967 = vmatprep.subr.mxu0 %v7956
      %7968 = vmatpush1.msra.mxu0 %v7955
      %7969 = vmatprep.subr.mxu0 %v7958
      %7970 = vmatpush1.msra.mxu0 %v7957
      %7971 = vmatprep.subr.mxu0 %v7960
      %7972 = vmatpush1.msra.mxu0 %v7959
      %7973 = vmatprep.subr.mxu0 0.0
      %7974 = vmatpush1.msra.mxu0 0.0
      %7975 = vmatprep.subr.mxu0 0.0
      %7976 = vmatpush1.msra.mxu0 0.0
      %7977 = vmatprep.subr.mxu0 0.0
      %7978 = vmatpush1.msra.mxu0 0.0
      %7979 = vmatprep.subr.mxu0 0.0
      %7980 = vmatpush1.msra.mxu0 0.0
      %7981 = vmatprep.subr.mxu0 0.0
      %7982 = vmatpush1.msra.mxu0 0.0
      %7983 = vmatprep.subr.mxu0 0.0
      %7984 = vmatpush1.msra.mxu0 0.0
      %7985 = vmatprep.subr.mxu0 0.0
      %7986 = vmatpush1.msra.mxu0 0.0
      %7987 = vmatprep.subr.mxu0 0.0
      %7988 = vmatpush1.msra.mxu0 0.0
      %7989 = vmatprep.subr.mxu0 0.0
      %7990 = vmatpush1.msra.mxu0 0.0
      %7991 = vmatprep.subr.mxu0 0.0
      %7992 = vmatpush1.msra.mxu0 0.0
      %7993 = vmatprep.subr.mxu0 0.0
      %7994 = vmatpush1.msra.mxu0 0.0
      %7995 = vmatprep.subr.mxu0 0.0
      %7996 = vmatpush1.msra.mxu0 0.0
      %7997 = vmatprep.subr.mxu0 0.0
      %7998 = vmatpush1.msra.mxu0 0.0
      %7999 = vmatprep.subr.mxu0 0.0
      %8000 = vmatpush1.msra.mxu0 0.0
      %8001 = vmatprep.subr.mxu0 0.0
      %8002 = vmatpush1.msra.mxu0 0.0
      %8003 = vmatprep.subr.mxu0 0.0
      %8004 = vmatpush1.msra.mxu0 0.0
      %8005 = vmatprep.subr.mxu0 0.0
      %8006 = vmatpush1.msra.mxu0 0.0
      %8007 = vmatprep.subr.mxu0 0.0
      %8008 = vmatpush1.msra.mxu0 0.0
      %8009 = vmatprep.subr.mxu0 0.0
      %8010 = vmatpush1.msra.mxu0 0.0
      %8011 = vmatprep.subr.mxu0 0.0
      %8012 = vmatpush1.msra.mxu0 0.0
      %8013 = vmatprep.subr.mxu0 0.0
      %8014 = vmatpush1.msra.mxu0 0.0
      %8015 = vmatprep.subr.mxu0 0.0
      %8016 = vmatpush1.msra.mxu0 0.0
      %8017 = vmatprep.subr.mxu0 0.0
      %8018 = vmatpush1.msra.mxu0 0.0
      %8019 = vmatprep.subr.mxu0 0.0
      %8020 = vmatpush1.msra.mxu0 0.0
      %8021 = vmatprep.subr.mxu0 0.0
      %8022 = vmatpush1.msra.mxu0 0.0
      %8023 = vmatprep.subr.mxu0 0.0
      %8024 = vmatpush1.msra.mxu0 0.0
      %8025 = vmatprep.subr.mxu0 0.0
      %8026 = vmatpush1.msra.mxu0 0.0
      %8027 = vmatprep.subr.mxu0 0.0
      %8028 = vmatpush1.msra.mxu0 0.0
      %8029 = vmatprep.mubr.f32.mxu0 0.0
      %8030 = vmatmul.mubr.f32.gmra.mrb[0].mxu0 %v7963
      %v8031 = vpop.f32.mrb[0].mxu0
      %v8032 = vadd.f32 0.0, %v8031
      %v8033 = vpop.f32.mrb[0].mxu0
      %v8034 = vadd.f32 0.0, %v8033
      %8035 = vdwg.mxu0
      %v8036 = vadd.f32 %v7927, %v8032
      %v8037 = vadd.f32 %v7928, %v8034
      %8038 = vrot.lane.b32.xlu0 %v5527, 95
      %v8039 = vpop.permute.xlu0 %8038
      %8040 = vrot.lane.b32.xlu0 %v5529, 95
      %v8041 = vpop.permute.xlu0 %8040
      %8042 = vrot.lane.b32.xlu0 %v5531, 95
      %v8043 = vpop.permute.xlu0 %8042
      %8044 = vrot.lane.b32.xlu0 %v5533, 95
      %v8045 = vpop.permute.xlu0 %8044
      %8046 = vrot.lane.b32.xlu0 %v5528, 95
      %v8047 = vpop.permute.xlu0 %8046
      %8048 = vrot.lane.b32.xlu0 %v5530, 95
      %v8049 = vpop.permute.xlu0 %8048
      %8050 = vrot.lane.b32.xlu0 %v5532, 95
      %v8051 = vpop.permute.xlu0 %8050
      %8052 = vrot.lane.b32.xlu0 %v5534, 95
      %v8053 = vpop.permute.xlu0 %8052
      %v8054 = vsel %vm1738, %v8039, %v8047
      %v8055 = vsel %vm1738, %v8041, %v8049
      %v8056 = vsel %vm1738, %v8043, %v8051
      %v8057 = vsel %vm1738, %v8045, %v8053
      %v8058 = vsel %vm1738, %v8047, %v8039
      %v8059 = vsel %vm1738, %v8049, %v8041
      %v8060 = vsel %vm1738, %v8051, %v8043
      %v8061 = vsel %vm1738, %v8053, %v8045
      %v8062 = vmul.f32 %v8054, %v1747
      %v8063 = vmul.f32 %v8058, %v1751
      %v8064 = vmul.f32 %v8055, %v1747
      %v8065 = vmul.f32 %v8059, %v1751
      %v8066 = vmul.f32 %v8056, %v1747
      %v8067 = vmul.f32 %v8060, %v1751
      %v8068 = vmul.f32 %v8057, %v1747
      %v8069 = vmul.f32 %v8061, %v1751
      %8070 = vrot.lane.b32.xlu0 %v7851, 32
      %v8071 = vpop.permute.xlu0 %8070
      %v8072 = vsel %vm1978, %v8071, 0
      %8074 = vmatprep.subr.mxu0 %v8063
      %8075 = vmatpush1.msra.mxu0 %v8062
      %8076 = vmatprep.subr.mxu0 %v8065
      %8077 = vmatpush1.msra.mxu0 %v8064
      %8078 = vmatprep.subr.mxu0 %v8067
      %8079 = vmatpush1.msra.mxu0 %v8066
      %8080 = vmatprep.subr.mxu0 %v8069
      %8081 = vmatpush1.msra.mxu0 %v8068
      %8082 = vmatprep.subr.mxu0 0.0
      %8083 = vmatpush1.msra.mxu0 0.0
      %8084 = vmatprep.subr.mxu0 0.0
      %8085 = vmatpush1.msra.mxu0 0.0
      %8086 = vmatprep.subr.mxu0 0.0
      %8087 = vmatpush1.msra.mxu0 0.0
      %8088 = vmatprep.subr.mxu0 0.0
      %8089 = vmatpush1.msra.mxu0 0.0
      %8090 = vmatprep.subr.mxu0 0.0
      %8091 = vmatpush1.msra.mxu0 0.0
      %8092 = vmatprep.subr.mxu0 0.0
      %8093 = vmatpush1.msra.mxu0 0.0
      %8094 = vmatprep.subr.mxu0 0.0
      %8095 = vmatpush1.msra.mxu0 0.0
      %8096 = vmatprep.subr.mxu0 0.0
      %8097 = vmatpush1.msra.mxu0 0.0
      %8098 = vmatprep.subr.mxu0 0.0
      %8099 = vmatpush1.msra.mxu0 0.0
      %8100 = vmatprep.subr.mxu0 0.0
      %8101 = vmatpush1.msra.mxu0 0.0
      %8102 = vmatprep.subr.mxu0 0.0
      %8103 = vmatpush1.msra.mxu0 0.0
      %8104 = vmatprep.subr.mxu0 0.0
      %8105 = vmatpush1.msra.mxu0 0.0
      %8106 = vmatprep.subr.mxu0 0.0
      %8107 = vmatpush1.msra.mxu0 0.0
      %8108 = vmatprep.subr.mxu0 0.0
      %8109 = vmatpush1.msra.mxu0 0.0
      %8110 = vmatprep.subr.mxu0 0.0
      %8111 = vmatpush1.msra.mxu0 0.0
      %8112 = vmatprep.subr.mxu0 0.0
      %8113 = vmatpush1.msra.mxu0 0.0
      %8114 = vmatprep.subr.mxu0 0.0
      %8115 = vmatpush1.msra.mxu0 0.0
      %8116 = vmatprep.subr.mxu0 0.0
      %8117 = vmatpush1.msra.mxu0 0.0
      %8118 = vmatprep.subr.mxu0 0.0
      %8119 = vmatpush1.msra.mxu0 0.0
      %8120 = vmatprep.subr.mxu0 0.0
      %8121 = vmatpush1.msra.mxu0 0.0
      %8122 = vmatprep.subr.mxu0 0.0
      %8123 = vmatpush1.msra.mxu0 0.0
      %8124 = vmatprep.subr.mxu0 0.0
      %8125 = vmatpush1.msra.mxu0 0.0
      %8126 = vmatprep.subr.mxu0 0.0
      %8127 = vmatpush1.msra.mxu0 0.0
      %8128 = vmatprep.subr.mxu0 0.0
      %8129 = vmatpush1.msra.mxu0 0.0
      %8130 = vmatprep.subr.mxu0 0.0
      %8131 = vmatpush1.msra.mxu0 0.0
      %8132 = vmatprep.subr.mxu0 0.0
      %8133 = vmatpush1.msra.mxu0 0.0
      %8134 = vmatprep.subr.mxu0 0.0
      %8135 = vmatpush1.msra.mxu0 0.0
      %8136 = vmatprep.subr.mxu0 0.0
      %8137 = vmatpush1.msra.mxu0 0.0
      %8138 = vmatprep.mubr.f32.mxu0 0.0
      %8139 = vmatmul.mubr.f32.gmra.mrb[0].mxu0 %v8072
      %v8140 = vpop.f32.mrb[0].mxu0
      %v8141 = vadd.f32 0.0, %v8140
      %v8142 = vpop.f32.mrb[0].mxu0
      %v8143 = vadd.f32 0.0, %v8142
      %8144 = vdwg.mxu0
      %v8145 = vadd.f32 %v8036, %v8141
      %v8146 = vadd.f32 %v8037, %v8143
      %8147 = vrot.lane.b32.xlu0 %v5527, 94
      %v8148 = vpop.permute.xlu0 %8147
      %8149 = vrot.lane.b32.xlu0 %v5529, 94
      %v8150 = vpop.permute.xlu0 %8149
      %8151 = vrot.lane.b32.xlu0 %v5531, 94
      %v8152 = vpop.permute.xlu0 %8151
      %8153 = vrot.lane.b32.xlu0 %v5533, 94
      %v8154 = vpop.permute.xlu0 %8153
      %8155 = vrot.lane.b32.xlu0 %v5528, 94
      %v8156 = vpop.permute.xlu0 %8155
      %8157 = vrot.lane.b32.xlu0 %v5530, 94
      %v8158 = vpop.permute.xlu0 %8157
      %8159 = vrot.lane.b32.xlu0 %v5532, 94
      %v8160 = vpop.permute.xlu0 %8159
      %8161 = vrot.lane.b32.xlu0 %v5534, 94
      %v8162 = vpop.permute.xlu0 %8161
      %v8163 = vsel %vm1800, %v8148, %v8156
      %v8164 = vsel %vm1800, %v8150, %v8158
      %v8165 = vsel %vm1800, %v8152, %v8160
      %v8166 = vsel %vm1800, %v8154, %v8162
      %v8167 = vsel %vm1800, %v8156, %v8148
      %v8168 = vsel %vm1800, %v8158, %v8150
      %v8169 = vsel %vm1800, %v8160, %v8152
      %v8170 = vsel %vm1800, %v8162, %v8154
      %v8171 = vmul.f32 %v8163, %v1809
      %v8172 = vmul.f32 %v8167, %v1813
      %v8173 = vmul.f32 %v8164, %v1809
      %v8174 = vmul.f32 %v8168, %v1813
      %v8175 = vmul.f32 %v8165, %v1809
      %v8176 = vmul.f32 %v8169, %v1813
      %v8177 = vmul.f32 %v8166, %v1809
      %v8178 = vmul.f32 %v8170, %v1813
      %v8179 = vld [vmem:[%s6 + $0x6] sm:$0x1]
      %v8181 = vsel %vm1978, %v8179, 0
      %8183 = vmatprep.subr.mxu0 %v8172
      %8184 = vmatpush1.msra.mxu0 %v8171
      %8185 = vmatprep.subr.mxu0 %v8174
      %8186 = vmatpush1.msra.mxu0 %v8173
      %8187 = vmatprep.subr.mxu0 %v8176
      %8188 = vmatpush1.msra.mxu0 %v8175
      %8189 = vmatprep.subr.mxu0 %v8178
      %8190 = vmatpush1.msra.mxu0 %v8177
      %8191 = vmatprep.subr.mxu0 0.0
      %8192 = vmatpush1.msra.mxu0 0.0
      %8193 = vmatprep.subr.mxu0 0.0
      %8194 = vmatpush1.msra.mxu0 0.0
      %8195 = vmatprep.subr.mxu0 0.0
      %8196 = vmatpush1.msra.mxu0 0.0
      %8197 = vmatprep.subr.mxu0 0.0
      %8198 = vmatpush1.msra.mxu0 0.0
      %8199 = vmatprep.subr.mxu0 0.0
      %8200 = vmatpush1.msra.mxu0 0.0
      %8201 = vmatprep.subr.mxu0 0.0
      %8202 = vmatpush1.msra.mxu0 0.0
      %8203 = vmatprep.subr.mxu0 0.0
      %8204 = vmatpush1.msra.mxu0 0.0
      %8205 = vmatprep.subr.mxu0 0.0
      %8206 = vmatpush1.msra.mxu0 0.0
      %8207 = vmatprep.subr.mxu0 0.0
      %8208 = vmatpush1.msra.mxu0 0.0
      %8209 = vmatprep.subr.mxu0 0.0
      %8210 = vmatpush1.msra.mxu0 0.0
      %8211 = vmatprep.subr.mxu0 0.0
      %8212 = vmatpush1.msra.mxu0 0.0
      %8213 = vmatprep.subr.mxu0 0.0
      %8214 = vmatpush1.msra.mxu0 0.0
      %8215 = vmatprep.subr.mxu0 0.0
      %8216 = vmatpush1.msra.mxu0 0.0
      %8217 = vmatprep.subr.mxu0 0.0
      %8218 = vmatpush1.msra.mxu0 0.0
      %8219 = vmatprep.subr.mxu0 0.0
      %8220 = vmatpush1.msra.mxu0 0.0
      %8221 = vmatprep.subr.mxu0 0.0
      %8222 = vmatpush1.msra.mxu0 0.0
      %8223 = vmatprep.subr.mxu0 0.0
      %8224 = vmatpush1.msra.mxu0 0.0
      %8225 = vmatprep.subr.mxu0 0.0
      %8226 = vmatpush1.msra.mxu0 0.0
      %8227 = vmatprep.subr.mxu0 0.0
      %8228 = vmatpush1.msra.mxu0 0.0
      %8229 = vmatprep.subr.mxu0 0.0
      %8230 = vmatpush1.msra.mxu0 0.0
      %8231 = vmatprep.subr.mxu0 0.0
      %8232 = vmatpush1.msra.mxu0 0.0
      %8233 = vmatprep.subr.mxu0 0.0
      %8234 = vmatpush1.msra.mxu0 0.0
      %8235 = vmatprep.subr.mxu0 0.0
      %8236 = vmatpush1.msra.mxu0 0.0
      %8237 = vmatprep.subr.mxu0 0.0
      %8238 = vmatpush1.msra.mxu0 0.0
      %8239 = vmatprep.subr.mxu0 0.0
      %8240 = vmatpush1.msra.mxu0 0.0
      %8241 = vmatprep.subr.mxu0 0.0
      %8242 = vmatpush1.msra.mxu0 0.0
      %8243 = vmatprep.subr.mxu0 0.0
      %8244 = vmatpush1.msra.mxu0 0.0
      %8245 = vmatprep.subr.mxu0 0.0
      %8246 = vmatpush1.msra.mxu0 0.0
      %8247 = vmatprep.mubr.f32.mxu0 0.0
      %8248 = vmatmul.mubr.f32.gmra.mrb[0].mxu0 %v8181
      %v8249 = vpop.f32.mrb[0].mxu0
      %v8250 = vadd.f32 0.0, %v8249
      %v8251 = vpop.f32.mrb[0].mxu0
      %v8252 = vadd.f32 0.0, %v8251
      %8253 = vdwg.mxu0
      %v8254 = vadd.f32 %v8145, %v8250
      %v8255 = vadd.f32 %v8146, %v8252
      %v8256 = vld [vmem:[#allocation2] sm:$0x1]
      %8258 = vset.pattern.permute.xlu0 0
      %8259 = vperm.xlu0 %8258, %v8256
      %v8260 = vpop.permute.xlu0 %8259
      %v8262 = vlaneseq
      %v8263 = vshrl.u32 %v8262, 7
      %v8264 = vsub.s32 0, %v8263
      %v8265 = vrot.slane %v8260, %v8264
      %v8266 = vadd.f32 %v8254, %v8265
      %v8267 = vadd.f32 %v8255, %v8265
      %v8270 = vcombine.low %v8266, %v8267
      %v8272 = vunpack.c.l.s4 1966171168
      %v8273 = vunpack.c.0.s8 %v8272
      %v8274 = vlaneseq
      %v8275 = vshrl.u32 %v8274, 7
      %v8276 = vsub.s32 %v8273, %v8275
      %v8277 = vrot.slane %v8270, %v8276
      %v8279 = vunpack.c.l.s4 1966171168
      %v8280 = vunpack.c.0.s8 %v8279
      %v8281 = vlaneseq
      %v8282 = vshrl.u32 %v8281, 7
      %v8283 = vsub.s32 %v8280, %v8282
      %v8284 = vrot.slane %v8277, %v8283
      %v8286 = vlaneseq
      %vm8287 = vcmp.ge.s32.totalorder %v8286, 0
      %vm8288 = vcmp.lt.s32.totalorder %v8286, 256
      %vm8289 = vmand %vm8287, %vm8288
      %8290 = vst.msk [vmem:[%s302] sm:$0x3] %vm8289, %v8284
      %p8291 = scmp.lt.s32.totalorder %s21, 1
      %s8292 = scalar_select %p8291, %s21, 1
      %s8293 = smul.addr %s8292, 2
      %s8294 = scalar_lea.vmem %s8, %s8293
      // Predicated region
      $region53: #{network_preconditioner.1} parent=51 // pred_check
        %p8295 = pneg %p212
      $region54: #{network_preconditioner.1} parent=51 // pred_check_branch
        %8297 = sbr.rel (%p8295) target = $region56
      $region55: #{network_preconditioner.1} parent=51 // pred_region
        _
      $region56: #{network_preconditioner.1} parent=51 // pred_fallthru
        _
    $region52: #{network_preconditioner.1} parent=5 // pred_fallthru
      _
    %p8298 = scmp.le.s32.totalorder 2, %s16
    // Predicated region
    $region57: #{network_preconditioner.1} parent=5 // pred_check
      %p8299 = pneg %p8298
    $region58: #{network_preconditioner.1} parent=5 // pred_check_branch
      %8301 = sbr.rel (%p8299) target = $region60
    $region59: #{network_preconditioner.1} parent=5 // pred_region
      %s8302 = ssub.s32 %s16, 2
      // Predicated region
      $region61: #{network_preconditioner.1} parent=59 // pred_check
        %p8303 = pneg %p218
      $region62: #{network_preconditioner.1} parent=59 // pred_check_branch
        %8305 = sbr.rel (%p8303) target = $region64
      $region63: #{network_preconditioner.1} parent=59 // pred_region
        %p8306 = scmp.lt.s32.totalorder %s22, 1
        %s8307 = scalar_select %p8306, %s22, 1
        %s8308 = smul.addr %s8307, 2
        %s8309 = scalar_lea.vmem %s8, %s8308
      $region64: #{network_preconditioner.1} parent=59 // pred_fallthru
        _
    $region60: #{network_preconditioner.1} parent=5 // pred_fallthru
      _
  $region6: #{network_preconditioner.1} parent=0 // loop_footer
    %s20 = sadd.s32 1, %s16
  $region7: #{network_preconditioner.1} parent=0 // loop_footer_branch
    %15 = sbr.rel target = $region3
  $region8: #{network_preconditioner.1} parent=0 // loop_exit
    _

</llo_original>
